<compile_context>
chip_gen: v5e
topology: v5e:2x2
jax: 0.10.0
libtpu: 0.0.40
codegen_flags: <defaults>
</compile_context>

<pallas_src>
import jax
import jax.numpy as jnp
from jax.experimental import pallas as pl
from jax.experimental.pallas import tpu as pltpu

HIDDEN = 3      # input_size == hidden_size == 3
LAYERS = 5
GATE_PAD = 128  # one vreg lane-tile per gate


def net_kernel(x_ref, w_ih_ref, w_hh_ref, b_ref, lin_w_ref, lin_b_ref, out_ref):
    """Full forward pass of Net for one small batch.

    x_ref:     (T, B, C)        time-major input sequence
    w_ih_ref:  (L, H, 4*128)    input->gates weights, gate g at lanes [g*128, g*128+H)
    w_hh_ref:  (L, H, 4*128)    hidden->gates weights, same lane layout
    b_ref:     (L, 1, 4*128)    combined bias (b_ih + b_hh), zero on padded lanes
    lin_w_ref: (H, H)           Linear weight, pre-transposed to (in, out)
    lin_b_ref: (1, H)           Linear bias
    out_ref:   (B, C)           final output
    """
    T, B, C = x_ref.shape
    H = C
    L = w_ih_ref.shape[0]
    P4 = w_ih_ref.shape[2]
    P = P4 // 4

    # Layer-0 input, flattened once to (T*B, H); stays vreg/VMEM resident.
    seq_flat = x_ref[...].reshape(T * B, C)

    h_small = jnp.zeros((B, H), dtype=jnp.float32)
    for layer in range(L):
        W_ih = w_ih_ref[layer]          # (H, 4P)
        W_hh = w_hh_ref[layer]          # (H, 4P)
        bias = b_ref[layer]             # (1, 4P)

        # Hoisted input projection for the whole sequence: one dot + one bias
        # add per layer, off the recurrence critical path.
        xproj = jnp.dot(seq_flat, W_ih,
                        preferred_element_type=jnp.float32) + bias   # (T*B, 4P)
        xproj = xproj.reshape(T, B, P4)

        c = jnp.zeros((B, P), dtype=jnp.float32)
        h_small = jnp.zeros((B, H), dtype=jnp.float32)
        outs = []
        for t in range(T):
            if t == 0:
                gates = xproj[0]                                      # h == 0
            else:
                # Only the (B,H)@(H,4P) recurrent dot sits on the serial chain.
                # TODO(synk): on v5e/v6e this could be 3 VPU broadcast-FMAs of
                # h columns against W_hh rows to skip the MXU round trip.
                gates = xproj[t] + jnp.dot(h_small, W_hh,
                                           preferred_element_type=jnp.float32)
            # Each gate is its own 128-lane slab -> vreg-aligned slices,
            # full-vreg transcendentals, no lane realignment anywhere below.
            i_g = jax.nn.sigmoid(gates[:, 0 * P:1 * P])
            f_g = jax.nn.sigmoid(gates[:, 1 * P:2 * P])
            g_g = jnp.tanh(gates[:, 2 * P:3 * P])
            o_g = jax.nn.sigmoid(gates[:, 3 * P:4 * P])
            c = f_g * c + i_g * g_g                                   # (B, P)
            h_full = o_g * jnp.tanh(c)                                # (B, P)
            h_small = h_full[:, :H]           # lane offset 0 -> free subview
            outs.append(h_small)

        if layer < L - 1:
            # Packed (T*B, H) carry for the next layer's hoisted projection.
            seq_flat = jnp.concatenate(outs, axis=0)

    # Last timestep of the last LSTM layer -> Linear(3, 3)
    x = jnp.dot(h_small, lin_w_ref[...],
                preferred_element_type=jnp.float32) + lin_b_ref[...]

    # Block: max((1 + x) * x_input[:, -1, :], 0)
    x_in_last = x_ref[T - 1]                                          # (B, C)
    out_ref[...] = jnp.maximum((1.0 + x) * x_in_last, 0.0)


def net_forward(x_input, packed_params):
    """x_input: (B, T, C) float32 (PyTorch batch_first layout)."""
    B, T, C = x_input.shape
    # Tiny (192 B) layout change; keeps in-kernel indexing time-major & trivial.
    x_tm = jnp.transpose(x_input, (1, 0, 2)).astype(jnp.float32)      # (T, B, C)
    w_ih_p, w_hh_p, b_p, lin_w_t, lin_b_2d = packed_params

    # Deliberately no grid / tiling / multi-buffering: everything fits in VMEM
    # and the kernel is latency-bound on the recurrence.
    return pl.pallas_call(
        net_kernel,
        out_shape=jax.ShapeDtypeStruct((B, C), jnp.float32),
        in_specs=[pl.BlockSpec(memory_space=pltpu.MemorySpace.VMEM)] * 6,
        out_specs=pl.BlockSpec(memory_space=pltpu.MemorySpace.VMEM),
    )(x_tm, w_ih_p, w_hh_p, b_p, lin_w_t, lin_b_2d)


def init_params(key):
    """Deterministic synthetic parameters in PyTorch-native layout.

    w_ih:  (L, 4H, C)   gate rows in PyTorch order (i, f, g, o)
    w_hh:  (L, 4H, H)
    b_ih:  (L, 4H)
    b_hh:  (L, 4H)
    lin_w: (H, H)       Linear weight, (out, in) like nn.Linear
    lin_b: (H,)
    """
    H, L = HIDDEN, LAYERS
    ks = jax.random.split(key, 6)
    scale = 1.0 / jnp.sqrt(jnp.float32(H))
    w_ih = jax.random.uniform(ks[0], (L, 4 * H, H), jnp.float32, -scale, scale)
    w_hh = jax.random.uniform(ks[1], (L, 4 * H, H), jnp.float32, -scale, scale)
    b_ih = jax.random.uniform(ks[2], (L, 4 * H), jnp.float32, -scale, scale)
    b_hh = jax.random.uniform(ks[3], (L, 4 * H), jnp.float32, -scale, scale)
    lin_w = jax.random.uniform(ks[4], (H, H), jnp.float32, -scale, scale)
    lin_b = jax.random.uniform(ks[5], (H,), jnp.float32, -scale, scale)
    return w_ih, w_hh, b_ih, b_hh, lin_w, lin_b


def pack_params(torch_params):
    """Pack PyTorch-layout weights into the lane-aligned kernel layout.

    Gate g of (i, f, g, o) is placed at lanes [g*128, g*128 + H); all other
    lanes are zero (weights AND bias), so padded lanes stay inert through
    sigmoid/tanh and the c/h recurrence.
    """
    w_ih, w_hh, b_ih, b_hh, lin_w, lin_b = torch_params
    H, L, P = HIDDEN, LAYERS, GATE_PAD

    def pad_w(w):                               # (L, 4H, in) -> (L, in, 4P)
        wt = jnp.swapaxes(w, 1, 2).astype(jnp.float32)      # (L, in, 4H)
        out = jnp.zeros((L, wt.shape[1], 4 * P), jnp.float32)
        for g in range(4):
            out = out.at[:, :, g * P:g * P + H].set(wt[:, :, g * H:(g + 1) * H])
        return out

    def pad_b(b):                               # (L, 4H) -> (L, 1, 4P)
        out = jnp.zeros((L, 1, 4 * P), jnp.float32)
        for g in range(4):
            out = out.at[:, 0, g * P:g * P + H].set(b[:, g * H:(g + 1) * H])
        return out

    w_ih_p = pad_w(w_ih)
    w_hh_p = pad_w(w_hh)
    b_p = pad_b((b_ih + b_hh).astype(jnp.float32))
    lin_w_t = lin_w.astype(jnp.float32).T       # (in, out)
    lin_b_2d = lin_b.astype(jnp.float32)[None, :]
    return w_ih_p, w_hh_p, b_p, lin_w_t, lin_b_2d


def net_reference(x_input, torch_params):
    """Pure-JAX reference mirroring PyTorch LSTM/Linear/Block semantics."""
    w_ih, w_hh, b_ih, b_hh, lin_w, lin_b = torch_params
    B, T, C = x_input.shape
    H = C
    seq = x_input.astype(jnp.float32)
    for layer in range(LAYERS):
        h = jnp.zeros((B, H), jnp.float32)
        c = jnp.zeros((B, H), jnp.float32)
        outs = []
        for t in range(T):
            xt = seq[:, t, :]
            gates = (xt @ w_ih[layer].T + h @ w_hh[layer].T
                     + b_ih[layer] + b_hh[layer])          # (B, 4H), (i,f,g,o)
            i_g = jax.nn.sigmoid(gates[:, :H])
            f_g = jax.nn.sigmoid(gates[:, H:2 * H])
            g_g = jnp.tanh(gates[:, 2 * H:3 * H])
            o_g = jax.nn.sigmoid(gates[:, 3 * H:])
            c = f_g * c + i_g * g_g
            h = o_g * jnp.tanh(c)
            outs.append(h)
        seq = jnp.stack(outs, axis=1)
    x = seq[:, -1, :] @ lin_w.T + lin_b
    return jnp.maximum((1.0 + x) * x_input[:, -1, :], 0.0)


if __name__ == "__main__":
    key = jax.random.PRNGKey(0)
    pkey, xkey = jax.random.split(key)
    torch_params = init_params(pkey)
    packed_params = pack_params(torch_params)

    B, T, C = 2, 8, 3                      # small shapes consistent with the module
    x_input = jax.random.normal(xkey, (B, T, C), jnp.float32)

    out = net_forward(x_input, packed_params)
    out = jax.block_until_ready(out)

    ref = net_reference(x_input, torch_params)
    assert out.shape == (B, C)
    assert jnp.allclose(out, ref, atol=1e-3, rtol=1e-3)

    print("KERNEL_OK")
</pallas_src>

<mosaic_0001>
module attributes {stable_mosaic.version = 11 : i64} {
  func.func @net_kernel(%arg0: memref<8x2x3xf32, #tpu.memory_space<vmem>>, %arg1: memref<5x3x512xf32, #tpu.memory_space<vmem>>, %arg2: memref<5x3x512xf32, #tpu.memory_space<vmem>>, %arg3: memref<5x1x512xf32, #tpu.memory_space<vmem>>, %arg4: memref<3x3xf32, #tpu.memory_space<vmem>>, %arg5: memref<1x3xf32, #tpu.memory_space<vmem>>, %arg6: memref<2x3xf32, #tpu.memory_space<vmem>>) attributes {dimension_semantics = [], scalar_prefetch = 0 : i64, scratch_operands = 0 : i64, tpu.core_type = #tpu.core_type<tc>} {
    %c0 = arith.constant 0 : index
    %c0_0 = arith.constant 0 : index
    %c0_1 = arith.constant 0 : index
    %0 = vector.load %arg0[%c0, %c0_0, %c0_1] : memref<8x2x3xf32, #tpu.memory_space<vmem>>, vector<8x2x3xf32>
    %1 = vector.shape_cast %0 : vector<8x2x3xf32> to vector<16x3xf32>
    %c0_2 = arith.constant 0 : index
    %c0_3 = arith.constant 0 : index
    %c0_4 = arith.constant 0 : index
    %2 = vector.load %arg1[%c0_2, %c0_3, %c0_4] : memref<5x3x512xf32, #tpu.memory_space<vmem>>, vector<1x3x512xf32>
    %3 = vector.shape_cast %2 : vector<1x3x512xf32> to vector<3x512xf32>
    %c0_5 = arith.constant 0 : index
    %c0_6 = arith.constant 0 : index
    %c0_7 = arith.constant 0 : index
    %4 = vector.load %arg2[%c0_5, %c0_6, %c0_7] : memref<5x3x512xf32, #tpu.memory_space<vmem>>, vector<1x3x512xf32>
    %5 = vector.shape_cast %4 : vector<1x3x512xf32> to vector<3x512xf32>
    %c0_8 = arith.constant 0 : index
    %c0_9 = arith.constant 0 : index
    %c0_10 = arith.constant 0 : index
    %6 = vector.load %arg3[%c0_8, %c0_9, %c0_10] : memref<5x1x512xf32, #tpu.memory_space<vmem>>, vector<1x1x512xf32>
    %7 = vector.shape_cast %6 : vector<1x1x512xf32> to vector<1x512xf32>
    %cst = arith.constant dense<0.000000e+00> : vector<16x512xf32>
    %8 = tpu.matmul %1, %3, %cst {dimension_numbers = #tpu.dot_dimension_numbers<[1], [0], [0], [1], [0, 0, 1, 1], [], []>} : vector<16x3xf32>, vector<3x512xf32>, vector<16x512xf32> -> vector<16x512xf32>
    %9 = vector.broadcast %7 : vector<1x512xf32> to vector<16x512xf32>
    %10 = arith.addf %8, %9 : vector<16x512xf32>
    %11 = vector.shape_cast %10 : vector<16x512xf32> to vector<8x2x512xf32>
    %cst_11 = arith.constant 0.000000e+00 : f32
    %12 = vector.broadcast %cst_11 : f32 to vector<2x128xf32>
    %13 = vector.extract_strided_slice %11 {offsets = [0, 0, 0], sizes = [1, 2, 512], strides = [1, 1, 1]} : vector<8x2x512xf32> to vector<1x2x512xf32>
    %14 = vector.shape_cast %13 : vector<1x2x512xf32> to vector<2x512xf32>
    %15 = vector.extract_strided_slice %14 {offsets = [0, 0], sizes = [2, 128], strides = [1, 1]} : vector<2x512xf32> to vector<2x128xf32>
    %16 = arith.negf %15 : vector<2x128xf32>
    %17 = math.exp %16 : vector<2x128xf32>
    %cst_12 = arith.constant 1.000000e+00 : f32
    %18 = vector.broadcast %cst_12 : f32 to vector<2x128xf32>
    %19 = arith.addf %18, %17 : vector<2x128xf32>
    %20 = arith.divf %18, %19 : vector<2x128xf32>
    %21 = vector.extract_strided_slice %14 {offsets = [0, 128], sizes = [2, 128], strides = [1, 1]} : vector<2x512xf32> to vector<2x128xf32>
    %22 = arith.negf %21 : vector<2x128xf32>
    %23 = math.exp %22 : vector<2x128xf32>
    %cst_13 = arith.constant 1.000000e+00 : f32
    %24 = vector.broadcast %cst_13 : f32 to vector<2x128xf32>
    %25 = arith.addf %24, %23 : vector<2x128xf32>
    %26 = arith.divf %24, %25 : vector<2x128xf32>
    %27 = vector.extract_strided_slice %14 {offsets = [0, 256], sizes = [2, 128], strides = [1, 1]} : vector<2x512xf32> to vector<2x128xf32>
    %28 = math.tanh %27 : vector<2x128xf32>
    %29 = vector.extract_strided_slice %14 {offsets = [0, 384], sizes = [2, 128], strides = [1, 1]} : vector<2x512xf32> to vector<2x128xf32>
    %30 = arith.negf %29 : vector<2x128xf32>
    %31 = math.exp %30 : vector<2x128xf32>
    %cst_14 = arith.constant 1.000000e+00 : f32
    %32 = vector.broadcast %cst_14 : f32 to vector<2x128xf32>
    %33 = arith.addf %32, %31 : vector<2x128xf32>
    %34 = arith.divf %32, %33 : vector<2x128xf32>
    %35 = arith.mulf %26, %12 : vector<2x128xf32>
    %36 = arith.mulf %20, %28 : vector<2x128xf32>
    %37 = arith.addf %35, %36 : vector<2x128xf32>
    %38 = math.tanh %37 : vector<2x128xf32>
    %39 = arith.mulf %34, %38 : vector<2x128xf32>
    %40 = vector.extract_strided_slice %39 {offsets = [0, 0], sizes = [2, 3], strides = [1, 1]} : vector<2x128xf32> to vector<2x3xf32>
    %41 = vector.extract_strided_slice %11 {offsets = [1, 0, 0], sizes = [1, 2, 512], strides = [1, 1, 1]} : vector<8x2x512xf32> to vector<1x2x512xf32>
    %42 = vector.shape_cast %41 : vector<1x2x512xf32> to vector<2x512xf32>
    %cst_15 = arith.constant dense<0.000000e+00> : vector<2x512xf32>
    %43 = tpu.matmul %40, %5, %cst_15 {dimension_numbers = #tpu.dot_dimension_numbers<[1], [0], [0], [1], [0, 0, 1, 1], [], []>} : vector<2x3xf32>, vector<3x512xf32>, vector<2x512xf32> -> vector<2x512xf32>
    %44 = arith.addf %42, %43 : vector<2x512xf32>
    %45 = vector.extract_strided_slice %44 {offsets = [0, 0], sizes = [2, 128], strides = [1, 1]} : vector<2x512xf32> to vector<2x128xf32>
    %46 = arith.negf %45 : vector<2x128xf32>
    %47 = math.exp %46 : vector<2x128xf32>
    %cst_16 = arith.constant 1.000000e+00 : f32
    %48 = vector.broadcast %cst_16 : f32 to vector<2x128xf32>
    %49 = arith.addf %48, %47 : vector<2x128xf32>
    %50 = arith.divf %48, %49 : vector<2x128xf32>
    %51 = vector.extract_strided_slice %44 {offsets = [0, 128], sizes = [2, 128], strides = [1, 1]} : vector<2x512xf32> to vector<2x128xf32>
    %52 = arith.negf %51 : vector<2x128xf32>
    %53 = math.exp %52 : vector<2x128xf32>
    %cst_17 = arith.constant 1.000000e+00 : f32
    %54 = vector.broadcast %cst_17 : f32 to vector<2x128xf32>
    %55 = arith.addf %54, %53 : vector<2x128xf32>
    %56 = arith.divf %54, %55 : vector<2x128xf32>
    %57 = vector.extract_strided_slice %44 {offsets = [0, 256], sizes = [2, 128], strides = [1, 1]} : vector<2x512xf32> to vector<2x128xf32>
    %58 = math.tanh %57 : vector<2x128xf32>
    %59 = vector.extract_strided_slice %44 {offsets = [0, 384], sizes = [2, 128], strides = [1, 1]} : vector<2x512xf32> to vector<2x128xf32>
    %60 = arith.negf %59 : vector<2x128xf32>
    %61 = math.exp %60 : vector<2x128xf32>
    %cst_18 = arith.constant 1.000000e+00 : f32
    %62 = vector.broadcast %cst_18 : f32 to vector<2x128xf32>
    %63 = arith.addf %62, %61 : vector<2x128xf32>
    %64 = arith.divf %62, %63 : vector<2x128xf32>
    %65 = arith.mulf %56, %37 : vector<2x128xf32>
    %66 = arith.mulf %50, %58 : vector<2x128xf32>
    %67 = arith.addf %65, %66 : vector<2x128xf32>
    %68 = math.tanh %67 : vector<2x128xf32>
    %69 = arith.mulf %64, %68 : vector<2x128xf32>
    %70 = vector.extract_strided_slice %69 {offsets = [0, 0], sizes = [2, 3], strides = [1, 1]} : vector<2x128xf32> to vector<2x3xf32>
    %71 = vector.extract_strided_slice %11 {offsets = [2, 0, 0], sizes = [1, 2, 512], strides = [1, 1, 1]} : vector<8x2x512xf32> to vector<1x2x512xf32>
    %72 = vector.shape_cast %71 : vector<1x2x512xf32> to vector<2x512xf32>
    %cst_19 = arith.constant dense<0.000000e+00> : vector<2x512xf32>
    %73 = tpu.matmul %70, %5, %cst_19 {dimension_numbers = #tpu.dot_dimension_numbers<[1], [0], [0], [1], [0, 0, 1, 1], [], []>} : vector<2x3xf32>, vector<3x512xf32>, vector<2x512xf32> -> vector<2x512xf32>
    %74 = arith.addf %72, %73 : vector<2x512xf32>
    %75 = vector.extract_strided_slice %74 {offsets = [0, 0], sizes = [2, 128], strides = [1, 1]} : vector<2x512xf32> to vector<2x128xf32>
    %76 = arith.negf %75 : vector<2x128xf32>
    %77 = math.exp %76 : vector<2x128xf32>
    %cst_20 = arith.constant 1.000000e+00 : f32
    %78 = vector.broadcast %cst_20 : f32 to vector<2x128xf32>
    %79 = arith.addf %78, %77 : vector<2x128xf32>
    %80 = arith.divf %78, %79 : vector<2x128xf32>
    %81 = vector.extract_strided_slice %74 {offsets = [0, 128], sizes = [2, 128], strides = [1, 1]} : vector<2x512xf32> to vector<2x128xf32>
    %82 = arith.negf %81 : vector<2x128xf32>
    %83 = math.exp %82 : vector<2x128xf32>
    %cst_21 = arith.constant 1.000000e+00 : f32
    %84 = vector.broadcast %cst_21 : f32 to vector<2x128xf32>
    %85 = arith.addf %84, %83 : vector<2x128xf32>
    %86 = arith.divf %84, %85 : vector<2x128xf32>
    %87 = vector.extract_strided_slice %74 {offsets = [0, 256], sizes = [2, 128], strides = [1, 1]} : vector<2x512xf32> to vector<2x128xf32>
    %88 = math.tanh %87 : vector<2x128xf32>
    %89 = vector.extract_strided_slice %74 {offsets = [0, 384], sizes = [2, 128], strides = [1, 1]} : vector<2x512xf32> to vector<2x128xf32>
    %90 = arith.negf %89 : vector<2x128xf32>
    %91 = math.exp %90 : vector<2x128xf32>
    %cst_22 = arith.constant 1.000000e+00 : f32
    %92 = vector.broadcast %cst_22 : f32 to vector<2x128xf32>
    %93 = arith.addf %92, %91 : vector<2x128xf32>
    %94 = arith.divf %92, %93 : vector<2x128xf32>
    %95 = arith.mulf %86, %67 : vector<2x128xf32>
    %96 = arith.mulf %80, %88 : vector<2x128xf32>
    %97 = arith.addf %95, %96 : vector<2x128xf32>
    %98 = math.tanh %97 : vector<2x128xf32>
    %99 = arith.mulf %94, %98 : vector<2x128xf32>
    %100 = vector.extract_strided_slice %99 {offsets = [0, 0], sizes = [2, 3], strides = [1, 1]} : vector<2x128xf32> to vector<2x3xf32>
    %101 = vector.extract_strided_slice %11 {offsets = [3, 0, 0], sizes = [1, 2, 512], strides = [1, 1, 1]} : vector<8x2x512xf32> to vector<1x2x512xf32>
    %102 = vector.shape_cast %101 : vector<1x2x512xf32> to vector<2x512xf32>
    %cst_23 = arith.constant dense<0.000000e+00> : vector<2x512xf32>
    %103 = tpu.matmul %100, %5, %cst_23 {dimension_numbers = #tpu.dot_dimension_numbers<[1], [0], [0], [1], [0, 0, 1, 1], [], []>} : vector<2x3xf32>, vector<3x512xf32>, vector<2x512xf32> -> vector<2x512xf32>
    %104 = arith.addf %102, %103 : vector<2x512xf32>
    %105 = vector.extract_strided_slice %104 {offsets = [0, 0], sizes = [2, 128], strides = [1, 1]} : vector<2x512xf32> to vector<2x128xf32>
    %106 = arith.negf %105 : vector<2x128xf32>
    %107 = math.exp %106 : vector<2x128xf32>
    %cst_24 = arith.constant 1.000000e+00 : f32
    %108 = vector.broadcast %cst_24 : f32 to vector<2x128xf32>
    %109 = arith.addf %108, %107 : vector<2x128xf32>
    %110 = arith.divf %108, %109 : vector<2x128xf32>
    %111 = vector.extract_strided_slice %104 {offsets = [0, 128], sizes = [2, 128], strides = [1, 1]} : vector<2x512xf32> to vector<2x128xf32>
    %112 = arith.negf %111 : vector<2x128xf32>
    %113 = math.exp %112 : vector<2x128xf32>
    %cst_25 = arith.constant 1.000000e+00 : f32
    %114 = vector.broadcast %cst_25 : f32 to vector<2x128xf32>
    %115 = arith.addf %114, %113 : vector<2x128xf32>
    %116 = arith.divf %114, %115 : vector<2x128xf32>
    %117 = vector.extract_strided_slice %104 {offsets = [0, 256], sizes = [2, 128], strides = [1, 1]} : vector<2x512xf32> to vector<2x128xf32>
    %118 = math.tanh %117 : vector<2x128xf32>
    %119 = vector.extract_strided_slice %104 {offsets = [0, 384], sizes = [2, 128], strides = [1, 1]} : vector<2x512xf32> to vector<2x128xf32>
    %120 = arith.negf %119 : vector<2x128xf32>
    %121 = math.exp %120 : vector<2x128xf32>
    %cst_26 = arith.constant 1.000000e+00 : f32
    %122 = vector.broadcast %cst_26 : f32 to vector<2x128xf32>
    %123 = arith.addf %122, %121 : vector<2x128xf32>
    %124 = arith.divf %122, %123 : vector<2x128xf32>
    %125 = arith.mulf %116, %97 : vector<2x128xf32>
    %126 = arith.mulf %110, %118 : vector<2x128xf32>
    %127 = arith.addf %125, %126 : vector<2x128xf32>
    %128 = math.tanh %127 : vector<2x128xf32>
    %129 = arith.mulf %124, %128 : vector<2x128xf32>
    %130 = vector.extract_strided_slice %129 {offsets = [0, 0], sizes = [2, 3], strides = [1, 1]} : vector<2x128xf32> to vector<2x3xf32>
    %131 = vector.extract_strided_slice %11 {offsets = [4, 0, 0], sizes = [1, 2, 512], strides = [1, 1, 1]} : vector<8x2x512xf32> to vector<1x2x512xf32>
    %132 = vector.shape_cast %131 : vector<1x2x512xf32> to vector<2x512xf32>
    %cst_27 = arith.constant dense<0.000000e+00> : vector<2x512xf32>
    %133 = tpu.matmul %130, %5, %cst_27 {dimension_numbers = #tpu.dot_dimension_numbers<[1], [0], [0], [1], [0, 0, 1, 1], [], []>} : vector<2x3xf32>, vector<3x512xf32>, vector<2x512xf32> -> vector<2x512xf32>
    %134 = arith.addf %132, %133 : vector<2x512xf32>
    %135 = vector.extract_strided_slice %134 {offsets = [0, 0], sizes = [2, 128], strides = [1, 1]} : vector<2x512xf32> to vector<2x128xf32>
    %136 = arith.negf %135 : vector<2x128xf32>
    %137 = math.exp %136 : vector<2x128xf32>
    %cst_28 = arith.constant 1.000000e+00 : f32
    %138 = vector.broadcast %cst_28 : f32 to vector<2x128xf32>
    %139 = arith.addf %138, %137 : vector<2x128xf32>
    %140 = arith.divf %138, %139 : vector<2x128xf32>
    %141 = vector.extract_strided_slice %134 {offsets = [0, 128], sizes = [2, 128], strides = [1, 1]} : vector<2x512xf32> to vector<2x128xf32>
    %142 = arith.negf %141 : vector<2x128xf32>
    %143 = math.exp %142 : vector<2x128xf32>
    %cst_29 = arith.constant 1.000000e+00 : f32
    %144 = vector.broadcast %cst_29 : f32 to vector<2x128xf32>
    %145 = arith.addf %144, %143 : vector<2x128xf32>
    %146 = arith.divf %144, %145 : vector<2x128xf32>
    %147 = vector.extract_strided_slice %134 {offsets = [0, 256], sizes = [2, 128], strides = [1, 1]} : vector<2x512xf32> to vector<2x128xf32>
    %148 = math.tanh %147 : vector<2x128xf32>
    %149 = vector.extract_strided_slice %134 {offsets = [0, 384], sizes = [2, 128], strides = [1, 1]} : vector<2x512xf32> to vector<2x128xf32>
    %150 = arith.negf %149 : vector<2x128xf32>
    %151 = math.exp %150 : vector<2x128xf32>
    %cst_30 = arith.constant 1.000000e+00 : f32
    %152 = vector.broadcast %cst_30 : f32 to vector<2x128xf32>
    %153 = arith.addf %152, %151 : vector<2x128xf32>
    %154 = arith.divf %152, %153 : vector<2x128xf32>
    %155 = arith.mulf %146, %127 : vector<2x128xf32>
    %156 = arith.mulf %140, %148 : vector<2x128xf32>
    %157 = arith.addf %155, %156 : vector<2x128xf32>
    %158 = math.tanh %157 : vector<2x128xf32>
    %159 = arith.mulf %154, %158 : vector<2x128xf32>
    %160 = vector.extract_strided_slice %159 {offsets = [0, 0], sizes = [2, 3], strides = [1, 1]} : vector<2x128xf32> to vector<2x3xf32>
    %161 = vector.extract_strided_slice %11 {offsets = [5, 0, 0], sizes = [1, 2, 512], strides = [1, 1, 1]} : vector<8x2x512xf32> to vector<1x2x512xf32>
    %162 = vector.shape_cast %161 : vector<1x2x512xf32> to vector<2x512xf32>
    %cst_31 = arith.constant dense<0.000000e+00> : vector<2x512xf32>
    %163 = tpu.matmul %160, %5, %cst_31 {dimension_numbers = #tpu.dot_dimension_numbers<[1], [0], [0], [1], [0, 0, 1, 1], [], []>} : vector<2x3xf32>, vector<3x512xf32>, vector<2x512xf32> -> vector<2x512xf32>
    %164 = arith.addf %162, %163 : vector<2x512xf32>
    %165 = vector.extract_strided_slice %164 {offsets = [0, 0], sizes = [2, 128], strides = [1, 1]} : vector<2x512xf32> to vector<2x128xf32>
    %166 = arith.negf %165 : vector<2x128xf32>
    %167 = math.exp %166 : vector<2x128xf32>
    %cst_32 = arith.constant 1.000000e+00 : f32
    %168 = vector.broadcast %cst_32 : f32 to vector<2x128xf32>
    %169 = arith.addf %168, %167 : vector<2x128xf32>
    %170 = arith.divf %168, %169 : vector<2x128xf32>
    %171 = vector.extract_strided_slice %164 {offsets = [0, 128], sizes = [2, 128], strides = [1, 1]} : vector<2x512xf32> to vector<2x128xf32>
    %172 = arith.negf %171 : vector<2x128xf32>
    %173 = math.exp %172 : vector<2x128xf32>
    %cst_33 = arith.constant 1.000000e+00 : f32
    %174 = vector.broadcast %cst_33 : f32 to vector<2x128xf32>
    %175 = arith.addf %174, %173 : vector<2x128xf32>
    %176 = arith.divf %174, %175 : vector<2x128xf32>
    %177 = vector.extract_strided_slice %164 {offsets = [0, 256], sizes = [2, 128], strides = [1, 1]} : vector<2x512xf32> to vector<2x128xf32>
    %178 = math.tanh %177 : vector<2x128xf32>
    %179 = vector.extract_strided_slice %164 {offsets = [0, 384], sizes = [2, 128], strides = [1, 1]} : vector<2x512xf32> to vector<2x128xf32>
    %180 = arith.negf %179 : vector<2x128xf32>
    %181 = math.exp %180 : vector<2x128xf32>
    %cst_34 = arith.constant 1.000000e+00 : f32
    %182 = vector.broadcast %cst_34 : f32 to vector<2x128xf32>
    %183 = arith.addf %182, %181 : vector<2x128xf32>
    %184 = arith.divf %182, %183 : vector<2x128xf32>
    %185 = arith.mulf %176, %157 : vector<2x128xf32>
    %186 = arith.mulf %170, %178 : vector<2x128xf32>
    %187 = arith.addf %185, %186 : vector<2x128xf32>
    %188 = math.tanh %187 : vector<2x128xf32>
    %189 = arith.mulf %184, %188 : vector<2x128xf32>
    %190 = vector.extract_strided_slice %189 {offsets = [0, 0], sizes = [2, 3], strides = [1, 1]} : vector<2x128xf32> to vector<2x3xf32>
    %191 = vector.extract_strided_slice %11 {offsets = [6, 0, 0], sizes = [1, 2, 512], strides = [1, 1, 1]} : vector<8x2x512xf32> to vector<1x2x512xf32>
    %192 = vector.shape_cast %191 : vector<1x2x512xf32> to vector<2x512xf32>
    %cst_35 = arith.constant dense<0.000000e+00> : vector<2x512xf32>
    %193 = tpu.matmul %190, %5, %cst_35 {dimension_numbers = #tpu.dot_dimension_numbers<[1], [0], [0], [1], [0, 0, 1, 1], [], []>} : vector<2x3xf32>, vector<3x512xf32>, vector<2x512xf32> -> vector<2x512xf32>
    %194 = arith.addf %192, %193 : vector<2x512xf32>
    %195 = vector.extract_strided_slice %194 {offsets = [0, 0], sizes = [2, 128], strides = [1, 1]} : vector<2x512xf32> to vector<2x128xf32>
    %196 = arith.negf %195 : vector<2x128xf32>
    %197 = math.exp %196 : vector<2x128xf32>
    %cst_36 = arith.constant 1.000000e+00 : f32
    %198 = vector.broadcast %cst_36 : f32 to vector<2x128xf32>
    %199 = arith.addf %198, %197 : vector<2x128xf32>
    %200 = arith.divf %198, %199 : vector<2x128xf32>
    %201 = vector.extract_strided_slice %194 {offsets = [0, 128], sizes = [2, 128], strides = [1, 1]} : vector<2x512xf32> to vector<2x128xf32>
    %202 = arith.negf %201 : vector<2x128xf32>
    %203 = math.exp %202 : vector<2x128xf32>
    %cst_37 = arith.constant 1.000000e+00 : f32
    %204 = vector.broadcast %cst_37 : f32 to vector<2x128xf32>
    %205 = arith.addf %204, %203 : vector<2x128xf32>
    %206 = arith.divf %204, %205 : vector<2x128xf32>
    %207 = vector.extract_strided_slice %194 {offsets = [0, 256], sizes = [2, 128], strides = [1, 1]} : vector<2x512xf32> to vector<2x128xf32>
    %208 = math.tanh %207 : vector<2x128xf32>
    %209 = vector.extract_strided_slice %194 {offsets = [0, 384], sizes = [2, 128], strides = [1, 1]} : vector<2x512xf32> to vector<2x128xf32>
    %210 = arith.negf %209 : vector<2x128xf32>
    %211 = math.exp %210 : vector<2x128xf32>
    %cst_38 = arith.constant 1.000000e+00 : f32
    %212 = vector.broadcast %cst_38 : f32 to vector<2x128xf32>
    %213 = arith.addf %212, %211 : vector<2x128xf32>
    %214 = arith.divf %212, %213 : vector<2x128xf32>
    %215 = arith.mulf %206, %187 : vector<2x128xf32>
    %216 = arith.mulf %200, %208 : vector<2x128xf32>
    %217 = arith.addf %215, %216 : vector<2x128xf32>
    %218 = math.tanh %217 : vector<2x128xf32>
    %219 = arith.mulf %214, %218 : vector<2x128xf32>
    %220 = vector.extract_strided_slice %219 {offsets = [0, 0], sizes = [2, 3], strides = [1, 1]} : vector<2x128xf32> to vector<2x3xf32>
    %221 = vector.extract_strided_slice %11 {offsets = [7, 0, 0], sizes = [1, 2, 512], strides = [1, 1, 1]} : vector<8x2x512xf32> to vector<1x2x512xf32>
    %222 = vector.shape_cast %221 : vector<1x2x512xf32> to vector<2x512xf32>
    %cst_39 = arith.constant dense<0.000000e+00> : vector<2x512xf32>
    %223 = tpu.matmul %220, %5, %cst_39 {dimension_numbers = #tpu.dot_dimension_numbers<[1], [0], [0], [1], [0, 0, 1, 1], [], []>} : vector<2x3xf32>, vector<3x512xf32>, vector<2x512xf32> -> vector<2x512xf32>
    %224 = arith.addf %222, %223 : vector<2x512xf32>
    %225 = vector.extract_strided_slice %224 {offsets = [0, 0], sizes = [2, 128], strides = [1, 1]} : vector<2x512xf32> to vector<2x128xf32>
    %226 = arith.negf %225 : vector<2x128xf32>
    %227 = math.exp %226 : vector<2x128xf32>
    %cst_40 = arith.constant 1.000000e+00 : f32
    %228 = vector.broadcast %cst_40 : f32 to vector<2x128xf32>
    %229 = arith.addf %228, %227 : vector<2x128xf32>
    %230 = arith.divf %228, %229 : vector<2x128xf32>
    %231 = vector.extract_strided_slice %224 {offsets = [0, 128], sizes = [2, 128], strides = [1, 1]} : vector<2x512xf32> to vector<2x128xf32>
    %232 = arith.negf %231 : vector<2x128xf32>
    %233 = math.exp %232 : vector<2x128xf32>
    %cst_41 = arith.constant 1.000000e+00 : f32
    %234 = vector.broadcast %cst_41 : f32 to vector<2x128xf32>
    %235 = arith.addf %234, %233 : vector<2x128xf32>
    %236 = arith.divf %234, %235 : vector<2x128xf32>
    %237 = vector.extract_strided_slice %224 {offsets = [0, 256], sizes = [2, 128], strides = [1, 1]} : vector<2x512xf32> to vector<2x128xf32>
    %238 = math.tanh %237 : vector<2x128xf32>
    %239 = vector.extract_strided_slice %224 {offsets = [0, 384], sizes = [2, 128], strides = [1, 1]} : vector<2x512xf32> to vector<2x128xf32>
    %240 = arith.negf %239 : vector<2x128xf32>
    %241 = math.exp %240 : vector<2x128xf32>
    %cst_42 = arith.constant 1.000000e+00 : f32
    %242 = vector.broadcast %cst_42 : f32 to vector<2x128xf32>
    %243 = arith.addf %242, %241 : vector<2x128xf32>
    %244 = arith.divf %242, %243 : vector<2x128xf32>
    %245 = arith.mulf %236, %217 : vector<2x128xf32>
    %246 = arith.mulf %230, %238 : vector<2x128xf32>
    %247 = arith.addf %245, %246 : vector<2x128xf32>
    %248 = math.tanh %247 : vector<2x128xf32>
    %249 = arith.mulf %244, %248 : vector<2x128xf32>
    %250 = vector.extract_strided_slice %249 {offsets = [0, 0], sizes = [2, 3], strides = [1, 1]} : vector<2x128xf32> to vector<2x3xf32>
    %251 = tpu.concatenate %40, %70, %100, %130, %160, %190, %220, %250 in 0 : vector<2x3xf32>, vector<2x3xf32>, vector<2x3xf32>, vector<2x3xf32>, vector<2x3xf32>, vector<2x3xf32>, vector<2x3xf32>, vector<2x3xf32> -> vector<16x3xf32>
    %c1 = arith.constant 1 : index
    %c0_43 = arith.constant 0 : index
    %c0_44 = arith.constant 0 : index
    %252 = vector.load %arg1[%c1, %c0_43, %c0_44] : memref<5x3x512xf32, #tpu.memory_space<vmem>>, vector<1x3x512xf32>
    %253 = vector.shape_cast %252 : vector<1x3x512xf32> to vector<3x512xf32>
    %c1_45 = arith.constant 1 : index
    %c0_46 = arith.constant 0 : index
    %c0_47 = arith.constant 0 : index
    %254 = vector.load %arg2[%c1_45, %c0_46, %c0_47] : memref<5x3x512xf32, #tpu.memory_space<vmem>>, vector<1x3x512xf32>
    %255 = vector.shape_cast %254 : vector<1x3x512xf32> to vector<3x512xf32>
    %c1_48 = arith.constant 1 : index
    %c0_49 = arith.constant 0 : index
    %c0_50 = arith.constant 0 : index
    %256 = vector.load %arg3[%c1_48, %c0_49, %c0_50] : memref<5x1x512xf32, #tpu.memory_space<vmem>>, vector<1x1x512xf32>
    %257 = vector.shape_cast %256 : vector<1x1x512xf32> to vector<1x512xf32>
    %cst_51 = arith.constant dense<0.000000e+00> : vector<16x512xf32>
    %258 = tpu.matmul %251, %253, %cst_51 {dimension_numbers = #tpu.dot_dimension_numbers<[1], [0], [0], [1], [0, 0, 1, 1], [], []>} : vector<16x3xf32>, vector<3x512xf32>, vector<16x512xf32> -> vector<16x512xf32>
    %259 = vector.broadcast %257 : vector<1x512xf32> to vector<16x512xf32>
    %260 = arith.addf %258, %259 : vector<16x512xf32>
    %261 = vector.shape_cast %260 : vector<16x512xf32> to vector<8x2x512xf32>
    %cst_52 = arith.constant 0.000000e+00 : f32
    %262 = vector.broadcast %cst_52 : f32 to vector<2x128xf32>
    %263 = vector.extract_strided_slice %261 {offsets = [0, 0, 0], sizes = [1, 2, 512], strides = [1, 1, 1]} : vector<8x2x512xf32> to vector<1x2x512xf32>
    %264 = vector.shape_cast %263 : vector<1x2x512xf32> to vector<2x512xf32>
    %265 = vector.extract_strided_slice %264 {offsets = [0, 0], sizes = [2, 128], strides = [1, 1]} : vector<2x512xf32> to vector<2x128xf32>
    %266 = arith.negf %265 : vector<2x128xf32>
    %267 = math.exp %266 : vector<2x128xf32>
    %cst_53 = arith.constant 1.000000e+00 : f32
    %268 = vector.broadcast %cst_53 : f32 to vector<2x128xf32>
    %269 = arith.addf %268, %267 : vector<2x128xf32>
    %270 = arith.divf %268, %269 : vector<2x128xf32>
    %271 = vector.extract_strided_slice %264 {offsets = [0, 128], sizes = [2, 128], strides = [1, 1]} : vector<2x512xf32> to vector<2x128xf32>
    %272 = arith.negf %271 : vector<2x128xf32>
    %273 = math.exp %272 : vector<2x128xf32>
    %cst_54 = arith.constant 1.000000e+00 : f32
    %274 = vector.broadcast %cst_54 : f32 to vector<2x128xf32>
    %275 = arith.addf %274, %273 : vector<2x128xf32>
    %276 = arith.divf %274, %275 : vector<2x128xf32>
    %277 = vector.extract_strided_slice %264 {offsets = [0, 256], sizes = [2, 128], strides = [1, 1]} : vector<2x512xf32> to vector<2x128xf32>
    %278 = math.tanh %277 : vector<2x128xf32>
    %279 = vector.extract_strided_slice %264 {offsets = [0, 384], sizes = [2, 128], strides = [1, 1]} : vector<2x512xf32> to vector<2x128xf32>
    %280 = arith.negf %279 : vector<2x128xf32>
    %281 = math.exp %280 : vector<2x128xf32>
    %cst_55 = arith.constant 1.000000e+00 : f32
    %282 = vector.broadcast %cst_55 : f32 to vector<2x128xf32>
    %283 = arith.addf %282, %281 : vector<2x128xf32>
    %284 = arith.divf %282, %283 : vector<2x128xf32>
    %285 = arith.mulf %276, %262 : vector<2x128xf32>
    %286 = arith.mulf %270, %278 : vector<2x128xf32>
    %287 = arith.addf %285, %286 : vector<2x128xf32>
    %288 = math.tanh %287 : vector<2x128xf32>
    %289 = arith.mulf %284, %288 : vector<2x128xf32>
    %290 = vector.extract_strided_slice %289 {offsets = [0, 0], sizes = [2, 3], strides = [1, 1]} : vector<2x128xf32> to vector<2x3xf32>
    %291 = vector.extract_strided_slice %261 {offsets = [1, 0, 0], sizes = [1, 2, 512], strides = [1, 1, 1]} : vector<8x2x512xf32> to vector<1x2x512xf32>
    %292 = vector.shape_cast %291 : vector<1x2x512xf32> to vector<2x512xf32>
    %cst_56 = arith.constant dense<0.000000e+00> : vector<2x512xf32>
    %293 = tpu.matmul %290, %255, %cst_56 {dimension_numbers = #tpu.dot_dimension_numbers<[1], [0], [0], [1], [0, 0, 1, 1], [], []>} : vector<2x3xf32>, vector<3x512xf32>, vector<2x512xf32> -> vector<2x512xf32>
    %294 = arith.addf %292, %293 : vector<2x512xf32>
    %295 = vector.extract_strided_slice %294 {offsets = [0, 0], sizes = [2, 128], strides = [1, 1]} : vector<2x512xf32> to vector<2x128xf32>
    %296 = arith.negf %295 : vector<2x128xf32>
    %297 = math.exp %296 : vector<2x128xf32>
    %cst_57 = arith.constant 1.000000e+00 : f32
    %298 = vector.broadcast %cst_57 : f32 to vector<2x128xf32>
    %299 = arith.addf %298, %297 : vector<2x128xf32>
    %300 = arith.divf %298, %299 : vector<2x128xf32>
    %301 = vector.extract_strided_slice %294 {offsets = [0, 128], sizes = [2, 128], strides = [1, 1]} : vector<2x512xf32> to vector<2x128xf32>
    %302 = arith.negf %301 : vector<2x128xf32>
    %303 = math.exp %302 : vector<2x128xf32>
    %cst_58 = arith.constant 1.000000e+00 : f32
    %304 = vector.broadcast %cst_58 : f32 to vector<2x128xf32>
    %305 = arith.addf %304, %303 : vector<2x128xf32>
    %306 = arith.divf %304, %305 : vector<2x128xf32>
    %307 = vector.extract_strided_slice %294 {offsets = [0, 256], sizes = [2, 128], strides = [1, 1]} : vector<2x512xf32> to vector<2x128xf32>
    %308 = math.tanh %307 : vector<2x128xf32>
    %309 = vector.extract_strided_slice %294 {offsets = [0, 384], sizes = [2, 128], strides = [1, 1]} : vector<2x512xf32> to vector<2x128xf32>
    %310 = arith.negf %309 : vector<2x128xf32>
    %311 = math.exp %310 : vector<2x128xf32>
    %cst_59 = arith.constant 1.000000e+00 : f32
    %312 = vector.broadcast %cst_59 : f32 to vector<2x128xf32>
    %313 = arith.addf %312, %311 : vector<2x128xf32>
    %314 = arith.divf %312, %313 : vector<2x128xf32>
    %315 = arith.mulf %306, %287 : vector<2x128xf32>
    %316 = arith.mulf %300, %308 : vector<2x128xf32>
    %317 = arith.addf %315, %316 : vector<2x128xf32>
    %318 = math.tanh %317 : vector<2x128xf32>
    %319 = arith.mulf %314, %318 : vector<2x128xf32>
    %320 = vector.extract_strided_slice %319 {offsets = [0, 0], sizes = [2, 3], strides = [1, 1]} : vector<2x128xf32> to vector<2x3xf32>
    %321 = vector.extract_strided_slice %261 {offsets = [2, 0, 0], sizes = [1, 2, 512], strides = [1, 1, 1]} : vector<8x2x512xf32> to vector<1x2x512xf32>
    %322 = vector.shape_cast %321 : vector<1x2x512xf32> to vector<2x512xf32>
    %cst_60 = arith.constant dense<0.000000e+00> : vector<2x512xf32>
    %323 = tpu.matmul %320, %255, %cst_60 {dimension_numbers = #tpu.dot_dimension_numbers<[1], [0], [0], [1], [0, 0, 1, 1], [], []>} : vector<2x3xf32>, vector<3x512xf32>, vector<2x512xf32> -> vector<2x512xf32>
    %324 = arith.addf %322, %323 : vector<2x512xf32>
    %325 = vector.extract_strided_slice %324 {offsets = [0, 0], sizes = [2, 128], strides = [1, 1]} : vector<2x512xf32> to vector<2x128xf32>
    %326 = arith.negf %325 : vector<2x128xf32>
    %327 = math.exp %326 : vector<2x128xf32>
    %cst_61 = arith.constant 1.000000e+00 : f32
    %328 = vector.broadcast %cst_61 : f32 to vector<2x128xf32>
    %329 = arith.addf %328, %327 : vector<2x128xf32>
    %330 = arith.divf %328, %329 : vector<2x128xf32>
    %331 = vector.extract_strided_slice %324 {offsets = [0, 128], sizes = [2, 128], strides = [1, 1]} : vector<2x512xf32> to vector<2x128xf32>
    %332 = arith.negf %331 : vector<2x128xf32>
    %333 = math.exp %332 : vector<2x128xf32>
    %cst_62 = arith.constant 1.000000e+00 : f32
    %334 = vector.broadcast %cst_62 : f32 to vector<2x128xf32>
    %335 = arith.addf %334, %333 : vector<2x128xf32>
    %336 = arith.divf %334, %335 : vector<2x128xf32>
    %337 = vector.extract_strided_slice %324 {offsets = [0, 256], sizes = [2, 128], strides = [1, 1]} : vector<2x512xf32> to vector<2x128xf32>
    %338 = math.tanh %337 : vector<2x128xf32>
    %339 = vector.extract_strided_slice %324 {offsets = [0, 384], sizes = [2, 128], strides = [1, 1]} : vector<2x512xf32> to vector<2x128xf32>
    %340 = arith.negf %339 : vector<2x128xf32>
    %341 = math.exp %340 : vector<2x128xf32>
    %cst_63 = arith.constant 1.000000e+00 : f32
    %342 = vector.broadcast %cst_63 : f32 to vector<2x128xf32>
    %343 = arith.addf %342, %341 : vector<2x128xf32>
    %344 = arith.divf %342, %343 : vector<2x128xf32>
    %345 = arith.mulf %336, %317 : vector<2x128xf32>
    %346 = arith.mulf %330, %338 : vector<2x128xf32>
    %347 = arith.addf %345, %346 : vector<2x128xf32>
    %348 = math.tanh %347 : vector<2x128xf32>
    %349 = arith.mulf %344, %348 : vector<2x128xf32>
    %350 = vector.extract_strided_slice %349 {offsets = [0, 0], sizes = [2, 3], strides = [1, 1]} : vector<2x128xf32> to vector<2x3xf32>
    %351 = vector.extract_strided_slice %261 {offsets = [3, 0, 0], sizes = [1, 2, 512], strides = [1, 1, 1]} : vector<8x2x512xf32> to vector<1x2x512xf32>
    %352 = vector.shape_cast %351 : vector<1x2x512xf32> to vector<2x512xf32>
    %cst_64 = arith.constant dense<0.000000e+00> : vector<2x512xf32>
    %353 = tpu.matmul %350, %255, %cst_64 {dimension_numbers = #tpu.dot_dimension_numbers<[1], [0], [0], [1], [0, 0, 1, 1], [], []>} : vector<2x3xf32>, vector<3x512xf32>, vector<2x512xf32> -> vector<2x512xf32>
    %354 = arith.addf %352, %353 : vector<2x512xf32>
    %355 = vector.extract_strided_slice %354 {offsets = [0, 0], sizes = [2, 128], strides = [1, 1]} : vector<2x512xf32> to vector<2x128xf32>
    %356 = arith.negf %355 : vector<2x128xf32>
    %357 = math.exp %356 : vector<2x128xf32>
    %cst_65 = arith.constant 1.000000e+00 : f32
    %358 = vector.broadcast %cst_65 : f32 to vector<2x128xf32>
    %359 = arith.addf %358, %357 : vector<2x128xf32>
    %360 = arith.divf %358, %359 : vector<2x128xf32>
    %361 = vector.extract_strided_slice %354 {offsets = [0, 128], sizes = [2, 128], strides = [1, 1]} : vector<2x512xf32> to vector<2x128xf32>
    %362 = arith.negf %361 : vector<2x128xf32>
    %363 = math.exp %362 : vector<2x128xf32>
    %cst_66 = arith.constant 1.000000e+00 : f32
    %364 = vector.broadcast %cst_66 : f32 to vector<2x128xf32>
    %365 = arith.addf %364, %363 : vector<2x128xf32>
    %366 = arith.divf %364, %365 : vector<2x128xf32>
    %367 = vector.extract_strided_slice %354 {offsets = [0, 256], sizes = [2, 128], strides = [1, 1]} : vector<2x512xf32> to vector<2x128xf32>
    %368 = math.tanh %367 : vector<2x128xf32>
    %369 = vector.extract_strided_slice %354 {offsets = [0, 384], sizes = [2, 128], strides = [1, 1]} : vector<2x512xf32> to vector<2x128xf32>
    %370 = arith.negf %369 : vector<2x128xf32>
    %371 = math.exp %370 : vector<2x128xf32>
    %cst_67 = arith.constant 1.000000e+00 : f32
    %372 = vector.broadcast %cst_67 : f32 to vector<2x128xf32>
    %373 = arith.addf %372, %371 : vector<2x128xf32>
    %374 = arith.divf %372, %373 : vector<2x128xf32>
    %375 = arith.mulf %366, %347 : vector<2x128xf32>
    %376 = arith.mulf %360, %368 : vector<2x128xf32>
    %377 = arith.addf %375, %376 : vector<2x128xf32>
    %378 = math.tanh %377 : vector<2x128xf32>
    %379 = arith.mulf %374, %378 : vector<2x128xf32>
    %380 = vector.extract_strided_slice %379 {offsets = [0, 0], sizes = [2, 3], strides = [1, 1]} : vector<2x128xf32> to vector<2x3xf32>
    %381 = vector.extract_strided_slice %261 {offsets = [4, 0, 0], sizes = [1, 2, 512], strides = [1, 1, 1]} : vector<8x2x512xf32> to vector<1x2x512xf32>
    %382 = vector.shape_cast %381 : vector<1x2x512xf32> to vector<2x512xf32>
    %cst_68 = arith.constant dense<0.000000e+00> : vector<2x512xf32>
    %383 = tpu.matmul %380, %255, %cst_68 {dimension_numbers = #tpu.dot_dimension_numbers<[1], [0], [0], [1], [0, 0, 1, 1], [], []>} : vector<2x3xf32>, vector<3x512xf32>, vector<2x512xf32> -> vector<2x512xf32>
    %384 = arith.addf %382, %383 : vector<2x512xf32>
    %385 = vector.extract_strided_slice %384 {offsets = [0, 0], sizes = [2, 128], strides = [1, 1]} : vector<2x512xf32> to vector<2x128xf32>
    %386 = arith.negf %385 : vector<2x128xf32>
    %387 = math.exp %386 : vector<2x128xf32>
    %cst_69 = arith.constant 1.000000e+00 : f32
    %388 = vector.broadcast %cst_69 : f32 to vector<2x128xf32>
    %389 = arith.addf %388, %387 : vector<2x128xf32>
    %390 = arith.divf %388, %389 : vector<2x128xf32>
    %391 = vector.extract_strided_slice %384 {offsets = [0, 128], sizes = [2, 128], strides = [1, 1]} : vector<2x512xf32> to vector<2x128xf32>
    %392 = arith.negf %391 : vector<2x128xf32>
    %393 = math.exp %392 : vector<2x128xf32>
    %cst_70 = arith.constant 1.000000e+00 : f32
    %394 = vector.broadcast %cst_70 : f32 to vector<2x128xf32>
    %395 = arith.addf %394, %393 : vector<2x128xf32>
    %396 = arith.divf %394, %395 : vector<2x128xf32>
    %397 = vector.extract_strided_slice %384 {offsets = [0, 256], sizes = [2, 128], strides = [1, 1]} : vector<2x512xf32> to vector<2x128xf32>
    %398 = math.tanh %397 : vector<2x128xf32>
    %399 = vector.extract_strided_slice %384 {offsets = [0, 384], sizes = [2, 128], strides = [1, 1]} : vector<2x512xf32> to vector<2x128xf32>
    %400 = arith.negf %399 : vector<2x128xf32>
    %401 = math.exp %400 : vector<2x128xf32>
    %cst_71 = arith.constant 1.000000e+00 : f32
    %402 = vector.broadcast %cst_71 : f32 to vector<2x128xf32>
    %403 = arith.addf %402, %401 : vector<2x128xf32>
    %404 = arith.divf %402, %403 : vector<2x128xf32>
    %405 = arith.mulf %396, %377 : vector<2x128xf32>
    %406 = arith.mulf %390, %398 : vector<2x128xf32>
    %407 = arith.addf %405, %406 : vector<2x128xf32>
    %408 = math.tanh %407 : vector<2x128xf32>
    %409 = arith.mulf %404, %408 : vector<2x128xf32>
    %410 = vector.extract_strided_slice %409 {offsets = [0, 0], sizes = [2, 3], strides = [1, 1]} : vector<2x128xf32> to vector<2x3xf32>
    %411 = vector.extract_strided_slice %261 {offsets = [5, 0, 0], sizes = [1, 2, 512], strides = [1, 1, 1]} : vector<8x2x512xf32> to vector<1x2x512xf32>
    %412 = vector.shape_cast %411 : vector<1x2x512xf32> to vector<2x512xf32>
    %cst_72 = arith.constant dense<0.000000e+00> : vector<2x512xf32>
    %413 = tpu.matmul %410, %255, %cst_72 {dimension_numbers = #tpu.dot_dimension_numbers<[1], [0], [0], [1], [0, 0, 1, 1], [], []>} : vector<2x3xf32>, vector<3x512xf32>, vector<2x512xf32> -> vector<2x512xf32>
    %414 = arith.addf %412, %413 : vector<2x512xf32>
    %415 = vector.extract_strided_slice %414 {offsets = [0, 0], sizes = [2, 128], strides = [1, 1]} : vector<2x512xf32> to vector<2x128xf32>
    %416 = arith.negf %415 : vector<2x128xf32>
    %417 = math.exp %416 : vector<2x128xf32>
    %cst_73 = arith.constant 1.000000e+00 : f32
    %418 = vector.broadcast %cst_73 : f32 to vector<2x128xf32>
    %419 = arith.addf %418, %417 : vector<2x128xf32>
    %420 = arith.divf %418, %419 : vector<2x128xf32>
    %421 = vector.extract_strided_slice %414 {offsets = [0, 128], sizes = [2, 128], strides = [1, 1]} : vector<2x512xf32> to vector<2x128xf32>
    %422 = arith.negf %421 : vector<2x128xf32>
    %423 = math.exp %422 : vector<2x128xf32>
    %cst_74 = arith.constant 1.000000e+00 : f32
    %424 = vector.broadcast %cst_74 : f32 to vector<2x128xf32>
    %425 = arith.addf %424, %423 : vector<2x128xf32>
    %426 = arith.divf %424, %425 : vector<2x128xf32>
    %427 = vector.extract_strided_slice %414 {offsets = [0, 256], sizes = [2, 128], strides = [1, 1]} : vector<2x512xf32> to vector<2x128xf32>
    %428 = math.tanh %427 : vector<2x128xf32>
    %429 = vector.extract_strided_slice %414 {offsets = [0, 384], sizes = [2, 128], strides = [1, 1]} : vector<2x512xf32> to vector<2x128xf32>
    %430 = arith.negf %429 : vector<2x128xf32>
    %431 = math.exp %430 : vector<2x128xf32>
    %cst_75 = arith.constant 1.000000e+00 : f32
    %432 = vector.broadcast %cst_75 : f32 to vector<2x128xf32>
    %433 = arith.addf %432, %431 : vector<2x128xf32>
    %434 = arith.divf %432, %433 : vector<2x128xf32>
    %435 = arith.mulf %426, %407 : vector<2x128xf32>
    %436 = arith.mulf %420, %428 : vector<2x128xf32>
    %437 = arith.addf %435, %436 : vector<2x128xf32>
    %438 = math.tanh %437 : vector<2x128xf32>
    %439 = arith.mulf %434, %438 : vector<2x128xf32>
    %440 = vector.extract_strided_slice %439 {offsets = [0, 0], sizes = [2, 3], strides = [1, 1]} : vector<2x128xf32> to vector<2x3xf32>
    %441 = vector.extract_strided_slice %261 {offsets = [6, 0, 0], sizes = [1, 2, 512], strides = [1, 1, 1]} : vector<8x2x512xf32> to vector<1x2x512xf32>
    %442 = vector.shape_cast %441 : vector<1x2x512xf32> to vector<2x512xf32>
    %cst_76 = arith.constant dense<0.000000e+00> : vector<2x512xf32>
    %443 = tpu.matmul %440, %255, %cst_76 {dimension_numbers = #tpu.dot_dimension_numbers<[1], [0], [0], [1], [0, 0, 1, 1], [], []>} : vector<2x3xf32>, vector<3x512xf32>, vector<2x512xf32> -> vector<2x512xf32>
    %444 = arith.addf %442, %443 : vector<2x512xf32>
    %445 = vector.extract_strided_slice %444 {offsets = [0, 0], sizes = [2, 128], strides = [1, 1]} : vector<2x512xf32> to vector<2x128xf32>
    %446 = arith.negf %445 : vector<2x128xf32>
    %447 = math.exp %446 : vector<2x128xf32>
    %cst_77 = arith.constant 1.000000e+00 : f32
    %448 = vector.broadcast %cst_77 : f32 to vector<2x128xf32>
    %449 = arith.addf %448, %447 : vector<2x128xf32>
    %450 = arith.divf %448, %449 : vector<2x128xf32>
    %451 = vector.extract_strided_slice %444 {offsets = [0, 128], sizes = [2, 128], strides = [1, 1]} : vector<2x512xf32> to vector<2x128xf32>
    %452 = arith.negf %451 : vector<2x128xf32>
    %453 = math.exp %452 : vector<2x128xf32>
    %cst_78 = arith.constant 1.000000e+00 : f32
    %454 = vector.broadcast %cst_78 : f32 to vector<2x128xf32>
    %455 = arith.addf %454, %453 : vector<2x128xf32>
    %456 = arith.divf %454, %455 : vector<2x128xf32>
    %457 = vector.extract_strided_slice %444 {offsets = [0, 256], sizes = [2, 128], strides = [1, 1]} : vector<2x512xf32> to vector<2x128xf32>
    %458 = math.tanh %457 : vector<2x128xf32>
    %459 = vector.extract_strided_slice %444 {offsets = [0, 384], sizes = [2, 128], strides = [1, 1]} : vector<2x512xf32> to vector<2x128xf32>
    %460 = arith.negf %459 : vector<2x128xf32>
    %461 = math.exp %460 : vector<2x128xf32>
    %cst_79 = arith.constant 1.000000e+00 : f32
    %462 = vector.broadcast %cst_79 : f32 to vector<2x128xf32>
    %463 = arith.addf %462, %461 : vector<2x128xf32>
    %464 = arith.divf %462, %463 : vector<2x128xf32>
    %465 = arith.mulf %456, %437 : vector<2x128xf32>
    %466 = arith.mulf %450, %458 : vector<2x128xf32>
    %467 = arith.addf %465, %466 : vector<2x128xf32>
    %468 = math.tanh %467 : vector<2x128xf32>
    %469 = arith.mulf %464, %468 : vector<2x128xf32>
    %470 = vector.extract_strided_slice %469 {offsets = [0, 0], sizes = [2, 3], strides = [1, 1]} : vector<2x128xf32> to vector<2x3xf32>
    %471 = vector.extract_strided_slice %261 {offsets = [7, 0, 0], sizes = [1, 2, 512], strides = [1, 1, 1]} : vector<8x2x512xf32> to vector<1x2x512xf32>
    %472 = vector.shape_cast %471 : vector<1x2x512xf32> to vector<2x512xf32>
    %cst_80 = arith.constant dense<0.000000e+00> : vector<2x512xf32>
    %473 = tpu.matmul %470, %255, %cst_80 {dimension_numbers = #tpu.dot_dimension_numbers<[1], [0], [0], [1], [0, 0, 1, 1], [], []>} : vector<2x3xf32>, vector<3x512xf32>, vector<2x512xf32> -> vector<2x512xf32>
    %474 = arith.addf %472, %473 : vector<2x512xf32>
    %475 = vector.extract_strided_slice %474 {offsets = [0, 0], sizes = [2, 128], strides = [1, 1]} : vector<2x512xf32> to vector<2x128xf32>
    %476 = arith.negf %475 : vector<2x128xf32>
    %477 = math.exp %476 : vector<2x128xf32>
    %cst_81 = arith.constant 1.000000e+00 : f32
    %478 = vector.broadcast %cst_81 : f32 to vector<2x128xf32>
    %479 = arith.addf %478, %477 : vector<2x128xf32>
    %480 = arith.divf %478, %479 : vector<2x128xf32>
    %481 = vector.extract_strided_slice %474 {offsets = [0, 128], sizes = [2, 128], strides = [1, 1]} : vector<2x512xf32> to vector<2x128xf32>
    %482 = arith.negf %481 : vector<2x128xf32>
    %483 = math.exp %482 : vector<2x128xf32>
    %cst_82 = arith.constant 1.000000e+00 : f32
    %484 = vector.broadcast %cst_82 : f32 to vector<2x128xf32>
    %485 = arith.addf %484, %483 : vector<2x128xf32>
    %486 = arith.divf %484, %485 : vector<2x128xf32>
    %487 = vector.extract_strided_slice %474 {offsets = [0, 256], sizes = [2, 128], strides = [1, 1]} : vector<2x512xf32> to vector<2x128xf32>
    %488 = math.tanh %487 : vector<2x128xf32>
    %489 = vector.extract_strided_slice %474 {offsets = [0, 384], sizes = [2, 128], strides = [1, 1]} : vector<2x512xf32> to vector<2x128xf32>
    %490 = arith.negf %489 : vector<2x128xf32>
    %491 = math.exp %490 : vector<2x128xf32>
    %cst_83 = arith.constant 1.000000e+00 : f32
    %492 = vector.broadcast %cst_83 : f32 to vector<2x128xf32>
    %493 = arith.addf %492, %491 : vector<2x128xf32>
    %494 = arith.divf %492, %493 : vector<2x128xf32>
    %495 = arith.mulf %486, %467 : vector<2x128xf32>
    %496 = arith.mulf %480, %488 : vector<2x128xf32>
    %497 = arith.addf %495, %496 : vector<2x128xf32>
    %498 = math.tanh %497 : vector<2x128xf32>
    %499 = arith.mulf %494, %498 : vector<2x128xf32>
    %500 = vector.extract_strided_slice %499 {offsets = [0, 0], sizes = [2, 3], strides = [1, 1]} : vector<2x128xf32> to vector<2x3xf32>
    %501 = tpu.concatenate %290, %320, %350, %380, %410, %440, %470, %500 in 0 : vector<2x3xf32>, vector<2x3xf32>, vector<2x3xf32>, vector<2x3xf32>, vector<2x3xf32>, vector<2x3xf32>, vector<2x3xf32>, vector<2x3xf32> -> vector<16x3xf32>
    %c2 = arith.constant 2 : index
    %c0_84 = arith.constant 0 : index
    %c0_85 = arith.constant 0 : index
    %502 = vector.load %arg1[%c2, %c0_84, %c0_85] : memref<5x3x512xf32, #tpu.memory_space<vmem>>, vector<1x3x512xf32>
    %503 = vector.shape_cast %502 : vector<1x3x512xf32> to vector<3x512xf32>
    %c2_86 = arith.constant 2 : index
    %c0_87 = arith.constant 0 : index
    %c0_88 = arith.constant 0 : index
    %504 = vector.load %arg2[%c2_86, %c0_87, %c0_88] : memref<5x3x512xf32, #tpu.memory_space<vmem>>, vector<1x3x512xf32>
    %505 = vector.shape_cast %504 : vector<1x3x512xf32> to vector<3x512xf32>
    %c2_89 = arith.constant 2 : index
    %c0_90 = arith.constant 0 : index
    %c0_91 = arith.constant 0 : index
    %506 = vector.load %arg3[%c2_89, %c0_90, %c0_91] : memref<5x1x512xf32, #tpu.memory_space<vmem>>, vector<1x1x512xf32>
    %507 = vector.shape_cast %506 : vector<1x1x512xf32> to vector<1x512xf32>
    %cst_92 = arith.constant dense<0.000000e+00> : vector<16x512xf32>
    %508 = tpu.matmul %501, %503, %cst_92 {dimension_numbers = #tpu.dot_dimension_numbers<[1], [0], [0], [1], [0, 0, 1, 1], [], []>} : vector<16x3xf32>, vector<3x512xf32>, vector<16x512xf32> -> vector<16x512xf32>
    %509 = vector.broadcast %507 : vector<1x512xf32> to vector<16x512xf32>
    %510 = arith.addf %508, %509 : vector<16x512xf32>
    %511 = vector.shape_cast %510 : vector<16x512xf32> to vector<8x2x512xf32>
    %cst_93 = arith.constant 0.000000e+00 : f32
    %512 = vector.broadcast %cst_93 : f32 to vector<2x128xf32>
    %513 = vector.extract_strided_slice %511 {offsets = [0, 0, 0], sizes = [1, 2, 512], strides = [1, 1, 1]} : vector<8x2x512xf32> to vector<1x2x512xf32>
    %514 = vector.shape_cast %513 : vector<1x2x512xf32> to vector<2x512xf32>
    %515 = vector.extract_strided_slice %514 {offsets = [0, 0], sizes = [2, 128], strides = [1, 1]} : vector<2x512xf32> to vector<2x128xf32>
    %516 = arith.negf %515 : vector<2x128xf32>
    %517 = math.exp %516 : vector<2x128xf32>
    %cst_94 = arith.constant 1.000000e+00 : f32
    %518 = vector.broadcast %cst_94 : f32 to vector<2x128xf32>
    %519 = arith.addf %518, %517 : vector<2x128xf32>
    %520 = arith.divf %518, %519 : vector<2x128xf32>
    %521 = vector.extract_strided_slice %514 {offsets = [0, 128], sizes = [2, 128], strides = [1, 1]} : vector<2x512xf32> to vector<2x128xf32>
    %522 = arith.negf %521 : vector<2x128xf32>
    %523 = math.exp %522 : vector<2x128xf32>
    %cst_95 = arith.constant 1.000000e+00 : f32
    %524 = vector.broadcast %cst_95 : f32 to vector<2x128xf32>
    %525 = arith.addf %524, %523 : vector<2x128xf32>
    %526 = arith.divf %524, %525 : vector<2x128xf32>
    %527 = vector.extract_strided_slice %514 {offsets = [0, 256], sizes = [2, 128], strides = [1, 1]} : vector<2x512xf32> to vector<2x128xf32>
    %528 = math.tanh %527 : vector<2x128xf32>
    %529 = vector.extract_strided_slice %514 {offsets = [0, 384], sizes = [2, 128], strides = [1, 1]} : vector<2x512xf32> to vector<2x128xf32>
    %530 = arith.negf %529 : vector<2x128xf32>
    %531 = math.exp %530 : vector<2x128xf32>
    %cst_96 = arith.constant 1.000000e+00 : f32
    %532 = vector.broadcast %cst_96 : f32 to vector<2x128xf32>
    %533 = arith.addf %532, %531 : vector<2x128xf32>
    %534 = arith.divf %532, %533 : vector<2x128xf32>
    %535 = arith.mulf %526, %512 : vector<2x128xf32>
    %536 = arith.mulf %520, %528 : vector<2x128xf32>
    %537 = arith.addf %535, %536 : vector<2x128xf32>
    %538 = math.tanh %537 : vector<2x128xf32>
    %539 = arith.mulf %534, %538 : vector<2x128xf32>
    %540 = vector.extract_strided_slice %539 {offsets = [0, 0], sizes = [2, 3], strides = [1, 1]} : vector<2x128xf32> to vector<2x3xf32>
    %541 = vector.extract_strided_slice %511 {offsets = [1, 0, 0], sizes = [1, 2, 512], strides = [1, 1, 1]} : vector<8x2x512xf32> to vector<1x2x512xf32>
    %542 = vector.shape_cast %541 : vector<1x2x512xf32> to vector<2x512xf32>
    %cst_97 = arith.constant dense<0.000000e+00> : vector<2x512xf32>
    %543 = tpu.matmul %540, %505, %cst_97 {dimension_numbers = #tpu.dot_dimension_numbers<[1], [0], [0], [1], [0, 0, 1, 1], [], []>} : vector<2x3xf32>, vector<3x512xf32>, vector<2x512xf32> -> vector<2x512xf32>
    %544 = arith.addf %542, %543 : vector<2x512xf32>
    %545 = vector.extract_strided_slice %544 {offsets = [0, 0], sizes = [2, 128], strides = [1, 1]} : vector<2x512xf32> to vector<2x128xf32>
    %546 = arith.negf %545 : vector<2x128xf32>
    %547 = math.exp %546 : vector<2x128xf32>
    %cst_98 = arith.constant 1.000000e+00 : f32
    %548 = vector.broadcast %cst_98 : f32 to vector<2x128xf32>
    %549 = arith.addf %548, %547 : vector<2x128xf32>
    %550 = arith.divf %548, %549 : vector<2x128xf32>
    %551 = vector.extract_strided_slice %544 {offsets = [0, 128], sizes = [2, 128], strides = [1, 1]} : vector<2x512xf32> to vector<2x128xf32>
    %552 = arith.negf %551 : vector<2x128xf32>
    %553 = math.exp %552 : vector<2x128xf32>
    %cst_99 = arith.constant 1.000000e+00 : f32
    %554 = vector.broadcast %cst_99 : f32 to vector<2x128xf32>
    %555 = arith.addf %554, %553 : vector<2x128xf32>
    %556 = arith.divf %554, %555 : vector<2x128xf32>
    %557 = vector.extract_strided_slice %544 {offsets = [0, 256], sizes = [2, 128], strides = [1, 1]} : vector<2x512xf32> to vector<2x128xf32>
    %558 = math.tanh %557 : vector<2x128xf32>
    %559 = vector.extract_strided_slice %544 {offsets = [0, 384], sizes = [2, 128], strides = [1, 1]} : vector<2x512xf32> to vector<2x128xf32>
    %560 = arith.negf %559 : vector<2x128xf32>
    %561 = math.exp %560 : vector<2x128xf32>
    %cst_100 = arith.constant 1.000000e+00 : f32
    %562 = vector.broadcast %cst_100 : f32 to vector<2x128xf32>
    %563 = arith.addf %562, %561 : vector<2x128xf32>
    %564 = arith.divf %562, %563 : vector<2x128xf32>
    %565 = arith.mulf %556, %537 : vector<2x128xf32>
    %566 = arith.mulf %550, %558 : vector<2x128xf32>
    %567 = arith.addf %565, %566 : vector<2x128xf32>
    %568 = math.tanh %567 : vector<2x128xf32>
    %569 = arith.mulf %564, %568 : vector<2x128xf32>
    %570 = vector.extract_strided_slice %569 {offsets = [0, 0], sizes = [2, 3], strides = [1, 1]} : vector<2x128xf32> to vector<2x3xf32>
    %571 = vector.extract_strided_slice %511 {offsets = [2, 0, 0], sizes = [1, 2, 512], strides = [1, 1, 1]} : vector<8x2x512xf32> to vector<1x2x512xf32>
    %572 = vector.shape_cast %571 : vector<1x2x512xf32> to vector<2x512xf32>
    %cst_101 = arith.constant dense<0.000000e+00> : vector<2x512xf32>
    %573 = tpu.matmul %570, %505, %cst_101 {dimension_numbers = #tpu.dot_dimension_numbers<[1], [0], [0], [1], [0, 0, 1, 1], [], []>} : vector<2x3xf32>, vector<3x512xf32>, vector<2x512xf32> -> vector<2x512xf32>
    %574 = arith.addf %572, %573 : vector<2x512xf32>
    %575 = vector.extract_strided_slice %574 {offsets = [0, 0], sizes = [2, 128], strides = [1, 1]} : vector<2x512xf32> to vector<2x128xf32>
    %576 = arith.negf %575 : vector<2x128xf32>
    %577 = math.exp %576 : vector<2x128xf32>
    %cst_102 = arith.constant 1.000000e+00 : f32
    %578 = vector.broadcast %cst_102 : f32 to vector<2x128xf32>
    %579 = arith.addf %578, %577 : vector<2x128xf32>
    %580 = arith.divf %578, %579 : vector<2x128xf32>
    %581 = vector.extract_strided_slice %574 {offsets = [0, 128], sizes = [2, 128], strides = [1, 1]} : vector<2x512xf32> to vector<2x128xf32>
    %582 = arith.negf %581 : vector<2x128xf32>
    %583 = math.exp %582 : vector<2x128xf32>
    %cst_103 = arith.constant 1.000000e+00 : f32
    %584 = vector.broadcast %cst_103 : f32 to vector<2x128xf32>
    %585 = arith.addf %584, %583 : vector<2x128xf32>
    %586 = arith.divf %584, %585 : vector<2x128xf32>
    %587 = vector.extract_strided_slice %574 {offsets = [0, 256], sizes = [2, 128], strides = [1, 1]} : vector<2x512xf32> to vector<2x128xf32>
    %588 = math.tanh %587 : vector<2x128xf32>
    %589 = vector.extract_strided_slice %574 {offsets = [0, 384], sizes = [2, 128], strides = [1, 1]} : vector<2x512xf32> to vector<2x128xf32>
    %590 = arith.negf %589 : vector<2x128xf32>
    %591 = math.exp %590 : vector<2x128xf32>
    %cst_104 = arith.constant 1.000000e+00 : f32
    %592 = vector.broadcast %cst_104 : f32 to vector<2x128xf32>
    %593 = arith.addf %592, %591 : vector<2x128xf32>
    %594 = arith.divf %592, %593 : vector<2x128xf32>
    %595 = arith.mulf %586, %567 : vector<2x128xf32>
    %596 = arith.mulf %580, %588 : vector<2x128xf32>
    %597 = arith.addf %595, %596 : vector<2x128xf32>
    %598 = math.tanh %597 : vector<2x128xf32>
    %599 = arith.mulf %594, %598 : vector<2x128xf32>
    %600 = vector.extract_strided_slice %599 {offsets = [0, 0], sizes = [2, 3], strides = [1, 1]} : vector<2x128xf32> to vector<2x3xf32>
    %601 = vector.extract_strided_slice %511 {offsets = [3, 0, 0], sizes = [1, 2, 512], strides = [1, 1, 1]} : vector<8x2x512xf32> to vector<1x2x512xf32>
    %602 = vector.shape_cast %601 : vector<1x2x512xf32> to vector<2x512xf32>
    %cst_105 = arith.constant dense<0.000000e+00> : vector<2x512xf32>
    %603 = tpu.matmul %600, %505, %cst_105 {dimension_numbers = #tpu.dot_dimension_numbers<[1], [0], [0], [1], [0, 0, 1, 1], [], []>} : vector<2x3xf32>, vector<3x512xf32>, vector<2x512xf32> -> vector<2x512xf32>
    %604 = arith.addf %602, %603 : vector<2x512xf32>
    %605 = vector.extract_strided_slice %604 {offsets = [0, 0], sizes = [2, 128], strides = [1, 1]} : vector<2x512xf32> to vector<2x128xf32>
    %606 = arith.negf %605 : vector<2x128xf32>
    %607 = math.exp %606 : vector<2x128xf32>
    %cst_106 = arith.constant 1.000000e+00 : f32
    %608 = vector.broadcast %cst_106 : f32 to vector<2x128xf32>
    %609 = arith.addf %608, %607 : vector<2x128xf32>
    %610 = arith.divf %608, %609 : vector<2x128xf32>
    %611 = vector.extract_strided_slice %604 {offsets = [0, 128], sizes = [2, 128], strides = [1, 1]} : vector<2x512xf32> to vector<2x128xf32>
    %612 = arith.negf %611 : vector<2x128xf32>
    %613 = math.exp %612 : vector<2x128xf32>
    %cst_107 = arith.constant 1.000000e+00 : f32
    %614 = vector.broadcast %cst_107 : f32 to vector<2x128xf32>
    %615 = arith.addf %614, %613 : vector<2x128xf32>
    %616 = arith.divf %614, %615 : vector<2x128xf32>
    %617 = vector.extract_strided_slice %604 {offsets = [0, 256], sizes = [2, 128], strides = [1, 1]} : vector<2x512xf32> to vector<2x128xf32>
    %618 = math.tanh %617 : vector<2x128xf32>
    %619 = vector.extract_strided_slice %604 {offsets = [0, 384], sizes = [2, 128], strides = [1, 1]} : vector<2x512xf32> to vector<2x128xf32>
    %620 = arith.negf %619 : vector<2x128xf32>
    %621 = math.exp %620 : vector<2x128xf32>
    %cst_108 = arith.constant 1.000000e+00 : f32
    %622 = vector.broadcast %cst_108 : f32 to vector<2x128xf32>
    %623 = arith.addf %622, %621 : vector<2x128xf32>
    %624 = arith.divf %622, %623 : vector<2x128xf32>
    %625 = arith.mulf %616, %597 : vector<2x128xf32>
    %626 = arith.mulf %610, %618 : vector<2x128xf32>
    %627 = arith.addf %625, %626 : vector<2x128xf32>
    %628 = math.tanh %627 : vector<2x128xf32>
    %629 = arith.mulf %624, %628 : vector<2x128xf32>
    %630 = vector.extract_strided_slice %629 {offsets = [0, 0], sizes = [2, 3], strides = [1, 1]} : vector<2x128xf32> to vector<2x3xf32>
    %631 = vector.extract_strided_slice %511 {offsets = [4, 0, 0], sizes = [1, 2, 512], strides = [1, 1, 1]} : vector<8x2x512xf32> to vector<1x2x512xf32>
    %632 = vector.shape_cast %631 : vector<1x2x512xf32> to vector<2x512xf32>
    %cst_109 = arith.constant dense<0.000000e+00> : vector<2x512xf32>
    %633 = tpu.matmul %630, %505, %cst_109 {dimension_numbers = #tpu.dot_dimension_numbers<[1], [0], [0], [1], [0, 0, 1, 1], [], []>} : vector<2x3xf32>, vector<3x512xf32>, vector<2x512xf32> -> vector<2x512xf32>
    %634 = arith.addf %632, %633 : vector<2x512xf32>
    %635 = vector.extract_strided_slice %634 {offsets = [0, 0], sizes = [2, 128], strides = [1, 1]} : vector<2x512xf32> to vector<2x128xf32>
    %636 = arith.negf %635 : vector<2x128xf32>
    %637 = math.exp %636 : vector<2x128xf32>
    %cst_110 = arith.constant 1.000000e+00 : f32
    %638 = vector.broadcast %cst_110 : f32 to vector<2x128xf32>
    %639 = arith.addf %638, %637 : vector<2x128xf32>
    %640 = arith.divf %638, %639 : vector<2x128xf32>
    %641 = vector.extract_strided_slice %634 {offsets = [0, 128], sizes = [2, 128], strides = [1, 1]} : vector<2x512xf32> to vector<2x128xf32>
    %642 = arith.negf %641 : vector<2x128xf32>
    %643 = math.exp %642 : vector<2x128xf32>
    %cst_111 = arith.constant 1.000000e+00 : f32
    %644 = vector.broadcast %cst_111 : f32 to vector<2x128xf32>
    %645 = arith.addf %644, %643 : vector<2x128xf32>
    %646 = arith.divf %644, %645 : vector<2x128xf32>
    %647 = vector.extract_strided_slice %634 {offsets = [0, 256], sizes = [2, 128], strides = [1, 1]} : vector<2x512xf32> to vector<2x128xf32>
    %648 = math.tanh %647 : vector<2x128xf32>
    %649 = vector.extract_strided_slice %634 {offsets = [0, 384], sizes = [2, 128], strides = [1, 1]} : vector<2x512xf32> to vector<2x128xf32>
    %650 = arith.negf %649 : vector<2x128xf32>
    %651 = math.exp %650 : vector<2x128xf32>
    %cst_112 = arith.constant 1.000000e+00 : f32
    %652 = vector.broadcast %cst_112 : f32 to vector<2x128xf32>
    %653 = arith.addf %652, %651 : vector<2x128xf32>
    %654 = arith.divf %652, %653 : vector<2x128xf32>
    %655 = arith.mulf %646, %627 : vector<2x128xf32>
    %656 = arith.mulf %640, %648 : vector<2x128xf32>
    %657 = arith.addf %655, %656 : vector<2x128xf32>
    %658 = math.tanh %657 : vector<2x128xf32>
    %659 = arith.mulf %654, %658 : vector<2x128xf32>
    %660 = vector.extract_strided_slice %659 {offsets = [0, 0], sizes = [2, 3], strides = [1, 1]} : vector<2x128xf32> to vector<2x3xf32>
    %661 = vector.extract_strided_slice %511 {offsets = [5, 0, 0], sizes = [1, 2, 512], strides = [1, 1, 1]} : vector<8x2x512xf32> to vector<1x2x512xf32>
    %662 = vector.shape_cast %661 : vector<1x2x512xf32> to vector<2x512xf32>
    %cst_113 = arith.constant dense<0.000000e+00> : vector<2x512xf32>
    %663 = tpu.matmul %660, %505, %cst_113 {dimension_numbers = #tpu.dot_dimension_numbers<[1], [0], [0], [1], [0, 0, 1, 1], [], []>} : vector<2x3xf32>, vector<3x512xf32>, vector<2x512xf32> -> vector<2x512xf32>
    %664 = arith.addf %662, %663 : vector<2x512xf32>
    %665 = vector.extract_strided_slice %664 {offsets = [0, 0], sizes = [2, 128], strides = [1, 1]} : vector<2x512xf32> to vector<2x128xf32>
    %666 = arith.negf %665 : vector<2x128xf32>
    %667 = math.exp %666 : vector<2x128xf32>
    %cst_114 = arith.constant 1.000000e+00 : f32
    %668 = vector.broadcast %cst_114 : f32 to vector<2x128xf32>
    %669 = arith.addf %668, %667 : vector<2x128xf32>
    %670 = arith.divf %668, %669 : vector<2x128xf32>
    %671 = vector.extract_strided_slice %664 {offsets = [0, 128], sizes = [2, 128], strides = [1, 1]} : vector<2x512xf32> to vector<2x128xf32>
    %672 = arith.negf %671 : vector<2x128xf32>
    %673 = math.exp %672 : vector<2x128xf32>
    %cst_115 = arith.constant 1.000000e+00 : f32
    %674 = vector.broadcast %cst_115 : f32 to vector<2x128xf32>
    %675 = arith.addf %674, %673 : vector<2x128xf32>
    %676 = arith.divf %674, %675 : vector<2x128xf32>
    %677 = vector.extract_strided_slice %664 {offsets = [0, 256], sizes = [2, 128], strides = [1, 1]} : vector<2x512xf32> to vector<2x128xf32>
    %678 = math.tanh %677 : vector<2x128xf32>
    %679 = vector.extract_strided_slice %664 {offsets = [0, 384], sizes = [2, 128], strides = [1, 1]} : vector<2x512xf32> to vector<2x128xf32>
    %680 = arith.negf %679 : vector<2x128xf32>
    %681 = math.exp %680 : vector<2x128xf32>
    %cst_116 = arith.constant 1.000000e+00 : f32
    %682 = vector.broadcast %cst_116 : f32 to vector<2x128xf32>
    %683 = arith.addf %682, %681 : vector<2x128xf32>
    %684 = arith.divf %682, %683 : vector<2x128xf32>
    %685 = arith.mulf %676, %657 : vector<2x128xf32>
    %686 = arith.mulf %670, %678 : vector<2x128xf32>
    %687 = arith.addf %685, %686 : vector<2x128xf32>
    %688 = math.tanh %687 : vector<2x128xf32>
    %689 = arith.mulf %684, %688 : vector<2x128xf32>
    %690 = vector.extract_strided_slice %689 {offsets = [0, 0], sizes = [2, 3], strides = [1, 1]} : vector<2x128xf32> to vector<2x3xf32>
    %691 = vector.extract_strided_slice %511 {offsets = [6, 0, 0], sizes = [1, 2, 512], strides = [1, 1, 1]} : vector<8x2x512xf32> to vector<1x2x512xf32>
    %692 = vector.shape_cast %691 : vector<1x2x512xf32> to vector<2x512xf32>
    %cst_117 = arith.constant dense<0.000000e+00> : vector<2x512xf32>
    %693 = tpu.matmul %690, %505, %cst_117 {dimension_numbers = #tpu.dot_dimension_numbers<[1], [0], [0], [1], [0, 0, 1, 1], [], []>} : vector<2x3xf32>, vector<3x512xf32>, vector<2x512xf32> -> vector<2x512xf32>
    %694 = arith.addf %692, %693 : vector<2x512xf32>
    %695 = vector.extract_strided_slice %694 {offsets = [0, 0], sizes = [2, 128], strides = [1, 1]} : vector<2x512xf32> to vector<2x128xf32>
    %696 = arith.negf %695 : vector<2x128xf32>
    %697 = math.exp %696 : vector<2x128xf32>
    %cst_118 = arith.constant 1.000000e+00 : f32
    %698 = vector.broadcast %cst_118 : f32 to vector<2x128xf32>
    %699 = arith.addf %698, %697 : vector<2x128xf32>
    %700 = arith.divf %698, %699 : vector<2x128xf32>
    %701 = vector.extract_strided_slice %694 {offsets = [0, 128], sizes = [2, 128], strides = [1, 1]} : vector<2x512xf32> to vector<2x128xf32>
    %702 = arith.negf %701 : vector<2x128xf32>
    %703 = math.exp %702 : vector<2x128xf32>
    %cst_119 = arith.constant 1.000000e+00 : f32
    %704 = vector.broadcast %cst_119 : f32 to vector<2x128xf32>
    %705 = arith.addf %704, %703 : vector<2x128xf32>
    %706 = arith.divf %704, %705 : vector<2x128xf32>
    %707 = vector.extract_strided_slice %694 {offsets = [0, 256], sizes = [2, 128], strides = [1, 1]} : vector<2x512xf32> to vector<2x128xf32>
    %708 = math.tanh %707 : vector<2x128xf32>
    %709 = vector.extract_strided_slice %694 {offsets = [0, 384], sizes = [2, 128], strides = [1, 1]} : vector<2x512xf32> to vector<2x128xf32>
    %710 = arith.negf %709 : vector<2x128xf32>
    %711 = math.exp %710 : vector<2x128xf32>
    %cst_120 = arith.constant 1.000000e+00 : f32
    %712 = vector.broadcast %cst_120 : f32 to vector<2x128xf32>
    %713 = arith.addf %712, %711 : vector<2x128xf32>
    %714 = arith.divf %712, %713 : vector<2x128xf32>
    %715 = arith.mulf %706, %687 : vector<2x128xf32>
    %716 = arith.mulf %700, %708 : vector<2x128xf32>
    %717 = arith.addf %715, %716 : vector<2x128xf32>
    %718 = math.tanh %717 : vector<2x128xf32>
    %719 = arith.mulf %714, %718 : vector<2x128xf32>
    %720 = vector.extract_strided_slice %719 {offsets = [0, 0], sizes = [2, 3], strides = [1, 1]} : vector<2x128xf32> to vector<2x3xf32>
    %721 = vector.extract_strided_slice %511 {offsets = [7, 0, 0], sizes = [1, 2, 512], strides = [1, 1, 1]} : vector<8x2x512xf32> to vector<1x2x512xf32>
    %722 = vector.shape_cast %721 : vector<1x2x512xf32> to vector<2x512xf32>
    %cst_121 = arith.constant dense<0.000000e+00> : vector<2x512xf32>
    %723 = tpu.matmul %720, %505, %cst_121 {dimension_numbers = #tpu.dot_dimension_numbers<[1], [0], [0], [1], [0, 0, 1, 1], [], []>} : vector<2x3xf32>, vector<3x512xf32>, vector<2x512xf32> -> vector<2x512xf32>
    %724 = arith.addf %722, %723 : vector<2x512xf32>
    %725 = vector.extract_strided_slice %724 {offsets = [0, 0], sizes = [2, 128], strides = [1, 1]} : vector<2x512xf32> to vector<2x128xf32>
    %726 = arith.negf %725 : vector<2x128xf32>
    %727 = math.exp %726 : vector<2x128xf32>
    %cst_122 = arith.constant 1.000000e+00 : f32
    %728 = vector.broadcast %cst_122 : f32 to vector<2x128xf32>
    %729 = arith.addf %728, %727 : vector<2x128xf32>
    %730 = arith.divf %728, %729 : vector<2x128xf32>
    %731 = vector.extract_strided_slice %724 {offsets = [0, 128], sizes = [2, 128], strides = [1, 1]} : vector<2x512xf32> to vector<2x128xf32>
    %732 = arith.negf %731 : vector<2x128xf32>
    %733 = math.exp %732 : vector<2x128xf32>
    %cst_123 = arith.constant 1.000000e+00 : f32
    %734 = vector.broadcast %cst_123 : f32 to vector<2x128xf32>
    %735 = arith.addf %734, %733 : vector<2x128xf32>
    %736 = arith.divf %734, %735 : vector<2x128xf32>
    %737 = vector.extract_strided_slice %724 {offsets = [0, 256], sizes = [2, 128], strides = [1, 1]} : vector<2x512xf32> to vector<2x128xf32>
    %738 = math.tanh %737 : vector<2x128xf32>
    %739 = vector.extract_strided_slice %724 {offsets = [0, 384], sizes = [2, 128], strides = [1, 1]} : vector<2x512xf32> to vector<2x128xf32>
    %740 = arith.negf %739 : vector<2x128xf32>
    %741 = math.exp %740 : vector<2x128xf32>
    %cst_124 = arith.constant 1.000000e+00 : f32
    %742 = vector.broadcast %cst_124 : f32 to vector<2x128xf32>
    %743 = arith.addf %742, %741 : vector<2x128xf32>
    %744 = arith.divf %742, %743 : vector<2x128xf32>
    %745 = arith.mulf %736, %717 : vector<2x128xf32>
    %746 = arith.mulf %730, %738 : vector<2x128xf32>
    %747 = arith.addf %745, %746 : vector<2x128xf32>
    %748 = math.tanh %747 : vector<2x128xf32>
    %749 = arith.mulf %744, %748 : vector<2x128xf32>
    %750 = vector.extract_strided_slice %749 {offsets = [0, 0], sizes = [2, 3], strides = [1, 1]} : vector<2x128xf32> to vector<2x3xf32>
    %751 = tpu.concatenate %540, %570, %600, %630, %660, %690, %720, %750 in 0 : vector<2x3xf32>, vector<2x3xf32>, vector<2x3xf32>, vector<2x3xf32>, vector<2x3xf32>, vector<2x3xf32>, vector<2x3xf32>, vector<2x3xf32> -> vector<16x3xf32>
    %c3 = arith.constant 3 : index
    %c0_125 = arith.constant 0 : index
    %c0_126 = arith.constant 0 : index
    %752 = vector.load %arg1[%c3, %c0_125, %c0_126] : memref<5x3x512xf32, #tpu.memory_space<vmem>>, vector<1x3x512xf32>
    %753 = vector.shape_cast %752 : vector<1x3x512xf32> to vector<3x512xf32>
    %c3_127 = arith.constant 3 : index
    %c0_128 = arith.constant 0 : index
    %c0_129 = arith.constant 0 : index
    %754 = vector.load %arg2[%c3_127, %c0_128, %c0_129] : memref<5x3x512xf32, #tpu.memory_space<vmem>>, vector<1x3x512xf32>
    %755 = vector.shape_cast %754 : vector<1x3x512xf32> to vector<3x512xf32>
    %c3_130 = arith.constant 3 : index
    %c0_131 = arith.constant 0 : index
    %c0_132 = arith.constant 0 : index
    %756 = vector.load %arg3[%c3_130, %c0_131, %c0_132] : memref<5x1x512xf32, #tpu.memory_space<vmem>>, vector<1x1x512xf32>
    %757 = vector.shape_cast %756 : vector<1x1x512xf32> to vector<1x512xf32>
    %cst_133 = arith.constant dense<0.000000e+00> : vector<16x512xf32>
    %758 = tpu.matmul %751, %753, %cst_133 {dimension_numbers = #tpu.dot_dimension_numbers<[1], [0], [0], [1], [0, 0, 1, 1], [], []>} : vector<16x3xf32>, vector<3x512xf32>, vector<16x512xf32> -> vector<16x512xf32>
    %759 = vector.broadcast %757 : vector<1x512xf32> to vector<16x512xf32>
    %760 = arith.addf %758, %759 : vector<16x512xf32>
    %761 = vector.shape_cast %760 : vector<16x512xf32> to vector<8x2x512xf32>
    %cst_134 = arith.constant 0.000000e+00 : f32
    %762 = vector.broadcast %cst_134 : f32 to vector<2x128xf32>
    %763 = vector.extract_strided_slice %761 {offsets = [0, 0, 0], sizes = [1, 2, 512], strides = [1, 1, 1]} : vector<8x2x512xf32> to vector<1x2x512xf32>
    %764 = vector.shape_cast %763 : vector<1x2x512xf32> to vector<2x512xf32>
    %765 = vector.extract_strided_slice %764 {offsets = [0, 0], sizes = [2, 128], strides = [1, 1]} : vector<2x512xf32> to vector<2x128xf32>
    %766 = arith.negf %765 : vector<2x128xf32>
    %767 = math.exp %766 : vector<2x128xf32>
    %cst_135 = arith.constant 1.000000e+00 : f32
    %768 = vector.broadcast %cst_135 : f32 to vector<2x128xf32>
    %769 = arith.addf %768, %767 : vector<2x128xf32>
    %770 = arith.divf %768, %769 : vector<2x128xf32>
    %771 = vector.extract_strided_slice %764 {offsets = [0, 128], sizes = [2, 128], strides = [1, 1]} : vector<2x512xf32> to vector<2x128xf32>
    %772 = arith.negf %771 : vector<2x128xf32>
    %773 = math.exp %772 : vector<2x128xf32>
    %cst_136 = arith.constant 1.000000e+00 : f32
    %774 = vector.broadcast %cst_136 : f32 to vector<2x128xf32>
    %775 = arith.addf %774, %773 : vector<2x128xf32>
    %776 = arith.divf %774, %775 : vector<2x128xf32>
    %777 = vector.extract_strided_slice %764 {offsets = [0, 256], sizes = [2, 128], strides = [1, 1]} : vector<2x512xf32> to vector<2x128xf32>
    %778 = math.tanh %777 : vector<2x128xf32>
    %779 = vector.extract_strided_slice %764 {offsets = [0, 384], sizes = [2, 128], strides = [1, 1]} : vector<2x512xf32> to vector<2x128xf32>
    %780 = arith.negf %779 : vector<2x128xf32>
    %781 = math.exp %780 : vector<2x128xf32>
    %cst_137 = arith.constant 1.000000e+00 : f32
    %782 = vector.broadcast %cst_137 : f32 to vector<2x128xf32>
    %783 = arith.addf %782, %781 : vector<2x128xf32>
    %784 = arith.divf %782, %783 : vector<2x128xf32>
    %785 = arith.mulf %776, %762 : vector<2x128xf32>
    %786 = arith.mulf %770, %778 : vector<2x128xf32>
    %787 = arith.addf %785, %786 : vector<2x128xf32>
    %788 = math.tanh %787 : vector<2x128xf32>
    %789 = arith.mulf %784, %788 : vector<2x128xf32>
    %790 = vector.extract_strided_slice %789 {offsets = [0, 0], sizes = [2, 3], strides = [1, 1]} : vector<2x128xf32> to vector<2x3xf32>
    %791 = vector.extract_strided_slice %761 {offsets = [1, 0, 0], sizes = [1, 2, 512], strides = [1, 1, 1]} : vector<8x2x512xf32> to vector<1x2x512xf32>
    %792 = vector.shape_cast %791 : vector<1x2x512xf32> to vector<2x512xf32>
    %cst_138 = arith.constant dense<0.000000e+00> : vector<2x512xf32>
    %793 = tpu.matmul %790, %755, %cst_138 {dimension_numbers = #tpu.dot_dimension_numbers<[1], [0], [0], [1], [0, 0, 1, 1], [], []>} : vector<2x3xf32>, vector<3x512xf32>, vector<2x512xf32> -> vector<2x512xf32>
    %794 = arith.addf %792, %793 : vector<2x512xf32>
    %795 = vector.extract_strided_slice %794 {offsets = [0, 0], sizes = [2, 128], strides = [1, 1]} : vector<2x512xf32> to vector<2x128xf32>
    %796 = arith.negf %795 : vector<2x128xf32>
    %797 = math.exp %796 : vector<2x128xf32>
    %cst_139 = arith.constant 1.000000e+00 : f32
    %798 = vector.broadcast %cst_139 : f32 to vector<2x128xf32>
    %799 = arith.addf %798, %797 : vector<2x128xf32>
    %800 = arith.divf %798, %799 : vector<2x128xf32>
    %801 = vector.extract_strided_slice %794 {offsets = [0, 128], sizes = [2, 128], strides = [1, 1]} : vector<2x512xf32> to vector<2x128xf32>
    %802 = arith.negf %801 : vector<2x128xf32>
    %803 = math.exp %802 : vector<2x128xf32>
    %cst_140 = arith.constant 1.000000e+00 : f32
    %804 = vector.broadcast %cst_140 : f32 to vector<2x128xf32>
    %805 = arith.addf %804, %803 : vector<2x128xf32>
    %806 = arith.divf %804, %805 : vector<2x128xf32>
    %807 = vector.extract_strided_slice %794 {offsets = [0, 256], sizes = [2, 128], strides = [1, 1]} : vector<2x512xf32> to vector<2x128xf32>
    %808 = math.tanh %807 : vector<2x128xf32>
    %809 = vector.extract_strided_slice %794 {offsets = [0, 384], sizes = [2, 128], strides = [1, 1]} : vector<2x512xf32> to vector<2x128xf32>
    %810 = arith.negf %809 : vector<2x128xf32>
    %811 = math.exp %810 : vector<2x128xf32>
    %cst_141 = arith.constant 1.000000e+00 : f32
    %812 = vector.broadcast %cst_141 : f32 to vector<2x128xf32>
    %813 = arith.addf %812, %811 : vector<2x128xf32>
    %814 = arith.divf %812, %813 : vector<2x128xf32>
    %815 = arith.mulf %806, %787 : vector<2x128xf32>
    %816 = arith.mulf %800, %808 : vector<2x128xf32>
    %817 = arith.addf %815, %816 : vector<2x128xf32>
    %818 = math.tanh %817 : vector<2x128xf32>
    %819 = arith.mulf %814, %818 : vector<2x128xf32>
    %820 = vector.extract_strided_slice %819 {offsets = [0, 0], sizes = [2, 3], strides = [1, 1]} : vector<2x128xf32> to vector<2x3xf32>
    %821 = vector.extract_strided_slice %761 {offsets = [2, 0, 0], sizes = [1, 2, 512], strides = [1, 1, 1]} : vector<8x2x512xf32> to vector<1x2x512xf32>
    %822 = vector.shape_cast %821 : vector<1x2x512xf32> to vector<2x512xf32>
    %cst_142 = arith.constant dense<0.000000e+00> : vector<2x512xf32>
    %823 = tpu.matmul %820, %755, %cst_142 {dimension_numbers = #tpu.dot_dimension_numbers<[1], [0], [0], [1], [0, 0, 1, 1], [], []>} : vector<2x3xf32>, vector<3x512xf32>, vector<2x512xf32> -> vector<2x512xf32>
    %824 = arith.addf %822, %823 : vector<2x512xf32>
    %825 = vector.extract_strided_slice %824 {offsets = [0, 0], sizes = [2, 128], strides = [1, 1]} : vector<2x512xf32> to vector<2x128xf32>
    %826 = arith.negf %825 : vector<2x128xf32>
    %827 = math.exp %826 : vector<2x128xf32>
    %cst_143 = arith.constant 1.000000e+00 : f32
    %828 = vector.broadcast %cst_143 : f32 to vector<2x128xf32>
    %829 = arith.addf %828, %827 : vector<2x128xf32>
    %830 = arith.divf %828, %829 : vector<2x128xf32>
    %831 = vector.extract_strided_slice %824 {offsets = [0, 128], sizes = [2, 128], strides = [1, 1]} : vector<2x512xf32> to vector<2x128xf32>
    %832 = arith.negf %831 : vector<2x128xf32>
    %833 = math.exp %832 : vector<2x128xf32>
    %cst_144 = arith.constant 1.000000e+00 : f32
    %834 = vector.broadcast %cst_144 : f32 to vector<2x128xf32>
    %835 = arith.addf %834, %833 : vector<2x128xf32>
    %836 = arith.divf %834, %835 : vector<2x128xf32>
    %837 = vector.extract_strided_slice %824 {offsets = [0, 256], sizes = [2, 128], strides = [1, 1]} : vector<2x512xf32> to vector<2x128xf32>
    %838 = math.tanh %837 : vector<2x128xf32>
    %839 = vector.extract_strided_slice %824 {offsets = [0, 384], sizes = [2, 128], strides = [1, 1]} : vector<2x512xf32> to vector<2x128xf32>
    %840 = arith.negf %839 : vector<2x128xf32>
    %841 = math.exp %840 : vector<2x128xf32>
    %cst_145 = arith.constant 1.000000e+00 : f32
    %842 = vector.broadcast %cst_145 : f32 to vector<2x128xf32>
    %843 = arith.addf %842, %841 : vector<2x128xf32>
    %844 = arith.divf %842, %843 : vector<2x128xf32>
    %845 = arith.mulf %836, %817 : vector<2x128xf32>
    %846 = arith.mulf %830, %838 : vector<2x128xf32>
    %847 = arith.addf %845, %846 : vector<2x128xf32>
    %848 = math.tanh %847 : vector<2x128xf32>
    %849 = arith.mulf %844, %848 : vector<2x128xf32>
    %850 = vector.extract_strided_slice %849 {offsets = [0, 0], sizes = [2, 3], strides = [1, 1]} : vector<2x128xf32> to vector<2x3xf32>
    %851 = vector.extract_strided_slice %761 {offsets = [3, 0, 0], sizes = [1, 2, 512], strides = [1, 1, 1]} : vector<8x2x512xf32> to vector<1x2x512xf32>
    %852 = vector.shape_cast %851 : vector<1x2x512xf32> to vector<2x512xf32>
    %cst_146 = arith.constant dense<0.000000e+00> : vector<2x512xf32>
    %853 = tpu.matmul %850, %755, %cst_146 {dimension_numbers = #tpu.dot_dimension_numbers<[1], [0], [0], [1], [0, 0, 1, 1], [], []>} : vector<2x3xf32>, vector<3x512xf32>, vector<2x512xf32> -> vector<2x512xf32>
    %854 = arith.addf %852, %853 : vector<2x512xf32>
    %855 = vector.extract_strided_slice %854 {offsets = [0, 0], sizes = [2, 128], strides = [1, 1]} : vector<2x512xf32> to vector<2x128xf32>
    %856 = arith.negf %855 : vector<2x128xf32>
    %857 = math.exp %856 : vector<2x128xf32>
    %cst_147 = arith.constant 1.000000e+00 : f32
    %858 = vector.broadcast %cst_147 : f32 to vector<2x128xf32>
    %859 = arith.addf %858, %857 : vector<2x128xf32>
    %860 = arith.divf %858, %859 : vector<2x128xf32>
    %861 = vector.extract_strided_slice %854 {offsets = [0, 128], sizes = [2, 128], strides = [1, 1]} : vector<2x512xf32> to vector<2x128xf32>
    %862 = arith.negf %861 : vector<2x128xf32>
    %863 = math.exp %862 : vector<2x128xf32>
    %cst_148 = arith.constant 1.000000e+00 : f32
    %864 = vector.broadcast %cst_148 : f32 to vector<2x128xf32>
    %865 = arith.addf %864, %863 : vector<2x128xf32>
    %866 = arith.divf %864, %865 : vector<2x128xf32>
    %867 = vector.extract_strided_slice %854 {offsets = [0, 256], sizes = [2, 128], strides = [1, 1]} : vector<2x512xf32> to vector<2x128xf32>
    %868 = math.tanh %867 : vector<2x128xf32>
    %869 = vector.extract_strided_slice %854 {offsets = [0, 384], sizes = [2, 128], strides = [1, 1]} : vector<2x512xf32> to vector<2x128xf32>
    %870 = arith.negf %869 : vector<2x128xf32>
    %871 = math.exp %870 : vector<2x128xf32>
    %cst_149 = arith.constant 1.000000e+00 : f32
    %872 = vector.broadcast %cst_149 : f32 to vector<2x128xf32>
    %873 = arith.addf %872, %871 : vector<2x128xf32>
    %874 = arith.divf %872, %873 : vector<2x128xf32>
    %875 = arith.mulf %866, %847 : vector<2x128xf32>
    %876 = arith.mulf %860, %868 : vector<2x128xf32>
    %877 = arith.addf %875, %876 : vector<2x128xf32>
    %878 = math.tanh %877 : vector<2x128xf32>
    %879 = arith.mulf %874, %878 : vector<2x128xf32>
    %880 = vector.extract_strided_slice %879 {offsets = [0, 0], sizes = [2, 3], strides = [1, 1]} : vector<2x128xf32> to vector<2x3xf32>
    %881 = vector.extract_strided_slice %761 {offsets = [4, 0, 0], sizes = [1, 2, 512], strides = [1, 1, 1]} : vector<8x2x512xf32> to vector<1x2x512xf32>
    %882 = vector.shape_cast %881 : vector<1x2x512xf32> to vector<2x512xf32>
    %cst_150 = arith.constant dense<0.000000e+00> : vector<2x512xf32>
    %883 = tpu.matmul %880, %755, %cst_150 {dimension_numbers = #tpu.dot_dimension_numbers<[1], [0], [0], [1], [0, 0, 1, 1], [], []>} : vector<2x3xf32>, vector<3x512xf32>, vector<2x512xf32> -> vector<2x512xf32>
    %884 = arith.addf %882, %883 : vector<2x512xf32>
    %885 = vector.extract_strided_slice %884 {offsets = [0, 0], sizes = [2, 128], strides = [1, 1]} : vector<2x512xf32> to vector<2x128xf32>
    %886 = arith.negf %885 : vector<2x128xf32>
    %887 = math.exp %886 : vector<2x128xf32>
    %cst_151 = arith.constant 1.000000e+00 : f32
    %888 = vector.broadcast %cst_151 : f32 to vector<2x128xf32>
    %889 = arith.addf %888, %887 : vector<2x128xf32>
    %890 = arith.divf %888, %889 : vector<2x128xf32>
    %891 = vector.extract_strided_slice %884 {offsets = [0, 128], sizes = [2, 128], strides = [1, 1]} : vector<2x512xf32> to vector<2x128xf32>
    %892 = arith.negf %891 : vector<2x128xf32>
    %893 = math.exp %892 : vector<2x128xf32>
    %cst_152 = arith.constant 1.000000e+00 : f32
    %894 = vector.broadcast %cst_152 : f32 to vector<2x128xf32>
    %895 = arith.addf %894, %893 : vector<2x128xf32>
    %896 = arith.divf %894, %895 : vector<2x128xf32>
    %897 = vector.extract_strided_slice %884 {offsets = [0, 256], sizes = [2, 128], strides = [1, 1]} : vector<2x512xf32> to vector<2x128xf32>
    %898 = math.tanh %897 : vector<2x128xf32>
    %899 = vector.extract_strided_slice %884 {offsets = [0, 384], sizes = [2, 128], strides = [1, 1]} : vector<2x512xf32> to vector<2x128xf32>
    %900 = arith.negf %899 : vector<2x128xf32>
    %901 = math.exp %900 : vector<2x128xf32>
    %cst_153 = arith.constant 1.000000e+00 : f32
    %902 = vector.broadcast %cst_153 : f32 to vector<2x128xf32>
    %903 = arith.addf %902, %901 : vector<2x128xf32>
    %904 = arith.divf %902, %903 : vector<2x128xf32>
    %905 = arith.mulf %896, %877 : vector<2x128xf32>
    %906 = arith.mulf %890, %898 : vector<2x128xf32>
    %907 = arith.addf %905, %906 : vector<2x128xf32>
    %908 = math.tanh %907 : vector<2x128xf32>
    %909 = arith.mulf %904, %908 : vector<2x128xf32>
    %910 = vector.extract_strided_slice %909 {offsets = [0, 0], sizes = [2, 3], strides = [1, 1]} : vector<2x128xf32> to vector<2x3xf32>
    %911 = vector.extract_strided_slice %761 {offsets = [5, 0, 0], sizes = [1, 2, 512], strides = [1, 1, 1]} : vector<8x2x512xf32> to vector<1x2x512xf32>
    %912 = vector.shape_cast %911 : vector<1x2x512xf32> to vector<2x512xf32>
    %cst_154 = arith.constant dense<0.000000e+00> : vector<2x512xf32>
    %913 = tpu.matmul %910, %755, %cst_154 {dimension_numbers = #tpu.dot_dimension_numbers<[1], [0], [0], [1], [0, 0, 1, 1], [], []>} : vector<2x3xf32>, vector<3x512xf32>, vector<2x512xf32> -> vector<2x512xf32>
    %914 = arith.addf %912, %913 : vector<2x512xf32>
    %915 = vector.extract_strided_slice %914 {offsets = [0, 0], sizes = [2, 128], strides = [1, 1]} : vector<2x512xf32> to vector<2x128xf32>
    %916 = arith.negf %915 : vector<2x128xf32>
    %917 = math.exp %916 : vector<2x128xf32>
    %cst_155 = arith.constant 1.000000e+00 : f32
    %918 = vector.broadcast %cst_155 : f32 to vector<2x128xf32>
    %919 = arith.addf %918, %917 : vector<2x128xf32>
    %920 = arith.divf %918, %919 : vector<2x128xf32>
    %921 = vector.extract_strided_slice %914 {offsets = [0, 128], sizes = [2, 128], strides = [1, 1]} : vector<2x512xf32> to vector<2x128xf32>
    %922 = arith.negf %921 : vector<2x128xf32>
    %923 = math.exp %922 : vector<2x128xf32>
    %cst_156 = arith.constant 1.000000e+00 : f32
    %924 = vector.broadcast %cst_156 : f32 to vector<2x128xf32>
    %925 = arith.addf %924, %923 : vector<2x128xf32>
    %926 = arith.divf %924, %925 : vector<2x128xf32>
    %927 = vector.extract_strided_slice %914 {offsets = [0, 256], sizes = [2, 128], strides = [1, 1]} : vector<2x512xf32> to vector<2x128xf32>
    %928 = math.tanh %927 : vector<2x128xf32>
    %929 = vector.extract_strided_slice %914 {offsets = [0, 384], sizes = [2, 128], strides = [1, 1]} : vector<2x512xf32> to vector<2x128xf32>
    %930 = arith.negf %929 : vector<2x128xf32>
    %931 = math.exp %930 : vector<2x128xf32>
    %cst_157 = arith.constant 1.000000e+00 : f32
    %932 = vector.broadcast %cst_157 : f32 to vector<2x128xf32>
    %933 = arith.addf %932, %931 : vector<2x128xf32>
    %934 = arith.divf %932, %933 : vector<2x128xf32>
    %935 = arith.mulf %926, %907 : vector<2x128xf32>
    %936 = arith.mulf %920, %928 : vector<2x128xf32>
    %937 = arith.addf %935, %936 : vector<2x128xf32>
    %938 = math.tanh %937 : vector<2x128xf32>
    %939 = arith.mulf %934, %938 : vector<2x128xf32>
    %940 = vector.extract_strided_slice %939 {offsets = [0, 0], sizes = [2, 3], strides = [1, 1]} : vector<2x128xf32> to vector<2x3xf32>
    %941 = vector.extract_strided_slice %761 {offsets = [6, 0, 0], sizes = [1, 2, 512], strides = [1, 1, 1]} : vector<8x2x512xf32> to vector<1x2x512xf32>
    %942 = vector.shape_cast %941 : vector<1x2x512xf32> to vector<2x512xf32>
    %cst_158 = arith.constant dense<0.000000e+00> : vector<2x512xf32>
    %943 = tpu.matmul %940, %755, %cst_158 {dimension_numbers = #tpu.dot_dimension_numbers<[1], [0], [0], [1], [0, 0, 1, 1], [], []>} : vector<2x3xf32>, vector<3x512xf32>, vector<2x512xf32> -> vector<2x512xf32>
    %944 = arith.addf %942, %943 : vector<2x512xf32>
    %945 = vector.extract_strided_slice %944 {offsets = [0, 0], sizes = [2, 128], strides = [1, 1]} : vector<2x512xf32> to vector<2x128xf32>
    %946 = arith.negf %945 : vector<2x128xf32>
    %947 = math.exp %946 : vector<2x128xf32>
    %cst_159 = arith.constant 1.000000e+00 : f32
    %948 = vector.broadcast %cst_159 : f32 to vector<2x128xf32>
    %949 = arith.addf %948, %947 : vector<2x128xf32>
    %950 = arith.divf %948, %949 : vector<2x128xf32>
    %951 = vector.extract_strided_slice %944 {offsets = [0, 128], sizes = [2, 128], strides = [1, 1]} : vector<2x512xf32> to vector<2x128xf32>
    %952 = arith.negf %951 : vector<2x128xf32>
    %953 = math.exp %952 : vector<2x128xf32>
    %cst_160 = arith.constant 1.000000e+00 : f32
    %954 = vector.broadcast %cst_160 : f32 to vector<2x128xf32>
    %955 = arith.addf %954, %953 : vector<2x128xf32>
    %956 = arith.divf %954, %955 : vector<2x128xf32>
    %957 = vector.extract_strided_slice %944 {offsets = [0, 256], sizes = [2, 128], strides = [1, 1]} : vector<2x512xf32> to vector<2x128xf32>
    %958 = math.tanh %957 : vector<2x128xf32>
    %959 = vector.extract_strided_slice %944 {offsets = [0, 384], sizes = [2, 128], strides = [1, 1]} : vector<2x512xf32> to vector<2x128xf32>
    %960 = arith.negf %959 : vector<2x128xf32>
    %961 = math.exp %960 : vector<2x128xf32>
    %cst_161 = arith.constant 1.000000e+00 : f32
    %962 = vector.broadcast %cst_161 : f32 to vector<2x128xf32>
    %963 = arith.addf %962, %961 : vector<2x128xf32>
    %964 = arith.divf %962, %963 : vector<2x128xf32>
    %965 = arith.mulf %956, %937 : vector<2x128xf32>
    %966 = arith.mulf %950, %958 : vector<2x128xf32>
    %967 = arith.addf %965, %966 : vector<2x128xf32>
    %968 = math.tanh %967 : vector<2x128xf32>
    %969 = arith.mulf %964, %968 : vector<2x128xf32>
    %970 = vector.extract_strided_slice %969 {offsets = [0, 0], sizes = [2, 3], strides = [1, 1]} : vector<2x128xf32> to vector<2x3xf32>
    %971 = vector.extract_strided_slice %761 {offsets = [7, 0, 0], sizes = [1, 2, 512], strides = [1, 1, 1]} : vector<8x2x512xf32> to vector<1x2x512xf32>
    %972 = vector.shape_cast %971 : vector<1x2x512xf32> to vector<2x512xf32>
    %cst_162 = arith.constant dense<0.000000e+00> : vector<2x512xf32>
    %973 = tpu.matmul %970, %755, %cst_162 {dimension_numbers = #tpu.dot_dimension_numbers<[1], [0], [0], [1], [0, 0, 1, 1], [], []>} : vector<2x3xf32>, vector<3x512xf32>, vector<2x512xf32> -> vector<2x512xf32>
    %974 = arith.addf %972, %973 : vector<2x512xf32>
    %975 = vector.extract_strided_slice %974 {offsets = [0, 0], sizes = [2, 128], strides = [1, 1]} : vector<2x512xf32> to vector<2x128xf32>
    %976 = arith.negf %975 : vector<2x128xf32>
    %977 = math.exp %976 : vector<2x128xf32>
    %cst_163 = arith.constant 1.000000e+00 : f32
    %978 = vector.broadcast %cst_163 : f32 to vector<2x128xf32>
    %979 = arith.addf %978, %977 : vector<2x128xf32>
    %980 = arith.divf %978, %979 : vector<2x128xf32>
    %981 = vector.extract_strided_slice %974 {offsets = [0, 128], sizes = [2, 128], strides = [1, 1]} : vector<2x512xf32> to vector<2x128xf32>
    %982 = arith.negf %981 : vector<2x128xf32>
    %983 = math.exp %982 : vector<2x128xf32>
    %cst_164 = arith.constant 1.000000e+00 : f32
    %984 = vector.broadcast %cst_164 : f32 to vector<2x128xf32>
    %985 = arith.addf %984, %983 : vector<2x128xf32>
    %986 = arith.divf %984, %985 : vector<2x128xf32>
    %987 = vector.extract_strided_slice %974 {offsets = [0, 256], sizes = [2, 128], strides = [1, 1]} : vector<2x512xf32> to vector<2x128xf32>
    %988 = math.tanh %987 : vector<2x128xf32>
    %989 = vector.extract_strided_slice %974 {offsets = [0, 384], sizes = [2, 128], strides = [1, 1]} : vector<2x512xf32> to vector<2x128xf32>
    %990 = arith.negf %989 : vector<2x128xf32>
    %991 = math.exp %990 : vector<2x128xf32>
    %cst_165 = arith.constant 1.000000e+00 : f32
    %992 = vector.broadcast %cst_165 : f32 to vector<2x128xf32>
    %993 = arith.addf %992, %991 : vector<2x128xf32>
    %994 = arith.divf %992, %993 : vector<2x128xf32>
    %995 = arith.mulf %986, %967 : vector<2x128xf32>
    %996 = arith.mulf %980, %988 : vector<2x128xf32>
    %997 = arith.addf %995, %996 : vector<2x128xf32>
    %998 = math.tanh %997 : vector<2x128xf32>
    %999 = arith.mulf %994, %998 : vector<2x128xf32>
    %1000 = vector.extract_strided_slice %999 {offsets = [0, 0], sizes = [2, 3], strides = [1, 1]} : vector<2x128xf32> to vector<2x3xf32>
    %1001 = tpu.concatenate %790, %820, %850, %880, %910, %940, %970, %1000 in 0 : vector<2x3xf32>, vector<2x3xf32>, vector<2x3xf32>, vector<2x3xf32>, vector<2x3xf32>, vector<2x3xf32>, vector<2x3xf32>, vector<2x3xf32> -> vector<16x3xf32>
    %c4 = arith.constant 4 : index
    %c0_166 = arith.constant 0 : index
    %c0_167 = arith.constant 0 : index
    %1002 = vector.load %arg1[%c4, %c0_166, %c0_167] : memref<5x3x512xf32, #tpu.memory_space<vmem>>, vector<1x3x512xf32>
    %1003 = vector.shape_cast %1002 : vector<1x3x512xf32> to vector<3x512xf32>
    %c4_168 = arith.constant 4 : index
    %c0_169 = arith.constant 0 : index
    %c0_170 = arith.constant 0 : index
    %1004 = vector.load %arg2[%c4_168, %c0_169, %c0_170] : memref<5x3x512xf32, #tpu.memory_space<vmem>>, vector<1x3x512xf32>
    %1005 = vector.shape_cast %1004 : vector<1x3x512xf32> to vector<3x512xf32>
    %c4_171 = arith.constant 4 : index
    %c0_172 = arith.constant 0 : index
    %c0_173 = arith.constant 0 : index
    %1006 = vector.load %arg3[%c4_171, %c0_172, %c0_173] : memref<5x1x512xf32, #tpu.memory_space<vmem>>, vector<1x1x512xf32>
    %1007 = vector.shape_cast %1006 : vector<1x1x512xf32> to vector<1x512xf32>
    %cst_174 = arith.constant dense<0.000000e+00> : vector<16x512xf32>
    %1008 = tpu.matmul %1001, %1003, %cst_174 {dimension_numbers = #tpu.dot_dimension_numbers<[1], [0], [0], [1], [0, 0, 1, 1], [], []>} : vector<16x3xf32>, vector<3x512xf32>, vector<16x512xf32> -> vector<16x512xf32>
    %1009 = vector.broadcast %1007 : vector<1x512xf32> to vector<16x512xf32>
    %1010 = arith.addf %1008, %1009 : vector<16x512xf32>
    %1011 = vector.shape_cast %1010 : vector<16x512xf32> to vector<8x2x512xf32>
    %cst_175 = arith.constant 0.000000e+00 : f32
    %1012 = vector.broadcast %cst_175 : f32 to vector<2x128xf32>
    %1013 = vector.extract_strided_slice %1011 {offsets = [0, 0, 0], sizes = [1, 2, 512], strides = [1, 1, 1]} : vector<8x2x512xf32> to vector<1x2x512xf32>
    %1014 = vector.shape_cast %1013 : vector<1x2x512xf32> to vector<2x512xf32>
    %1015 = vector.extract_strided_slice %1014 {offsets = [0, 0], sizes = [2, 128], strides = [1, 1]} : vector<2x512xf32> to vector<2x128xf32>
    %1016 = arith.negf %1015 : vector<2x128xf32>
    %1017 = math.exp %1016 : vector<2x128xf32>
    %cst_176 = arith.constant 1.000000e+00 : f32
    %1018 = vector.broadcast %cst_176 : f32 to vector<2x128xf32>
    %1019 = arith.addf %1018, %1017 : vector<2x128xf32>
    %1020 = arith.divf %1018, %1019 : vector<2x128xf32>
    %1021 = vector.extract_strided_slice %1014 {offsets = [0, 128], sizes = [2, 128], strides = [1, 1]} : vector<2x512xf32> to vector<2x128xf32>
    %1022 = arith.negf %1021 : vector<2x128xf32>
    %1023 = math.exp %1022 : vector<2x128xf32>
    %cst_177 = arith.constant 1.000000e+00 : f32
    %1024 = vector.broadcast %cst_177 : f32 to vector<2x128xf32>
    %1025 = arith.addf %1024, %1023 : vector<2x128xf32>
    %1026 = arith.divf %1024, %1025 : vector<2x128xf32>
    %1027 = vector.extract_strided_slice %1014 {offsets = [0, 256], sizes = [2, 128], strides = [1, 1]} : vector<2x512xf32> to vector<2x128xf32>
    %1028 = math.tanh %1027 : vector<2x128xf32>
    %1029 = vector.extract_strided_slice %1014 {offsets = [0, 384], sizes = [2, 128], strides = [1, 1]} : vector<2x512xf32> to vector<2x128xf32>
    %1030 = arith.negf %1029 : vector<2x128xf32>
    %1031 = math.exp %1030 : vector<2x128xf32>
    %cst_178 = arith.constant 1.000000e+00 : f32
    %1032 = vector.broadcast %cst_178 : f32 to vector<2x128xf32>
    %1033 = arith.addf %1032, %1031 : vector<2x128xf32>
    %1034 = arith.divf %1032, %1033 : vector<2x128xf32>
    %1035 = arith.mulf %1026, %1012 : vector<2x128xf32>
    %1036 = arith.mulf %1020, %1028 : vector<2x128xf32>
    %1037 = arith.addf %1035, %1036 : vector<2x128xf32>
    %1038 = math.tanh %1037 : vector<2x128xf32>
    %1039 = arith.mulf %1034, %1038 : vector<2x128xf32>
    %1040 = vector.extract_strided_slice %1039 {offsets = [0, 0], sizes = [2, 3], strides = [1, 1]} : vector<2x128xf32> to vector<2x3xf32>
    %1041 = vector.extract_strided_slice %1011 {offsets = [1, 0, 0], sizes = [1, 2, 512], strides = [1, 1, 1]} : vector<8x2x512xf32> to vector<1x2x512xf32>
    %1042 = vector.shape_cast %1041 : vector<1x2x512xf32> to vector<2x512xf32>
    %cst_179 = arith.constant dense<0.000000e+00> : vector<2x512xf32>
    %1043 = tpu.matmul %1040, %1005, %cst_179 {dimension_numbers = #tpu.dot_dimension_numbers<[1], [0], [0], [1], [0, 0, 1, 1], [], []>} : vector<2x3xf32>, vector<3x512xf32>, vector<2x512xf32> -> vector<2x512xf32>
    %1044 = arith.addf %1042, %1043 : vector<2x512xf32>
    %1045 = vector.extract_strided_slice %1044 {offsets = [0, 0], sizes = [2, 128], strides = [1, 1]} : vector<2x512xf32> to vector<2x128xf32>
    %1046 = arith.negf %1045 : vector<2x128xf32>
    %1047 = math.exp %1046 : vector<2x128xf32>
    %cst_180 = arith.constant 1.000000e+00 : f32
    %1048 = vector.broadcast %cst_180 : f32 to vector<2x128xf32>
    %1049 = arith.addf %1048, %1047 : vector<2x128xf32>
    %1050 = arith.divf %1048, %1049 : vector<2x128xf32>
    %1051 = vector.extract_strided_slice %1044 {offsets = [0, 128], sizes = [2, 128], strides = [1, 1]} : vector<2x512xf32> to vector<2x128xf32>
    %1052 = arith.negf %1051 : vector<2x128xf32>
    %1053 = math.exp %1052 : vector<2x128xf32>
    %cst_181 = arith.constant 1.000000e+00 : f32
    %1054 = vector.broadcast %cst_181 : f32 to vector<2x128xf32>
    %1055 = arith.addf %1054, %1053 : vector<2x128xf32>
    %1056 = arith.divf %1054, %1055 : vector<2x128xf32>
    %1057 = vector.extract_strided_slice %1044 {offsets = [0, 256], sizes = [2, 128], strides = [1, 1]} : vector<2x512xf32> to vector<2x128xf32>
    %1058 = math.tanh %1057 : vector<2x128xf32>
    %1059 = vector.extract_strided_slice %1044 {offsets = [0, 384], sizes = [2, 128], strides = [1, 1]} : vector<2x512xf32> to vector<2x128xf32>
    %1060 = arith.negf %1059 : vector<2x128xf32>
    %1061 = math.exp %1060 : vector<2x128xf32>
    %cst_182 = arith.constant 1.000000e+00 : f32
    %1062 = vector.broadcast %cst_182 : f32 to vector<2x128xf32>
    %1063 = arith.addf %1062, %1061 : vector<2x128xf32>
    %1064 = arith.divf %1062, %1063 : vector<2x128xf32>
    %1065 = arith.mulf %1056, %1037 : vector<2x128xf32>
    %1066 = arith.mulf %1050, %1058 : vector<2x128xf32>
    %1067 = arith.addf %1065, %1066 : vector<2x128xf32>
    %1068 = math.tanh %1067 : vector<2x128xf32>
    %1069 = arith.mulf %1064, %1068 : vector<2x128xf32>
    %1070 = vector.extract_strided_slice %1069 {offsets = [0, 0], sizes = [2, 3], strides = [1, 1]} : vector<2x128xf32> to vector<2x3xf32>
    %1071 = vector.extract_strided_slice %1011 {offsets = [2, 0, 0], sizes = [1, 2, 512], strides = [1, 1, 1]} : vector<8x2x512xf32> to vector<1x2x512xf32>
    %1072 = vector.shape_cast %1071 : vector<1x2x512xf32> to vector<2x512xf32>
    %cst_183 = arith.constant dense<0.000000e+00> : vector<2x512xf32>
    %1073 = tpu.matmul %1070, %1005, %cst_183 {dimension_numbers = #tpu.dot_dimension_numbers<[1], [0], [0], [1], [0, 0, 1, 1], [], []>} : vector<2x3xf32>, vector<3x512xf32>, vector<2x512xf32> -> vector<2x512xf32>
    %1074 = arith.addf %1072, %1073 : vector<2x512xf32>
    %1075 = vector.extract_strided_slice %1074 {offsets = [0, 0], sizes = [2, 128], strides = [1, 1]} : vector<2x512xf32> to vector<2x128xf32>
    %1076 = arith.negf %1075 : vector<2x128xf32>
    %1077 = math.exp %1076 : vector<2x128xf32>
    %cst_184 = arith.constant 1.000000e+00 : f32
    %1078 = vector.broadcast %cst_184 : f32 to vector<2x128xf32>
    %1079 = arith.addf %1078, %1077 : vector<2x128xf32>
    %1080 = arith.divf %1078, %1079 : vector<2x128xf32>
    %1081 = vector.extract_strided_slice %1074 {offsets = [0, 128], sizes = [2, 128], strides = [1, 1]} : vector<2x512xf32> to vector<2x128xf32>
    %1082 = arith.negf %1081 : vector<2x128xf32>
    %1083 = math.exp %1082 : vector<2x128xf32>
    %cst_185 = arith.constant 1.000000e+00 : f32
    %1084 = vector.broadcast %cst_185 : f32 to vector<2x128xf32>
    %1085 = arith.addf %1084, %1083 : vector<2x128xf32>
    %1086 = arith.divf %1084, %1085 : vector<2x128xf32>
    %1087 = vector.extract_strided_slice %1074 {offsets = [0, 256], sizes = [2, 128], strides = [1, 1]} : vector<2x512xf32> to vector<2x128xf32>
    %1088 = math.tanh %1087 : vector<2x128xf32>
    %1089 = vector.extract_strided_slice %1074 {offsets = [0, 384], sizes = [2, 128], strides = [1, 1]} : vector<2x512xf32> to vector<2x128xf32>
    %1090 = arith.negf %1089 : vector<2x128xf32>
    %1091 = math.exp %1090 : vector<2x128xf32>
    %cst_186 = arith.constant 1.000000e+00 : f32
    %1092 = vector.broadcast %cst_186 : f32 to vector<2x128xf32>
    %1093 = arith.addf %1092, %1091 : vector<2x128xf32>
    %1094 = arith.divf %1092, %1093 : vector<2x128xf32>
    %1095 = arith.mulf %1086, %1067 : vector<2x128xf32>
    %1096 = arith.mulf %1080, %1088 : vector<2x128xf32>
    %1097 = arith.addf %1095, %1096 : vector<2x128xf32>
    %1098 = math.tanh %1097 : vector<2x128xf32>
    %1099 = arith.mulf %1094, %1098 : vector<2x128xf32>
    %1100 = vector.extract_strided_slice %1099 {offsets = [0, 0], sizes = [2, 3], strides = [1, 1]} : vector<2x128xf32> to vector<2x3xf32>
    %1101 = vector.extract_strided_slice %1011 {offsets = [3, 0, 0], sizes = [1, 2, 512], strides = [1, 1, 1]} : vector<8x2x512xf32> to vector<1x2x512xf32>
    %1102 = vector.shape_cast %1101 : vector<1x2x512xf32> to vector<2x512xf32>
    %cst_187 = arith.constant dense<0.000000e+00> : vector<2x512xf32>
    %1103 = tpu.matmul %1100, %1005, %cst_187 {dimension_numbers = #tpu.dot_dimension_numbers<[1], [0], [0], [1], [0, 0, 1, 1], [], []>} : vector<2x3xf32>, vector<3x512xf32>, vector<2x512xf32> -> vector<2x512xf32>
    %1104 = arith.addf %1102, %1103 : vector<2x512xf32>
    %1105 = vector.extract_strided_slice %1104 {offsets = [0, 0], sizes = [2, 128], strides = [1, 1]} : vector<2x512xf32> to vector<2x128xf32>
    %1106 = arith.negf %1105 : vector<2x128xf32>
    %1107 = math.exp %1106 : vector<2x128xf32>
    %cst_188 = arith.constant 1.000000e+00 : f32
    %1108 = vector.broadcast %cst_188 : f32 to vector<2x128xf32>
    %1109 = arith.addf %1108, %1107 : vector<2x128xf32>
    %1110 = arith.divf %1108, %1109 : vector<2x128xf32>
    %1111 = vector.extract_strided_slice %1104 {offsets = [0, 128], sizes = [2, 128], strides = [1, 1]} : vector<2x512xf32> to vector<2x128xf32>
    %1112 = arith.negf %1111 : vector<2x128xf32>
    %1113 = math.exp %1112 : vector<2x128xf32>
    %cst_189 = arith.constant 1.000000e+00 : f32
    %1114 = vector.broadcast %cst_189 : f32 to vector<2x128xf32>
    %1115 = arith.addf %1114, %1113 : vector<2x128xf32>
    %1116 = arith.divf %1114, %1115 : vector<2x128xf32>
    %1117 = vector.extract_strided_slice %1104 {offsets = [0, 256], sizes = [2, 128], strides = [1, 1]} : vector<2x512xf32> to vector<2x128xf32>
    %1118 = math.tanh %1117 : vector<2x128xf32>
    %1119 = vector.extract_strided_slice %1104 {offsets = [0, 384], sizes = [2, 128], strides = [1, 1]} : vector<2x512xf32> to vector<2x128xf32>
    %1120 = arith.negf %1119 : vector<2x128xf32>
    %1121 = math.exp %1120 : vector<2x128xf32>
    %cst_190 = arith.constant 1.000000e+00 : f32
    %1122 = vector.broadcast %cst_190 : f32 to vector<2x128xf32>
    %1123 = arith.addf %1122, %1121 : vector<2x128xf32>
    %1124 = arith.divf %1122, %1123 : vector<2x128xf32>
    %1125 = arith.mulf %1116, %1097 : vector<2x128xf32>
    %1126 = arith.mulf %1110, %1118 : vector<2x128xf32>
    %1127 = arith.addf %1125, %1126 : vector<2x128xf32>
    %1128 = math.tanh %1127 : vector<2x128xf32>
    %1129 = arith.mulf %1124, %1128 : vector<2x128xf32>
    %1130 = vector.extract_strided_slice %1129 {offsets = [0, 0], sizes = [2, 3], strides = [1, 1]} : vector<2x128xf32> to vector<2x3xf32>
    %1131 = vector.extract_strided_slice %1011 {offsets = [4, 0, 0], sizes = [1, 2, 512], strides = [1, 1, 1]} : vector<8x2x512xf32> to vector<1x2x512xf32>
    %1132 = vector.shape_cast %1131 : vector<1x2x512xf32> to vector<2x512xf32>
    %cst_191 = arith.constant dense<0.000000e+00> : vector<2x512xf32>
    %1133 = tpu.matmul %1130, %1005, %cst_191 {dimension_numbers = #tpu.dot_dimension_numbers<[1], [0], [0], [1], [0, 0, 1, 1], [], []>} : vector<2x3xf32>, vector<3x512xf32>, vector<2x512xf32> -> vector<2x512xf32>
    %1134 = arith.addf %1132, %1133 : vector<2x512xf32>
    %1135 = vector.extract_strided_slice %1134 {offsets = [0, 0], sizes = [2, 128], strides = [1, 1]} : vector<2x512xf32> to vector<2x128xf32>
    %1136 = arith.negf %1135 : vector<2x128xf32>
    %1137 = math.exp %1136 : vector<2x128xf32>
    %cst_192 = arith.constant 1.000000e+00 : f32
    %1138 = vector.broadcast %cst_192 : f32 to vector<2x128xf32>
    %1139 = arith.addf %1138, %1137 : vector<2x128xf32>
    %1140 = arith.divf %1138, %1139 : vector<2x128xf32>
    %1141 = vector.extract_strided_slice %1134 {offsets = [0, 128], sizes = [2, 128], strides = [1, 1]} : vector<2x512xf32> to vector<2x128xf32>
    %1142 = arith.negf %1141 : vector<2x128xf32>
    %1143 = math.exp %1142 : vector<2x128xf32>
    %cst_193 = arith.constant 1.000000e+00 : f32
    %1144 = vector.broadcast %cst_193 : f32 to vector<2x128xf32>
    %1145 = arith.addf %1144, %1143 : vector<2x128xf32>
    %1146 = arith.divf %1144, %1145 : vector<2x128xf32>
    %1147 = vector.extract_strided_slice %1134 {offsets = [0, 256], sizes = [2, 128], strides = [1, 1]} : vector<2x512xf32> to vector<2x128xf32>
    %1148 = math.tanh %1147 : vector<2x128xf32>
    %1149 = vector.extract_strided_slice %1134 {offsets = [0, 384], sizes = [2, 128], strides = [1, 1]} : vector<2x512xf32> to vector<2x128xf32>
    %1150 = arith.negf %1149 : vector<2x128xf32>
    %1151 = math.exp %1150 : vector<2x128xf32>
    %cst_194 = arith.constant 1.000000e+00 : f32
    %1152 = vector.broadcast %cst_194 : f32 to vector<2x128xf32>
    %1153 = arith.addf %1152, %1151 : vector<2x128xf32>
    %1154 = arith.divf %1152, %1153 : vector<2x128xf32>
    %1155 = arith.mulf %1146, %1127 : vector<2x128xf32>
    %1156 = arith.mulf %1140, %1148 : vector<2x128xf32>
    %1157 = arith.addf %1155, %1156 : vector<2x128xf32>
    %1158 = math.tanh %1157 : vector<2x128xf32>
    %1159 = arith.mulf %1154, %1158 : vector<2x128xf32>
    %1160 = vector.extract_strided_slice %1159 {offsets = [0, 0], sizes = [2, 3], strides = [1, 1]} : vector<2x128xf32> to vector<2x3xf32>
    %1161 = vector.extract_strided_slice %1011 {offsets = [5, 0, 0], sizes = [1, 2, 512], strides = [1, 1, 1]} : vector<8x2x512xf32> to vector<1x2x512xf32>
    %1162 = vector.shape_cast %1161 : vector<1x2x512xf32> to vector<2x512xf32>
    %cst_195 = arith.constant dense<0.000000e+00> : vector<2x512xf32>
    %1163 = tpu.matmul %1160, %1005, %cst_195 {dimension_numbers = #tpu.dot_dimension_numbers<[1], [0], [0], [1], [0, 0, 1, 1], [], []>} : vector<2x3xf32>, vector<3x512xf32>, vector<2x512xf32> -> vector<2x512xf32>
    %1164 = arith.addf %1162, %1163 : vector<2x512xf32>
    %1165 = vector.extract_strided_slice %1164 {offsets = [0, 0], sizes = [2, 128], strides = [1, 1]} : vector<2x512xf32> to vector<2x128xf32>
    %1166 = arith.negf %1165 : vector<2x128xf32>
    %1167 = math.exp %1166 : vector<2x128xf32>
    %cst_196 = arith.constant 1.000000e+00 : f32
    %1168 = vector.broadcast %cst_196 : f32 to vector<2x128xf32>
    %1169 = arith.addf %1168, %1167 : vector<2x128xf32>
    %1170 = arith.divf %1168, %1169 : vector<2x128xf32>
    %1171 = vector.extract_strided_slice %1164 {offsets = [0, 128], sizes = [2, 128], strides = [1, 1]} : vector<2x512xf32> to vector<2x128xf32>
    %1172 = arith.negf %1171 : vector<2x128xf32>
    %1173 = math.exp %1172 : vector<2x128xf32>
    %cst_197 = arith.constant 1.000000e+00 : f32
    %1174 = vector.broadcast %cst_197 : f32 to vector<2x128xf32>
    %1175 = arith.addf %1174, %1173 : vector<2x128xf32>
    %1176 = arith.divf %1174, %1175 : vector<2x128xf32>
    %1177 = vector.extract_strided_slice %1164 {offsets = [0, 256], sizes = [2, 128], strides = [1, 1]} : vector<2x512xf32> to vector<2x128xf32>
    %1178 = math.tanh %1177 : vector<2x128xf32>
    %1179 = vector.extract_strided_slice %1164 {offsets = [0, 384], sizes = [2, 128], strides = [1, 1]} : vector<2x512xf32> to vector<2x128xf32>
    %1180 = arith.negf %1179 : vector<2x128xf32>
    %1181 = math.exp %1180 : vector<2x128xf32>
    %cst_198 = arith.constant 1.000000e+00 : f32
    %1182 = vector.broadcast %cst_198 : f32 to vector<2x128xf32>
    %1183 = arith.addf %1182, %1181 : vector<2x128xf32>
    %1184 = arith.divf %1182, %1183 : vector<2x128xf32>
    %1185 = arith.mulf %1176, %1157 : vector<2x128xf32>
    %1186 = arith.mulf %1170, %1178 : vector<2x128xf32>
    %1187 = arith.addf %1185, %1186 : vector<2x128xf32>
    %1188 = math.tanh %1187 : vector<2x128xf32>
    %1189 = arith.mulf %1184, %1188 : vector<2x128xf32>
    %1190 = vector.extract_strided_slice %1189 {offsets = [0, 0], sizes = [2, 3], strides = [1, 1]} : vector<2x128xf32> to vector<2x3xf32>
    %1191 = vector.extract_strided_slice %1011 {offsets = [6, 0, 0], sizes = [1, 2, 512], strides = [1, 1, 1]} : vector<8x2x512xf32> to vector<1x2x512xf32>
    %1192 = vector.shape_cast %1191 : vector<1x2x512xf32> to vector<2x512xf32>
    %cst_199 = arith.constant dense<0.000000e+00> : vector<2x512xf32>
    %1193 = tpu.matmul %1190, %1005, %cst_199 {dimension_numbers = #tpu.dot_dimension_numbers<[1], [0], [0], [1], [0, 0, 1, 1], [], []>} : vector<2x3xf32>, vector<3x512xf32>, vector<2x512xf32> -> vector<2x512xf32>
    %1194 = arith.addf %1192, %1193 : vector<2x512xf32>
    %1195 = vector.extract_strided_slice %1194 {offsets = [0, 0], sizes = [2, 128], strides = [1, 1]} : vector<2x512xf32> to vector<2x128xf32>
    %1196 = arith.negf %1195 : vector<2x128xf32>
    %1197 = math.exp %1196 : vector<2x128xf32>
    %cst_200 = arith.constant 1.000000e+00 : f32
    %1198 = vector.broadcast %cst_200 : f32 to vector<2x128xf32>
    %1199 = arith.addf %1198, %1197 : vector<2x128xf32>
    %1200 = arith.divf %1198, %1199 : vector<2x128xf32>
    %1201 = vector.extract_strided_slice %1194 {offsets = [0, 128], sizes = [2, 128], strides = [1, 1]} : vector<2x512xf32> to vector<2x128xf32>
    %1202 = arith.negf %1201 : vector<2x128xf32>
    %1203 = math.exp %1202 : vector<2x128xf32>
    %cst_201 = arith.constant 1.000000e+00 : f32
    %1204 = vector.broadcast %cst_201 : f32 to vector<2x128xf32>
    %1205 = arith.addf %1204, %1203 : vector<2x128xf32>
    %1206 = arith.divf %1204, %1205 : vector<2x128xf32>
    %1207 = vector.extract_strided_slice %1194 {offsets = [0, 256], sizes = [2, 128], strides = [1, 1]} : vector<2x512xf32> to vector<2x128xf32>
    %1208 = math.tanh %1207 : vector<2x128xf32>
    %1209 = vector.extract_strided_slice %1194 {offsets = [0, 384], sizes = [2, 128], strides = [1, 1]} : vector<2x512xf32> to vector<2x128xf32>
    %1210 = arith.negf %1209 : vector<2x128xf32>
    %1211 = math.exp %1210 : vector<2x128xf32>
    %cst_202 = arith.constant 1.000000e+00 : f32
    %1212 = vector.broadcast %cst_202 : f32 to vector<2x128xf32>
    %1213 = arith.addf %1212, %1211 : vector<2x128xf32>
    %1214 = arith.divf %1212, %1213 : vector<2x128xf32>
    %1215 = arith.mulf %1206, %1187 : vector<2x128xf32>
    %1216 = arith.mulf %1200, %1208 : vector<2x128xf32>
    %1217 = arith.addf %1215, %1216 : vector<2x128xf32>
    %1218 = math.tanh %1217 : vector<2x128xf32>
    %1219 = arith.mulf %1214, %1218 : vector<2x128xf32>
    %1220 = vector.extract_strided_slice %1219 {offsets = [0, 0], sizes = [2, 3], strides = [1, 1]} : vector<2x128xf32> to vector<2x3xf32>
    %1221 = vector.extract_strided_slice %1011 {offsets = [7, 0, 0], sizes = [1, 2, 512], strides = [1, 1, 1]} : vector<8x2x512xf32> to vector<1x2x512xf32>
    %1222 = vector.shape_cast %1221 : vector<1x2x512xf32> to vector<2x512xf32>
    %cst_203 = arith.constant dense<0.000000e+00> : vector<2x512xf32>
    %1223 = tpu.matmul %1220, %1005, %cst_203 {dimension_numbers = #tpu.dot_dimension_numbers<[1], [0], [0], [1], [0, 0, 1, 1], [], []>} : vector<2x3xf32>, vector<3x512xf32>, vector<2x512xf32> -> vector<2x512xf32>
    %1224 = arith.addf %1222, %1223 : vector<2x512xf32>
    %1225 = vector.extract_strided_slice %1224 {offsets = [0, 0], sizes = [2, 128], strides = [1, 1]} : vector<2x512xf32> to vector<2x128xf32>
    %1226 = arith.negf %1225 : vector<2x128xf32>
    %1227 = math.exp %1226 : vector<2x128xf32>
    %cst_204 = arith.constant 1.000000e+00 : f32
    %1228 = vector.broadcast %cst_204 : f32 to vector<2x128xf32>
    %1229 = arith.addf %1228, %1227 : vector<2x128xf32>
    %1230 = arith.divf %1228, %1229 : vector<2x128xf32>
    %1231 = vector.extract_strided_slice %1224 {offsets = [0, 128], sizes = [2, 128], strides = [1, 1]} : vector<2x512xf32> to vector<2x128xf32>
    %1232 = arith.negf %1231 : vector<2x128xf32>
    %1233 = math.exp %1232 : vector<2x128xf32>
    %cst_205 = arith.constant 1.000000e+00 : f32
    %1234 = vector.broadcast %cst_205 : f32 to vector<2x128xf32>
    %1235 = arith.addf %1234, %1233 : vector<2x128xf32>
    %1236 = arith.divf %1234, %1235 : vector<2x128xf32>
    %1237 = vector.extract_strided_slice %1224 {offsets = [0, 256], sizes = [2, 128], strides = [1, 1]} : vector<2x512xf32> to vector<2x128xf32>
    %1238 = math.tanh %1237 : vector<2x128xf32>
    %1239 = vector.extract_strided_slice %1224 {offsets = [0, 384], sizes = [2, 128], strides = [1, 1]} : vector<2x512xf32> to vector<2x128xf32>
    %1240 = arith.negf %1239 : vector<2x128xf32>
    %1241 = math.exp %1240 : vector<2x128xf32>
    %cst_206 = arith.constant 1.000000e+00 : f32
    %1242 = vector.broadcast %cst_206 : f32 to vector<2x128xf32>
    %1243 = arith.addf %1242, %1241 : vector<2x128xf32>
    %1244 = arith.divf %1242, %1243 : vector<2x128xf32>
    %1245 = arith.mulf %1236, %1217 : vector<2x128xf32>
    %1246 = arith.mulf %1230, %1238 : vector<2x128xf32>
    %1247 = arith.addf %1245, %1246 : vector<2x128xf32>
    %1248 = math.tanh %1247 : vector<2x128xf32>
    %1249 = arith.mulf %1244, %1248 : vector<2x128xf32>
    %1250 = vector.extract_strided_slice %1249 {offsets = [0, 0], sizes = [2, 3], strides = [1, 1]} : vector<2x128xf32> to vector<2x3xf32>
    %c0_207 = arith.constant 0 : index
    %c0_208 = arith.constant 0 : index
    %1251 = vector.load %arg4[%c0_207, %c0_208] : memref<3x3xf32, #tpu.memory_space<vmem>>, vector<3x3xf32>
    %cst_209 = arith.constant dense<0.000000e+00> : vector<2x3xf32>
    %1252 = tpu.matmul %1250, %1251, %cst_209 {dimension_numbers = #tpu.dot_dimension_numbers<[1], [0], [0], [1], [0, 0, 1, 1], [], []>} : vector<2x3xf32>, vector<3x3xf32>, vector<2x3xf32> -> vector<2x3xf32>
    %c0_210 = arith.constant 0 : index
    %c0_211 = arith.constant 0 : index
    %1253 = vector.load %arg5[%c0_210, %c0_211] : memref<1x3xf32, #tpu.memory_space<vmem>>, vector<1x3xf32>
    %1254 = vector.broadcast %1253 : vector<1x3xf32> to vector<2x3xf32>
    %1255 = arith.addf %1252, %1254 : vector<2x3xf32>
    %c7 = arith.constant 7 : index
    %c0_212 = arith.constant 0 : index
    %c0_213 = arith.constant 0 : index
    %1256 = vector.load %arg0[%c7, %c0_212, %c0_213] : memref<8x2x3xf32, #tpu.memory_space<vmem>>, vector<1x2x3xf32>
    %1257 = vector.shape_cast %1256 : vector<1x2x3xf32> to vector<2x3xf32>
    %cst_214 = arith.constant 1.000000e+00 : f32
    %1258 = vector.broadcast %cst_214 : f32 to vector<2x3xf32>
    %1259 = arith.addf %1258, %1255 : vector<2x3xf32>
    %1260 = arith.mulf %1259, %1257 : vector<2x3xf32>
    %cst_215 = arith.constant 0.000000e+00 : f32
    %1261 = vector.broadcast %cst_215 : f32 to vector<2x3xf32>
    %1262 = arith.maximumf %1260, %1261 : vector<2x3xf32>
    %c0_216 = arith.constant 0 : index
    %c0_217 = arith.constant 0 : index
    %1263 = vector.load %arg6[%c0_216, %c0_217] : memref<2x3xf32, #tpu.memory_space<vmem>>, vector<2x3xf32>
    tpu.vector_store %arg6[%c0_216, %c0_217], %1262 {strides = array<i32>} : memref<2x3xf32, #tpu.memory_space<vmem>>, vector<2x3xf32>,
    return
  }
}

</mosaic_0001>

<llo_original>
// kernel: tpu_custom_call.1
$region0: #{tpu_custom_call.1}
  #allocation0 [shape = 'u32[]', space=smem, size = 0x4, offset = 0x4, fixed_abs, tag = 'smem constant byte address 0x4 - core index']
  #allocation1 [shape = 'u32[72,128]{1,0:T(1,128)}', space=vmem, size = 0x9000, scoped, tag = 'internal scratch']
  %s0 = inlined_call_operand.vmem [shape: f32[8,2,3], index: 0, kind: input, shape index: {}]
  %s1 = inlined_call_operand.hbm [shape: f32[5,3,512], index: 1, kind: input, shape index: {}]
  %s2 = inlined_call_operand.hbm [shape: f32[5,3,512], index: 2, kind: input, shape index: {}]
  %s3 = inlined_call_operand.vmem [shape: f32[5,1,512], index: 3, kind: input, shape index: {}]
  %s4 = inlined_call_operand.vmem [shape: f32[3,3], index: 4, kind: input, shape index: {}]
  %s5 = inlined_call_operand.vmem [shape: f32[1,3], index: 5, kind: input, shape index: {}]
  %s6 = inlined_call_operand.hbm [shape: f32[2,3], index: 6, kind: output, shape index: {}]
  %s7 = sld [smem:[#allocation0]]
  $region42: #{tpu_custom_call.1} parent=0
    _
  %s9 = ssub.s32 1, %s7
  %s10 = scalar_select 0, %s9, %s7
  $region1: #{tpu_custom_call.1} parent=0
    #allocation2 [shape = 'u8[40960]{0}', space=vmem, size = 0xa000, scoped, tag = 'input window, operand 1, single buffered']
    #allocation3 [shape = 's32[1]{0}', space=sflag, size = 0x4, scoped, tag = 'scoped memory for tpu_custom_call.1']
    #allocation4 [shape = 's32[1]{0}', space=sflag, size = 0x4, scoped, tag = 'scoped memory for tpu_custom_call.1']
    #allocation5 [shape = 'u8[40960]{0}', space=vmem, size = 0xa000, scoped, tag = 'input window, operand 2, single buffered']
    #allocation6 [shape = 's32[1]{0}', space=sflag, size = 0x4, scoped, tag = 'scoped memory for tpu_custom_call.1']
    #allocation7 [shape = 'u8[1024]{0}', space=vmem, size = 0x400, scoped, tag = 'output window, operand 0, single buffered']
    %11 = vsyncpa [#allocation3], 0
    %12 = vsyncpa [#allocation6], 0
    %13 = vsyncpa [#allocation4], 0
    // Predicated region
    $region2: #{tpu_custom_call.1} parent=1 // pred_check
      _
    $region3: #{tpu_custom_call.1} parent=1 // pred_check_branch
      %15 = sbr.rel (0) target = $region5
    $region4: #{tpu_custom_call.1} parent=1 // pred_region
      _
    $region5: #{tpu_custom_call.1} parent=1 // pred_fallthru
      _
    // Predicated region
    $region6: #{tpu_custom_call.1} parent=1 // pred_check
      _
    $region7: #{tpu_custom_call.1} parent=1 // pred_check_branch
      %17 = sbr.rel (0) target = $region9
    $region8: #{tpu_custom_call.1} parent=1 // pred_region
      %19 = vsyncadd [#allocation3], 0
      %s20 = sshll.u32 %s1, 4
      %s21 = int_to_ptr.hbm [resolvable:$true] %s20
      %s22 = sshll.u32 [#allocation2], 4
      %s23 = int_to_ptr.vmem [resolvable:$true] %s22
      %28 = dma.hbm_to_vmem [thread:$0]  %s21, 1280, %s23, [#allocation3], 256, 256, 16
    $region9: #{tpu_custom_call.1} parent=1 // pred_fallthru
      _
    // Predicated region
    $region10: #{tpu_custom_call.1} parent=1 // pred_check
      _
    $region11: #{tpu_custom_call.1} parent=1 // pred_check_branch
      %30 = sbr.rel (0) target = $region13
    $region12: #{tpu_custom_call.1} parent=1 // pred_region
      %32 = vsyncadd [#allocation6], 0
      %s33 = sshll.u32 %s2, 4
      %s34 = int_to_ptr.hbm [resolvable:$true] %s33
      %s35 = sshll.u32 [#allocation5], 4
      %s36 = int_to_ptr.vmem [resolvable:$true] %s35
      %41 = dma.hbm_to_vmem [thread:$0]  %s34, 1280, %s36, [#allocation6], 256, 256, 16
    $region13: #{tpu_custom_call.1} parent=1 // pred_fallthru
      _
    // Predicated region
    $region14: #{tpu_custom_call.1} parent=1 // pred_check
      _
    $region15: #{tpu_custom_call.1} parent=1 // pred_check_branch
      %43 = sbr.rel (0) target = $region17
    $region16: #{tpu_custom_call.1} parent=1 // pred_region
      _
    $region17: #{tpu_custom_call.1} parent=1 // pred_fallthru
      _
    // Predicated region
    $region18: #{tpu_custom_call.1} parent=1 // pred_check
      _
    $region19: #{tpu_custom_call.1} parent=1 // pred_check_branch
      %45 = sbr.rel (0) target = $region21
    $region20: #{tpu_custom_call.1} parent=1 // pred_region
      _
    $region21: #{tpu_custom_call.1} parent=1 // pred_fallthru
      _
    // Predicated region
    $region22: #{tpu_custom_call.1} parent=1 // pred_check
      _
    $region23: #{tpu_custom_call.1} parent=1 // pred_check_branch
      %47 = sbr.rel (0) target = $region25
    $region24: #{tpu_custom_call.1} parent=1 // pred_region
      _
    $region25: #{tpu_custom_call.1} parent=1 // pred_fallthru
      _
    // Predicated region
    $region26: #{tpu_custom_call.1} parent=1 // pred_check
      _
    $region27: #{tpu_custom_call.1} parent=1 // pred_check_branch
      %49 = sbr.rel (0) target = $region29
    $region28: #{tpu_custom_call.1} parent=1 // pred_region
      %51 = dma.done [#allocation3], 1280
    $region29: #{tpu_custom_call.1} parent=1 // pred_fallthru
      _
    // Predicated region
    $region30: #{tpu_custom_call.1} parent=1 // pred_check
      _
    $region31: #{tpu_custom_call.1} parent=1 // pred_check_branch
      %53 = sbr.rel (0) target = $region33
    $region32: #{tpu_custom_call.1} parent=1 // pred_region
      %55 = dma.done [#allocation6], 1280
    $region33: #{tpu_custom_call.1} parent=1 // pred_fallthru
      _
    %v56 = vld [vmem:[%s0] sm:$0x3]
    %v57 = vld [vmem:[%s0 + $0x2] sm:$0x3]
    %v58 = vld [vmem:[%s0 + $0x4] sm:$0x3]
    %v59 = vld [vmem:[%s0 + $0x6] sm:$0x3]
    %v60 = vld [vmem:[%s0 + $0x8] sm:$0x3]
    %v61 = vld [vmem:[%s0 + $0xa] sm:$0x3]
    %v62 = vld [vmem:[%s0 + $0xc] sm:$0x3]
    %v63 = vld [vmem:[%s0 + $0xe] sm:$0x3]
    %v64 = vld [vmem:[#allocation2] sm:$0x77]
    %v65 = vld [vmem:[#allocation2 + $0x8] sm:$0x77]
    %v66 = vld [vmem:[#allocation5] sm:$0x77]
    %v67 = vld [vmem:[#allocation5 + $0x8] sm:$0x77]
    %v68 = vld [vmem:[%s3] sm:$0xf]
    %v70 = vperm.slane %v68, 0
    %v71 = vperm.slane %v68, 1
    %v72 = vperm.slane %v68, 2
    %v73 = vperm.slane %v68, 3
    %86 = vst [vmem:[#allocation1] ss:$4 sm:$0xff] %v56
    %s87 = scalar_lea.vmem [#allocation1], 1
    %88 = vst [vmem:[%s87] ss:$4 sm:$0xff] %v57
    %s89 = scalar_lea.vmem [#allocation1], 2
    %90 = vst [vmem:[%s89] ss:$4 sm:$0xff] %v58
    %s91 = scalar_lea.vmem [#allocation1], 3
    %92 = vst [vmem:[%s91] ss:$4 sm:$0xff] %v59
    %s93 = scalar_lea.vmem [#allocation1], 32
    %94 = vst [vmem:[%s93] ss:$4 sm:$0xff] %v60
    %s95 = scalar_lea.vmem [#allocation1], 33
    %96 = vst [vmem:[%s95] ss:$4 sm:$0xff] %v61
    %s97 = scalar_lea.vmem [#allocation1], 34
    %98 = vst [vmem:[%s97] ss:$4 sm:$0xff] %v62
    %s99 = scalar_lea.vmem [#allocation1], 35
    %100 = vst [vmem:[%s99] ss:$4 sm:$0xff] %v63
    %v101 = vld.sshfl [vmem:[#allocation1] sm:$0xff pattern:$0x73625140]
    %v102 = vld.sshfl [vmem:[#allocation1 + $0x20] sm:$0xff pattern:$0x73625140]
    %105 = vst [vmem:[#allocation1] ss:$2 sm:$0xff] %v64
    %s106 = scalar_lea.vmem [#allocation1], 16
    %107 = vst [vmem:[%s106] ss:$2 sm:$0xff] %v65
    %v108 = vld.sshfl [vmem:[#allocation1] sm:$0xff pattern:$0x75316420]
    %v109 = vld.sshfl [vmem:[#allocation1 + $0x8] sm:$0xff pattern:$0x75316420]
    %v110 = vld.sshfl [vmem:[#allocation1 + $0x10] sm:$0xff pattern:$0x75316420]
    %v111 = vld.sshfl [vmem:[#allocation1 + $0x18] sm:$0xff pattern:$0x75316420]
    %vm112 = vcmask 23552
    %v113 = vsel %vm112, %v101, 0
    %v115 = vsel %vm112, %v102, 0
    %vm117 = vcmask 1042432
    %v118 = vsel %vm117, %v108, 0
    %v120 = vsel %vm117, %v109, 0
    %v122 = vsel %vm117, %v110, 0
    %v124 = vsel %vm117, %v111, 0
    %126 = vmatpush.msra.mxu0 0.0
    %127 = vmatpush.msra.mxu0 0.0
    %128 = vmatpush.msra.mxu0 0.0
    %129 = vmatpush.msra.mxu0 0.0
    %130 = vmatpush.msra.mxu0 0.0
    %131 = vmatpush.msra.mxu0 0.0
    %132 = vmatpush.msra.mxu0 0.0
    %133 = vmatpush.msra.mxu0 0.0
    %134 = vmatpush.msra.mxu0 0.0
    %135 = vmatpush.msra.mxu0 0.0
    %136 = vmatpush.msra.mxu0 0.0
    %137 = vmatpush.msra.mxu0 0.0
    %138 = vmatpush.msra.mxu0 0.0
    %139 = vmatpush.msra.mxu0 0.0
    %140 = vmatpush.msra.mxu0 0.0
    %141 = vmatpush.msra.mxu0 %v118
    %142 = vmatmul.f32.gmra.mxu0 %v113
    %v143 = vpop.f32.mrf.mxu0
    %v144 = vadd.f32 %v70, %v143
    %145 = vmatmul.f32.gmra.mxu0 %v115
    %v146 = vpop.f32.mrf.mxu0
    %v147 = vadd.f32 %v70, %v146
    %148 = vdwg.mxu0
    %149 = vmatpush.msra.mxu0 0.0
    %150 = vmatpush.msra.mxu0 0.0
    %151 = vmatpush.msra.mxu0 0.0
    %152 = vmatpush.msra.mxu0 0.0
    %153 = vmatpush.msra.mxu0 0.0
    %154 = vmatpush.msra.mxu0 0.0
    %155 = vmatpush.msra.mxu0 0.0
    %156 = vmatpush.msra.mxu0 0.0
    %157 = vmatpush.msra.mxu0 0.0
    %158 = vmatpush.msra.mxu0 0.0
    %159 = vmatpush.msra.mxu0 0.0
    %160 = vmatpush.msra.mxu0 0.0
    %161 = vmatpush.msra.mxu0 0.0
    %162 = vmatpush.msra.mxu0 0.0
    %163 = vmatpush.msra.mxu0 0.0
    %164 = vmatpush.msra.mxu0 %v120
    %165 = vmatmul.f32.gmra.mxu0 %v113
    %v166 = vpop.f32.mrf.mxu0
    %v167 = vadd.f32 %v71, %v166
    %168 = vmatmul.f32.gmra.mxu0 %v115
    %v169 = vpop.f32.mrf.mxu0
    %v170 = vadd.f32 %v71, %v169
    %171 = vdwg.mxu0
    %172 = vmatpush.msra.mxu0 0.0
    %173 = vmatpush.msra.mxu0 0.0
    %174 = vmatpush.msra.mxu0 0.0
    %175 = vmatpush.msra.mxu0 0.0
    %176 = vmatpush.msra.mxu0 0.0
    %177 = vmatpush.msra.mxu0 0.0
    %178 = vmatpush.msra.mxu0 0.0
    %179 = vmatpush.msra.mxu0 0.0
    %180 = vmatpush.msra.mxu0 0.0
    %181 = vmatpush.msra.mxu0 0.0
    %182 = vmatpush.msra.mxu0 0.0
    %183 = vmatpush.msra.mxu0 0.0
    %184 = vmatpush.msra.mxu0 0.0
    %185 = vmatpush.msra.mxu0 0.0
    %186 = vmatpush.msra.mxu0 0.0
    %187 = vmatpush.msra.mxu0 %v122
    %188 = vmatmul.f32.gmra.mxu0 %v113
    %v189 = vpop.f32.mrf.mxu0
    %v190 = vadd.f32 %v72, %v189
    %191 = vmatmul.f32.gmra.mxu0 %v115
    %v192 = vpop.f32.mrf.mxu0
    %v193 = vadd.f32 %v72, %v192
    %194 = vdwg.mxu0
    %195 = vmatpush.msra.mxu0 0.0
    %196 = vmatpush.msra.mxu0 0.0
    %197 = vmatpush.msra.mxu0 0.0
    %198 = vmatpush.msra.mxu0 0.0
    %199 = vmatpush.msra.mxu0 0.0
    %200 = vmatpush.msra.mxu0 0.0
    %201 = vmatpush.msra.mxu0 0.0
    %202 = vmatpush.msra.mxu0 0.0
    %203 = vmatpush.msra.mxu0 0.0
    %204 = vmatpush.msra.mxu0 0.0
    %205 = vmatpush.msra.mxu0 0.0
    %206 = vmatpush.msra.mxu0 0.0
    %207 = vmatpush.msra.mxu0 0.0
    %208 = vmatpush.msra.mxu0 0.0
    %209 = vmatpush.msra.mxu0 0.0
    %210 = vmatpush.msra.mxu0 %v124
    %211 = vmatmul.f32.gmra.mxu0 %v113
    %v212 = vpop.f32.mrf.mxu0
    %v213 = vadd.f32 %v73, %v212
    %214 = vmatmul.f32.gmra.mxu0 %v115
    %v215 = vpop.f32.mrf.mxu0
    %v216 = vadd.f32 %v73, %v215
    %217 = vdwg.mxu0
    %v226 = vrot.slane %v167, 6
    %v227 = vrot.slane %v190, 4
    %v228 = vrot.slane %v213, 2
    %v229 = vrot.slane %v170, 6
    %v230 = vrot.slane %v193, 4
    %v231 = vrot.slane %v216, 2
    %vm232 = vcmask 1041408
    %v233 = vsel %vm232, %v144, %v226
    %vm234 = vcmask 1045508
    %v235 = vsel %vm234, %v227, %v228
    %vm236 = vcmask 1043456
    %v237 = vsel %vm236, %v233, %v235
    %vm238 = vcmask 1043458
    %v239 = vsel %vm238, %v144, %v226
    %vm240 = vcmask 1045504
    %v241 = vsel %vm240, %v228, %v227
    %vm242 = vcmask 1045506
    %v243 = vsel %vm242, %v239, %v241
    %v244 = vrot.slane %v243, 2
    %v245 = vsel %vm234, %v144, %v226
    %v246 = vsel %vm232, %v227, %v228
    %v247 = vsel %vm236, %v246, %v245
    %v248 = vrot.slane %v247, 4
    %v249 = vsel %vm240, %v226, %v144
    %v250 = vsel %vm238, %v227, %v228
    %v251 = vsel %vm242, %v250, %v249
    %v252 = vrot.slane %v251, 6
    %v253 = vsel %vm232, %v147, %v229
    %v254 = vsel %vm234, %v230, %v231
    %v255 = vsel %vm236, %v253, %v254
    %v256 = vsel %vm238, %v147, %v229
    %v257 = vsel %vm240, %v231, %v230
    %v258 = vsel %vm242, %v256, %v257
    %v259 = vrot.slane %v258, 2
    %v260 = vsel %vm234, %v147, %v229
    %v261 = vsel %vm232, %v230, %v231
    %v262 = vsel %vm236, %v261, %v260
    %v263 = vrot.slane %v262, 4
    %v264 = vsel %vm240, %v229, %v147
    %v265 = vsel %vm238, %v230, %v231
    %v266 = vsel %vm242, %v265, %v264
    %v267 = vrot.slane %v266, 6
    %v276 = vxor.u32 %v237, 2147483648
    %v277 = vmul.f32 %v276, 1.442695
    %v278 = vpow.pop %v277
    %v279 = vadd.f32 %v278, 1.0
    %v280 = vrcp.pop %v279
    %v281 = vmul.f32 %v279, %v280
    %v282 = vsub.f32 1.0, %v281
    %v283 = vmul.f32 %v280, %v282
    %v284 = vadd.f32 %v280, %v283
    %vm285 = vweird.f32 %v279
    %vm286 = vweird.f32 %v280
    %vm287 = vmor %vm285, %vm286
    %v288 = vsel %vm287, %v280, %v284
    %v289 = vand.u32 2147483647, %v279
    %vm290 = vcmp.eq.f32.partialorder %v289, 8.507059e+37
    %v291 = vand.u32 %v279, 2147483648
    %v292 = vor.u32 1.1754944e-38, %v291
    %v293 = vsel %vm290, %v292, %v288
    %v294 = vmul.f32 1.0, %v293
    %v295 = vrot.slane %v237, 2
    %v297 = vxor.u32 %v295, 2147483648
    %v298 = vmul.f32 %v297, 1.442695
    %v299 = vpow.pop %v298
    %v300 = vadd.f32 %v299, 1.0
    %v301 = vrcp.pop %v300
    %v302 = vmul.f32 %v300, %v301
    %v303 = vsub.f32 1.0, %v302
    %v304 = vmul.f32 %v301, %v303
    %v305 = vadd.f32 %v301, %v304
    %vm306 = vweird.f32 %v300
    %vm307 = vweird.f32 %v301
    %vm308 = vmor %vm306, %vm307
    %v309 = vsel %vm308, %v301, %v305
    %v310 = vand.u32 2147483647, %v300
    %vm311 = vcmp.eq.f32.partialorder %v310, 8.507059e+37
    %v312 = vand.u32 %v300, 2147483648
    %v313 = vor.u32 1.1754944e-38, %v312
    %v314 = vsel %vm311, %v313, %v309
    %v315 = vmul.f32 1.0, %v314
    %v316 = vrot.slane %v237, 4
    %v318 = vtanh.pop %v316
    %v319 = vrot.slane %v237, 6
    %v321 = vxor.u32 %v319, 2147483648
    %v322 = vmul.f32 %v321, 1.442695
    %v323 = vpow.pop %v322
    %v324 = vadd.f32 %v323, 1.0
    %v325 = vrcp.pop %v324
    %v326 = vmul.f32 %v324, %v325
    %v327 = vsub.f32 1.0, %v326
    %v328 = vmul.f32 %v325, %v327
    %v329 = vadd.f32 %v325, %v328
    %vm330 = vweird.f32 %v324
    %vm331 = vweird.f32 %v325
    %vm332 = vmor %vm330, %vm331
    %v333 = vsel %vm332, %v325, %v329
    %v334 = vand.u32 2147483647, %v324
    %vm335 = vcmp.eq.f32.partialorder %v334, 8.507059e+37
    %v336 = vand.u32 %v324, 2147483648
    %v337 = vor.u32 1.1754944e-38, %v336
    %v338 = vsel %vm335, %v337, %v333
    %v339 = vmul.f32 1.0, %v338
    %v340 = vmul.f32 %v315, 0.0
    %v341 = vmul.f32 %v294, %v318
    %v342 = vadd.f32 %v340, %v341
    %v343 = vtanh.pop %v342
    %v344 = vmul.f32 %v339, %v343
    %347 = vst [vmem:[#allocation1] ss:$2 sm:$0xff] %v66
    %s348 = scalar_lea.vmem [#allocation1], 16
    %349 = vst [vmem:[%s348] ss:$2 sm:$0xff] %v67
    %v350 = vld.sshfl [vmem:[#allocation1] sm:$0xff pattern:$0x75316420]
    %v351 = vld.sshfl [vmem:[#allocation1 + $0x8] sm:$0xff pattern:$0x75316420]
    %v352 = vld.sshfl [vmem:[#allocation1 + $0x10] sm:$0xff pattern:$0x75316420]
    %v353 = vld.sshfl [vmem:[#allocation1 + $0x18] sm:$0xff pattern:$0x75316420]
    %v355 = vsel %vm112, %v344, 0
    %v357 = vsel %vm117, %v350, 0
    %v359 = vsel %vm117, %v351, 0
    %v361 = vsel %vm117, %v352, 0
    %v363 = vsel %vm117, %v353, 0
    %365 = vmatpush.msra.mxu0 0.0
    %366 = vmatpush.msra.mxu0 0.0
    %367 = vmatpush.msra.mxu0 0.0
    %368 = vmatpush.msra.mxu0 0.0
    %369 = vmatpush.msra.mxu0 0.0
    %370 = vmatpush.msra.mxu0 0.0
    %371 = vmatpush.msra.mxu0 0.0
    %372 = vmatpush.msra.mxu0 0.0
    %373 = vmatpush.msra.mxu0 0.0
    %374 = vmatpush.msra.mxu0 0.0
    %375 = vmatpush.msra.mxu0 0.0
    %376 = vmatpush.msra.mxu0 0.0
    %377 = vmatpush.msra.mxu0 0.0
    %378 = vmatpush.msra.mxu0 0.0
    %379 = vmatpush.msra.mxu0 0.0
    %380 = vmatpush.msra.mxu0 %v357
    %381 = vmatmul.f32.gmra.mxu0 %v355
    %v382 = vpop.f32.mrf.mxu0
    %v383 = vadd.f32 0.0, %v382
    %384 = vdwg.mxu0
    %385 = vmatpush.msra.mxu0 0.0
    %386 = vmatpush.msra.mxu0 0.0
    %387 = vmatpush.msra.mxu0 0.0
    %388 = vmatpush.msra.mxu0 0.0
    %389 = vmatpush.msra.mxu0 0.0
    %390 = vmatpush.msra.mxu0 0.0
    %391 = vmatpush.msra.mxu0 0.0
    %392 = vmatpush.msra.mxu0 0.0
    %393 = vmatpush.msra.mxu0 0.0
    %394 = vmatpush.msra.mxu0 0.0
    %395 = vmatpush.msra.mxu0 0.0
    %396 = vmatpush.msra.mxu0 0.0
    %397 = vmatpush.msra.mxu0 0.0
    %398 = vmatpush.msra.mxu0 0.0
    %399 = vmatpush.msra.mxu0 0.0
    %400 = vmatpush.msra.mxu0 %v359
    %401 = vmatmul.f32.gmra.mxu0 %v355
    %v402 = vpop.f32.mrf.mxu0
    %v403 = vadd.f32 0.0, %v402
    %404 = vdwg.mxu0
    %405 = vmatpush.msra.mxu0 0.0
    %406 = vmatpush.msra.mxu0 0.0
    %407 = vmatpush.msra.mxu0 0.0
    %408 = vmatpush.msra.mxu0 0.0
    %409 = vmatpush.msra.mxu0 0.0
    %410 = vmatpush.msra.mxu0 0.0
    %411 = vmatpush.msra.mxu0 0.0
    %412 = vmatpush.msra.mxu0 0.0
    %413 = vmatpush.msra.mxu0 0.0
    %414 = vmatpush.msra.mxu0 0.0
    %415 = vmatpush.msra.mxu0 0.0
    %416 = vmatpush.msra.mxu0 0.0
    %417 = vmatpush.msra.mxu0 0.0
    %418 = vmatpush.msra.mxu0 0.0
    %419 = vmatpush.msra.mxu0 0.0
    %420 = vmatpush.msra.mxu0 %v361
    %421 = vmatmul.f32.gmra.mxu0 %v355
    %v422 = vpop.f32.mrf.mxu0
    %v423 = vadd.f32 0.0, %v422
    %424 = vdwg.mxu0
    %425 = vmatpush.msra.mxu0 0.0
    %426 = vmatpush.msra.mxu0 0.0
    %427 = vmatpush.msra.mxu0 0.0
    %428 = vmatpush.msra.mxu0 0.0
    %429 = vmatpush.msra.mxu0 0.0
    %430 = vmatpush.msra.mxu0 0.0
    %431 = vmatpush.msra.mxu0 0.0
    %432 = vmatpush.msra.mxu0 0.0
    %433 = vmatpush.msra.mxu0 0.0
    %434 = vmatpush.msra.mxu0 0.0
    %435 = vmatpush.msra.mxu0 0.0
    %436 = vmatpush.msra.mxu0 0.0
    %437 = vmatpush.msra.mxu0 0.0
    %438 = vmatpush.msra.mxu0 0.0
    %439 = vmatpush.msra.mxu0 0.0
    %440 = vmatpush.msra.mxu0 %v363
    %441 = vmatmul.f32.gmra.mxu0 %v355
    %v442 = vpop.f32.mrf.mxu0
    %v443 = vadd.f32 0.0, %v442
    %444 = vdwg.mxu0
    %v449 = vrot.slane %v403, 6
    %v450 = vrot.slane %v423, 4
    %v451 = vrot.slane %v443, 2
    %v452 = vsel %vm232, %v383, %v449
    %v453 = vsel %vm234, %v450, %v451
    %v454 = vsel %vm236, %v452, %v453
    %v456 = vadd.f32 %v244, %v454
    %v457 = vxor.u32 %v456, 2147483648
    %v458 = vmul.f32 %v457, 1.442695
    %v459 = vpow.pop %v458
    %v460 = vadd.f32 %v459, 1.0
    %v461 = vrcp.pop %v460
    %v462 = vmul.f32 %v460, %v461
    %v463 = vsub.f32 1.0, %v462
    %v464 = vmul.f32 %v461, %v463
    %v465 = vadd.f32 %v461, %v464
    %vm466 = vweird.f32 %v460
    %vm467 = vweird.f32 %v461
    %vm468 = vmor %vm466, %vm467
    %v469 = vsel %vm468, %v461, %v465
    %v470 = vand.u32 2147483647, %v460
    %vm471 = vcmp.eq.f32.partialorder %v470, 8.507059e+37
    %v472 = vand.u32 %v460, 2147483648
    %v473 = vor.u32 1.1754944e-38, %v472
    %v474 = vsel %vm471, %v473, %v469
    %v475 = vmul.f32 1.0, %v474
    %v477 = vrot.slane %v456, 2
    %v479 = vxor.u32 %v477, 2147483648
    %v480 = vmul.f32 %v479, 1.442695
    %v481 = vpow.pop %v480
    %v482 = vadd.f32 %v481, 1.0
    %v483 = vrcp.pop %v482
    %v484 = vmul.f32 %v482, %v483
    %v485 = vsub.f32 1.0, %v484
    %v486 = vmul.f32 %v483, %v485
    %v487 = vadd.f32 %v483, %v486
    %vm488 = vweird.f32 %v482
    %vm489 = vweird.f32 %v483
    %vm490 = vmor %vm488, %vm489
    %v491 = vsel %vm490, %v483, %v487
    %v492 = vand.u32 2147483647, %v482
    %vm493 = vcmp.eq.f32.partialorder %v492, 8.507059e+37
    %v494 = vand.u32 %v482, 2147483648
    %v495 = vor.u32 1.1754944e-38, %v494
    %v496 = vsel %vm493, %v495, %v491
    %v497 = vmul.f32 1.0, %v496
    %v498 = vrot.slane %v456, 4
    %v500 = vtanh.pop %v498
    %v501 = vrot.slane %v456, 6
    %v503 = vxor.u32 %v501, 2147483648
    %v504 = vmul.f32 %v503, 1.442695
    %v505 = vpow.pop %v504
    %v506 = vadd.f32 %v505, 1.0
    %v507 = vrcp.pop %v506
    %v508 = vmul.f32 %v506, %v507
    %v509 = vsub.f32 1.0, %v508
    %v510 = vmul.f32 %v507, %v509
    %v511 = vadd.f32 %v507, %v510
    %vm512 = vweird.f32 %v506
    %vm513 = vweird.f32 %v507
    %vm514 = vmor %vm512, %vm513
    %v515 = vsel %vm514, %v507, %v511
    %v516 = vand.u32 2147483647, %v506
    %vm517 = vcmp.eq.f32.partialorder %v516, 8.507059e+37
    %v518 = vand.u32 %v506, 2147483648
    %v519 = vor.u32 1.1754944e-38, %v518
    %v520 = vsel %vm517, %v519, %v515
    %v521 = vmul.f32 1.0, %v520
    %v522 = vmul.f32 %v497, %v342
    %v523 = vmul.f32 %v475, %v500
    %v524 = vadd.f32 %v522, %v523
    %v525 = vtanh.pop %v524
    %v526 = vmul.f32 %v521, %v525
    %527 = vst [vmem:[#allocation1] ss:$2 sm:$0xff] %v66
    %s528 = scalar_lea.vmem [#allocation1], 16
    %529 = vst [vmem:[%s528] ss:$2 sm:$0xff] %v67
    %v530 = vld.sshfl [vmem:[#allocation1] sm:$0xff pattern:$0x75316420]
    %v531 = vld.sshfl [vmem:[#allocation1 + $0x8] sm:$0xff pattern:$0x75316420]
    %v532 = vld.sshfl [vmem:[#allocation1 + $0x10] sm:$0xff pattern:$0x75316420]
    %v533 = vld.sshfl [vmem:[#allocation1 + $0x18] sm:$0xff pattern:$0x75316420]
    %v535 = vsel %vm112, %v526, 0
    %v537 = vsel %vm117, %v530, 0
    %v539 = vsel %vm117, %v531, 0
    %v541 = vsel %vm117, %v532, 0
    %v543 = vsel %vm117, %v533, 0
    %545 = vmatpush.msra.mxu0 0.0
    %546 = vmatpush.msra.mxu0 0.0
    %547 = vmatpush.msra.mxu0 0.0
    %548 = vmatpush.msra.mxu0 0.0
    %549 = vmatpush.msra.mxu0 0.0
    %550 = vmatpush.msra.mxu0 0.0
    %551 = vmatpush.msra.mxu0 0.0
    %552 = vmatpush.msra.mxu0 0.0
    %553 = vmatpush.msra.mxu0 0.0
    %554 = vmatpush.msra.mxu0 0.0
    %555 = vmatpush.msra.mxu0 0.0
    %556 = vmatpush.msra.mxu0 0.0
    %557 = vmatpush.msra.mxu0 0.0
    %558 = vmatpush.msra.mxu0 0.0
    %559 = vmatpush.msra.mxu0 0.0
    %560 = vmatpush.msra.mxu0 %v537
    %561 = vmatmul.f32.gmra.mxu0 %v535
    %v562 = vpop.f32.mrf.mxu0
    %v563 = vadd.f32 0.0, %v562
    %564 = vdwg.mxu0
    %565 = vmatpush.msra.mxu0 0.0
    %566 = vmatpush.msra.mxu0 0.0
    %567 = vmatpush.msra.mxu0 0.0
    %568 = vmatpush.msra.mxu0 0.0
    %569 = vmatpush.msra.mxu0 0.0
    %570 = vmatpush.msra.mxu0 0.0
    %571 = vmatpush.msra.mxu0 0.0
    %572 = vmatpush.msra.mxu0 0.0
    %573 = vmatpush.msra.mxu0 0.0
    %574 = vmatpush.msra.mxu0 0.0
    %575 = vmatpush.msra.mxu0 0.0
    %576 = vmatpush.msra.mxu0 0.0
    %577 = vmatpush.msra.mxu0 0.0
    %578 = vmatpush.msra.mxu0 0.0
    %579 = vmatpush.msra.mxu0 0.0
    %580 = vmatpush.msra.mxu0 %v539
    %581 = vmatmul.f32.gmra.mxu0 %v535
    %v582 = vpop.f32.mrf.mxu0
    %v583 = vadd.f32 0.0, %v582
    %584 = vdwg.mxu0
    %585 = vmatpush.msra.mxu0 0.0
    %586 = vmatpush.msra.mxu0 0.0
    %587 = vmatpush.msra.mxu0 0.0
    %588 = vmatpush.msra.mxu0 0.0
    %589 = vmatpush.msra.mxu0 0.0
    %590 = vmatpush.msra.mxu0 0.0
    %591 = vmatpush.msra.mxu0 0.0
    %592 = vmatpush.msra.mxu0 0.0
    %593 = vmatpush.msra.mxu0 0.0
    %594 = vmatpush.msra.mxu0 0.0
    %595 = vmatpush.msra.mxu0 0.0
    %596 = vmatpush.msra.mxu0 0.0
    %597 = vmatpush.msra.mxu0 0.0
    %598 = vmatpush.msra.mxu0 0.0
    %599 = vmatpush.msra.mxu0 0.0
    %600 = vmatpush.msra.mxu0 %v541
    %601 = vmatmul.f32.gmra.mxu0 %v535
    %v602 = vpop.f32.mrf.mxu0
    %v603 = vadd.f32 0.0, %v602
    %604 = vdwg.mxu0
    %605 = vmatpush.msra.mxu0 0.0
    %606 = vmatpush.msra.mxu0 0.0
    %607 = vmatpush.msra.mxu0 0.0
    %608 = vmatpush.msra.mxu0 0.0
    %609 = vmatpush.msra.mxu0 0.0
    %610 = vmatpush.msra.mxu0 0.0
    %611 = vmatpush.msra.mxu0 0.0
    %612 = vmatpush.msra.mxu0 0.0
    %613 = vmatpush.msra.mxu0 0.0
    %614 = vmatpush.msra.mxu0 0.0
    %615 = vmatpush.msra.mxu0 0.0
    %616 = vmatpush.msra.mxu0 0.0
    %617 = vmatpush.msra.mxu0 0.0
    %618 = vmatpush.msra.mxu0 0.0
    %619 = vmatpush.msra.mxu0 0.0
    %620 = vmatpush.msra.mxu0 %v543
    %621 = vmatmul.f32.gmra.mxu0 %v535
    %v622 = vpop.f32.mrf.mxu0
    %v623 = vadd.f32 0.0, %v622
    %624 = vdwg.mxu0
    %v629 = vrot.slane %v583, 6
    %v630 = vrot.slane %v603, 4
    %v631 = vrot.slane %v623, 2
    %v632 = vsel %vm232, %v563, %v629
    %v633 = vsel %vm234, %v630, %v631
    %v634 = vsel %vm236, %v632, %v633
    %v636 = vadd.f32 %v248, %v634
    %v637 = vxor.u32 %v636, 2147483648
    %v638 = vmul.f32 %v637, 1.442695
    %v639 = vpow.pop %v638
    %v640 = vadd.f32 %v639, 1.0
    %v641 = vrcp.pop %v640
    %v642 = vmul.f32 %v640, %v641
    %v643 = vsub.f32 1.0, %v642
    %v644 = vmul.f32 %v641, %v643
    %v645 = vadd.f32 %v641, %v644
    %vm646 = vweird.f32 %v640
    %vm647 = vweird.f32 %v641
    %vm648 = vmor %vm646, %vm647
    %v649 = vsel %vm648, %v641, %v645
    %v650 = vand.u32 2147483647, %v640
    %vm651 = vcmp.eq.f32.partialorder %v650, 8.507059e+37
    %v652 = vand.u32 %v640, 2147483648
    %v653 = vor.u32 1.1754944e-38, %v652
    %v654 = vsel %vm651, %v653, %v649
    %v655 = vmul.f32 1.0, %v654
    %v657 = vrot.slane %v636, 2
    %v659 = vxor.u32 %v657, 2147483648
    %v660 = vmul.f32 %v659, 1.442695
    %v661 = vpow.pop %v660
    %v662 = vadd.f32 %v661, 1.0
    %v663 = vrcp.pop %v662
    %v664 = vmul.f32 %v662, %v663
    %v665 = vsub.f32 1.0, %v664
    %v666 = vmul.f32 %v663, %v665
    %v667 = vadd.f32 %v663, %v666
    %vm668 = vweird.f32 %v662
    %vm669 = vweird.f32 %v663
    %vm670 = vmor %vm668, %vm669
    %v671 = vsel %vm670, %v663, %v667
    %v672 = vand.u32 2147483647, %v662
    %vm673 = vcmp.eq.f32.partialorder %v672, 8.507059e+37
    %v674 = vand.u32 %v662, 2147483648
    %v675 = vor.u32 1.1754944e-38, %v674
    %v676 = vsel %vm673, %v675, %v671
    %v677 = vmul.f32 1.0, %v676
    %v678 = vrot.slane %v636, 4
    %v680 = vtanh.pop %v678
    %v681 = vrot.slane %v636, 6
    %v683 = vxor.u32 %v681, 2147483648
    %v684 = vmul.f32 %v683, 1.442695
    %v685 = vpow.pop %v684
    %v686 = vadd.f32 %v685, 1.0
    %v687 = vrcp.pop %v686
    %v688 = vmul.f32 %v686, %v687
    %v689 = vsub.f32 1.0, %v688
    %v690 = vmul.f32 %v687, %v689
    %v691 = vadd.f32 %v687, %v690
    %vm692 = vweird.f32 %v686
    %vm693 = vweird.f32 %v687
    %vm694 = vmor %vm692, %vm693
    %v695 = vsel %vm694, %v687, %v691
    %v696 = vand.u32 2147483647, %v686
    %vm697 = vcmp.eq.f32.partialorder %v696, 8.507059e+37
    %v698 = vand.u32 %v686, 2147483648
    %v699 = vor.u32 1.1754944e-38, %v698
    %v700 = vsel %vm697, %v699, %v695
    %v701 = vmul.f32 1.0, %v700
    %v702 = vmul.f32 %v677, %v524
    %v703 = vmul.f32 %v655, %v680
    %v704 = vadd.f32 %v702, %v703
    %v705 = vtanh.pop %v704
    %v706 = vmul.f32 %v701, %v705
    %707 = vst [vmem:[#allocation1] ss:$2 sm:$0xff] %v66
    %s708 = scalar_lea.vmem [#allocation1], 16
    %709 = vst [vmem:[%s708] ss:$2 sm:$0xff] %v67
    %v710 = vld.sshfl [vmem:[#allocation1] sm:$0xff pattern:$0x75316420]
    %v711 = vld.sshfl [vmem:[#allocation1 + $0x8] sm:$0xff pattern:$0x75316420]
    %v712 = vld.sshfl [vmem:[#allocation1 + $0x10] sm:$0xff pattern:$0x75316420]
    %v713 = vld.sshfl [vmem:[#allocation1 + $0x18] sm:$0xff pattern:$0x75316420]
    %v715 = vsel %vm112, %v706, 0
    %v717 = vsel %vm117, %v710, 0
    %v719 = vsel %vm117, %v711, 0
    %v721 = vsel %vm117, %v712, 0
    %v723 = vsel %vm117, %v713, 0
    %725 = vmatpush.msra.mxu0 0.0
    %726 = vmatpush.msra.mxu0 0.0
    %727 = vmatpush.msra.mxu0 0.0
    %728 = vmatpush.msra.mxu0 0.0
    %729 = vmatpush.msra.mxu0 0.0
    %730 = vmatpush.msra.mxu0 0.0
    %731 = vmatpush.msra.mxu0 0.0
    %732 = vmatpush.msra.mxu0 0.0
    %733 = vmatpush.msra.mxu0 0.0
    %734 = vmatpush.msra.mxu0 0.0
    %735 = vmatpush.msra.mxu0 0.0
    %736 = vmatpush.msra.mxu0 0.0
    %737 = vmatpush.msra.mxu0 0.0
    %738 = vmatpush.msra.mxu0 0.0
    %739 = vmatpush.msra.mxu0 0.0
    %740 = vmatpush.msra.mxu0 %v717
    %741 = vmatmul.f32.gmra.mxu0 %v715
    %v742 = vpop.f32.mrf.mxu0
    %v743 = vadd.f32 0.0, %v742
    %744 = vdwg.mxu0
    %745 = vmatpush.msra.mxu0 0.0
    %746 = vmatpush.msra.mxu0 0.0
    %747 = vmatpush.msra.mxu0 0.0
    %748 = vmatpush.msra.mxu0 0.0
    %749 = vmatpush.msra.mxu0 0.0
    %750 = vmatpush.msra.mxu0 0.0
    %751 = vmatpush.msra.mxu0 0.0
    %752 = vmatpush.msra.mxu0 0.0
    %753 = vmatpush.msra.mxu0 0.0
    %754 = vmatpush.msra.mxu0 0.0
    %755 = vmatpush.msra.mxu0 0.0
    %756 = vmatpush.msra.mxu0 0.0
    %757 = vmatpush.msra.mxu0 0.0
    %758 = vmatpush.msra.mxu0 0.0
    %759 = vmatpush.msra.mxu0 0.0
    %760 = vmatpush.msra.mxu0 %v719
    %761 = vmatmul.f32.gmra.mxu0 %v715
    %v762 = vpop.f32.mrf.mxu0
    %v763 = vadd.f32 0.0, %v762
    %764 = vdwg.mxu0
    %765 = vmatpush.msra.mxu0 0.0
    %766 = vmatpush.msra.mxu0 0.0
    %767 = vmatpush.msra.mxu0 0.0
    %768 = vmatpush.msra.mxu0 0.0
    %769 = vmatpush.msra.mxu0 0.0
    %770 = vmatpush.msra.mxu0 0.0
    %771 = vmatpush.msra.mxu0 0.0
    %772 = vmatpush.msra.mxu0 0.0
    %773 = vmatpush.msra.mxu0 0.0
    %774 = vmatpush.msra.mxu0 0.0
    %775 = vmatpush.msra.mxu0 0.0
    %776 = vmatpush.msra.mxu0 0.0
    %777 = vmatpush.msra.mxu0 0.0
    %778 = vmatpush.msra.mxu0 0.0
    %779 = vmatpush.msra.mxu0 0.0
    %780 = vmatpush.msra.mxu0 %v721
    %781 = vmatmul.f32.gmra.mxu0 %v715
    %v782 = vpop.f32.mrf.mxu0
    %v783 = vadd.f32 0.0, %v782
    %784 = vdwg.mxu0
    %785 = vmatpush.msra.mxu0 0.0
    %786 = vmatpush.msra.mxu0 0.0
    %787 = vmatpush.msra.mxu0 0.0
    %788 = vmatpush.msra.mxu0 0.0
    %789 = vmatpush.msra.mxu0 0.0
    %790 = vmatpush.msra.mxu0 0.0
    %791 = vmatpush.msra.mxu0 0.0
    %792 = vmatpush.msra.mxu0 0.0
    %793 = vmatpush.msra.mxu0 0.0
    %794 = vmatpush.msra.mxu0 0.0
    %795 = vmatpush.msra.mxu0 0.0
    %796 = vmatpush.msra.mxu0 0.0
    %797 = vmatpush.msra.mxu0 0.0
    %798 = vmatpush.msra.mxu0 0.0
    %799 = vmatpush.msra.mxu0 0.0
    %800 = vmatpush.msra.mxu0 %v723
    %801 = vmatmul.f32.gmra.mxu0 %v715
    %v802 = vpop.f32.mrf.mxu0
    %v803 = vadd.f32 0.0, %v802
    %804 = vdwg.mxu0
    %v809 = vrot.slane %v763, 6
    %v810 = vrot.slane %v783, 4
    %v811 = vrot.slane %v803, 2
    %v812 = vsel %vm232, %v743, %v809
    %v813 = vsel %vm234, %v810, %v811
    %v814 = vsel %vm236, %v812, %v813
    %v816 = vadd.f32 %v252, %v814
    %v817 = vxor.u32 %v816, 2147483648
    %v818 = vmul.f32 %v817, 1.442695
    %v819 = vpow.pop %v818
    %v820 = vadd.f32 %v819, 1.0
    %v821 = vrcp.pop %v820
    %v822 = vmul.f32 %v820, %v821
    %v823 = vsub.f32 1.0, %v822
    %v824 = vmul.f32 %v821, %v823
    %v825 = vadd.f32 %v821, %v824
    %vm826 = vweird.f32 %v820
    %vm827 = vweird.f32 %v821
    %vm828 = vmor %vm826, %vm827
    %v829 = vsel %vm828, %v821, %v825
    %v830 = vand.u32 2147483647, %v820
    %vm831 = vcmp.eq.f32.partialorder %v830, 8.507059e+37
    %v832 = vand.u32 %v820, 2147483648
    %v833 = vor.u32 1.1754944e-38, %v832
    %v834 = vsel %vm831, %v833, %v829
    %v835 = vmul.f32 1.0, %v834
    %v837 = vrot.slane %v816, 2
    %v839 = vxor.u32 %v837, 2147483648
    %v840 = vmul.f32 %v839, 1.442695
    %v841 = vpow.pop %v840
    %v842 = vadd.f32 %v841, 1.0
    %v843 = vrcp.pop %v842
    %v844 = vmul.f32 %v842, %v843
    %v845 = vsub.f32 1.0, %v844
    %v846 = vmul.f32 %v843, %v845
    %v847 = vadd.f32 %v843, %v846
    %vm848 = vweird.f32 %v842
    %vm849 = vweird.f32 %v843
    %vm850 = vmor %vm848, %vm849
    %v851 = vsel %vm850, %v843, %v847
    %v852 = vand.u32 2147483647, %v842
    %vm853 = vcmp.eq.f32.partialorder %v852, 8.507059e+37
    %v854 = vand.u32 %v842, 2147483648
    %v855 = vor.u32 1.1754944e-38, %v854
    %v856 = vsel %vm853, %v855, %v851
    %v857 = vmul.f32 1.0, %v856
    %v858 = vrot.slane %v816, 4
    %v860 = vtanh.pop %v858
    %v861 = vrot.slane %v816, 6
    %v863 = vxor.u32 %v861, 2147483648
    %v864 = vmul.f32 %v863, 1.442695
    %v865 = vpow.pop %v864
    %v866 = vadd.f32 %v865, 1.0
    %v867 = vrcp.pop %v866
    %v868 = vmul.f32 %v866, %v867
    %v869 = vsub.f32 1.0, %v868
    %v870 = vmul.f32 %v867, %v869
    %v871 = vadd.f32 %v867, %v870
    %vm872 = vweird.f32 %v866
    %vm873 = vweird.f32 %v867
    %vm874 = vmor %vm872, %vm873
    %v875 = vsel %vm874, %v867, %v871
    %v876 = vand.u32 2147483647, %v866
    %vm877 = vcmp.eq.f32.partialorder %v876, 8.507059e+37
    %v878 = vand.u32 %v866, 2147483648
    %v879 = vor.u32 1.1754944e-38, %v878
    %v880 = vsel %vm877, %v879, %v875
    %v881 = vmul.f32 1.0, %v880
    %v882 = vmul.f32 %v857, %v704
    %v883 = vmul.f32 %v835, %v860
    %v884 = vadd.f32 %v882, %v883
    %v885 = vtanh.pop %v884
    %v886 = vmul.f32 %v881, %v885
    %887 = vst [vmem:[#allocation1] ss:$2 sm:$0xff] %v66
    %s888 = scalar_lea.vmem [#allocation1], 16
    %889 = vst [vmem:[%s888] ss:$2 sm:$0xff] %v67
    %v890 = vld.sshfl [vmem:[#allocation1] sm:$0xff pattern:$0x75316420]
    %v891 = vld.sshfl [vmem:[#allocation1 + $0x8] sm:$0xff pattern:$0x75316420]
    %v892 = vld.sshfl [vmem:[#allocation1 + $0x10] sm:$0xff pattern:$0x75316420]
    %v893 = vld.sshfl [vmem:[#allocation1 + $0x18] sm:$0xff pattern:$0x75316420]
    %v895 = vsel %vm112, %v886, 0
    %v897 = vsel %vm117, %v890, 0
    %v899 = vsel %vm117, %v891, 0
    %v901 = vsel %vm117, %v892, 0
    %v903 = vsel %vm117, %v893, 0
    %905 = vmatpush.msra.mxu0 0.0
    %906 = vmatpush.msra.mxu0 0.0
    %907 = vmatpush.msra.mxu0 0.0
    %908 = vmatpush.msra.mxu0 0.0
    %909 = vmatpush.msra.mxu0 0.0
    %910 = vmatpush.msra.mxu0 0.0
    %911 = vmatpush.msra.mxu0 0.0
    %912 = vmatpush.msra.mxu0 0.0
    %913 = vmatpush.msra.mxu0 0.0
    %914 = vmatpush.msra.mxu0 0.0
    %915 = vmatpush.msra.mxu0 0.0
    %916 = vmatpush.msra.mxu0 0.0
    %917 = vmatpush.msra.mxu0 0.0
    %918 = vmatpush.msra.mxu0 0.0
    %919 = vmatpush.msra.mxu0 0.0
    %920 = vmatpush.msra.mxu0 %v897
    %921 = vmatmul.f32.gmra.mxu0 %v895
    %v922 = vpop.f32.mrf.mxu0
    %v923 = vadd.f32 0.0, %v922
    %924 = vdwg.mxu0
    %925 = vmatpush.msra.mxu0 0.0
    %926 = vmatpush.msra.mxu0 0.0
    %927 = vmatpush.msra.mxu0 0.0
    %928 = vmatpush.msra.mxu0 0.0
    %929 = vmatpush.msra.mxu0 0.0
    %930 = vmatpush.msra.mxu0 0.0
    %931 = vmatpush.msra.mxu0 0.0
    %932 = vmatpush.msra.mxu0 0.0
    %933 = vmatpush.msra.mxu0 0.0
    %934 = vmatpush.msra.mxu0 0.0
    %935 = vmatpush.msra.mxu0 0.0
    %936 = vmatpush.msra.mxu0 0.0
    %937 = vmatpush.msra.mxu0 0.0
    %938 = vmatpush.msra.mxu0 0.0
    %939 = vmatpush.msra.mxu0 0.0
    %940 = vmatpush.msra.mxu0 %v899
    %941 = vmatmul.f32.gmra.mxu0 %v895
    %v942 = vpop.f32.mrf.mxu0
    %v943 = vadd.f32 0.0, %v942
    %944 = vdwg.mxu0
    %945 = vmatpush.msra.mxu0 0.0
    %946 = vmatpush.msra.mxu0 0.0
    %947 = vmatpush.msra.mxu0 0.0
    %948 = vmatpush.msra.mxu0 0.0
    %949 = vmatpush.msra.mxu0 0.0
    %950 = vmatpush.msra.mxu0 0.0
    %951 = vmatpush.msra.mxu0 0.0
    %952 = vmatpush.msra.mxu0 0.0
    %953 = vmatpush.msra.mxu0 0.0
    %954 = vmatpush.msra.mxu0 0.0
    %955 = vmatpush.msra.mxu0 0.0
    %956 = vmatpush.msra.mxu0 0.0
    %957 = vmatpush.msra.mxu0 0.0
    %958 = vmatpush.msra.mxu0 0.0
    %959 = vmatpush.msra.mxu0 0.0
    %960 = vmatpush.msra.mxu0 %v901
    %961 = vmatmul.f32.gmra.mxu0 %v895
    %v962 = vpop.f32.mrf.mxu0
    %v963 = vadd.f32 0.0, %v962
    %964 = vdwg.mxu0
    %965 = vmatpush.msra.mxu0 0.0
    %966 = vmatpush.msra.mxu0 0.0
    %967 = vmatpush.msra.mxu0 0.0
    %968 = vmatpush.msra.mxu0 0.0
    %969 = vmatpush.msra.mxu0 0.0
    %970 = vmatpush.msra.mxu0 0.0
    %971 = vmatpush.msra.mxu0 0.0
    %972 = vmatpush.msra.mxu0 0.0
    %973 = vmatpush.msra.mxu0 0.0
    %974 = vmatpush.msra.mxu0 0.0
    %975 = vmatpush.msra.mxu0 0.0
    %976 = vmatpush.msra.mxu0 0.0
    %977 = vmatpush.msra.mxu0 0.0
    %978 = vmatpush.msra.mxu0 0.0
    %979 = vmatpush.msra.mxu0 0.0
    %980 = vmatpush.msra.mxu0 %v903
    %981 = vmatmul.f32.gmra.mxu0 %v895
    %v982 = vpop.f32.mrf.mxu0
    %v983 = vadd.f32 0.0, %v982
    %984 = vdwg.mxu0
    %v989 = vrot.slane %v943, 6
    %v990 = vrot.slane %v963, 4
    %v991 = vrot.slane %v983, 2
    %v992 = vsel %vm232, %v923, %v989
    %v993 = vsel %vm234, %v990, %v991
    %v994 = vsel %vm236, %v992, %v993
    %v996 = vadd.f32 %v255, %v994
    %v997 = vxor.u32 %v996, 2147483648
    %v998 = vmul.f32 %v997, 1.442695
    %v999 = vpow.pop %v998
    %v1000 = vadd.f32 %v999, 1.0
    %v1001 = vrcp.pop %v1000
    %v1002 = vmul.f32 %v1000, %v1001
    %v1003 = vsub.f32 1.0, %v1002
    %v1004 = vmul.f32 %v1001, %v1003
    %v1005 = vadd.f32 %v1001, %v1004
    %vm1006 = vweird.f32 %v1000
    %vm1007 = vweird.f32 %v1001
    %vm1008 = vmor %vm1006, %vm1007
    %v1009 = vsel %vm1008, %v1001, %v1005
    %v1010 = vand.u32 2147483647, %v1000
    %vm1011 = vcmp.eq.f32.partialorder %v1010, 8.507059e+37
    %v1012 = vand.u32 %v1000, 2147483648
    %v1013 = vor.u32 1.1754944e-38, %v1012
    %v1014 = vsel %vm1011, %v1013, %v1009
    %v1015 = vmul.f32 1.0, %v1014
    %v1017 = vrot.slane %v996, 2
    %v1019 = vxor.u32 %v1017, 2147483648
    %v1020 = vmul.f32 %v1019, 1.442695
    %v1021 = vpow.pop %v1020
    %v1022 = vadd.f32 %v1021, 1.0
    %v1023 = vrcp.pop %v1022
    %v1024 = vmul.f32 %v1022, %v1023
    %v1025 = vsub.f32 1.0, %v1024
    %v1026 = vmul.f32 %v1023, %v1025
    %v1027 = vadd.f32 %v1023, %v1026
    %vm1028 = vweird.f32 %v1022
    %vm1029 = vweird.f32 %v1023
    %vm1030 = vmor %vm1028, %vm1029
    %v1031 = vsel %vm1030, %v1023, %v1027
    %v1032 = vand.u32 2147483647, %v1022
    %vm1033 = vcmp.eq.f32.partialorder %v1032, 8.507059e+37
    %v1034 = vand.u32 %v1022, 2147483648
    %v1035 = vor.u32 1.1754944e-38, %v1034
    %v1036 = vsel %vm1033, %v1035, %v1031
    %v1037 = vmul.f32 1.0, %v1036
    %v1038 = vrot.slane %v996, 4
    %v1040 = vtanh.pop %v1038
    %v1041 = vrot.slane %v996, 6
    %v1043 = vxor.u32 %v1041, 2147483648
    %v1044 = vmul.f32 %v1043, 1.442695
    %v1045 = vpow.pop %v1044
    %v1046 = vadd.f32 %v1045, 1.0
    %v1047 = vrcp.pop %v1046
    %v1048 = vmul.f32 %v1046, %v1047
    %v1049 = vsub.f32 1.0, %v1048
    %v1050 = vmul.f32 %v1047, %v1049
    %v1051 = vadd.f32 %v1047, %v1050
    %vm1052 = vweird.f32 %v1046
    %vm1053 = vweird.f32 %v1047
    %vm1054 = vmor %vm1052, %vm1053
    %v1055 = vsel %vm1054, %v1047, %v1051
    %v1056 = vand.u32 2147483647, %v1046
    %vm1057 = vcmp.eq.f32.partialorder %v1056, 8.507059e+37
    %v1058 = vand.u32 %v1046, 2147483648
    %v1059 = vor.u32 1.1754944e-38, %v1058
    %v1060 = vsel %vm1057, %v1059, %v1055
    %v1061 = vmul.f32 1.0, %v1060
    %v1062 = vmul.f32 %v1037, %v884
    %v1063 = vmul.f32 %v1015, %v1040
    %v1064 = vadd.f32 %v1062, %v1063
    %v1065 = vtanh.pop %v1064
    %v1066 = vmul.f32 %v1061, %v1065
    %1067 = vst [vmem:[#allocation1] ss:$2 sm:$0xff] %v66
    %s1068 = scalar_lea.vmem [#allocation1], 16
    %1069 = vst [vmem:[%s1068] ss:$2 sm:$0xff] %v67
    %v1070 = vld.sshfl [vmem:[#allocation1] sm:$0xff pattern:$0x75316420]
    %v1071 = vld.sshfl [vmem:[#allocation1 + $0x8] sm:$0xff pattern:$0x75316420]
    %v1072 = vld.sshfl [vmem:[#allocation1 + $0x10] sm:$0xff pattern:$0x75316420]
    %v1073 = vld.sshfl [vmem:[#allocation1 + $0x18] sm:$0xff pattern:$0x75316420]
    %v1075 = vsel %vm112, %v1066, 0
    %v1077 = vsel %vm117, %v1070, 0
    %v1079 = vsel %vm117, %v1071, 0
    %v1081 = vsel %vm117, %v1072, 0
    %v1083 = vsel %vm117, %v1073, 0
    %1085 = vmatpush.msra.mxu0 0.0
    %1086 = vmatpush.msra.mxu0 0.0
    %1087 = vmatpush.msra.mxu0 0.0
    %1088 = vmatpush.msra.mxu0 0.0
    %1089 = vmatpush.msra.mxu0 0.0
    %1090 = vmatpush.msra.mxu0 0.0
    %1091 = vmatpush.msra.mxu0 0.0
    %1092 = vmatpush.msra.mxu0 0.0
    %1093 = vmatpush.msra.mxu0 0.0
    %1094 = vmatpush.msra.mxu0 0.0
    %1095 = vmatpush.msra.mxu0 0.0
    %1096 = vmatpush.msra.mxu0 0.0
    %1097 = vmatpush.msra.mxu0 0.0
    %1098 = vmatpush.msra.mxu0 0.0
    %1099 = vmatpush.msra.mxu0 0.0
    %1100 = vmatpush.msra.mxu0 %v1077
    %1101 = vmatmul.f32.gmra.mxu0 %v1075
    %v1102 = vpop.f32.mrf.mxu0
    %v1103 = vadd.f32 0.0, %v1102
    %1104 = vdwg.mxu0
    %1105 = vmatpush.msra.mxu0 0.0
    %1106 = vmatpush.msra.mxu0 0.0
    %1107 = vmatpush.msra.mxu0 0.0
    %1108 = vmatpush.msra.mxu0 0.0
    %1109 = vmatpush.msra.mxu0 0.0
    %1110 = vmatpush.msra.mxu0 0.0
    %1111 = vmatpush.msra.mxu0 0.0
    %1112 = vmatpush.msra.mxu0 0.0
    %1113 = vmatpush.msra.mxu0 0.0
    %1114 = vmatpush.msra.mxu0 0.0
    %1115 = vmatpush.msra.mxu0 0.0
    %1116 = vmatpush.msra.mxu0 0.0
    %1117 = vmatpush.msra.mxu0 0.0
    %1118 = vmatpush.msra.mxu0 0.0
    %1119 = vmatpush.msra.mxu0 0.0
    %1120 = vmatpush.msra.mxu0 %v1079
    %1121 = vmatmul.f32.gmra.mxu0 %v1075
    %v1122 = vpop.f32.mrf.mxu0
    %v1123 = vadd.f32 0.0, %v1122
    %1124 = vdwg.mxu0
    %1125 = vmatpush.msra.mxu0 0.0
    %1126 = vmatpush.msra.mxu0 0.0
    %1127 = vmatpush.msra.mxu0 0.0
    %1128 = vmatpush.msra.mxu0 0.0
    %1129 = vmatpush.msra.mxu0 0.0
    %1130 = vmatpush.msra.mxu0 0.0
    %1131 = vmatpush.msra.mxu0 0.0
    %1132 = vmatpush.msra.mxu0 0.0
    %1133 = vmatpush.msra.mxu0 0.0
    %1134 = vmatpush.msra.mxu0 0.0
    %1135 = vmatpush.msra.mxu0 0.0
    %1136 = vmatpush.msra.mxu0 0.0
    %1137 = vmatpush.msra.mxu0 0.0
    %1138 = vmatpush.msra.mxu0 0.0
    %1139 = vmatpush.msra.mxu0 0.0
    %1140 = vmatpush.msra.mxu0 %v1081
    %1141 = vmatmul.f32.gmra.mxu0 %v1075
    %v1142 = vpop.f32.mrf.mxu0
    %v1143 = vadd.f32 0.0, %v1142
    %1144 = vdwg.mxu0
    %1145 = vmatpush.msra.mxu0 0.0
    %1146 = vmatpush.msra.mxu0 0.0
    %1147 = vmatpush.msra.mxu0 0.0
    %1148 = vmatpush.msra.mxu0 0.0
    %1149 = vmatpush.msra.mxu0 0.0
    %1150 = vmatpush.msra.mxu0 0.0
    %1151 = vmatpush.msra.mxu0 0.0
    %1152 = vmatpush.msra.mxu0 0.0
    %1153 = vmatpush.msra.mxu0 0.0
    %1154 = vmatpush.msra.mxu0 0.0
    %1155 = vmatpush.msra.mxu0 0.0
    %1156 = vmatpush.msra.mxu0 0.0
    %1157 = vmatpush.msra.mxu0 0.0
    %1158 = vmatpush.msra.mxu0 0.0
    %1159 = vmatpush.msra.mxu0 0.0
    %1160 = vmatpush.msra.mxu0 %v1083
    %1161 = vmatmul.f32.gmra.mxu0 %v1075
    %v1162 = vpop.f32.mrf.mxu0
    %v1163 = vadd.f32 0.0, %v1162
    %1164 = vdwg.mxu0
    %v1169 = vrot.slane %v1123, 6
    %v1170 = vrot.slane %v1143, 4
    %v1171 = vrot.slane %v1163, 2
    %v1172 = vsel %vm232, %v1103, %v1169
    %v1173 = vsel %vm234, %v1170, %v1171
    %v1174 = vsel %vm236, %v1172, %v1173
    %v1176 = vadd.f32 %v259, %v1174
    %v1177 = vxor.u32 %v1176, 2147483648
    %v1178 = vmul.f32 %v1177, 1.442695
    %v1179 = vpow.pop %v1178
    %v1180 = vadd.f32 %v1179, 1.0
    %v1181 = vrcp.pop %v1180
    %v1182 = vmul.f32 %v1180, %v1181
    %v1183 = vsub.f32 1.0, %v1182
    %v1184 = vmul.f32 %v1181, %v1183
    %v1185 = vadd.f32 %v1181, %v1184
    %vm1186 = vweird.f32 %v1180
    %vm1187 = vweird.f32 %v1181
    %vm1188 = vmor %vm1186, %vm1187
    %v1189 = vsel %vm1188, %v1181, %v1185
    %v1190 = vand.u32 2147483647, %v1180
    %vm1191 = vcmp.eq.f32.partialorder %v1190, 8.507059e+37
    %v1192 = vand.u32 %v1180, 2147483648
    %v1193 = vor.u32 1.1754944e-38, %v1192
    %v1194 = vsel %vm1191, %v1193, %v1189
    %v1195 = vmul.f32 1.0, %v1194
    %v1197 = vrot.slane %v1176, 2
    %v1199 = vxor.u32 %v1197, 2147483648
    %v1200 = vmul.f32 %v1199, 1.442695
    %v1201 = vpow.pop %v1200
    %v1202 = vadd.f32 %v1201, 1.0
    %v1203 = vrcp.pop %v1202
    %v1204 = vmul.f32 %v1202, %v1203
    %v1205 = vsub.f32 1.0, %v1204
    %v1206 = vmul.f32 %v1203, %v1205
    %v1207 = vadd.f32 %v1203, %v1206
    %vm1208 = vweird.f32 %v1202
    %vm1209 = vweird.f32 %v1203
    %vm1210 = vmor %vm1208, %vm1209
    %v1211 = vsel %vm1210, %v1203, %v1207
    %v1212 = vand.u32 2147483647, %v1202
    %vm1213 = vcmp.eq.f32.partialorder %v1212, 8.507059e+37
    %v1214 = vand.u32 %v1202, 2147483648
    %v1215 = vor.u32 1.1754944e-38, %v1214
    %v1216 = vsel %vm1213, %v1215, %v1211
    %v1217 = vmul.f32 1.0, %v1216
    %v1218 = vrot.slane %v1176, 4
    %v1220 = vtanh.pop %v1218
    %v1221 = vrot.slane %v1176, 6
    %v1223 = vxor.u32 %v1221, 2147483648
    %v1224 = vmul.f32 %v1223, 1.442695
    %v1225 = vpow.pop %v1224
    %v1226 = vadd.f32 %v1225, 1.0
    %v1227 = vrcp.pop %v1226
    %v1228 = vmul.f32 %v1226, %v1227
    %v1229 = vsub.f32 1.0, %v1228
    %v1230 = vmul.f32 %v1227, %v1229
    %v1231 = vadd.f32 %v1227, %v1230
    %vm1232 = vweird.f32 %v1226
    %vm1233 = vweird.f32 %v1227
    %vm1234 = vmor %vm1232, %vm1233
    %v1235 = vsel %vm1234, %v1227, %v1231
    %v1236 = vand.u32 2147483647, %v1226
    %vm1237 = vcmp.eq.f32.partialorder %v1236, 8.507059e+37
    %v1238 = vand.u32 %v1226, 2147483648
    %v1239 = vor.u32 1.1754944e-38, %v1238
    %v1240 = vsel %vm1237, %v1239, %v1235
    %v1241 = vmul.f32 1.0, %v1240
    %v1242 = vmul.f32 %v1217, %v1064
    %v1243 = vmul.f32 %v1195, %v1220
    %v1244 = vadd.f32 %v1242, %v1243
    %v1245 = vtanh.pop %v1244
    %v1246 = vmul.f32 %v1241, %v1245
    %1247 = vst [vmem:[#allocation1] ss:$2 sm:$0xff] %v66
    %s1248 = scalar_lea.vmem [#allocation1], 16
    %1249 = vst [vmem:[%s1248] ss:$2 sm:$0xff] %v67
    %v1250 = vld.sshfl [vmem:[#allocation1] sm:$0xff pattern:$0x75316420]
    %v1251 = vld.sshfl [vmem:[#allocation1 + $0x8] sm:$0xff pattern:$0x75316420]
    %v1252 = vld.sshfl [vmem:[#allocation1 + $0x10] sm:$0xff pattern:$0x75316420]
    %v1253 = vld.sshfl [vmem:[#allocation1 + $0x18] sm:$0xff pattern:$0x75316420]
    %v1255 = vsel %vm112, %v1246, 0
    %v1257 = vsel %vm117, %v1250, 0
    %v1259 = vsel %vm117, %v1251, 0
    %v1261 = vsel %vm117, %v1252, 0
    %v1263 = vsel %vm117, %v1253, 0
    %1265 = vmatpush.msra.mxu0 0.0
    %1266 = vmatpush.msra.mxu0 0.0
    %1267 = vmatpush.msra.mxu0 0.0
    %1268 = vmatpush.msra.mxu0 0.0
    %1269 = vmatpush.msra.mxu0 0.0
    %1270 = vmatpush.msra.mxu0 0.0
    %1271 = vmatpush.msra.mxu0 0.0
    %1272 = vmatpush.msra.mxu0 0.0
    %1273 = vmatpush.msra.mxu0 0.0
    %1274 = vmatpush.msra.mxu0 0.0
    %1275 = vmatpush.msra.mxu0 0.0
    %1276 = vmatpush.msra.mxu0 0.0
    %1277 = vmatpush.msra.mxu0 0.0
    %1278 = vmatpush.msra.mxu0 0.0
    %1279 = vmatpush.msra.mxu0 0.0
    %1280 = vmatpush.msra.mxu0 %v1257
    %1281 = vmatmul.f32.gmra.mxu0 %v1255
    %v1282 = vpop.f32.mrf.mxu0
    %v1283 = vadd.f32 0.0, %v1282
    %1284 = vdwg.mxu0
    %1285 = vmatpush.msra.mxu0 0.0
    %1286 = vmatpush.msra.mxu0 0.0
    %1287 = vmatpush.msra.mxu0 0.0
    %1288 = vmatpush.msra.mxu0 0.0
    %1289 = vmatpush.msra.mxu0 0.0
    %1290 = vmatpush.msra.mxu0 0.0
    %1291 = vmatpush.msra.mxu0 0.0
    %1292 = vmatpush.msra.mxu0 0.0
    %1293 = vmatpush.msra.mxu0 0.0
    %1294 = vmatpush.msra.mxu0 0.0
    %1295 = vmatpush.msra.mxu0 0.0
    %1296 = vmatpush.msra.mxu0 0.0
    %1297 = vmatpush.msra.mxu0 0.0
    %1298 = vmatpush.msra.mxu0 0.0
    %1299 = vmatpush.msra.mxu0 0.0
    %1300 = vmatpush.msra.mxu0 %v1259
    %1301 = vmatmul.f32.gmra.mxu0 %v1255
    %v1302 = vpop.f32.mrf.mxu0
    %v1303 = vadd.f32 0.0, %v1302
    %1304 = vdwg.mxu0
    %1305 = vmatpush.msra.mxu0 0.0
    %1306 = vmatpush.msra.mxu0 0.0
    %1307 = vmatpush.msra.mxu0 0.0
    %1308 = vmatpush.msra.mxu0 0.0
    %1309 = vmatpush.msra.mxu0 0.0
    %1310 = vmatpush.msra.mxu0 0.0
    %1311 = vmatpush.msra.mxu0 0.0
    %1312 = vmatpush.msra.mxu0 0.0
    %1313 = vmatpush.msra.mxu0 0.0
    %1314 = vmatpush.msra.mxu0 0.0
    %1315 = vmatpush.msra.mxu0 0.0
    %1316 = vmatpush.msra.mxu0 0.0
    %1317 = vmatpush.msra.mxu0 0.0
    %1318 = vmatpush.msra.mxu0 0.0
    %1319 = vmatpush.msra.mxu0 0.0
    %1320 = vmatpush.msra.mxu0 %v1261
    %1321 = vmatmul.f32.gmra.mxu0 %v1255
    %v1322 = vpop.f32.mrf.mxu0
    %v1323 = vadd.f32 0.0, %v1322
    %1324 = vdwg.mxu0
    %1325 = vmatpush.msra.mxu0 0.0
    %1326 = vmatpush.msra.mxu0 0.0
    %1327 = vmatpush.msra.mxu0 0.0
    %1328 = vmatpush.msra.mxu0 0.0
    %1329 = vmatpush.msra.mxu0 0.0
    %1330 = vmatpush.msra.mxu0 0.0
    %1331 = vmatpush.msra.mxu0 0.0
    %1332 = vmatpush.msra.mxu0 0.0
    %1333 = vmatpush.msra.mxu0 0.0
    %1334 = vmatpush.msra.mxu0 0.0
    %1335 = vmatpush.msra.mxu0 0.0
    %1336 = vmatpush.msra.mxu0 0.0
    %1337 = vmatpush.msra.mxu0 0.0
    %1338 = vmatpush.msra.mxu0 0.0
    %1339 = vmatpush.msra.mxu0 0.0
    %1340 = vmatpush.msra.mxu0 %v1263
    %1341 = vmatmul.f32.gmra.mxu0 %v1255
    %v1342 = vpop.f32.mrf.mxu0
    %v1343 = vadd.f32 0.0, %v1342
    %1344 = vdwg.mxu0
    %v1349 = vrot.slane %v1303, 6
    %v1350 = vrot.slane %v1323, 4
    %v1351 = vrot.slane %v1343, 2
    %v1352 = vsel %vm232, %v1283, %v1349
    %v1353 = vsel %vm234, %v1350, %v1351
    %v1354 = vsel %vm236, %v1352, %v1353
    %v1356 = vadd.f32 %v263, %v1354
    %v1357 = vxor.u32 %v1356, 2147483648
    %v1358 = vmul.f32 %v1357, 1.442695
    %v1359 = vpow.pop %v1358
    %v1360 = vadd.f32 %v1359, 1.0
    %v1361 = vrcp.pop %v1360
    %v1362 = vmul.f32 %v1360, %v1361
    %v1363 = vsub.f32 1.0, %v1362
    %v1364 = vmul.f32 %v1361, %v1363
    %v1365 = vadd.f32 %v1361, %v1364
    %vm1366 = vweird.f32 %v1360
    %vm1367 = vweird.f32 %v1361
    %vm1368 = vmor %vm1366, %vm1367
    %v1369 = vsel %vm1368, %v1361, %v1365
    %v1370 = vand.u32 2147483647, %v1360
    %vm1371 = vcmp.eq.f32.partialorder %v1370, 8.507059e+37
    %v1372 = vand.u32 %v1360, 2147483648
    %v1373 = vor.u32 1.1754944e-38, %v1372
    %v1374 = vsel %vm1371, %v1373, %v1369
    %v1375 = vmul.f32 1.0, %v1374
    %v1377 = vrot.slane %v1356, 2
    %v1379 = vxor.u32 %v1377, 2147483648
    %v1380 = vmul.f32 %v1379, 1.442695
    %v1381 = vpow.pop %v1380
    %v1382 = vadd.f32 %v1381, 1.0
    %v1383 = vrcp.pop %v1382
    %v1384 = vmul.f32 %v1382, %v1383
    %v1385 = vsub.f32 1.0, %v1384
    %v1386 = vmul.f32 %v1383, %v1385
    %v1387 = vadd.f32 %v1383, %v1386
    %vm1388 = vweird.f32 %v1382
    %vm1389 = vweird.f32 %v1383
    %vm1390 = vmor %vm1388, %vm1389
    %v1391 = vsel %vm1390, %v1383, %v1387
    %v1392 = vand.u32 2147483647, %v1382
    %vm1393 = vcmp.eq.f32.partialorder %v1392, 8.507059e+37
    %v1394 = vand.u32 %v1382, 2147483648
    %v1395 = vor.u32 1.1754944e-38, %v1394
    %v1396 = vsel %vm1393, %v1395, %v1391
    %v1397 = vmul.f32 1.0, %v1396
    %v1398 = vrot.slane %v1356, 4
    %v1400 = vtanh.pop %v1398
    %v1401 = vrot.slane %v1356, 6
    %v1403 = vxor.u32 %v1401, 2147483648
    %v1404 = vmul.f32 %v1403, 1.442695
    %v1405 = vpow.pop %v1404
    %v1406 = vadd.f32 %v1405, 1.0
    %v1407 = vrcp.pop %v1406
    %v1408 = vmul.f32 %v1406, %v1407
    %v1409 = vsub.f32 1.0, %v1408
    %v1410 = vmul.f32 %v1407, %v1409
    %v1411 = vadd.f32 %v1407, %v1410
    %vm1412 = vweird.f32 %v1406
    %vm1413 = vweird.f32 %v1407
    %vm1414 = vmor %vm1412, %vm1413
    %v1415 = vsel %vm1414, %v1407, %v1411
    %v1416 = vand.u32 2147483647, %v1406
    %vm1417 = vcmp.eq.f32.partialorder %v1416, 8.507059e+37
    %v1418 = vand.u32 %v1406, 2147483648
    %v1419 = vor.u32 1.1754944e-38, %v1418
    %v1420 = vsel %vm1417, %v1419, %v1415
    %v1421 = vmul.f32 1.0, %v1420
    %v1422 = vmul.f32 %v1397, %v1244
    %v1423 = vmul.f32 %v1375, %v1400
    %v1424 = vadd.f32 %v1422, %v1423
    %v1425 = vtanh.pop %v1424
    %v1426 = vmul.f32 %v1421, %v1425
    %1427 = vst [vmem:[#allocation1] ss:$2 sm:$0xff] %v66
    %s1428 = scalar_lea.vmem [#allocation1], 16
    %1429 = vst [vmem:[%s1428] ss:$2 sm:$0xff] %v67
    %v1430 = vld.sshfl [vmem:[#allocation1] sm:$0xff pattern:$0x75316420]
    %v1431 = vld.sshfl [vmem:[#allocation1 + $0x8] sm:$0xff pattern:$0x75316420]
    %v1432 = vld.sshfl [vmem:[#allocation1 + $0x10] sm:$0xff pattern:$0x75316420]
    %v1433 = vld.sshfl [vmem:[#allocation1 + $0x18] sm:$0xff pattern:$0x75316420]
    %v1435 = vsel %vm112, %v1426, 0
    %v1437 = vsel %vm117, %v1430, 0
    %v1439 = vsel %vm117, %v1431, 0
    %v1441 = vsel %vm117, %v1432, 0
    %v1443 = vsel %vm117, %v1433, 0
    %1445 = vmatpush.msra.mxu0 0.0
    %1446 = vmatpush.msra.mxu0 0.0
    %1447 = vmatpush.msra.mxu0 0.0
    %1448 = vmatpush.msra.mxu0 0.0
    %1449 = vmatpush.msra.mxu0 0.0
    %1450 = vmatpush.msra.mxu0 0.0
    %1451 = vmatpush.msra.mxu0 0.0
    %1452 = vmatpush.msra.mxu0 0.0
    %1453 = vmatpush.msra.mxu0 0.0
    %1454 = vmatpush.msra.mxu0 0.0
    %1455 = vmatpush.msra.mxu0 0.0
    %1456 = vmatpush.msra.mxu0 0.0
    %1457 = vmatpush.msra.mxu0 0.0
    %1458 = vmatpush.msra.mxu0 0.0
    %1459 = vmatpush.msra.mxu0 0.0
    %1460 = vmatpush.msra.mxu0 %v1437
    %1461 = vmatmul.f32.gmra.mxu0 %v1435
    %v1462 = vpop.f32.mrf.mxu0
    %v1463 = vadd.f32 0.0, %v1462
    %1464 = vdwg.mxu0
    %1465 = vmatpush.msra.mxu0 0.0
    %1466 = vmatpush.msra.mxu0 0.0
    %1467 = vmatpush.msra.mxu0 0.0
    %1468 = vmatpush.msra.mxu0 0.0
    %1469 = vmatpush.msra.mxu0 0.0
    %1470 = vmatpush.msra.mxu0 0.0
    %1471 = vmatpush.msra.mxu0 0.0
    %1472 = vmatpush.msra.mxu0 0.0
    %1473 = vmatpush.msra.mxu0 0.0
    %1474 = vmatpush.msra.mxu0 0.0
    %1475 = vmatpush.msra.mxu0 0.0
    %1476 = vmatpush.msra.mxu0 0.0
    %1477 = vmatpush.msra.mxu0 0.0
    %1478 = vmatpush.msra.mxu0 0.0
    %1479 = vmatpush.msra.mxu0 0.0
    %1480 = vmatpush.msra.mxu0 %v1439
    %1481 = vmatmul.f32.gmra.mxu0 %v1435
    %v1482 = vpop.f32.mrf.mxu0
    %v1483 = vadd.f32 0.0, %v1482
    %1484 = vdwg.mxu0
    %1485 = vmatpush.msra.mxu0 0.0
    %1486 = vmatpush.msra.mxu0 0.0
    %1487 = vmatpush.msra.mxu0 0.0
    %1488 = vmatpush.msra.mxu0 0.0
    %1489 = vmatpush.msra.mxu0 0.0
    %1490 = vmatpush.msra.mxu0 0.0
    %1491 = vmatpush.msra.mxu0 0.0
    %1492 = vmatpush.msra.mxu0 0.0
    %1493 = vmatpush.msra.mxu0 0.0
    %1494 = vmatpush.msra.mxu0 0.0
    %1495 = vmatpush.msra.mxu0 0.0
    %1496 = vmatpush.msra.mxu0 0.0
    %1497 = vmatpush.msra.mxu0 0.0
    %1498 = vmatpush.msra.mxu0 0.0
    %1499 = vmatpush.msra.mxu0 0.0
    %1500 = vmatpush.msra.mxu0 %v1441
    %1501 = vmatmul.f32.gmra.mxu0 %v1435
    %v1502 = vpop.f32.mrf.mxu0
    %v1503 = vadd.f32 0.0, %v1502
    %1504 = vdwg.mxu0
    %1505 = vmatpush.msra.mxu0 0.0
    %1506 = vmatpush.msra.mxu0 0.0
    %1507 = vmatpush.msra.mxu0 0.0
    %1508 = vmatpush.msra.mxu0 0.0
    %1509 = vmatpush.msra.mxu0 0.0
    %1510 = vmatpush.msra.mxu0 0.0
    %1511 = vmatpush.msra.mxu0 0.0
    %1512 = vmatpush.msra.mxu0 0.0
    %1513 = vmatpush.msra.mxu0 0.0
    %1514 = vmatpush.msra.mxu0 0.0
    %1515 = vmatpush.msra.mxu0 0.0
    %1516 = vmatpush.msra.mxu0 0.0
    %1517 = vmatpush.msra.mxu0 0.0
    %1518 = vmatpush.msra.mxu0 0.0
    %1519 = vmatpush.msra.mxu0 0.0
    %1520 = vmatpush.msra.mxu0 %v1443
    %1521 = vmatmul.f32.gmra.mxu0 %v1435
    %v1522 = vpop.f32.mrf.mxu0
    %v1523 = vadd.f32 0.0, %v1522
    %1524 = vdwg.mxu0
    %v1529 = vrot.slane %v1483, 6
    %v1530 = vrot.slane %v1503, 4
    %v1531 = vrot.slane %v1523, 2
    %v1532 = vsel %vm232, %v1463, %v1529
    %v1533 = vsel %vm234, %v1530, %v1531
    %v1534 = vsel %vm236, %v1532, %v1533
    %v1536 = vadd.f32 %v267, %v1534
    %v1537 = vxor.u32 %v1536, 2147483648
    %v1538 = vmul.f32 %v1537, 1.442695
    %v1539 = vpow.pop %v1538
    %v1540 = vadd.f32 %v1539, 1.0
    %v1541 = vrcp.pop %v1540
    %v1542 = vmul.f32 %v1540, %v1541
    %v1543 = vsub.f32 1.0, %v1542
    %v1544 = vmul.f32 %v1541, %v1543
    %v1545 = vadd.f32 %v1541, %v1544
    %vm1546 = vweird.f32 %v1540
    %vm1547 = vweird.f32 %v1541
    %vm1548 = vmor %vm1546, %vm1547
    %v1549 = vsel %vm1548, %v1541, %v1545
    %v1550 = vand.u32 2147483647, %v1540
    %vm1551 = vcmp.eq.f32.partialorder %v1550, 8.507059e+37
    %v1552 = vand.u32 %v1540, 2147483648
    %v1553 = vor.u32 1.1754944e-38, %v1552
    %v1554 = vsel %vm1551, %v1553, %v1549
    %v1555 = vmul.f32 1.0, %v1554
    %v1557 = vrot.slane %v1536, 2
    %v1559 = vxor.u32 %v1557, 2147483648
    %v1560 = vmul.f32 %v1559, 1.442695
    %v1561 = vpow.pop %v1560
    %v1562 = vadd.f32 %v1561, 1.0
    %v1563 = vrcp.pop %v1562
    %v1564 = vmul.f32 %v1562, %v1563
    %v1565 = vsub.f32 1.0, %v1564
    %v1566 = vmul.f32 %v1563, %v1565
    %v1567 = vadd.f32 %v1563, %v1566
    %vm1568 = vweird.f32 %v1562
    %vm1569 = vweird.f32 %v1563
    %vm1570 = vmor %vm1568, %vm1569
    %v1571 = vsel %vm1570, %v1563, %v1567
    %v1572 = vand.u32 2147483647, %v1562
    %vm1573 = vcmp.eq.f32.partialorder %v1572, 8.507059e+37
    %v1574 = vand.u32 %v1562, 2147483648
    %v1575 = vor.u32 1.1754944e-38, %v1574
    %v1576 = vsel %vm1573, %v1575, %v1571
    %v1577 = vmul.f32 1.0, %v1576
    %v1578 = vrot.slane %v1536, 4
    %v1580 = vtanh.pop %v1578
    %v1581 = vrot.slane %v1536, 6
    %v1583 = vxor.u32 %v1581, 2147483648
    %v1584 = vmul.f32 %v1583, 1.442695
    %v1585 = vpow.pop %v1584
    %v1586 = vadd.f32 %v1585, 1.0
    %v1587 = vrcp.pop %v1586
    %v1588 = vmul.f32 %v1586, %v1587
    %v1589 = vsub.f32 1.0, %v1588
    %v1590 = vmul.f32 %v1587, %v1589
    %v1591 = vadd.f32 %v1587, %v1590
    %vm1592 = vweird.f32 %v1586
    %vm1593 = vweird.f32 %v1587
    %vm1594 = vmor %vm1592, %vm1593
    %v1595 = vsel %vm1594, %v1587, %v1591
    %v1596 = vand.u32 2147483647, %v1586
    %vm1597 = vcmp.eq.f32.partialorder %v1596, 8.507059e+37
    %v1598 = vand.u32 %v1586, 2147483648
    %v1599 = vor.u32 1.1754944e-38, %v1598
    %v1600 = vsel %vm1597, %v1599, %v1595
    %v1601 = vmul.f32 1.0, %v1600
    %v1602 = vmul.f32 %v1577, %v1424
    %v1603 = vmul.f32 %v1555, %v1580
    %v1604 = vadd.f32 %v1602, %v1603
    %v1605 = vtanh.pop %v1604
    %v1606 = vmul.f32 %v1601, %v1605
    %s1607 = scalar_lea.vmem [#allocation1], 1
    %1608 = vst [vmem:[%s1607] ss:$4 sm:$0xff] %v526
    %v1609 = vld.sshfl [vmem:[#allocation1] sm:$0xff pattern:$0x73625140]
    %s1611 = scalar_lea.vmem [#allocation1], 2
    %1612 = vst [vmem:[%s1611] ss:$4 sm:$0xff] %v706
    %v1613 = vld.sshfl [vmem:[#allocation1] sm:$0xff pattern:$0x73625140]
    %s1615 = scalar_lea.vmem [#allocation1], 3
    %1616 = vst [vmem:[%s1615] ss:$4 sm:$0xff] %v886
    %v1617 = vld.sshfl [vmem:[#allocation1] sm:$0xff pattern:$0x73625140]
    %s1619 = scalar_lea.vmem [#allocation1], 1
    %1620 = vst [vmem:[%s1619] ss:$4 sm:$0xff] %v1246
    %v1621 = vld.sshfl [vmem:[#allocation1] sm:$0xff pattern:$0x73625140]
    %s1623 = scalar_lea.vmem [#allocation1], 2
    %1624 = vst [vmem:[%s1623] ss:$4 sm:$0xff] %v1426
    %v1625 = vld.sshfl [vmem:[#allocation1] sm:$0xff pattern:$0x73625140]
    %s1628 = scalar_lea.vmem [#allocation1], 3
    %1629 = vst [vmem:[%s1628] ss:$4 sm:$0xff] %v1606
    %v1630 = vld.sshfl [vmem:[#allocation1] sm:$0xff pattern:$0x73625140]
    %v1632 = vsel %vm232, %v344, %v1609
    %v1633 = vsel %vm236, %v1632, %v1613
    %v1634 = vsel %vm240, %v1633, %v1617
    %v1635 = vsel %vm232, %v1066, %v1621
    %v1636 = vsel %vm236, %v1635, %v1625
    %v1637 = vsel %vm240, %v1636, %v1630
    %s1638 = scalar_lea.vmem [#allocation2], 16
    %v1639 = vld [vmem:[%s1638] sm:$0x77]
    %v1640 = vld [vmem:[%s1638 + $0x8] sm:$0x77]
    %s1641 = scalar_lea.vmem [#allocation5], 16
    %v1642 = vld [vmem:[%s1641] sm:$0x77]
    %v1643 = vld [vmem:[%s1641 + $0x8] sm:$0x77]
    %s1644 = scalar_lea.vmem %s3, 4
    %v1645 = vld [vmem:[%s1644] sm:$0xf]
    %v1647 = vperm.slane %v1645, 0
    %v1648 = vperm.slane %v1645, 1
    %v1649 = vperm.slane %v1645, 2
    %v1650 = vperm.slane %v1645, 3
    %1657 = vst [vmem:[#allocation1] ss:$2 sm:$0xff] %v1639
    %s1658 = scalar_lea.vmem [#allocation1], 16
    %1659 = vst [vmem:[%s1658] ss:$2 sm:$0xff] %v1640
    %v1660 = vld.sshfl [vmem:[#allocation1] sm:$0xff pattern:$0x75316420]
    %v1661 = vld.sshfl [vmem:[#allocation1 + $0x8] sm:$0xff pattern:$0x75316420]
    %v1662 = vld.sshfl [vmem:[#allocation1 + $0x10] sm:$0xff pattern:$0x75316420]
    %v1663 = vld.sshfl [vmem:[#allocation1 + $0x18] sm:$0xff pattern:$0x75316420]
    %v1665 = vsel %vm112, %v1634, 0
    %v1668 = vsel %vm112, %v1637, 0
    %v1670 = vsel %vm117, %v1660, 0
    %v1672 = vsel %vm117, %v1661, 0
    %v1674 = vsel %vm117, %v1662, 0
    %v1676 = vsel %vm117, %v1663, 0
    %1678 = vmatpush.msra.mxu0 0.0
    %1679 = vmatpush.msra.mxu0 0.0
    %1680 = vmatpush.msra.mxu0 0.0
    %1681 = vmatpush.msra.mxu0 0.0
    %1682 = vmatpush.msra.mxu0 0.0
    %1683 = vmatpush.msra.mxu0 0.0
    %1684 = vmatpush.msra.mxu0 0.0
    %1685 = vmatpush.msra.mxu0 0.0
    %1686 = vmatpush.msra.mxu0 0.0
    %1687 = vmatpush.msra.mxu0 0.0
    %1688 = vmatpush.msra.mxu0 0.0
    %1689 = vmatpush.msra.mxu0 0.0
    %1690 = vmatpush.msra.mxu0 0.0
    %1691 = vmatpush.msra.mxu0 0.0
    %1692 = vmatpush.msra.mxu0 0.0
    %1693 = vmatpush.msra.mxu0 %v1670
    %1694 = vmatmul.f32.gmra.mxu0 %v1665
    %v1695 = vpop.f32.mrf.mxu0
    %v1696 = vadd.f32 %v1647, %v1695
    %1697 = vmatmul.f32.gmra.mxu0 %v1668
    %v1698 = vpop.f32.mrf.mxu0
    %v1699 = vadd.f32 %v1647, %v1698
    %1700 = vdwg.mxu0
    %1701 = vmatpush.msra.mxu0 0.0
    %1702 = vmatpush.msra.mxu0 0.0
    %1703 = vmatpush.msra.mxu0 0.0
    %1704 = vmatpush.msra.mxu0 0.0
    %1705 = vmatpush.msra.mxu0 0.0
    %1706 = vmatpush.msra.mxu0 0.0
    %1707 = vmatpush.msra.mxu0 0.0
    %1708 = vmatpush.msra.mxu0 0.0
    %1709 = vmatpush.msra.mxu0 0.0
    %1710 = vmatpush.msra.mxu0 0.0
    %1711 = vmatpush.msra.mxu0 0.0
    %1712 = vmatpush.msra.mxu0 0.0
    %1713 = vmatpush.msra.mxu0 0.0
    %1714 = vmatpush.msra.mxu0 0.0
    %1715 = vmatpush.msra.mxu0 0.0
    %1716 = vmatpush.msra.mxu0 %v1672
    %1717 = vmatmul.f32.gmra.mxu0 %v1665
    %v1718 = vpop.f32.mrf.mxu0
    %v1719 = vadd.f32 %v1648, %v1718
    %1720 = vmatmul.f32.gmra.mxu0 %v1668
    %v1721 = vpop.f32.mrf.mxu0
    %v1722 = vadd.f32 %v1648, %v1721
    %1723 = vdwg.mxu0
    %1724 = vmatpush.msra.mxu0 0.0
    %1725 = vmatpush.msra.mxu0 0.0
    %1726 = vmatpush.msra.mxu0 0.0
    %1727 = vmatpush.msra.mxu0 0.0
    %1728 = vmatpush.msra.mxu0 0.0
    %1729 = vmatpush.msra.mxu0 0.0
    %1730 = vmatpush.msra.mxu0 0.0
    %1731 = vmatpush.msra.mxu0 0.0
    %1732 = vmatpush.msra.mxu0 0.0
    %1733 = vmatpush.msra.mxu0 0.0
    %1734 = vmatpush.msra.mxu0 0.0
    %1735 = vmatpush.msra.mxu0 0.0
    %1736 = vmatpush.msra.mxu0 0.0
    %1737 = vmatpush.msra.mxu0 0.0
    %1738 = vmatpush.msra.mxu0 0.0
    %1739 = vmatpush.msra.mxu0 %v1674
    %1740 = vmatmul.f32.gmra.mxu0 %v1665
    %v1741 = vpop.f32.mrf.mxu0
    %v1742 = vadd.f32 %v1649, %v1741
    %1743 = vmatmul.f32.gmra.mxu0 %v1668
    %v1744 = vpop.f32.mrf.mxu0
    %v1745 = vadd.f32 %v1649, %v1744
    %1746 = vdwg.mxu0
    %1747 = vmatpush.msra.mxu0 0.0
    %1748 = vmatpush.msra.mxu0 0.0
    %1749 = vmatpush.msra.mxu0 0.0
    %1750 = vmatpush.msra.mxu0 0.0
    %1751 = vmatpush.msra.mxu0 0.0
    %1752 = vmatpush.msra.mxu0 0.0
    %1753 = vmatpush.msra.mxu0 0.0
    %1754 = vmatpush.msra.mxu0 0.0
    %1755 = vmatpush.msra.mxu0 0.0
    %1756 = vmatpush.msra.mxu0 0.0
    %1757 = vmatpush.msra.mxu0 0.0
    %1758 = vmatpush.msra.mxu0 0.0
    %1759 = vmatpush.msra.mxu0 0.0
    %1760 = vmatpush.msra.mxu0 0.0
    %1761 = vmatpush.msra.mxu0 0.0
    %1762 = vmatpush.msra.mxu0 %v1676
    %1763 = vmatmul.f32.gmra.mxu0 %v1665
    %v1764 = vpop.f32.mrf.mxu0
    %v1765 = vadd.f32 %v1650, %v1764
    %1766 = vmatmul.f32.gmra.mxu0 %v1668
    %v1767 = vpop.f32.mrf.mxu0
    %v1768 = vadd.f32 %v1650, %v1767
    %1769 = vdwg.mxu0
    %v1778 = vrot.slane %v1719, 6
    %v1779 = vrot.slane %v1742, 4
    %v1780 = vrot.slane %v1765, 2
    %v1781 = vrot.slane %v1722, 6
    %v1782 = vrot.slane %v1745, 4
    %v1783 = vrot.slane %v1768, 2
    %v1784 = vsel %vm232, %v1696, %v1778
    %v1785 = vsel %vm234, %v1779, %v1780
    %v1786 = vsel %vm236, %v1784, %v1785
    %v1787 = vsel %vm238, %v1696, %v1778
    %v1788 = vsel %vm240, %v1780, %v1779
    %v1789 = vsel %vm242, %v1787, %v1788
    %v1790 = vrot.slane %v1789, 2
    %v1791 = vsel %vm234, %v1696, %v1778
    %v1792 = vsel %vm232, %v1779, %v1780
    %v1793 = vsel %vm236, %v1792, %v1791
    %v1794 = vrot.slane %v1793, 4
    %v1795 = vsel %vm240, %v1778, %v1696
    %v1796 = vsel %vm238, %v1779, %v1780
    %v1797 = vsel %vm242, %v1796, %v1795
    %v1798 = vrot.slane %v1797, 6
    %v1799 = vsel %vm232, %v1699, %v1781
    %v1800 = vsel %vm234, %v1782, %v1783
    %v1801 = vsel %vm236, %v1799, %v1800
    %v1802 = vsel %vm238, %v1699, %v1781
    %v1803 = vsel %vm240, %v1783, %v1782
    %v1804 = vsel %vm242, %v1802, %v1803
    %v1805 = vrot.slane %v1804, 2
    %v1806 = vsel %vm234, %v1699, %v1781
    %v1807 = vsel %vm232, %v1782, %v1783
    %v1808 = vsel %vm236, %v1807, %v1806
    %v1809 = vrot.slane %v1808, 4
    %v1810 = vsel %vm240, %v1781, %v1699
    %v1811 = vsel %vm238, %v1782, %v1783
    %v1812 = vsel %vm242, %v1811, %v1810
    %v1813 = vrot.slane %v1812, 6
    %v1822 = vxor.u32 %v1786, 2147483648
    %v1823 = vmul.f32 %v1822, 1.442695
    %v1824 = vpow.pop %v1823
    %v1825 = vadd.f32 %v1824, 1.0
    %v1826 = vrcp.pop %v1825
    %v1827 = vmul.f32 %v1825, %v1826
    %v1828 = vsub.f32 1.0, %v1827
    %v1829 = vmul.f32 %v1826, %v1828
    %v1830 = vadd.f32 %v1826, %v1829
    %vm1831 = vweird.f32 %v1825
    %vm1832 = vweird.f32 %v1826
    %vm1833 = vmor %vm1831, %vm1832
    %v1834 = vsel %vm1833, %v1826, %v1830
    %v1835 = vand.u32 2147483647, %v1825
    %vm1836 = vcmp.eq.f32.partialorder %v1835, 8.507059e+37
    %v1837 = vand.u32 %v1825, 2147483648
    %v1838 = vor.u32 1.1754944e-38, %v1837
    %v1839 = vsel %vm1836, %v1838, %v1834
    %v1840 = vmul.f32 1.0, %v1839
    %v1841 = vrot.slane %v1786, 2
    %v1843 = vxor.u32 %v1841, 2147483648
    %v1844 = vmul.f32 %v1843, 1.442695
    %v1845 = vpow.pop %v1844
    %v1846 = vadd.f32 %v1845, 1.0
    %v1847 = vrcp.pop %v1846
    %v1848 = vmul.f32 %v1846, %v1847
    %v1849 = vsub.f32 1.0, %v1848
    %v1850 = vmul.f32 %v1847, %v1849
    %v1851 = vadd.f32 %v1847, %v1850
    %vm1852 = vweird.f32 %v1846
    %vm1853 = vweird.f32 %v1847
    %vm1854 = vmor %vm1852, %vm1853
    %v1855 = vsel %vm1854, %v1847, %v1851
    %v1856 = vand.u32 2147483647, %v1846
    %vm1857 = vcmp.eq.f32.partialorder %v1856, 8.507059e+37
    %v1858 = vand.u32 %v1846, 2147483648
    %v1859 = vor.u32 1.1754944e-38, %v1858
    %v1860 = vsel %vm1857, %v1859, %v1855
    %v1861 = vmul.f32 1.0, %v1860
    %v1862 = vrot.slane %v1786, 4
    %v1864 = vtanh.pop %v1862
    %v1865 = vrot.slane %v1786, 6
    %v1867 = vxor.u32 %v1865, 2147483648
    %v1868 = vmul.f32 %v1867, 1.442695
    %v1869 = vpow.pop %v1868
    %v1870 = vadd.f32 %v1869, 1.0
    %v1871 = vrcp.pop %v1870
    %v1872 = vmul.f32 %v1870, %v1871
    %v1873 = vsub.f32 1.0, %v1872
    %v1874 = vmul.f32 %v1871, %v1873
    %v1875 = vadd.f32 %v1871, %v1874
    %vm1876 = vweird.f32 %v1870
    %vm1877 = vweird.f32 %v1871
    %vm1878 = vmor %vm1876, %vm1877
    %v1879 = vsel %vm1878, %v1871, %v1875
    %v1880 = vand.u32 2147483647, %v1870
    %vm1881 = vcmp.eq.f32.partialorder %v1880, 8.507059e+37
    %v1882 = vand.u32 %v1870, 2147483648
    %v1883 = vor.u32 1.1754944e-38, %v1882
    %v1884 = vsel %vm1881, %v1883, %v1879
    %v1885 = vmul.f32 1.0, %v1884
    %v1886 = vmul.f32 %v1861, 0.0
    %v1887 = vmul.f32 %v1840, %v1864
    %v1888 = vadd.f32 %v1886, %v1887
    %v1889 = vtanh.pop %v1888
    %v1890 = vmul.f32 %v1885, %v1889
    %1893 = vst [vmem:[#allocation1] ss:$2 sm:$0xff] %v1642
    %s1894 = scalar_lea.vmem [#allocation1], 16
    %1895 = vst [vmem:[%s1894] ss:$2 sm:$0xff] %v1643
    %v1896 = vld.sshfl [vmem:[#allocation1] sm:$0xff pattern:$0x75316420]
    %v1897 = vld.sshfl [vmem:[#allocation1 + $0x8] sm:$0xff pattern:$0x75316420]
    %v1898 = vld.sshfl [vmem:[#allocation1 + $0x10] sm:$0xff pattern:$0x75316420]
    %v1899 = vld.sshfl [vmem:[#allocation1 + $0x18] sm:$0xff pattern:$0x75316420]
    %v1901 = vsel %vm112, %v1890, 0
    %v1903 = vsel %vm117, %v1896, 0
    %v1905 = vsel %vm117, %v1897, 0
    %v1907 = vsel %vm117, %v1898, 0
    %v1909 = vsel %vm117, %v1899, 0
    %1911 = vmatpush.msra.mxu0 0.0
    %1912 = vmatpush.msra.mxu0 0.0
    %1913 = vmatpush.msra.mxu0 0.0
    %1914 = vmatpush.msra.mxu0 0.0
    %1915 = vmatpush.msra.mxu0 0.0
    %1916 = vmatpush.msra.mxu0 0.0
    %1917 = vmatpush.msra.mxu0 0.0
    %1918 = vmatpush.msra.mxu0 0.0
    %1919 = vmatpush.msra.mxu0 0.0
    %1920 = vmatpush.msra.mxu0 0.0
    %1921 = vmatpush.msra.mxu0 0.0
    %1922 = vmatpush.msra.mxu0 0.0
    %1923 = vmatpush.msra.mxu0 0.0
    %1924 = vmatpush.msra.mxu0 0.0
    %1925 = vmatpush.msra.mxu0 0.0
    %1926 = vmatpush.msra.mxu0 %v1903
    %1927 = vmatmul.f32.gmra.mxu0 %v1901
    %v1928 = vpop.f32.mrf.mxu0
    %v1929 = vadd.f32 0.0, %v1928
    %1930 = vdwg.mxu0
    %1931 = vmatpush.msra.mxu0 0.0
    %1932 = vmatpush.msra.mxu0 0.0
    %1933 = vmatpush.msra.mxu0 0.0
    %1934 = vmatpush.msra.mxu0 0.0
    %1935 = vmatpush.msra.mxu0 0.0
    %1936 = vmatpush.msra.mxu0 0.0
    %1937 = vmatpush.msra.mxu0 0.0
    %1938 = vmatpush.msra.mxu0 0.0
    %1939 = vmatpush.msra.mxu0 0.0
    %1940 = vmatpush.msra.mxu0 0.0
    %1941 = vmatpush.msra.mxu0 0.0
    %1942 = vmatpush.msra.mxu0 0.0
    %1943 = vmatpush.msra.mxu0 0.0
    %1944 = vmatpush.msra.mxu0 0.0
    %1945 = vmatpush.msra.mxu0 0.0
    %1946 = vmatpush.msra.mxu0 %v1905
    %1947 = vmatmul.f32.gmra.mxu0 %v1901
    %v1948 = vpop.f32.mrf.mxu0
    %v1949 = vadd.f32 0.0, %v1948
    %1950 = vdwg.mxu0
    %1951 = vmatpush.msra.mxu0 0.0
    %1952 = vmatpush.msra.mxu0 0.0
    %1953 = vmatpush.msra.mxu0 0.0
    %1954 = vmatpush.msra.mxu0 0.0
    %1955 = vmatpush.msra.mxu0 0.0
    %1956 = vmatpush.msra.mxu0 0.0
    %1957 = vmatpush.msra.mxu0 0.0
    %1958 = vmatpush.msra.mxu0 0.0
    %1959 = vmatpush.msra.mxu0 0.0
    %1960 = vmatpush.msra.mxu0 0.0
    %1961 = vmatpush.msra.mxu0 0.0
    %1962 = vmatpush.msra.mxu0 0.0
    %1963 = vmatpush.msra.mxu0 0.0
    %1964 = vmatpush.msra.mxu0 0.0
    %1965 = vmatpush.msra.mxu0 0.0
    %1966 = vmatpush.msra.mxu0 %v1907
    %1967 = vmatmul.f32.gmra.mxu0 %v1901
    %v1968 = vpop.f32.mrf.mxu0
    %v1969 = vadd.f32 0.0, %v1968
    %1970 = vdwg.mxu0
    %1971 = vmatpush.msra.mxu0 0.0
    %1972 = vmatpush.msra.mxu0 0.0
    %1973 = vmatpush.msra.mxu0 0.0
    %1974 = vmatpush.msra.mxu0 0.0
    %1975 = vmatpush.msra.mxu0 0.0
    %1976 = vmatpush.msra.mxu0 0.0
    %1977 = vmatpush.msra.mxu0 0.0
    %1978 = vmatpush.msra.mxu0 0.0
    %1979 = vmatpush.msra.mxu0 0.0
    %1980 = vmatpush.msra.mxu0 0.0
    %1981 = vmatpush.msra.mxu0 0.0
    %1982 = vmatpush.msra.mxu0 0.0
    %1983 = vmatpush.msra.mxu0 0.0
    %1984 = vmatpush.msra.mxu0 0.0
    %1985 = vmatpush.msra.mxu0 0.0
    %1986 = vmatpush.msra.mxu0 %v1909
    %1987 = vmatmul.f32.gmra.mxu0 %v1901
    %v1988 = vpop.f32.mrf.mxu0
    %v1989 = vadd.f32 0.0, %v1988
    %1990 = vdwg.mxu0
    %v1995 = vrot.slane %v1949, 6
    %v1996 = vrot.slane %v1969, 4
    %v1997 = vrot.slane %v1989, 2
    %v1998 = vsel %vm232, %v1929, %v1995
    %v1999 = vsel %vm234, %v1996, %v1997
    %v2000 = vsel %vm236, %v1998, %v1999
    %v2002 = vadd.f32 %v1790, %v2000
    %v2003 = vxor.u32 %v2002, 2147483648
    %v2004 = vmul.f32 %v2003, 1.442695
    %v2005 = vpow.pop %v2004
    %v2006 = vadd.f32 %v2005, 1.0
    %v2007 = vrcp.pop %v2006
    %v2008 = vmul.f32 %v2006, %v2007
    %v2009 = vsub.f32 1.0, %v2008
    %v2010 = vmul.f32 %v2007, %v2009
    %v2011 = vadd.f32 %v2007, %v2010
    %vm2012 = vweird.f32 %v2006
    %vm2013 = vweird.f32 %v2007
    %vm2014 = vmor %vm2012, %vm2013
    %v2015 = vsel %vm2014, %v2007, %v2011
    %v2016 = vand.u32 2147483647, %v2006
    %vm2017 = vcmp.eq.f32.partialorder %v2016, 8.507059e+37
    %v2018 = vand.u32 %v2006, 2147483648
    %v2019 = vor.u32 1.1754944e-38, %v2018
    %v2020 = vsel %vm2017, %v2019, %v2015
    %v2021 = vmul.f32 1.0, %v2020
    %v2023 = vrot.slane %v2002, 2
    %v2025 = vxor.u32 %v2023, 2147483648
    %v2026 = vmul.f32 %v2025, 1.442695
    %v2027 = vpow.pop %v2026
    %v2028 = vadd.f32 %v2027, 1.0
    %v2029 = vrcp.pop %v2028
    %v2030 = vmul.f32 %v2028, %v2029
    %v2031 = vsub.f32 1.0, %v2030
    %v2032 = vmul.f32 %v2029, %v2031
    %v2033 = vadd.f32 %v2029, %v2032
    %vm2034 = vweird.f32 %v2028
    %vm2035 = vweird.f32 %v2029
    %vm2036 = vmor %vm2034, %vm2035
    %v2037 = vsel %vm2036, %v2029, %v2033
    %v2038 = vand.u32 2147483647, %v2028
    %vm2039 = vcmp.eq.f32.partialorder %v2038, 8.507059e+37
    %v2040 = vand.u32 %v2028, 2147483648
    %v2041 = vor.u32 1.1754944e-38, %v2040
    %v2042 = vsel %vm2039, %v2041, %v2037
    %v2043 = vmul.f32 1.0, %v2042
    %v2044 = vrot.slane %v2002, 4
    %v2046 = vtanh.pop %v2044
    %v2047 = vrot.slane %v2002, 6
    %v2049 = vxor.u32 %v2047, 2147483648
    %v2050 = vmul.f32 %v2049, 1.442695
    %v2051 = vpow.pop %v2050
    %v2052 = vadd.f32 %v2051, 1.0
    %v2053 = vrcp.pop %v2052
    %v2054 = vmul.f32 %v2052, %v2053
    %v2055 = vsub.f32 1.0, %v2054
    %v2056 = vmul.f32 %v2053, %v2055
    %v2057 = vadd.f32 %v2053, %v2056
    %vm2058 = vweird.f32 %v2052
    %vm2059 = vweird.f32 %v2053
    %vm2060 = vmor %vm2058, %vm2059
    %v2061 = vsel %vm2060, %v2053, %v2057
    %v2062 = vand.u32 2147483647, %v2052
    %vm2063 = vcmp.eq.f32.partialorder %v2062, 8.507059e+37
    %v2064 = vand.u32 %v2052, 2147483648
    %v2065 = vor.u32 1.1754944e-38, %v2064
    %v2066 = vsel %vm2063, %v2065, %v2061
    %v2067 = vmul.f32 1.0, %v2066
    %v2068 = vmul.f32 %v2043, %v1888
    %v2069 = vmul.f32 %v2021, %v2046
    %v2070 = vadd.f32 %v2068, %v2069
    %v2071 = vtanh.pop %v2070
    %v2072 = vmul.f32 %v2067, %v2071
    %2073 = vst [vmem:[#allocation1] ss:$2 sm:$0xff] %v1642
    %s2074 = scalar_lea.vmem [#allocation1], 16
    %2075 = vst [vmem:[%s2074] ss:$2 sm:$0xff] %v1643
    %v2076 = vld.sshfl [vmem:[#allocation1] sm:$0xff pattern:$0x75316420]
    %v2077 = vld.sshfl [vmem:[#allocation1 + $0x8] sm:$0xff pattern:$0x75316420]
    %v2078 = vld.sshfl [vmem:[#allocation1 + $0x10] sm:$0xff pattern:$0x75316420]
    %v2079 = vld.sshfl [vmem:[#allocation1 + $0x18] sm:$0xff pattern:$0x75316420]
    %v2081 = vsel %vm112, %v2072, 0
    %v2083 = vsel %vm117, %v2076, 0
    %v2085 = vsel %vm117, %v2077, 0
    %v2087 = vsel %vm117, %v2078, 0
    %v2089 = vsel %vm117, %v2079, 0
    %2091 = vmatpush.msra.mxu0 0.0
    %2092 = vmatpush.msra.mxu0 0.0
    %2093 = vmatpush.msra.mxu0 0.0
    %2094 = vmatpush.msra.mxu0 0.0
    %2095 = vmatpush.msra.mxu0 0.0
    %2096 = vmatpush.msra.mxu0 0.0
    %2097 = vmatpush.msra.mxu0 0.0
    %2098 = vmatpush.msra.mxu0 0.0
    %2099 = vmatpush.msra.mxu0 0.0
    %2100 = vmatpush.msra.mxu0 0.0
    %2101 = vmatpush.msra.mxu0 0.0
    %2102 = vmatpush.msra.mxu0 0.0
    %2103 = vmatpush.msra.mxu0 0.0
    %2104 = vmatpush.msra.mxu0 0.0
    %2105 = vmatpush.msra.mxu0 0.0
    %2106 = vmatpush.msra.mxu0 %v2083
    %2107 = vmatmul.f32.gmra.mxu0 %v2081
    %v2108 = vpop.f32.mrf.mxu0
    %v2109 = vadd.f32 0.0, %v2108
    %2110 = vdwg.mxu0
    %2111 = vmatpush.msra.mxu0 0.0
    %2112 = vmatpush.msra.mxu0 0.0
    %2113 = vmatpush.msra.mxu0 0.0
    %2114 = vmatpush.msra.mxu0 0.0
    %2115 = vmatpush.msra.mxu0 0.0
    %2116 = vmatpush.msra.mxu0 0.0
    %2117 = vmatpush.msra.mxu0 0.0
    %2118 = vmatpush.msra.mxu0 0.0
    %2119 = vmatpush.msra.mxu0 0.0
    %2120 = vmatpush.msra.mxu0 0.0
    %2121 = vmatpush.msra.mxu0 0.0
    %2122 = vmatpush.msra.mxu0 0.0
    %2123 = vmatpush.msra.mxu0 0.0
    %2124 = vmatpush.msra.mxu0 0.0
    %2125 = vmatpush.msra.mxu0 0.0
    %2126 = vmatpush.msra.mxu0 %v2085
    %2127 = vmatmul.f32.gmra.mxu0 %v2081
    %v2128 = vpop.f32.mrf.mxu0
    %v2129 = vadd.f32 0.0, %v2128
    %2130 = vdwg.mxu0
    %2131 = vmatpush.msra.mxu0 0.0
    %2132 = vmatpush.msra.mxu0 0.0
    %2133 = vmatpush.msra.mxu0 0.0
    %2134 = vmatpush.msra.mxu0 0.0
    %2135 = vmatpush.msra.mxu0 0.0
    %2136 = vmatpush.msra.mxu0 0.0
    %2137 = vmatpush.msra.mxu0 0.0
    %2138 = vmatpush.msra.mxu0 0.0
    %2139 = vmatpush.msra.mxu0 0.0
    %2140 = vmatpush.msra.mxu0 0.0
    %2141 = vmatpush.msra.mxu0 0.0
    %2142 = vmatpush.msra.mxu0 0.0
    %2143 = vmatpush.msra.mxu0 0.0
    %2144 = vmatpush.msra.mxu0 0.0
    %2145 = vmatpush.msra.mxu0 0.0
    %2146 = vmatpush.msra.mxu0 %v2087
    %2147 = vmatmul.f32.gmra.mxu0 %v2081
    %v2148 = vpop.f32.mrf.mxu0
    %v2149 = vadd.f32 0.0, %v2148
    %2150 = vdwg.mxu0
    %2151 = vmatpush.msra.mxu0 0.0
    %2152 = vmatpush.msra.mxu0 0.0
    %2153 = vmatpush.msra.mxu0 0.0
    %2154 = vmatpush.msra.mxu0 0.0
    %2155 = vmatpush.msra.mxu0 0.0
    %2156 = vmatpush.msra.mxu0 0.0
    %2157 = vmatpush.msra.mxu0 0.0
    %2158 = vmatpush.msra.mxu0 0.0
    %2159 = vmatpush.msra.mxu0 0.0
    %2160 = vmatpush.msra.mxu0 0.0
    %2161 = vmatpush.msra.mxu0 0.0
    %2162 = vmatpush.msra.mxu0 0.0
    %2163 = vmatpush.msra.mxu0 0.0
    %2164 = vmatpush.msra.mxu0 0.0
    %2165 = vmatpush.msra.mxu0 0.0
    %2166 = vmatpush.msra.mxu0 %v2089
    %2167 = vmatmul.f32.gmra.mxu0 %v2081
    %v2168 = vpop.f32.mrf.mxu0
    %v2169 = vadd.f32 0.0, %v2168
    %2170 = vdwg.mxu0
    %v2175 = vrot.slane %v2129, 6
    %v2176 = vrot.slane %v2149, 4
    %v2177 = vrot.slane %v2169, 2
    %v2178 = vsel %vm232, %v2109, %v2175
    %v2179 = vsel %vm234, %v2176, %v2177
    %v2180 = vsel %vm236, %v2178, %v2179
    %v2182 = vadd.f32 %v1794, %v2180
    %v2183 = vxor.u32 %v2182, 2147483648
    %v2184 = vmul.f32 %v2183, 1.442695
    %v2185 = vpow.pop %v2184
    %v2186 = vadd.f32 %v2185, 1.0
    %v2187 = vrcp.pop %v2186
    %v2188 = vmul.f32 %v2186, %v2187
    %v2189 = vsub.f32 1.0, %v2188
    %v2190 = vmul.f32 %v2187, %v2189
    %v2191 = vadd.f32 %v2187, %v2190
    %vm2192 = vweird.f32 %v2186
    %vm2193 = vweird.f32 %v2187
    %vm2194 = vmor %vm2192, %vm2193
    %v2195 = vsel %vm2194, %v2187, %v2191
    %v2196 = vand.u32 2147483647, %v2186
    %vm2197 = vcmp.eq.f32.partialorder %v2196, 8.507059e+37
    %v2198 = vand.u32 %v2186, 2147483648
    %v2199 = vor.u32 1.1754944e-38, %v2198
    %v2200 = vsel %vm2197, %v2199, %v2195
    %v2201 = vmul.f32 1.0, %v2200
    %v2203 = vrot.slane %v2182, 2
    %v2205 = vxor.u32 %v2203, 2147483648
    %v2206 = vmul.f32 %v2205, 1.442695
    %v2207 = vpow.pop %v2206
    %v2208 = vadd.f32 %v2207, 1.0
    %v2209 = vrcp.pop %v2208
    %v2210 = vmul.f32 %v2208, %v2209
    %v2211 = vsub.f32 1.0, %v2210
    %v2212 = vmul.f32 %v2209, %v2211
    %v2213 = vadd.f32 %v2209, %v2212
    %vm2214 = vweird.f32 %v2208
    %vm2215 = vweird.f32 %v2209
    %vm2216 = vmor %vm2214, %vm2215
    %v2217 = vsel %vm2216, %v2209, %v2213
    %v2218 = vand.u32 2147483647, %v2208
    %vm2219 = vcmp.eq.f32.partialorder %v2218, 8.507059e+37
    %v2220 = vand.u32 %v2208, 2147483648
    %v2221 = vor.u32 1.1754944e-38, %v2220
    %v2222 = vsel %vm2219, %v2221, %v2217
    %v2223 = vmul.f32 1.0, %v2222
    %v2224 = vrot.slane %v2182, 4
    %v2226 = vtanh.pop %v2224
    %v2227 = vrot.slane %v2182, 6
    %v2229 = vxor.u32 %v2227, 2147483648
    %v2230 = vmul.f32 %v2229, 1.442695
    %v2231 = vpow.pop %v2230
    %v2232 = vadd.f32 %v2231, 1.0
    %v2233 = vrcp.pop %v2232
    %v2234 = vmul.f32 %v2232, %v2233
    %v2235 = vsub.f32 1.0, %v2234
    %v2236 = vmul.f32 %v2233, %v2235
    %v2237 = vadd.f32 %v2233, %v2236
    %vm2238 = vweird.f32 %v2232
    %vm2239 = vweird.f32 %v2233
    %vm2240 = vmor %vm2238, %vm2239
    %v2241 = vsel %vm2240, %v2233, %v2237
    %v2242 = vand.u32 2147483647, %v2232
    %vm2243 = vcmp.eq.f32.partialorder %v2242, 8.507059e+37
    %v2244 = vand.u32 %v2232, 2147483648
    %v2245 = vor.u32 1.1754944e-38, %v2244
    %v2246 = vsel %vm2243, %v2245, %v2241
    %v2247 = vmul.f32 1.0, %v2246
    %v2248 = vmul.f32 %v2223, %v2070
    %v2249 = vmul.f32 %v2201, %v2226
    %v2250 = vadd.f32 %v2248, %v2249
    %v2251 = vtanh.pop %v2250
    %v2252 = vmul.f32 %v2247, %v2251
    %2253 = vst [vmem:[#allocation1] ss:$2 sm:$0xff] %v1642
    %s2254 = scalar_lea.vmem [#allocation1], 16
    %2255 = vst [vmem:[%s2254] ss:$2 sm:$0xff] %v1643
    %v2256 = vld.sshfl [vmem:[#allocation1] sm:$0xff pattern:$0x75316420]
    %v2257 = vld.sshfl [vmem:[#allocation1 + $0x8] sm:$0xff pattern:$0x75316420]
    %v2258 = vld.sshfl [vmem:[#allocation1 + $0x10] sm:$0xff pattern:$0x75316420]
    %v2259 = vld.sshfl [vmem:[#allocation1 + $0x18] sm:$0xff pattern:$0x75316420]
    %v2261 = vsel %vm112, %v2252, 0
    %v2263 = vsel %vm117, %v2256, 0
    %v2265 = vsel %vm117, %v2257, 0
    %v2267 = vsel %vm117, %v2258, 0
    %v2269 = vsel %vm117, %v2259, 0
    %2271 = vmatpush.msra.mxu0 0.0
    %2272 = vmatpush.msra.mxu0 0.0
    %2273 = vmatpush.msra.mxu0 0.0
    %2274 = vmatpush.msra.mxu0 0.0
    %2275 = vmatpush.msra.mxu0 0.0
    %2276 = vmatpush.msra.mxu0 0.0
    %2277 = vmatpush.msra.mxu0 0.0
    %2278 = vmatpush.msra.mxu0 0.0
    %2279 = vmatpush.msra.mxu0 0.0
    %2280 = vmatpush.msra.mxu0 0.0
    %2281 = vmatpush.msra.mxu0 0.0
    %2282 = vmatpush.msra.mxu0 0.0
    %2283 = vmatpush.msra.mxu0 0.0
    %2284 = vmatpush.msra.mxu0 0.0
    %2285 = vmatpush.msra.mxu0 0.0
    %2286 = vmatpush.msra.mxu0 %v2263
    %2287 = vmatmul.f32.gmra.mxu0 %v2261
    %v2288 = vpop.f32.mrf.mxu0
    %v2289 = vadd.f32 0.0, %v2288
    %2290 = vdwg.mxu0
    %2291 = vmatpush.msra.mxu0 0.0
    %2292 = vmatpush.msra.mxu0 0.0
    %2293 = vmatpush.msra.mxu0 0.0
    %2294 = vmatpush.msra.mxu0 0.0
    %2295 = vmatpush.msra.mxu0 0.0
    %2296 = vmatpush.msra.mxu0 0.0
    %2297 = vmatpush.msra.mxu0 0.0
    %2298 = vmatpush.msra.mxu0 0.0
    %2299 = vmatpush.msra.mxu0 0.0
    %2300 = vmatpush.msra.mxu0 0.0
    %2301 = vmatpush.msra.mxu0 0.0
    %2302 = vmatpush.msra.mxu0 0.0
    %2303 = vmatpush.msra.mxu0 0.0
    %2304 = vmatpush.msra.mxu0 0.0
    %2305 = vmatpush.msra.mxu0 0.0
    %2306 = vmatpush.msra.mxu0 %v2265
    %2307 = vmatmul.f32.gmra.mxu0 %v2261
    %v2308 = vpop.f32.mrf.mxu0
    %v2309 = vadd.f32 0.0, %v2308
    %2310 = vdwg.mxu0
    %2311 = vmatpush.msra.mxu0 0.0
    %2312 = vmatpush.msra.mxu0 0.0
    %2313 = vmatpush.msra.mxu0 0.0
    %2314 = vmatpush.msra.mxu0 0.0
    %2315 = vmatpush.msra.mxu0 0.0
    %2316 = vmatpush.msra.mxu0 0.0
    %2317 = vmatpush.msra.mxu0 0.0
    %2318 = vmatpush.msra.mxu0 0.0
    %2319 = vmatpush.msra.mxu0 0.0
    %2320 = vmatpush.msra.mxu0 0.0
    %2321 = vmatpush.msra.mxu0 0.0
    %2322 = vmatpush.msra.mxu0 0.0
    %2323 = vmatpush.msra.mxu0 0.0
    %2324 = vmatpush.msra.mxu0 0.0
    %2325 = vmatpush.msra.mxu0 0.0
    %2326 = vmatpush.msra.mxu0 %v2267
    %2327 = vmatmul.f32.gmra.mxu0 %v2261
    %v2328 = vpop.f32.mrf.mxu0
    %v2329 = vadd.f32 0.0, %v2328
    %2330 = vdwg.mxu0
    %2331 = vmatpush.msra.mxu0 0.0
    %2332 = vmatpush.msra.mxu0 0.0
    %2333 = vmatpush.msra.mxu0 0.0
    %2334 = vmatpush.msra.mxu0 0.0
    %2335 = vmatpush.msra.mxu0 0.0
    %2336 = vmatpush.msra.mxu0 0.0
    %2337 = vmatpush.msra.mxu0 0.0
    %2338 = vmatpush.msra.mxu0 0.0
    %2339 = vmatpush.msra.mxu0 0.0
    %2340 = vmatpush.msra.mxu0 0.0
    %2341 = vmatpush.msra.mxu0 0.0
    %2342 = vmatpush.msra.mxu0 0.0
    %2343 = vmatpush.msra.mxu0 0.0
    %2344 = vmatpush.msra.mxu0 0.0
    %2345 = vmatpush.msra.mxu0 0.0
    %2346 = vmatpush.msra.mxu0 %v2269
    %2347 = vmatmul.f32.gmra.mxu0 %v2261
    %v2348 = vpop.f32.mrf.mxu0
    %v2349 = vadd.f32 0.0, %v2348
    %2350 = vdwg.mxu0
    %v2355 = vrot.slane %v2309, 6
    %v2356 = vrot.slane %v2329, 4
    %v2357 = vrot.slane %v2349, 2
    %v2358 = vsel %vm232, %v2289, %v2355
    %v2359 = vsel %vm234, %v2356, %v2357
    %v2360 = vsel %vm236, %v2358, %v2359
    %v2362 = vadd.f32 %v1798, %v2360
    %v2363 = vxor.u32 %v2362, 2147483648
    %v2364 = vmul.f32 %v2363, 1.442695
    %v2365 = vpow.pop %v2364
    %v2366 = vadd.f32 %v2365, 1.0
    %v2367 = vrcp.pop %v2366
    %v2368 = vmul.f32 %v2366, %v2367
    %v2369 = vsub.f32 1.0, %v2368
    %v2370 = vmul.f32 %v2367, %v2369
    %v2371 = vadd.f32 %v2367, %v2370
    %vm2372 = vweird.f32 %v2366
    %vm2373 = vweird.f32 %v2367
    %vm2374 = vmor %vm2372, %vm2373
    %v2375 = vsel %vm2374, %v2367, %v2371
    %v2376 = vand.u32 2147483647, %v2366
    %vm2377 = vcmp.eq.f32.partialorder %v2376, 8.507059e+37
    %v2378 = vand.u32 %v2366, 2147483648
    %v2379 = vor.u32 1.1754944e-38, %v2378
    %v2380 = vsel %vm2377, %v2379, %v2375
    %v2381 = vmul.f32 1.0, %v2380
    %v2383 = vrot.slane %v2362, 2
    %v2385 = vxor.u32 %v2383, 2147483648
    %v2386 = vmul.f32 %v2385, 1.442695
    %v2387 = vpow.pop %v2386
    %v2388 = vadd.f32 %v2387, 1.0
    %v2389 = vrcp.pop %v2388
    %v2390 = vmul.f32 %v2388, %v2389
    %v2391 = vsub.f32 1.0, %v2390
    %v2392 = vmul.f32 %v2389, %v2391
    %v2393 = vadd.f32 %v2389, %v2392
    %vm2394 = vweird.f32 %v2388
    %vm2395 = vweird.f32 %v2389
    %vm2396 = vmor %vm2394, %vm2395
    %v2397 = vsel %vm2396, %v2389, %v2393
    %v2398 = vand.u32 2147483647, %v2388
    %vm2399 = vcmp.eq.f32.partialorder %v2398, 8.507059e+37
    %v2400 = vand.u32 %v2388, 2147483648
    %v2401 = vor.u32 1.1754944e-38, %v2400
    %v2402 = vsel %vm2399, %v2401, %v2397
    %v2403 = vmul.f32 1.0, %v2402
    %v2404 = vrot.slane %v2362, 4
    %v2406 = vtanh.pop %v2404
    %v2407 = vrot.slane %v2362, 6
    %v2409 = vxor.u32 %v2407, 2147483648
    %v2410 = vmul.f32 %v2409, 1.442695
    %v2411 = vpow.pop %v2410
    %v2412 = vadd.f32 %v2411, 1.0
    %v2413 = vrcp.pop %v2412
    %v2414 = vmul.f32 %v2412, %v2413
    %v2415 = vsub.f32 1.0, %v2414
    %v2416 = vmul.f32 %v2413, %v2415
    %v2417 = vadd.f32 %v2413, %v2416
    %vm2418 = vweird.f32 %v2412
    %vm2419 = vweird.f32 %v2413
    %vm2420 = vmor %vm2418, %vm2419
    %v2421 = vsel %vm2420, %v2413, %v2417
    %v2422 = vand.u32 2147483647, %v2412
    %vm2423 = vcmp.eq.f32.partialorder %v2422, 8.507059e+37
    %v2424 = vand.u32 %v2412, 2147483648
    %v2425 = vor.u32 1.1754944e-38, %v2424
    %v2426 = vsel %vm2423, %v2425, %v2421
    %v2427 = vmul.f32 1.0, %v2426
    %v2428 = vmul.f32 %v2403, %v2250
    %v2429 = vmul.f32 %v2381, %v2406
    %v2430 = vadd.f32 %v2428, %v2429
    %v2431 = vtanh.pop %v2430
    %v2432 = vmul.f32 %v2427, %v2431
    %2433 = vst [vmem:[#allocation1] ss:$2 sm:$0xff] %v1642
    %s2434 = scalar_lea.vmem [#allocation1], 16
    %2435 = vst [vmem:[%s2434] ss:$2 sm:$0xff] %v1643
    %v2436 = vld.sshfl [vmem:[#allocation1] sm:$0xff pattern:$0x75316420]
    %v2437 = vld.sshfl [vmem:[#allocation1 + $0x8] sm:$0xff pattern:$0x75316420]
    %v2438 = vld.sshfl [vmem:[#allocation1 + $0x10] sm:$0xff pattern:$0x75316420]
    %v2439 = vld.sshfl [vmem:[#allocation1 + $0x18] sm:$0xff pattern:$0x75316420]
    %v2441 = vsel %vm112, %v2432, 0
    %v2443 = vsel %vm117, %v2436, 0
    %v2445 = vsel %vm117, %v2437, 0
    %v2447 = vsel %vm117, %v2438, 0
    %v2449 = vsel %vm117, %v2439, 0
    %2451 = vmatpush.msra.mxu0 0.0
    %2452 = vmatpush.msra.mxu0 0.0
    %2453 = vmatpush.msra.mxu0 0.0
    %2454 = vmatpush.msra.mxu0 0.0
    %2455 = vmatpush.msra.mxu0 0.0
    %2456 = vmatpush.msra.mxu0 0.0
    %2457 = vmatpush.msra.mxu0 0.0
    %2458 = vmatpush.msra.mxu0 0.0
    %2459 = vmatpush.msra.mxu0 0.0
    %2460 = vmatpush.msra.mxu0 0.0
    %2461 = vmatpush.msra.mxu0 0.0
    %2462 = vmatpush.msra.mxu0 0.0
    %2463 = vmatpush.msra.mxu0 0.0
    %2464 = vmatpush.msra.mxu0 0.0
    %2465 = vmatpush.msra.mxu0 0.0
    %2466 = vmatpush.msra.mxu0 %v2443
    %2467 = vmatmul.f32.gmra.mxu0 %v2441
    %v2468 = vpop.f32.mrf.mxu0
    %v2469 = vadd.f32 0.0, %v2468
    %2470 = vdwg.mxu0
    %2471 = vmatpush.msra.mxu0 0.0
    %2472 = vmatpush.msra.mxu0 0.0
    %2473 = vmatpush.msra.mxu0 0.0
    %2474 = vmatpush.msra.mxu0 0.0
    %2475 = vmatpush.msra.mxu0 0.0
    %2476 = vmatpush.msra.mxu0 0.0
    %2477 = vmatpush.msra.mxu0 0.0
    %2478 = vmatpush.msra.mxu0 0.0
    %2479 = vmatpush.msra.mxu0 0.0
    %2480 = vmatpush.msra.mxu0 0.0
    %2481 = vmatpush.msra.mxu0 0.0
    %2482 = vmatpush.msra.mxu0 0.0
    %2483 = vmatpush.msra.mxu0 0.0
    %2484 = vmatpush.msra.mxu0 0.0
    %2485 = vmatpush.msra.mxu0 0.0
    %2486 = vmatpush.msra.mxu0 %v2445
    %2487 = vmatmul.f32.gmra.mxu0 %v2441
    %v2488 = vpop.f32.mrf.mxu0
    %v2489 = vadd.f32 0.0, %v2488
    %2490 = vdwg.mxu0
    %2491 = vmatpush.msra.mxu0 0.0
    %2492 = vmatpush.msra.mxu0 0.0
    %2493 = vmatpush.msra.mxu0 0.0
    %2494 = vmatpush.msra.mxu0 0.0
    %2495 = vmatpush.msra.mxu0 0.0
    %2496 = vmatpush.msra.mxu0 0.0
    %2497 = vmatpush.msra.mxu0 0.0
    %2498 = vmatpush.msra.mxu0 0.0
    %2499 = vmatpush.msra.mxu0 0.0
    %2500 = vmatpush.msra.mxu0 0.0
    %2501 = vmatpush.msra.mxu0 0.0
    %2502 = vmatpush.msra.mxu0 0.0
    %2503 = vmatpush.msra.mxu0 0.0
    %2504 = vmatpush.msra.mxu0 0.0
    %2505 = vmatpush.msra.mxu0 0.0
    %2506 = vmatpush.msra.mxu0 %v2447
    %2507 = vmatmul.f32.gmra.mxu0 %v2441
    %v2508 = vpop.f32.mrf.mxu0
    %v2509 = vadd.f32 0.0, %v2508
    %2510 = vdwg.mxu0
    %2511 = vmatpush.msra.mxu0 0.0
    %2512 = vmatpush.msra.mxu0 0.0
    %2513 = vmatpush.msra.mxu0 0.0
    %2514 = vmatpush.msra.mxu0 0.0
    %2515 = vmatpush.msra.mxu0 0.0
    %2516 = vmatpush.msra.mxu0 0.0
    %2517 = vmatpush.msra.mxu0 0.0
    %2518 = vmatpush.msra.mxu0 0.0
    %2519 = vmatpush.msra.mxu0 0.0
    %2520 = vmatpush.msra.mxu0 0.0
    %2521 = vmatpush.msra.mxu0 0.0
    %2522 = vmatpush.msra.mxu0 0.0
    %2523 = vmatpush.msra.mxu0 0.0
    %2524 = vmatpush.msra.mxu0 0.0
    %2525 = vmatpush.msra.mxu0 0.0
    %2526 = vmatpush.msra.mxu0 %v2449
    %2527 = vmatmul.f32.gmra.mxu0 %v2441
    %v2528 = vpop.f32.mrf.mxu0
    %v2529 = vadd.f32 0.0, %v2528
    %2530 = vdwg.mxu0
    %v2535 = vrot.slane %v2489, 6
    %v2536 = vrot.slane %v2509, 4
    %v2537 = vrot.slane %v2529, 2
    %v2538 = vsel %vm232, %v2469, %v2535
    %v2539 = vsel %vm234, %v2536, %v2537
    %v2540 = vsel %vm236, %v2538, %v2539
    %v2542 = vadd.f32 %v1801, %v2540
    %v2543 = vxor.u32 %v2542, 2147483648
    %v2544 = vmul.f32 %v2543, 1.442695
    %v2545 = vpow.pop %v2544
    %v2546 = vadd.f32 %v2545, 1.0
    %v2547 = vrcp.pop %v2546
    %v2548 = vmul.f32 %v2546, %v2547
    %v2549 = vsub.f32 1.0, %v2548
    %v2550 = vmul.f32 %v2547, %v2549
    %v2551 = vadd.f32 %v2547, %v2550
    %vm2552 = vweird.f32 %v2546
    %vm2553 = vweird.f32 %v2547
    %vm2554 = vmor %vm2552, %vm2553
    %v2555 = vsel %vm2554, %v2547, %v2551
    %v2556 = vand.u32 2147483647, %v2546
    %vm2557 = vcmp.eq.f32.partialorder %v2556, 8.507059e+37
    %v2558 = vand.u32 %v2546, 2147483648
    %v2559 = vor.u32 1.1754944e-38, %v2558
    %v2560 = vsel %vm2557, %v2559, %v2555
    %v2561 = vmul.f32 1.0, %v2560
    %v2563 = vrot.slane %v2542, 2
    %v2565 = vxor.u32 %v2563, 2147483648
    %v2566 = vmul.f32 %v2565, 1.442695
    %v2567 = vpow.pop %v2566
    %v2568 = vadd.f32 %v2567, 1.0
    %v2569 = vrcp.pop %v2568
    %v2570 = vmul.f32 %v2568, %v2569
    %v2571 = vsub.f32 1.0, %v2570
    %v2572 = vmul.f32 %v2569, %v2571
    %v2573 = vadd.f32 %v2569, %v2572
    %vm2574 = vweird.f32 %v2568
    %vm2575 = vweird.f32 %v2569
    %vm2576 = vmor %vm2574, %vm2575
    %v2577 = vsel %vm2576, %v2569, %v2573
    %v2578 = vand.u32 2147483647, %v2568
    %vm2579 = vcmp.eq.f32.partialorder %v2578, 8.507059e+37
    %v2580 = vand.u32 %v2568, 2147483648
    %v2581 = vor.u32 1.1754944e-38, %v2580
    %v2582 = vsel %vm2579, %v2581, %v2577
    %v2583 = vmul.f32 1.0, %v2582
    %v2584 = vrot.slane %v2542, 4
    %v2586 = vtanh.pop %v2584
    %v2587 = vrot.slane %v2542, 6
    %v2589 = vxor.u32 %v2587, 2147483648
    %v2590 = vmul.f32 %v2589, 1.442695
    %v2591 = vpow.pop %v2590
    %v2592 = vadd.f32 %v2591, 1.0
    %v2593 = vrcp.pop %v2592
    %v2594 = vmul.f32 %v2592, %v2593
    %v2595 = vsub.f32 1.0, %v2594
    %v2596 = vmul.f32 %v2593, %v2595
    %v2597 = vadd.f32 %v2593, %v2596
    %vm2598 = vweird.f32 %v2592
    %vm2599 = vweird.f32 %v2593
    %vm2600 = vmor %vm2598, %vm2599
    %v2601 = vsel %vm2600, %v2593, %v2597
    %v2602 = vand.u32 2147483647, %v2592
    %vm2603 = vcmp.eq.f32.partialorder %v2602, 8.507059e+37
    %v2604 = vand.u32 %v2592, 2147483648
    %v2605 = vor.u32 1.1754944e-38, %v2604
    %v2606 = vsel %vm2603, %v2605, %v2601
    %v2607 = vmul.f32 1.0, %v2606
    %v2608 = vmul.f32 %v2583, %v2430
    %v2609 = vmul.f32 %v2561, %v2586
    %v2610 = vadd.f32 %v2608, %v2609
    %v2611 = vtanh.pop %v2610
    %v2612 = vmul.f32 %v2607, %v2611
    %2613 = vst [vmem:[#allocation1] ss:$2 sm:$0xff] %v1642
    %s2614 = scalar_lea.vmem [#allocation1], 16
    %2615 = vst [vmem:[%s2614] ss:$2 sm:$0xff] %v1643
    %v2616 = vld.sshfl [vmem:[#allocation1] sm:$0xff pattern:$0x75316420]
    %v2617 = vld.sshfl [vmem:[#allocation1 + $0x8] sm:$0xff pattern:$0x75316420]
    %v2618 = vld.sshfl [vmem:[#allocation1 + $0x10] sm:$0xff pattern:$0x75316420]
    %v2619 = vld.sshfl [vmem:[#allocation1 + $0x18] sm:$0xff pattern:$0x75316420]
    %v2621 = vsel %vm112, %v2612, 0
    %v2623 = vsel %vm117, %v2616, 0
    %v2625 = vsel %vm117, %v2617, 0
    %v2627 = vsel %vm117, %v2618, 0
    %v2629 = vsel %vm117, %v2619, 0
    %2631 = vmatpush.msra.mxu0 0.0
    %2632 = vmatpush.msra.mxu0 0.0
    %2633 = vmatpush.msra.mxu0 0.0
    %2634 = vmatpush.msra.mxu0 0.0
    %2635 = vmatpush.msra.mxu0 0.0
    %2636 = vmatpush.msra.mxu0 0.0
    %2637 = vmatpush.msra.mxu0 0.0
    %2638 = vmatpush.msra.mxu0 0.0
    %2639 = vmatpush.msra.mxu0 0.0
    %2640 = vmatpush.msra.mxu0 0.0
    %2641 = vmatpush.msra.mxu0 0.0
    %2642 = vmatpush.msra.mxu0 0.0
    %2643 = vmatpush.msra.mxu0 0.0
    %2644 = vmatpush.msra.mxu0 0.0
    %2645 = vmatpush.msra.mxu0 0.0
    %2646 = vmatpush.msra.mxu0 %v2623
    %2647 = vmatmul.f32.gmra.mxu0 %v2621
    %v2648 = vpop.f32.mrf.mxu0
    %v2649 = vadd.f32 0.0, %v2648
    %2650 = vdwg.mxu0
    %2651 = vmatpush.msra.mxu0 0.0
    %2652 = vmatpush.msra.mxu0 0.0
    %2653 = vmatpush.msra.mxu0 0.0
    %2654 = vmatpush.msra.mxu0 0.0
    %2655 = vmatpush.msra.mxu0 0.0
    %2656 = vmatpush.msra.mxu0 0.0
    %2657 = vmatpush.msra.mxu0 0.0
    %2658 = vmatpush.msra.mxu0 0.0
    %2659 = vmatpush.msra.mxu0 0.0
    %2660 = vmatpush.msra.mxu0 0.0
    %2661 = vmatpush.msra.mxu0 0.0
    %2662 = vmatpush.msra.mxu0 0.0
    %2663 = vmatpush.msra.mxu0 0.0
    %2664 = vmatpush.msra.mxu0 0.0
    %2665 = vmatpush.msra.mxu0 0.0
    %2666 = vmatpush.msra.mxu0 %v2625
    %2667 = vmatmul.f32.gmra.mxu0 %v2621
    %v2668 = vpop.f32.mrf.mxu0
    %v2669 = vadd.f32 0.0, %v2668
    %2670 = vdwg.mxu0
    %2671 = vmatpush.msra.mxu0 0.0
    %2672 = vmatpush.msra.mxu0 0.0
    %2673 = vmatpush.msra.mxu0 0.0
    %2674 = vmatpush.msra.mxu0 0.0
    %2675 = vmatpush.msra.mxu0 0.0
    %2676 = vmatpush.msra.mxu0 0.0
    %2677 = vmatpush.msra.mxu0 0.0
    %2678 = vmatpush.msra.mxu0 0.0
    %2679 = vmatpush.msra.mxu0 0.0
    %2680 = vmatpush.msra.mxu0 0.0
    %2681 = vmatpush.msra.mxu0 0.0
    %2682 = vmatpush.msra.mxu0 0.0
    %2683 = vmatpush.msra.mxu0 0.0
    %2684 = vmatpush.msra.mxu0 0.0
    %2685 = vmatpush.msra.mxu0 0.0
    %2686 = vmatpush.msra.mxu0 %v2627
    %2687 = vmatmul.f32.gmra.mxu0 %v2621
    %v2688 = vpop.f32.mrf.mxu0
    %v2689 = vadd.f32 0.0, %v2688
    %2690 = vdwg.mxu0
    %2691 = vmatpush.msra.mxu0 0.0
    %2692 = vmatpush.msra.mxu0 0.0
    %2693 = vmatpush.msra.mxu0 0.0
    %2694 = vmatpush.msra.mxu0 0.0
    %2695 = vmatpush.msra.mxu0 0.0
    %2696 = vmatpush.msra.mxu0 0.0
    %2697 = vmatpush.msra.mxu0 0.0
    %2698 = vmatpush.msra.mxu0 0.0
    %2699 = vmatpush.msra.mxu0 0.0
    %2700 = vmatpush.msra.mxu0 0.0
    %2701 = vmatpush.msra.mxu0 0.0
    %2702 = vmatpush.msra.mxu0 0.0
    %2703 = vmatpush.msra.mxu0 0.0
    %2704 = vmatpush.msra.mxu0 0.0
    %2705 = vmatpush.msra.mxu0 0.0
    %2706 = vmatpush.msra.mxu0 %v2629
    %2707 = vmatmul.f32.gmra.mxu0 %v2621
    %v2708 = vpop.f32.mrf.mxu0
    %v2709 = vadd.f32 0.0, %v2708
    %2710 = vdwg.mxu0
    %v2715 = vrot.slane %v2669, 6
    %v2716 = vrot.slane %v2689, 4
    %v2717 = vrot.slane %v2709, 2
    %v2718 = vsel %vm232, %v2649, %v2715
    %v2719 = vsel %vm234, %v2716, %v2717
    %v2720 = vsel %vm236, %v2718, %v2719
    %v2722 = vadd.f32 %v1805, %v2720
    %v2723 = vxor.u32 %v2722, 2147483648
    %v2724 = vmul.f32 %v2723, 1.442695
    %v2725 = vpow.pop %v2724
    %v2726 = vadd.f32 %v2725, 1.0
    %v2727 = vrcp.pop %v2726
    %v2728 = vmul.f32 %v2726, %v2727
    %v2729 = vsub.f32 1.0, %v2728
    %v2730 = vmul.f32 %v2727, %v2729
    %v2731 = vadd.f32 %v2727, %v2730
    %vm2732 = vweird.f32 %v2726
    %vm2733 = vweird.f32 %v2727
    %vm2734 = vmor %vm2732, %vm2733
    %v2735 = vsel %vm2734, %v2727, %v2731
    %v2736 = vand.u32 2147483647, %v2726
    %vm2737 = vcmp.eq.f32.partialorder %v2736, 8.507059e+37
    %v2738 = vand.u32 %v2726, 2147483648
    %v2739 = vor.u32 1.1754944e-38, %v2738
    %v2740 = vsel %vm2737, %v2739, %v2735
    %v2741 = vmul.f32 1.0, %v2740
    %v2743 = vrot.slane %v2722, 2
    %v2745 = vxor.u32 %v2743, 2147483648
    %v2746 = vmul.f32 %v2745, 1.442695
    %v2747 = vpow.pop %v2746
    %v2748 = vadd.f32 %v2747, 1.0
    %v2749 = vrcp.pop %v2748
    %v2750 = vmul.f32 %v2748, %v2749
    %v2751 = vsub.f32 1.0, %v2750
    %v2752 = vmul.f32 %v2749, %v2751
    %v2753 = vadd.f32 %v2749, %v2752
    %vm2754 = vweird.f32 %v2748
    %vm2755 = vweird.f32 %v2749
    %vm2756 = vmor %vm2754, %vm2755
    %v2757 = vsel %vm2756, %v2749, %v2753
    %v2758 = vand.u32 2147483647, %v2748
    %vm2759 = vcmp.eq.f32.partialorder %v2758, 8.507059e+37
    %v2760 = vand.u32 %v2748, 2147483648
    %v2761 = vor.u32 1.1754944e-38, %v2760
    %v2762 = vsel %vm2759, %v2761, %v2757
    %v2763 = vmul.f32 1.0, %v2762
    %v2764 = vrot.slane %v2722, 4
    %v2766 = vtanh.pop %v2764
    %v2767 = vrot.slane %v2722, 6
    %v2769 = vxor.u32 %v2767, 2147483648
    %v2770 = vmul.f32 %v2769, 1.442695
    %v2771 = vpow.pop %v2770
    %v2772 = vadd.f32 %v2771, 1.0
    %v2773 = vrcp.pop %v2772
    %v2774 = vmul.f32 %v2772, %v2773
    %v2775 = vsub.f32 1.0, %v2774
    %v2776 = vmul.f32 %v2773, %v2775
    %v2777 = vadd.f32 %v2773, %v2776
    %vm2778 = vweird.f32 %v2772
    %vm2779 = vweird.f32 %v2773
    %vm2780 = vmor %vm2778, %vm2779
    %v2781 = vsel %vm2780, %v2773, %v2777
    %v2782 = vand.u32 2147483647, %v2772
    %vm2783 = vcmp.eq.f32.partialorder %v2782, 8.507059e+37
    %v2784 = vand.u32 %v2772, 2147483648
    %v2785 = vor.u32 1.1754944e-38, %v2784
    %v2786 = vsel %vm2783, %v2785, %v2781
    %v2787 = vmul.f32 1.0, %v2786
    %v2788 = vmul.f32 %v2763, %v2610
    %v2789 = vmul.f32 %v2741, %v2766
    %v2790 = vadd.f32 %v2788, %v2789
    %v2791 = vtanh.pop %v2790
    %v2792 = vmul.f32 %v2787, %v2791
    %2793 = vst [vmem:[#allocation1] ss:$2 sm:$0xff] %v1642
    %s2794 = scalar_lea.vmem [#allocation1], 16
    %2795 = vst [vmem:[%s2794] ss:$2 sm:$0xff] %v1643
    %v2796 = vld.sshfl [vmem:[#allocation1] sm:$0xff pattern:$0x75316420]
    %v2797 = vld.sshfl [vmem:[#allocation1 + $0x8] sm:$0xff pattern:$0x75316420]
    %v2798 = vld.sshfl [vmem:[#allocation1 + $0x10] sm:$0xff pattern:$0x75316420]
    %v2799 = vld.sshfl [vmem:[#allocation1 + $0x18] sm:$0xff pattern:$0x75316420]
    %v2801 = vsel %vm112, %v2792, 0
    %v2803 = vsel %vm117, %v2796, 0
    %v2805 = vsel %vm117, %v2797, 0
    %v2807 = vsel %vm117, %v2798, 0
    %v2809 = vsel %vm117, %v2799, 0
    %2811 = vmatpush.msra.mxu0 0.0
    %2812 = vmatpush.msra.mxu0 0.0
    %2813 = vmatpush.msra.mxu0 0.0
    %2814 = vmatpush.msra.mxu0 0.0
    %2815 = vmatpush.msra.mxu0 0.0
    %2816 = vmatpush.msra.mxu0 0.0
    %2817 = vmatpush.msra.mxu0 0.0
    %2818 = vmatpush.msra.mxu0 0.0
    %2819 = vmatpush.msra.mxu0 0.0
    %2820 = vmatpush.msra.mxu0 0.0
    %2821 = vmatpush.msra.mxu0 0.0
    %2822 = vmatpush.msra.mxu0 0.0
    %2823 = vmatpush.msra.mxu0 0.0
    %2824 = vmatpush.msra.mxu0 0.0
    %2825 = vmatpush.msra.mxu0 0.0
    %2826 = vmatpush.msra.mxu0 %v2803
    %2827 = vmatmul.f32.gmra.mxu0 %v2801
    %v2828 = vpop.f32.mrf.mxu0
    %v2829 = vadd.f32 0.0, %v2828
    %2830 = vdwg.mxu0
    %2831 = vmatpush.msra.mxu0 0.0
    %2832 = vmatpush.msra.mxu0 0.0
    %2833 = vmatpush.msra.mxu0 0.0
    %2834 = vmatpush.msra.mxu0 0.0
    %2835 = vmatpush.msra.mxu0 0.0
    %2836 = vmatpush.msra.mxu0 0.0
    %2837 = vmatpush.msra.mxu0 0.0
    %2838 = vmatpush.msra.mxu0 0.0
    %2839 = vmatpush.msra.mxu0 0.0
    %2840 = vmatpush.msra.mxu0 0.0
    %2841 = vmatpush.msra.mxu0 0.0
    %2842 = vmatpush.msra.mxu0 0.0
    %2843 = vmatpush.msra.mxu0 0.0
    %2844 = vmatpush.msra.mxu0 0.0
    %2845 = vmatpush.msra.mxu0 0.0
    %2846 = vmatpush.msra.mxu0 %v2805
    %2847 = vmatmul.f32.gmra.mxu0 %v2801
    %v2848 = vpop.f32.mrf.mxu0
    %v2849 = vadd.f32 0.0, %v2848
    %2850 = vdwg.mxu0
    %2851 = vmatpush.msra.mxu0 0.0
    %2852 = vmatpush.msra.mxu0 0.0
    %2853 = vmatpush.msra.mxu0 0.0
    %2854 = vmatpush.msra.mxu0 0.0
    %2855 = vmatpush.msra.mxu0 0.0
    %2856 = vmatpush.msra.mxu0 0.0
    %2857 = vmatpush.msra.mxu0 0.0
    %2858 = vmatpush.msra.mxu0 0.0
    %2859 = vmatpush.msra.mxu0 0.0
    %2860 = vmatpush.msra.mxu0 0.0
    %2861 = vmatpush.msra.mxu0 0.0
    %2862 = vmatpush.msra.mxu0 0.0
    %2863 = vmatpush.msra.mxu0 0.0
    %2864 = vmatpush.msra.mxu0 0.0
    %2865 = vmatpush.msra.mxu0 0.0
    %2866 = vmatpush.msra.mxu0 %v2807
    %2867 = vmatmul.f32.gmra.mxu0 %v2801
    %v2868 = vpop.f32.mrf.mxu0
    %v2869 = vadd.f32 0.0, %v2868
    %2870 = vdwg.mxu0
    %2871 = vmatpush.msra.mxu0 0.0
    %2872 = vmatpush.msra.mxu0 0.0
    %2873 = vmatpush.msra.mxu0 0.0
    %2874 = vmatpush.msra.mxu0 0.0
    %2875 = vmatpush.msra.mxu0 0.0
    %2876 = vmatpush.msra.mxu0 0.0
    %2877 = vmatpush.msra.mxu0 0.0
    %2878 = vmatpush.msra.mxu0 0.0
    %2879 = vmatpush.msra.mxu0 0.0
    %2880 = vmatpush.msra.mxu0 0.0
    %2881 = vmatpush.msra.mxu0 0.0
    %2882 = vmatpush.msra.mxu0 0.0
    %2883 = vmatpush.msra.mxu0 0.0
    %2884 = vmatpush.msra.mxu0 0.0
    %2885 = vmatpush.msra.mxu0 0.0
    %2886 = vmatpush.msra.mxu0 %v2809
    %2887 = vmatmul.f32.gmra.mxu0 %v2801
    %v2888 = vpop.f32.mrf.mxu0
    %v2889 = vadd.f32 0.0, %v2888
    %2890 = vdwg.mxu0
    %v2895 = vrot.slane %v2849, 6
    %v2896 = vrot.slane %v2869, 4
    %v2897 = vrot.slane %v2889, 2
    %v2898 = vsel %vm232, %v2829, %v2895
    %v2899 = vsel %vm234, %v2896, %v2897
    %v2900 = vsel %vm236, %v2898, %v2899
    %v2902 = vadd.f32 %v1809, %v2900
    %v2903 = vxor.u32 %v2902, 2147483648
    %v2904 = vmul.f32 %v2903, 1.442695
    %v2905 = vpow.pop %v2904
    %v2906 = vadd.f32 %v2905, 1.0
    %v2907 = vrcp.pop %v2906
    %v2908 = vmul.f32 %v2906, %v2907
    %v2909 = vsub.f32 1.0, %v2908
    %v2910 = vmul.f32 %v2907, %v2909
    %v2911 = vadd.f32 %v2907, %v2910
    %vm2912 = vweird.f32 %v2906
    %vm2913 = vweird.f32 %v2907
    %vm2914 = vmor %vm2912, %vm2913
    %v2915 = vsel %vm2914, %v2907, %v2911
    %v2916 = vand.u32 2147483647, %v2906
    %vm2917 = vcmp.eq.f32.partialorder %v2916, 8.507059e+37
    %v2918 = vand.u32 %v2906, 2147483648
    %v2919 = vor.u32 1.1754944e-38, %v2918
    %v2920 = vsel %vm2917, %v2919, %v2915
    %v2921 = vmul.f32 1.0, %v2920
    %v2923 = vrot.slane %v2902, 2
    %v2925 = vxor.u32 %v2923, 2147483648
    %v2926 = vmul.f32 %v2925, 1.442695
    %v2927 = vpow.pop %v2926
    %v2928 = vadd.f32 %v2927, 1.0
    %v2929 = vrcp.pop %v2928
    %v2930 = vmul.f32 %v2928, %v2929
    %v2931 = vsub.f32 1.0, %v2930
    %v2932 = vmul.f32 %v2929, %v2931
    %v2933 = vadd.f32 %v2929, %v2932
    %vm2934 = vweird.f32 %v2928
    %vm2935 = vweird.f32 %v2929
    %vm2936 = vmor %vm2934, %vm2935
    %v2937 = vsel %vm2936, %v2929, %v2933
    %v2938 = vand.u32 2147483647, %v2928
    %vm2939 = vcmp.eq.f32.partialorder %v2938, 8.507059e+37
    %v2940 = vand.u32 %v2928, 2147483648
    %v2941 = vor.u32 1.1754944e-38, %v2940
    %v2942 = vsel %vm2939, %v2941, %v2937
    %v2943 = vmul.f32 1.0, %v2942
    %v2944 = vrot.slane %v2902, 4
    %v2946 = vtanh.pop %v2944
    %v2947 = vrot.slane %v2902, 6
    %v2949 = vxor.u32 %v2947, 2147483648
    %v2950 = vmul.f32 %v2949, 1.442695
    %v2951 = vpow.pop %v2950
    %v2952 = vadd.f32 %v2951, 1.0
    %v2953 = vrcp.pop %v2952
    %v2954 = vmul.f32 %v2952, %v2953
    %v2955 = vsub.f32 1.0, %v2954
    %v2956 = vmul.f32 %v2953, %v2955
    %v2957 = vadd.f32 %v2953, %v2956
    %vm2958 = vweird.f32 %v2952
    %vm2959 = vweird.f32 %v2953
    %vm2960 = vmor %vm2958, %vm2959
    %v2961 = vsel %vm2960, %v2953, %v2957
    %v2962 = vand.u32 2147483647, %v2952
    %vm2963 = vcmp.eq.f32.partialorder %v2962, 8.507059e+37
    %v2964 = vand.u32 %v2952, 2147483648
    %v2965 = vor.u32 1.1754944e-38, %v2964
    %v2966 = vsel %vm2963, %v2965, %v2961
    %v2967 = vmul.f32 1.0, %v2966
    %v2968 = vmul.f32 %v2943, %v2790
    %v2969 = vmul.f32 %v2921, %v2946
    %v2970 = vadd.f32 %v2968, %v2969
    %v2971 = vtanh.pop %v2970
    %v2972 = vmul.f32 %v2967, %v2971
    %2973 = vst [vmem:[#allocation1] ss:$2 sm:$0xff] %v1642
    %s2974 = scalar_lea.vmem [#allocation1], 16
    %2975 = vst [vmem:[%s2974] ss:$2 sm:$0xff] %v1643
    %v2976 = vld.sshfl [vmem:[#allocation1] sm:$0xff pattern:$0x75316420]
    %v2977 = vld.sshfl [vmem:[#allocation1 + $0x8] sm:$0xff pattern:$0x75316420]
    %v2978 = vld.sshfl [vmem:[#allocation1 + $0x10] sm:$0xff pattern:$0x75316420]
    %v2979 = vld.sshfl [vmem:[#allocation1 + $0x18] sm:$0xff pattern:$0x75316420]
    %v2981 = vsel %vm112, %v2972, 0
    %v2983 = vsel %vm117, %v2976, 0
    %v2985 = vsel %vm117, %v2977, 0
    %v2987 = vsel %vm117, %v2978, 0
    %v2989 = vsel %vm117, %v2979, 0
    %2991 = vmatpush.msra.mxu0 0.0
    %2992 = vmatpush.msra.mxu0 0.0
    %2993 = vmatpush.msra.mxu0 0.0
    %2994 = vmatpush.msra.mxu0 0.0
    %2995 = vmatpush.msra.mxu0 0.0
    %2996 = vmatpush.msra.mxu0 0.0
    %2997 = vmatpush.msra.mxu0 0.0
    %2998 = vmatpush.msra.mxu0 0.0
    %2999 = vmatpush.msra.mxu0 0.0
    %3000 = vmatpush.msra.mxu0 0.0
    %3001 = vmatpush.msra.mxu0 0.0
    %3002 = vmatpush.msra.mxu0 0.0
    %3003 = vmatpush.msra.mxu0 0.0
    %3004 = vmatpush.msra.mxu0 0.0
    %3005 = vmatpush.msra.mxu0 0.0
    %3006 = vmatpush.msra.mxu0 %v2983
    %3007 = vmatmul.f32.gmra.mxu0 %v2981
    %v3008 = vpop.f32.mrf.mxu0
    %v3009 = vadd.f32 0.0, %v3008
    %3010 = vdwg.mxu0
    %3011 = vmatpush.msra.mxu0 0.0
    %3012 = vmatpush.msra.mxu0 0.0
    %3013 = vmatpush.msra.mxu0 0.0
    %3014 = vmatpush.msra.mxu0 0.0
    %3015 = vmatpush.msra.mxu0 0.0
    %3016 = vmatpush.msra.mxu0 0.0
    %3017 = vmatpush.msra.mxu0 0.0
    %3018 = vmatpush.msra.mxu0 0.0
    %3019 = vmatpush.msra.mxu0 0.0
    %3020 = vmatpush.msra.mxu0 0.0
    %3021 = vmatpush.msra.mxu0 0.0
    %3022 = vmatpush.msra.mxu0 0.0
    %3023 = vmatpush.msra.mxu0 0.0
    %3024 = vmatpush.msra.mxu0 0.0
    %3025 = vmatpush.msra.mxu0 0.0
    %3026 = vmatpush.msra.mxu0 %v2985
    %3027 = vmatmul.f32.gmra.mxu0 %v2981
    %v3028 = vpop.f32.mrf.mxu0
    %v3029 = vadd.f32 0.0, %v3028
    %3030 = vdwg.mxu0
    %3031 = vmatpush.msra.mxu0 0.0
    %3032 = vmatpush.msra.mxu0 0.0
    %3033 = vmatpush.msra.mxu0 0.0
    %3034 = vmatpush.msra.mxu0 0.0
    %3035 = vmatpush.msra.mxu0 0.0
    %3036 = vmatpush.msra.mxu0 0.0
    %3037 = vmatpush.msra.mxu0 0.0
    %3038 = vmatpush.msra.mxu0 0.0
    %3039 = vmatpush.msra.mxu0 0.0
    %3040 = vmatpush.msra.mxu0 0.0
    %3041 = vmatpush.msra.mxu0 0.0
    %3042 = vmatpush.msra.mxu0 0.0
    %3043 = vmatpush.msra.mxu0 0.0
    %3044 = vmatpush.msra.mxu0 0.0
    %3045 = vmatpush.msra.mxu0 0.0
    %3046 = vmatpush.msra.mxu0 %v2987
    %3047 = vmatmul.f32.gmra.mxu0 %v2981
    %v3048 = vpop.f32.mrf.mxu0
    %v3049 = vadd.f32 0.0, %v3048
    %3050 = vdwg.mxu0
    %3051 = vmatpush.msra.mxu0 0.0
    %3052 = vmatpush.msra.mxu0 0.0
    %3053 = vmatpush.msra.mxu0 0.0
    %3054 = vmatpush.msra.mxu0 0.0
    %3055 = vmatpush.msra.mxu0 0.0
    %3056 = vmatpush.msra.mxu0 0.0
    %3057 = vmatpush.msra.mxu0 0.0
    %3058 = vmatpush.msra.mxu0 0.0
    %3059 = vmatpush.msra.mxu0 0.0
    %3060 = vmatpush.msra.mxu0 0.0
    %3061 = vmatpush.msra.mxu0 0.0
    %3062 = vmatpush.msra.mxu0 0.0
    %3063 = vmatpush.msra.mxu0 0.0
    %3064 = vmatpush.msra.mxu0 0.0
    %3065 = vmatpush.msra.mxu0 0.0
    %3066 = vmatpush.msra.mxu0 %v2989
    %3067 = vmatmul.f32.gmra.mxu0 %v2981
    %v3068 = vpop.f32.mrf.mxu0
    %v3069 = vadd.f32 0.0, %v3068
    %3070 = vdwg.mxu0
    %v3075 = vrot.slane %v3029, 6
    %v3076 = vrot.slane %v3049, 4
    %v3077 = vrot.slane %v3069, 2
    %v3078 = vsel %vm232, %v3009, %v3075
    %v3079 = vsel %vm234, %v3076, %v3077
    %v3080 = vsel %vm236, %v3078, %v3079
    %v3082 = vadd.f32 %v1813, %v3080
    %v3083 = vxor.u32 %v3082, 2147483648
    %v3084 = vmul.f32 %v3083, 1.442695
    %v3085 = vpow.pop %v3084
    %v3086 = vadd.f32 %v3085, 1.0
    %v3087 = vrcp.pop %v3086
    %v3088 = vmul.f32 %v3086, %v3087
    %v3089 = vsub.f32 1.0, %v3088
    %v3090 = vmul.f32 %v3087, %v3089
    %v3091 = vadd.f32 %v3087, %v3090
    %vm3092 = vweird.f32 %v3086
    %vm3093 = vweird.f32 %v3087
    %vm3094 = vmor %vm3092, %vm3093
    %v3095 = vsel %vm3094, %v3087, %v3091
    %v3096 = vand.u32 2147483647, %v3086
    %vm3097 = vcmp.eq.f32.partialorder %v3096, 8.507059e+37
    %v3098 = vand.u32 %v3086, 2147483648
    %v3099 = vor.u32 1.1754944e-38, %v3098
    %v3100 = vsel %vm3097, %v3099, %v3095
    %v3101 = vmul.f32 1.0, %v3100
    %v3103 = vrot.slane %v3082, 2
    %v3105 = vxor.u32 %v3103, 2147483648
    %v3106 = vmul.f32 %v3105, 1.442695
    %v3107 = vpow.pop %v3106
    %v3108 = vadd.f32 %v3107, 1.0
    %v3109 = vrcp.pop %v3108
    %v3110 = vmul.f32 %v3108, %v3109
    %v3111 = vsub.f32 1.0, %v3110
    %v3112 = vmul.f32 %v3109, %v3111
    %v3113 = vadd.f32 %v3109, %v3112
    %vm3114 = vweird.f32 %v3108
    %vm3115 = vweird.f32 %v3109
    %vm3116 = vmor %vm3114, %vm3115
    %v3117 = vsel %vm3116, %v3109, %v3113
    %v3118 = vand.u32 2147483647, %v3108
    %vm3119 = vcmp.eq.f32.partialorder %v3118, 8.507059e+37
    %v3120 = vand.u32 %v3108, 2147483648
    %v3121 = vor.u32 1.1754944e-38, %v3120
    %v3122 = vsel %vm3119, %v3121, %v3117
    %v3123 = vmul.f32 1.0, %v3122
    %v3124 = vrot.slane %v3082, 4
    %v3126 = vtanh.pop %v3124
    %v3127 = vrot.slane %v3082, 6
    %v3129 = vxor.u32 %v3127, 2147483648
    %v3130 = vmul.f32 %v3129, 1.442695
    %v3131 = vpow.pop %v3130
    %v3132 = vadd.f32 %v3131, 1.0
    %v3133 = vrcp.pop %v3132
    %v3134 = vmul.f32 %v3132, %v3133
    %v3135 = vsub.f32 1.0, %v3134
    %v3136 = vmul.f32 %v3133, %v3135
    %v3137 = vadd.f32 %v3133, %v3136
    %vm3138 = vweird.f32 %v3132
    %vm3139 = vweird.f32 %v3133
    %vm3140 = vmor %vm3138, %vm3139
    %v3141 = vsel %vm3140, %v3133, %v3137
    %v3142 = vand.u32 2147483647, %v3132
    %vm3143 = vcmp.eq.f32.partialorder %v3142, 8.507059e+37
    %v3144 = vand.u32 %v3132, 2147483648
    %v3145 = vor.u32 1.1754944e-38, %v3144
    %v3146 = vsel %vm3143, %v3145, %v3141
    %v3147 = vmul.f32 1.0, %v3146
    %v3148 = vmul.f32 %v3123, %v2970
    %v3149 = vmul.f32 %v3101, %v3126
    %v3150 = vadd.f32 %v3148, %v3149
    %v3151 = vtanh.pop %v3150
    %v3152 = vmul.f32 %v3147, %v3151
    %s3153 = scalar_lea.vmem [#allocation1], 1
    %3154 = vst [vmem:[%s3153] ss:$4 sm:$0xff] %v2072
    %v3155 = vld.sshfl [vmem:[#allocation1] sm:$0xff pattern:$0x73625140]
    %s3157 = scalar_lea.vmem [#allocation1], 2
    %3158 = vst [vmem:[%s3157] ss:$4 sm:$0xff] %v2252
    %v3159 = vld.sshfl [vmem:[#allocation1] sm:$0xff pattern:$0x73625140]
    %s3161 = scalar_lea.vmem [#allocation1], 3
    %3162 = vst [vmem:[%s3161] ss:$4 sm:$0xff] %v2432
    %v3163 = vld.sshfl [vmem:[#allocation1] sm:$0xff pattern:$0x73625140]
    %s3165 = scalar_lea.vmem [#allocation1], 1
    %3166 = vst [vmem:[%s3165] ss:$4 sm:$0xff] %v2792
    %v3167 = vld.sshfl [vmem:[#allocation1] sm:$0xff pattern:$0x73625140]
    %s3169 = scalar_lea.vmem [#allocation1], 2
    %3170 = vst [vmem:[%s3169] ss:$4 sm:$0xff] %v2972
    %v3171 = vld.sshfl [vmem:[#allocation1] sm:$0xff pattern:$0x73625140]
    %s3174 = scalar_lea.vmem [#allocation1], 3
    %3175 = vst [vmem:[%s3174] ss:$4 sm:$0xff] %v3152
    %v3176 = vld.sshfl [vmem:[#allocation1] sm:$0xff pattern:$0x73625140]
    %v3178 = vsel %vm232, %v1890, %v3155
    %v3179 = vsel %vm236, %v3178, %v3159
    %v3180 = vsel %vm240, %v3179, %v3163
    %v3181 = vsel %vm232, %v2612, %v3167
    %v3182 = vsel %vm236, %v3181, %v3171
    %v3183 = vsel %vm240, %v3182, %v3176
    %s3184 = scalar_lea.vmem [#allocation2], 32
    %v3185 = vld [vmem:[%s3184] sm:$0x77]
    %v3186 = vld [vmem:[%s3184 + $0x8] sm:$0x77]
    %s3187 = scalar_lea.vmem [#allocation5], 32
    %v3188 = vld [vmem:[%s3187] sm:$0x77]
    %v3189 = vld [vmem:[%s3187 + $0x8] sm:$0x77]
    %s3190 = scalar_lea.vmem %s3, 8
    %v3191 = vld [vmem:[%s3190] sm:$0xf]
    %v3193 = vperm.slane %v3191, 0
    %v3194 = vperm.slane %v3191, 1
    %v3195 = vperm.slane %v3191, 2
    %v3196 = vperm.slane %v3191, 3
    %3203 = vst [vmem:[#allocation1] ss:$2 sm:$0xff] %v3185
    %s3204 = scalar_lea.vmem [#allocation1], 16
    %3205 = vst [vmem:[%s3204] ss:$2 sm:$0xff] %v3186
    %v3206 = vld.sshfl [vmem:[#allocation1] sm:$0xff pattern:$0x75316420]
    %v3207 = vld.sshfl [vmem:[#allocation1 + $0x8] sm:$0xff pattern:$0x75316420]
    %v3208 = vld.sshfl [vmem:[#allocation1 + $0x10] sm:$0xff pattern:$0x75316420]
    %v3209 = vld.sshfl [vmem:[#allocation1 + $0x18] sm:$0xff pattern:$0x75316420]
    %v3211 = vsel %vm112, %v3180, 0
    %v3214 = vsel %vm112, %v3183, 0
    %v3216 = vsel %vm117, %v3206, 0
    %v3218 = vsel %vm117, %v3207, 0
    %v3220 = vsel %vm117, %v3208, 0
    %v3222 = vsel %vm117, %v3209, 0
    %3224 = vmatpush.msra.mxu0 0.0
    %3225 = vmatpush.msra.mxu0 0.0
    %3226 = vmatpush.msra.mxu0 0.0
    %3227 = vmatpush.msra.mxu0 0.0
    %3228 = vmatpush.msra.mxu0 0.0
    %3229 = vmatpush.msra.mxu0 0.0
    %3230 = vmatpush.msra.mxu0 0.0
    %3231 = vmatpush.msra.mxu0 0.0
    %3232 = vmatpush.msra.mxu0 0.0
    %3233 = vmatpush.msra.mxu0 0.0
    %3234 = vmatpush.msra.mxu0 0.0
    %3235 = vmatpush.msra.mxu0 0.0
    %3236 = vmatpush.msra.mxu0 0.0
    %3237 = vmatpush.msra.mxu0 0.0
    %3238 = vmatpush.msra.mxu0 0.0
    %3239 = vmatpush.msra.mxu0 %v3216
    %3240 = vmatmul.f32.gmra.mxu0 %v3211
    %v3241 = vpop.f32.mrf.mxu0
    %v3242 = vadd.f32 %v3193, %v3241
    %3243 = vmatmul.f32.gmra.mxu0 %v3214
    %v3244 = vpop.f32.mrf.mxu0
    %v3245 = vadd.f32 %v3193, %v3244
    %3246 = vdwg.mxu0
    %3247 = vmatpush.msra.mxu0 0.0
    %3248 = vmatpush.msra.mxu0 0.0
    %3249 = vmatpush.msra.mxu0 0.0
    %3250 = vmatpush.msra.mxu0 0.0
    %3251 = vmatpush.msra.mxu0 0.0
    %3252 = vmatpush.msra.mxu0 0.0
    %3253 = vmatpush.msra.mxu0 0.0
    %3254 = vmatpush.msra.mxu0 0.0
    %3255 = vmatpush.msra.mxu0 0.0
    %3256 = vmatpush.msra.mxu0 0.0
    %3257 = vmatpush.msra.mxu0 0.0
    %3258 = vmatpush.msra.mxu0 0.0
    %3259 = vmatpush.msra.mxu0 0.0
    %3260 = vmatpush.msra.mxu0 0.0
    %3261 = vmatpush.msra.mxu0 0.0
    %3262 = vmatpush.msra.mxu0 %v3218
    %3263 = vmatmul.f32.gmra.mxu0 %v3211
    %v3264 = vpop.f32.mrf.mxu0
    %v3265 = vadd.f32 %v3194, %v3264
    %3266 = vmatmul.f32.gmra.mxu0 %v3214
    %v3267 = vpop.f32.mrf.mxu0
    %v3268 = vadd.f32 %v3194, %v3267
    %3269 = vdwg.mxu0
    %3270 = vmatpush.msra.mxu0 0.0
    %3271 = vmatpush.msra.mxu0 0.0
    %3272 = vmatpush.msra.mxu0 0.0
    %3273 = vmatpush.msra.mxu0 0.0
    %3274 = vmatpush.msra.mxu0 0.0
    %3275 = vmatpush.msra.mxu0 0.0
    %3276 = vmatpush.msra.mxu0 0.0
    %3277 = vmatpush.msra.mxu0 0.0
    %3278 = vmatpush.msra.mxu0 0.0
    %3279 = vmatpush.msra.mxu0 0.0
    %3280 = vmatpush.msra.mxu0 0.0
    %3281 = vmatpush.msra.mxu0 0.0
    %3282 = vmatpush.msra.mxu0 0.0
    %3283 = vmatpush.msra.mxu0 0.0
    %3284 = vmatpush.msra.mxu0 0.0
    %3285 = vmatpush.msra.mxu0 %v3220
    %3286 = vmatmul.f32.gmra.mxu0 %v3211
    %v3287 = vpop.f32.mrf.mxu0
    %v3288 = vadd.f32 %v3195, %v3287
    %3289 = vmatmul.f32.gmra.mxu0 %v3214
    %v3290 = vpop.f32.mrf.mxu0
    %v3291 = vadd.f32 %v3195, %v3290
    %3292 = vdwg.mxu0
    %3293 = vmatpush.msra.mxu0 0.0
    %3294 = vmatpush.msra.mxu0 0.0
    %3295 = vmatpush.msra.mxu0 0.0
    %3296 = vmatpush.msra.mxu0 0.0
    %3297 = vmatpush.msra.mxu0 0.0
    %3298 = vmatpush.msra.mxu0 0.0
    %3299 = vmatpush.msra.mxu0 0.0
    %3300 = vmatpush.msra.mxu0 0.0
    %3301 = vmatpush.msra.mxu0 0.0
    %3302 = vmatpush.msra.mxu0 0.0
    %3303 = vmatpush.msra.mxu0 0.0
    %3304 = vmatpush.msra.mxu0 0.0
    %3305 = vmatpush.msra.mxu0 0.0
    %3306 = vmatpush.msra.mxu0 0.0
    %3307 = vmatpush.msra.mxu0 0.0
    %3308 = vmatpush.msra.mxu0 %v3222
    %3309 = vmatmul.f32.gmra.mxu0 %v3211
    %v3310 = vpop.f32.mrf.mxu0
    %v3311 = vadd.f32 %v3196, %v3310
    %3312 = vmatmul.f32.gmra.mxu0 %v3214
    %v3313 = vpop.f32.mrf.mxu0
    %v3314 = vadd.f32 %v3196, %v3313
    %3315 = vdwg.mxu0
    %v3324 = vrot.slane %v3265, 6
    %v3325 = vrot.slane %v3288, 4
    %v3326 = vrot.slane %v3311, 2
    %v3327 = vrot.slane %v3268, 6
    %v3328 = vrot.slane %v3291, 4
    %v3329 = vrot.slane %v3314, 2
    %v3330 = vsel %vm232, %v3242, %v3324
    %v3331 = vsel %vm234, %v3325, %v3326
    %v3332 = vsel %vm236, %v3330, %v3331
    %v3333 = vsel %vm238, %v3242, %v3324
    %v3334 = vsel %vm240, %v3326, %v3325
    %v3335 = vsel %vm242, %v3333, %v3334
    %v3336 = vrot.slane %v3335, 2
    %v3337 = vsel %vm234, %v3242, %v3324
    %v3338 = vsel %vm232, %v3325, %v3326
    %v3339 = vsel %vm236, %v3338, %v3337
    %v3340 = vrot.slane %v3339, 4
    %v3341 = vsel %vm240, %v3324, %v3242
    %v3342 = vsel %vm238, %v3325, %v3326
    %v3343 = vsel %vm242, %v3342, %v3341
    %v3344 = vrot.slane %v3343, 6
    %v3345 = vsel %vm232, %v3245, %v3327
    %v3346 = vsel %vm234, %v3328, %v3329
    %v3347 = vsel %vm236, %v3345, %v3346
    %v3348 = vsel %vm238, %v3245, %v3327
    %v3349 = vsel %vm240, %v3329, %v3328
    %v3350 = vsel %vm242, %v3348, %v3349
    %v3351 = vrot.slane %v3350, 2
    %v3352 = vsel %vm234, %v3245, %v3327
    %v3353 = vsel %vm232, %v3328, %v3329
    %v3354 = vsel %vm236, %v3353, %v3352
    %v3355 = vrot.slane %v3354, 4
    %v3356 = vsel %vm240, %v3327, %v3245
    %v3357 = vsel %vm238, %v3328, %v3329
    %v3358 = vsel %vm242, %v3357, %v3356
    %v3359 = vrot.slane %v3358, 6
    %v3368 = vxor.u32 %v3332, 2147483648
    %v3369 = vmul.f32 %v3368, 1.442695
    %v3370 = vpow.pop %v3369
    %v3371 = vadd.f32 %v3370, 1.0
    %v3372 = vrcp.pop %v3371
    %v3373 = vmul.f32 %v3371, %v3372
    %v3374 = vsub.f32 1.0, %v3373
    %v3375 = vmul.f32 %v3372, %v3374
    %v3376 = vadd.f32 %v3372, %v3375
    %vm3377 = vweird.f32 %v3371
    %vm3378 = vweird.f32 %v3372
    %vm3379 = vmor %vm3377, %vm3378
    %v3380 = vsel %vm3379, %v3372, %v3376
    %v3381 = vand.u32 2147483647, %v3371
    %vm3382 = vcmp.eq.f32.partialorder %v3381, 8.507059e+37
    %v3383 = vand.u32 %v3371, 2147483648
    %v3384 = vor.u32 1.1754944e-38, %v3383
    %v3385 = vsel %vm3382, %v3384, %v3380
    %v3386 = vmul.f32 1.0, %v3385
    %v3387 = vrot.slane %v3332, 2
    %v3389 = vxor.u32 %v3387, 2147483648
    %v3390 = vmul.f32 %v3389, 1.442695
    %v3391 = vpow.pop %v3390
    %v3392 = vadd.f32 %v3391, 1.0
    %v3393 = vrcp.pop %v3392
    %v3394 = vmul.f32 %v3392, %v3393
    %v3395 = vsub.f32 1.0, %v3394
    %v3396 = vmul.f32 %v3393, %v3395
    %v3397 = vadd.f32 %v3393, %v3396
    %vm3398 = vweird.f32 %v3392
    %vm3399 = vweird.f32 %v3393
    %vm3400 = vmor %vm3398, %vm3399
    %v3401 = vsel %vm3400, %v3393, %v3397
    %v3402 = vand.u32 2147483647, %v3392
    %vm3403 = vcmp.eq.f32.partialorder %v3402, 8.507059e+37
    %v3404 = vand.u32 %v3392, 2147483648
    %v3405 = vor.u32 1.1754944e-38, %v3404
    %v3406 = vsel %vm3403, %v3405, %v3401
    %v3407 = vmul.f32 1.0, %v3406
    %v3408 = vrot.slane %v3332, 4
    %v3410 = vtanh.pop %v3408
    %v3411 = vrot.slane %v3332, 6
    %v3413 = vxor.u32 %v3411, 2147483648
    %v3414 = vmul.f32 %v3413, 1.442695
    %v3415 = vpow.pop %v3414
    %v3416 = vadd.f32 %v3415, 1.0
    %v3417 = vrcp.pop %v3416
    %v3418 = vmul.f32 %v3416, %v3417
    %v3419 = vsub.f32 1.0, %v3418
    %v3420 = vmul.f32 %v3417, %v3419
    %v3421 = vadd.f32 %v3417, %v3420
    %vm3422 = vweird.f32 %v3416
    %vm3423 = vweird.f32 %v3417
    %vm3424 = vmor %vm3422, %vm3423
    %v3425 = vsel %vm3424, %v3417, %v3421
    %v3426 = vand.u32 2147483647, %v3416
    %vm3427 = vcmp.eq.f32.partialorder %v3426, 8.507059e+37
    %v3428 = vand.u32 %v3416, 2147483648
    %v3429 = vor.u32 1.1754944e-38, %v3428
    %v3430 = vsel %vm3427, %v3429, %v3425
    %v3431 = vmul.f32 1.0, %v3430
    %v3432 = vmul.f32 %v3407, 0.0
    %v3433 = vmul.f32 %v3386, %v3410
    %v3434 = vadd.f32 %v3432, %v3433
    %v3435 = vtanh.pop %v3434
    %v3436 = vmul.f32 %v3431, %v3435
    %3439 = vst [vmem:[#allocation1] ss:$2 sm:$0xff] %v3188
    %s3440 = scalar_lea.vmem [#allocation1], 16
    %3441 = vst [vmem:[%s3440] ss:$2 sm:$0xff] %v3189
    %v3442 = vld.sshfl [vmem:[#allocation1] sm:$0xff pattern:$0x75316420]
    %v3443 = vld.sshfl [vmem:[#allocation1 + $0x8] sm:$0xff pattern:$0x75316420]
    %v3444 = vld.sshfl [vmem:[#allocation1 + $0x10] sm:$0xff pattern:$0x75316420]
    %v3445 = vld.sshfl [vmem:[#allocation1 + $0x18] sm:$0xff pattern:$0x75316420]
    %v3447 = vsel %vm112, %v3436, 0
    %v3449 = vsel %vm117, %v3442, 0
    %v3451 = vsel %vm117, %v3443, 0
    %v3453 = vsel %vm117, %v3444, 0
    %v3455 = vsel %vm117, %v3445, 0
    %3457 = vmatpush.msra.mxu0 0.0
    %3458 = vmatpush.msra.mxu0 0.0
    %3459 = vmatpush.msra.mxu0 0.0
    %3460 = vmatpush.msra.mxu0 0.0
    %3461 = vmatpush.msra.mxu0 0.0
    %3462 = vmatpush.msra.mxu0 0.0
    %3463 = vmatpush.msra.mxu0 0.0
    %3464 = vmatpush.msra.mxu0 0.0
    %3465 = vmatpush.msra.mxu0 0.0
    %3466 = vmatpush.msra.mxu0 0.0
    %3467 = vmatpush.msra.mxu0 0.0
    %3468 = vmatpush.msra.mxu0 0.0
    %3469 = vmatpush.msra.mxu0 0.0
    %3470 = vmatpush.msra.mxu0 0.0
    %3471 = vmatpush.msra.mxu0 0.0
    %3472 = vmatpush.msra.mxu0 %v3449
    %3473 = vmatmul.f32.gmra.mxu0 %v3447
    %v3474 = vpop.f32.mrf.mxu0
    %v3475 = vadd.f32 0.0, %v3474
    %3476 = vdwg.mxu0
    %3477 = vmatpush.msra.mxu0 0.0
    %3478 = vmatpush.msra.mxu0 0.0
    %3479 = vmatpush.msra.mxu0 0.0
    %3480 = vmatpush.msra.mxu0 0.0
    %3481 = vmatpush.msra.mxu0 0.0
    %3482 = vmatpush.msra.mxu0 0.0
    %3483 = vmatpush.msra.mxu0 0.0
    %3484 = vmatpush.msra.mxu0 0.0
    %3485 = vmatpush.msra.mxu0 0.0
    %3486 = vmatpush.msra.mxu0 0.0
    %3487 = vmatpush.msra.mxu0 0.0
    %3488 = vmatpush.msra.mxu0 0.0
    %3489 = vmatpush.msra.mxu0 0.0
    %3490 = vmatpush.msra.mxu0 0.0
    %3491 = vmatpush.msra.mxu0 0.0
    %3492 = vmatpush.msra.mxu0 %v3451
    %3493 = vmatmul.f32.gmra.mxu0 %v3447
    %v3494 = vpop.f32.mrf.mxu0
    %v3495 = vadd.f32 0.0, %v3494
    %3496 = vdwg.mxu0
    %3497 = vmatpush.msra.mxu0 0.0
    %3498 = vmatpush.msra.mxu0 0.0
    %3499 = vmatpush.msra.mxu0 0.0
    %3500 = vmatpush.msra.mxu0 0.0
    %3501 = vmatpush.msra.mxu0 0.0
    %3502 = vmatpush.msra.mxu0 0.0
    %3503 = vmatpush.msra.mxu0 0.0
    %3504 = vmatpush.msra.mxu0 0.0
    %3505 = vmatpush.msra.mxu0 0.0
    %3506 = vmatpush.msra.mxu0 0.0
    %3507 = vmatpush.msra.mxu0 0.0
    %3508 = vmatpush.msra.mxu0 0.0
    %3509 = vmatpush.msra.mxu0 0.0
    %3510 = vmatpush.msra.mxu0 0.0
    %3511 = vmatpush.msra.mxu0 0.0
    %3512 = vmatpush.msra.mxu0 %v3453
    %3513 = vmatmul.f32.gmra.mxu0 %v3447
    %v3514 = vpop.f32.mrf.mxu0
    %v3515 = vadd.f32 0.0, %v3514
    %3516 = vdwg.mxu0
    %3517 = vmatpush.msra.mxu0 0.0
    %3518 = vmatpush.msra.mxu0 0.0
    %3519 = vmatpush.msra.mxu0 0.0
    %3520 = vmatpush.msra.mxu0 0.0
    %3521 = vmatpush.msra.mxu0 0.0
    %3522 = vmatpush.msra.mxu0 0.0
    %3523 = vmatpush.msra.mxu0 0.0
    %3524 = vmatpush.msra.mxu0 0.0
    %3525 = vmatpush.msra.mxu0 0.0
    %3526 = vmatpush.msra.mxu0 0.0
    %3527 = vmatpush.msra.mxu0 0.0
    %3528 = vmatpush.msra.mxu0 0.0
    %3529 = vmatpush.msra.mxu0 0.0
    %3530 = vmatpush.msra.mxu0 0.0
    %3531 = vmatpush.msra.mxu0 0.0
    %3532 = vmatpush.msra.mxu0 %v3455
    %3533 = vmatmul.f32.gmra.mxu0 %v3447
    %v3534 = vpop.f32.mrf.mxu0
    %v3535 = vadd.f32 0.0, %v3534
    %3536 = vdwg.mxu0
    %v3541 = vrot.slane %v3495, 6
    %v3542 = vrot.slane %v3515, 4
    %v3543 = vrot.slane %v3535, 2
    %v3544 = vsel %vm232, %v3475, %v3541
    %v3545 = vsel %vm234, %v3542, %v3543
    %v3546 = vsel %vm236, %v3544, %v3545
    %v3548 = vadd.f32 %v3336, %v3546
    %v3549 = vxor.u32 %v3548, 2147483648
    %v3550 = vmul.f32 %v3549, 1.442695
    %v3551 = vpow.pop %v3550
    %v3552 = vadd.f32 %v3551, 1.0
    %v3553 = vrcp.pop %v3552
    %v3554 = vmul.f32 %v3552, %v3553
    %v3555 = vsub.f32 1.0, %v3554
    %v3556 = vmul.f32 %v3553, %v3555
    %v3557 = vadd.f32 %v3553, %v3556
    %vm3558 = vweird.f32 %v3552
    %vm3559 = vweird.f32 %v3553
    %vm3560 = vmor %vm3558, %vm3559
    %v3561 = vsel %vm3560, %v3553, %v3557
    %v3562 = vand.u32 2147483647, %v3552
    %vm3563 = vcmp.eq.f32.partialorder %v3562, 8.507059e+37
    %v3564 = vand.u32 %v3552, 2147483648
    %v3565 = vor.u32 1.1754944e-38, %v3564
    %v3566 = vsel %vm3563, %v3565, %v3561
    %v3567 = vmul.f32 1.0, %v3566
    %v3569 = vrot.slane %v3548, 2
    %v3571 = vxor.u32 %v3569, 2147483648
    %v3572 = vmul.f32 %v3571, 1.442695
    %v3573 = vpow.pop %v3572
    %v3574 = vadd.f32 %v3573, 1.0
    %v3575 = vrcp.pop %v3574
    %v3576 = vmul.f32 %v3574, %v3575
    %v3577 = vsub.f32 1.0, %v3576
    %v3578 = vmul.f32 %v3575, %v3577
    %v3579 = vadd.f32 %v3575, %v3578
    %vm3580 = vweird.f32 %v3574
    %vm3581 = vweird.f32 %v3575
    %vm3582 = vmor %vm3580, %vm3581
    %v3583 = vsel %vm3582, %v3575, %v3579
    %v3584 = vand.u32 2147483647, %v3574
    %vm3585 = vcmp.eq.f32.partialorder %v3584, 8.507059e+37
    %v3586 = vand.u32 %v3574, 2147483648
    %v3587 = vor.u32 1.1754944e-38, %v3586
    %v3588 = vsel %vm3585, %v3587, %v3583
    %v3589 = vmul.f32 1.0, %v3588
    %v3590 = vrot.slane %v3548, 4
    %v3592 = vtanh.pop %v3590
    %v3593 = vrot.slane %v3548, 6
    %v3595 = vxor.u32 %v3593, 2147483648
    %v3596 = vmul.f32 %v3595, 1.442695
    %v3597 = vpow.pop %v3596
    %v3598 = vadd.f32 %v3597, 1.0
    %v3599 = vrcp.pop %v3598
    %v3600 = vmul.f32 %v3598, %v3599
    %v3601 = vsub.f32 1.0, %v3600
    %v3602 = vmul.f32 %v3599, %v3601
    %v3603 = vadd.f32 %v3599, %v3602
    %vm3604 = vweird.f32 %v3598
    %vm3605 = vweird.f32 %v3599
    %vm3606 = vmor %vm3604, %vm3605
    %v3607 = vsel %vm3606, %v3599, %v3603
    %v3608 = vand.u32 2147483647, %v3598
    %vm3609 = vcmp.eq.f32.partialorder %v3608, 8.507059e+37
    %v3610 = vand.u32 %v3598, 2147483648
    %v3611 = vor.u32 1.1754944e-38, %v3610
    %v3612 = vsel %vm3609, %v3611, %v3607
    %v3613 = vmul.f32 1.0, %v3612
    %v3614 = vmul.f32 %v3589, %v3434
    %v3615 = vmul.f32 %v3567, %v3592
    %v3616 = vadd.f32 %v3614, %v3615
    %v3617 = vtanh.pop %v3616
    %v3618 = vmul.f32 %v3613, %v3617
    %3619 = vst [vmem:[#allocation1] ss:$2 sm:$0xff] %v3188
    %s3620 = scalar_lea.vmem [#allocation1], 16
    %3621 = vst [vmem:[%s3620] ss:$2 sm:$0xff] %v3189
    %v3622 = vld.sshfl [vmem:[#allocation1] sm:$0xff pattern:$0x75316420]
    %v3623 = vld.sshfl [vmem:[#allocation1 + $0x8] sm:$0xff pattern:$0x75316420]
    %v3624 = vld.sshfl [vmem:[#allocation1 + $0x10] sm:$0xff pattern:$0x75316420]
    %v3625 = vld.sshfl [vmem:[#allocation1 + $0x18] sm:$0xff pattern:$0x75316420]
    %v3627 = vsel %vm112, %v3618, 0
    %v3629 = vsel %vm117, %v3622, 0
    %v3631 = vsel %vm117, %v3623, 0
    %v3633 = vsel %vm117, %v3624, 0
    %v3635 = vsel %vm117, %v3625, 0
    %3637 = vmatpush.msra.mxu0 0.0
    %3638 = vmatpush.msra.mxu0 0.0
    %3639 = vmatpush.msra.mxu0 0.0
    %3640 = vmatpush.msra.mxu0 0.0
    %3641 = vmatpush.msra.mxu0 0.0
    %3642 = vmatpush.msra.mxu0 0.0
    %3643 = vmatpush.msra.mxu0 0.0
    %3644 = vmatpush.msra.mxu0 0.0
    %3645 = vmatpush.msra.mxu0 0.0
    %3646 = vmatpush.msra.mxu0 0.0
    %3647 = vmatpush.msra.mxu0 0.0
    %3648 = vmatpush.msra.mxu0 0.0
    %3649 = vmatpush.msra.mxu0 0.0
    %3650 = vmatpush.msra.mxu0 0.0
    %3651 = vmatpush.msra.mxu0 0.0
    %3652 = vmatpush.msra.mxu0 %v3629
    %3653 = vmatmul.f32.gmra.mxu0 %v3627
    %v3654 = vpop.f32.mrf.mxu0
    %v3655 = vadd.f32 0.0, %v3654
    %3656 = vdwg.mxu0
    %3657 = vmatpush.msra.mxu0 0.0
    %3658 = vmatpush.msra.mxu0 0.0
    %3659 = vmatpush.msra.mxu0 0.0
    %3660 = vmatpush.msra.mxu0 0.0
    %3661 = vmatpush.msra.mxu0 0.0
    %3662 = vmatpush.msra.mxu0 0.0
    %3663 = vmatpush.msra.mxu0 0.0
    %3664 = vmatpush.msra.mxu0 0.0
    %3665 = vmatpush.msra.mxu0 0.0
    %3666 = vmatpush.msra.mxu0 0.0
    %3667 = vmatpush.msra.mxu0 0.0
    %3668 = vmatpush.msra.mxu0 0.0
    %3669 = vmatpush.msra.mxu0 0.0
    %3670 = vmatpush.msra.mxu0 0.0
    %3671 = vmatpush.msra.mxu0 0.0
    %3672 = vmatpush.msra.mxu0 %v3631
    %3673 = vmatmul.f32.gmra.mxu0 %v3627
    %v3674 = vpop.f32.mrf.mxu0
    %v3675 = vadd.f32 0.0, %v3674
    %3676 = vdwg.mxu0
    %3677 = vmatpush.msra.mxu0 0.0
    %3678 = vmatpush.msra.mxu0 0.0
    %3679 = vmatpush.msra.mxu0 0.0
    %3680 = vmatpush.msra.mxu0 0.0
    %3681 = vmatpush.msra.mxu0 0.0
    %3682 = vmatpush.msra.mxu0 0.0
    %3683 = vmatpush.msra.mxu0 0.0
    %3684 = vmatpush.msra.mxu0 0.0
    %3685 = vmatpush.msra.mxu0 0.0
    %3686 = vmatpush.msra.mxu0 0.0
    %3687 = vmatpush.msra.mxu0 0.0
    %3688 = vmatpush.msra.mxu0 0.0
    %3689 = vmatpush.msra.mxu0 0.0
    %3690 = vmatpush.msra.mxu0 0.0
    %3691 = vmatpush.msra.mxu0 0.0
    %3692 = vmatpush.msra.mxu0 %v3633
    %3693 = vmatmul.f32.gmra.mxu0 %v3627
    %v3694 = vpop.f32.mrf.mxu0
    %v3695 = vadd.f32 0.0, %v3694
    %3696 = vdwg.mxu0
    %3697 = vmatpush.msra.mxu0 0.0
    %3698 = vmatpush.msra.mxu0 0.0
    %3699 = vmatpush.msra.mxu0 0.0
    %3700 = vmatpush.msra.mxu0 0.0
    %3701 = vmatpush.msra.mxu0 0.0
    %3702 = vmatpush.msra.mxu0 0.0
    %3703 = vmatpush.msra.mxu0 0.0
    %3704 = vmatpush.msra.mxu0 0.0
    %3705 = vmatpush.msra.mxu0 0.0
    %3706 = vmatpush.msra.mxu0 0.0
    %3707 = vmatpush.msra.mxu0 0.0
    %3708 = vmatpush.msra.mxu0 0.0
    %3709 = vmatpush.msra.mxu0 0.0
    %3710 = vmatpush.msra.mxu0 0.0
    %3711 = vmatpush.msra.mxu0 0.0
    %3712 = vmatpush.msra.mxu0 %v3635
    %3713 = vmatmul.f32.gmra.mxu0 %v3627
    %v3714 = vpop.f32.mrf.mxu0
    %v3715 = vadd.f32 0.0, %v3714
    %3716 = vdwg.mxu0
    %v3721 = vrot.slane %v3675, 6
    %v3722 = vrot.slane %v3695, 4
    %v3723 = vrot.slane %v3715, 2
    %v3724 = vsel %vm232, %v3655, %v3721
    %v3725 = vsel %vm234, %v3722, %v3723
    %v3726 = vsel %vm236, %v3724, %v3725
    %v3728 = vadd.f32 %v3340, %v3726
    %v3729 = vxor.u32 %v3728, 2147483648
    %v3730 = vmul.f32 %v3729, 1.442695
    %v3731 = vpow.pop %v3730
    %v3732 = vadd.f32 %v3731, 1.0
    %v3733 = vrcp.pop %v3732
    %v3734 = vmul.f32 %v3732, %v3733
    %v3735 = vsub.f32 1.0, %v3734
    %v3736 = vmul.f32 %v3733, %v3735
    %v3737 = vadd.f32 %v3733, %v3736
    %vm3738 = vweird.f32 %v3732
    %vm3739 = vweird.f32 %v3733
    %vm3740 = vmor %vm3738, %vm3739
    %v3741 = vsel %vm3740, %v3733, %v3737
    %v3742 = vand.u32 2147483647, %v3732
    %vm3743 = vcmp.eq.f32.partialorder %v3742, 8.507059e+37
    %v3744 = vand.u32 %v3732, 2147483648
    %v3745 = vor.u32 1.1754944e-38, %v3744
    %v3746 = vsel %vm3743, %v3745, %v3741
    %v3747 = vmul.f32 1.0, %v3746
    %v3749 = vrot.slane %v3728, 2
    %v3751 = vxor.u32 %v3749, 2147483648
    %v3752 = vmul.f32 %v3751, 1.442695
    %v3753 = vpow.pop %v3752
    %v3754 = vadd.f32 %v3753, 1.0
    %v3755 = vrcp.pop %v3754
    %v3756 = vmul.f32 %v3754, %v3755
    %v3757 = vsub.f32 1.0, %v3756
    %v3758 = vmul.f32 %v3755, %v3757
    %v3759 = vadd.f32 %v3755, %v3758
    %vm3760 = vweird.f32 %v3754
    %vm3761 = vweird.f32 %v3755
    %vm3762 = vmor %vm3760, %vm3761
    %v3763 = vsel %vm3762, %v3755, %v3759
    %v3764 = vand.u32 2147483647, %v3754
    %vm3765 = vcmp.eq.f32.partialorder %v3764, 8.507059e+37
    %v3766 = vand.u32 %v3754, 2147483648
    %v3767 = vor.u32 1.1754944e-38, %v3766
    %v3768 = vsel %vm3765, %v3767, %v3763
    %v3769 = vmul.f32 1.0, %v3768
    %v3770 = vrot.slane %v3728, 4
    %v3772 = vtanh.pop %v3770
    %v3773 = vrot.slane %v3728, 6
    %v3775 = vxor.u32 %v3773, 2147483648
    %v3776 = vmul.f32 %v3775, 1.442695
    %v3777 = vpow.pop %v3776
    %v3778 = vadd.f32 %v3777, 1.0
    %v3779 = vrcp.pop %v3778
    %v3780 = vmul.f32 %v3778, %v3779
    %v3781 = vsub.f32 1.0, %v3780
    %v3782 = vmul.f32 %v3779, %v3781
    %v3783 = vadd.f32 %v3779, %v3782
    %vm3784 = vweird.f32 %v3778
    %vm3785 = vweird.f32 %v3779
    %vm3786 = vmor %vm3784, %vm3785
    %v3787 = vsel %vm3786, %v3779, %v3783
    %v3788 = vand.u32 2147483647, %v3778
    %vm3789 = vcmp.eq.f32.partialorder %v3788, 8.507059e+37
    %v3790 = vand.u32 %v3778, 2147483648
    %v3791 = vor.u32 1.1754944e-38, %v3790
    %v3792 = vsel %vm3789, %v3791, %v3787
    %v3793 = vmul.f32 1.0, %v3792
    %v3794 = vmul.f32 %v3769, %v3616
    %v3795 = vmul.f32 %v3747, %v3772
    %v3796 = vadd.f32 %v3794, %v3795
    %v3797 = vtanh.pop %v3796
    %v3798 = vmul.f32 %v3793, %v3797
    %3799 = vst [vmem:[#allocation1] ss:$2 sm:$0xff] %v3188
    %s3800 = scalar_lea.vmem [#allocation1], 16
    %3801 = vst [vmem:[%s3800] ss:$2 sm:$0xff] %v3189
    %v3802 = vld.sshfl [vmem:[#allocation1] sm:$0xff pattern:$0x75316420]
    %v3803 = vld.sshfl [vmem:[#allocation1 + $0x8] sm:$0xff pattern:$0x75316420]
    %v3804 = vld.sshfl [vmem:[#allocation1 + $0x10] sm:$0xff pattern:$0x75316420]
    %v3805 = vld.sshfl [vmem:[#allocation1 + $0x18] sm:$0xff pattern:$0x75316420]
    %v3807 = vsel %vm112, %v3798, 0
    %v3809 = vsel %vm117, %v3802, 0
    %v3811 = vsel %vm117, %v3803, 0
    %v3813 = vsel %vm117, %v3804, 0
    %v3815 = vsel %vm117, %v3805, 0
    %3817 = vmatpush.msra.mxu0 0.0
    %3818 = vmatpush.msra.mxu0 0.0
    %3819 = vmatpush.msra.mxu0 0.0
    %3820 = vmatpush.msra.mxu0 0.0
    %3821 = vmatpush.msra.mxu0 0.0
    %3822 = vmatpush.msra.mxu0 0.0
    %3823 = vmatpush.msra.mxu0 0.0
    %3824 = vmatpush.msra.mxu0 0.0
    %3825 = vmatpush.msra.mxu0 0.0
    %3826 = vmatpush.msra.mxu0 0.0
    %3827 = vmatpush.msra.mxu0 0.0
    %3828 = vmatpush.msra.mxu0 0.0
    %3829 = vmatpush.msra.mxu0 0.0
    %3830 = vmatpush.msra.mxu0 0.0
    %3831 = vmatpush.msra.mxu0 0.0
    %3832 = vmatpush.msra.mxu0 %v3809
    %3833 = vmatmul.f32.gmra.mxu0 %v3807
    %v3834 = vpop.f32.mrf.mxu0
    %v3835 = vadd.f32 0.0, %v3834
    %3836 = vdwg.mxu0
    %3837 = vmatpush.msra.mxu0 0.0
    %3838 = vmatpush.msra.mxu0 0.0
    %3839 = vmatpush.msra.mxu0 0.0
    %3840 = vmatpush.msra.mxu0 0.0
    %3841 = vmatpush.msra.mxu0 0.0
    %3842 = vmatpush.msra.mxu0 0.0
    %3843 = vmatpush.msra.mxu0 0.0
    %3844 = vmatpush.msra.mxu0 0.0
    %3845 = vmatpush.msra.mxu0 0.0
    %3846 = vmatpush.msra.mxu0 0.0
    %3847 = vmatpush.msra.mxu0 0.0
    %3848 = vmatpush.msra.mxu0 0.0
    %3849 = vmatpush.msra.mxu0 0.0
    %3850 = vmatpush.msra.mxu0 0.0
    %3851 = vmatpush.msra.mxu0 0.0
    %3852 = vmatpush.msra.mxu0 %v3811
    %3853 = vmatmul.f32.gmra.mxu0 %v3807
    %v3854 = vpop.f32.mrf.mxu0
    %v3855 = vadd.f32 0.0, %v3854
    %3856 = vdwg.mxu0
    %3857 = vmatpush.msra.mxu0 0.0
    %3858 = vmatpush.msra.mxu0 0.0
    %3859 = vmatpush.msra.mxu0 0.0
    %3860 = vmatpush.msra.mxu0 0.0
    %3861 = vmatpush.msra.mxu0 0.0
    %3862 = vmatpush.msra.mxu0 0.0
    %3863 = vmatpush.msra.mxu0 0.0
    %3864 = vmatpush.msra.mxu0 0.0
    %3865 = vmatpush.msra.mxu0 0.0
    %3866 = vmatpush.msra.mxu0 0.0
    %3867 = vmatpush.msra.mxu0 0.0
    %3868 = vmatpush.msra.mxu0 0.0
    %3869 = vmatpush.msra.mxu0 0.0
    %3870 = vmatpush.msra.mxu0 0.0
    %3871 = vmatpush.msra.mxu0 0.0
    %3872 = vmatpush.msra.mxu0 %v3813
    %3873 = vmatmul.f32.gmra.mxu0 %v3807
    %v3874 = vpop.f32.mrf.mxu0
    %v3875 = vadd.f32 0.0, %v3874
    %3876 = vdwg.mxu0
    %3877 = vmatpush.msra.mxu0 0.0
    %3878 = vmatpush.msra.mxu0 0.0
    %3879 = vmatpush.msra.mxu0 0.0
    %3880 = vmatpush.msra.mxu0 0.0
    %3881 = vmatpush.msra.mxu0 0.0
    %3882 = vmatpush.msra.mxu0 0.0
    %3883 = vmatpush.msra.mxu0 0.0
    %3884 = vmatpush.msra.mxu0 0.0
    %3885 = vmatpush.msra.mxu0 0.0
    %3886 = vmatpush.msra.mxu0 0.0
    %3887 = vmatpush.msra.mxu0 0.0
    %3888 = vmatpush.msra.mxu0 0.0
    %3889 = vmatpush.msra.mxu0 0.0
    %3890 = vmatpush.msra.mxu0 0.0
    %3891 = vmatpush.msra.mxu0 0.0
    %3892 = vmatpush.msra.mxu0 %v3815
    %3893 = vmatmul.f32.gmra.mxu0 %v3807
    %v3894 = vpop.f32.mrf.mxu0
    %v3895 = vadd.f32 0.0, %v3894
    %3896 = vdwg.mxu0
    %v3901 = vrot.slane %v3855, 6
    %v3902 = vrot.slane %v3875, 4
    %v3903 = vrot.slane %v3895, 2
    %v3904 = vsel %vm232, %v3835, %v3901
    %v3905 = vsel %vm234, %v3902, %v3903
    %v3906 = vsel %vm236, %v3904, %v3905
    %v3908 = vadd.f32 %v3344, %v3906
    %v3909 = vxor.u32 %v3908, 2147483648
    %v3910 = vmul.f32 %v3909, 1.442695
    %v3911 = vpow.pop %v3910
    %v3912 = vadd.f32 %v3911, 1.0
    %v3913 = vrcp.pop %v3912
    %v3914 = vmul.f32 %v3912, %v3913
    %v3915 = vsub.f32 1.0, %v3914
    %v3916 = vmul.f32 %v3913, %v3915
    %v3917 = vadd.f32 %v3913, %v3916
    %vm3918 = vweird.f32 %v3912
    %vm3919 = vweird.f32 %v3913
    %vm3920 = vmor %vm3918, %vm3919
    %v3921 = vsel %vm3920, %v3913, %v3917
    %v3922 = vand.u32 2147483647, %v3912
    %vm3923 = vcmp.eq.f32.partialorder %v3922, 8.507059e+37
    %v3924 = vand.u32 %v3912, 2147483648
    %v3925 = vor.u32 1.1754944e-38, %v3924
    %v3926 = vsel %vm3923, %v3925, %v3921
    %v3927 = vmul.f32 1.0, %v3926
    %v3929 = vrot.slane %v3908, 2
    %v3931 = vxor.u32 %v3929, 2147483648
    %v3932 = vmul.f32 %v3931, 1.442695
    %v3933 = vpow.pop %v3932
    %v3934 = vadd.f32 %v3933, 1.0
    %v3935 = vrcp.pop %v3934
    %v3936 = vmul.f32 %v3934, %v3935
    %v3937 = vsub.f32 1.0, %v3936
    %v3938 = vmul.f32 %v3935, %v3937
    %v3939 = vadd.f32 %v3935, %v3938
    %vm3940 = vweird.f32 %v3934
    %vm3941 = vweird.f32 %v3935
    %vm3942 = vmor %vm3940, %vm3941
    %v3943 = vsel %vm3942, %v3935, %v3939
    %v3944 = vand.u32 2147483647, %v3934
    %vm3945 = vcmp.eq.f32.partialorder %v3944, 8.507059e+37
    %v3946 = vand.u32 %v3934, 2147483648
    %v3947 = vor.u32 1.1754944e-38, %v3946
    %v3948 = vsel %vm3945, %v3947, %v3943
    %v3949 = vmul.f32 1.0, %v3948
    %v3950 = vrot.slane %v3908, 4
    %v3952 = vtanh.pop %v3950
    %v3953 = vrot.slane %v3908, 6
    %v3955 = vxor.u32 %v3953, 2147483648
    %v3956 = vmul.f32 %v3955, 1.442695
    %v3957 = vpow.pop %v3956
    %v3958 = vadd.f32 %v3957, 1.0
    %v3959 = vrcp.pop %v3958
    %v3960 = vmul.f32 %v3958, %v3959
    %v3961 = vsub.f32 1.0, %v3960
    %v3962 = vmul.f32 %v3959, %v3961
    %v3963 = vadd.f32 %v3959, %v3962
    %vm3964 = vweird.f32 %v3958
    %vm3965 = vweird.f32 %v3959
    %vm3966 = vmor %vm3964, %vm3965
    %v3967 = vsel %vm3966, %v3959, %v3963
    %v3968 = vand.u32 2147483647, %v3958
    %vm3969 = vcmp.eq.f32.partialorder %v3968, 8.507059e+37
    %v3970 = vand.u32 %v3958, 2147483648
    %v3971 = vor.u32 1.1754944e-38, %v3970
    %v3972 = vsel %vm3969, %v3971, %v3967
    %v3973 = vmul.f32 1.0, %v3972
    %v3974 = vmul.f32 %v3949, %v3796
    %v3975 = vmul.f32 %v3927, %v3952
    %v3976 = vadd.f32 %v3974, %v3975
    %v3977 = vtanh.pop %v3976
    %v3978 = vmul.f32 %v3973, %v3977
    %3979 = vst [vmem:[#allocation1] ss:$2 sm:$0xff] %v3188
    %s3980 = scalar_lea.vmem [#allocation1], 16
    %3981 = vst [vmem:[%s3980] ss:$2 sm:$0xff] %v3189
    %v3982 = vld.sshfl [vmem:[#allocation1] sm:$0xff pattern:$0x75316420]
    %v3983 = vld.sshfl [vmem:[#allocation1 + $0x8] sm:$0xff pattern:$0x75316420]
    %v3984 = vld.sshfl [vmem:[#allocation1 + $0x10] sm:$0xff pattern:$0x75316420]
    %v3985 = vld.sshfl [vmem:[#allocation1 + $0x18] sm:$0xff pattern:$0x75316420]
    %v3987 = vsel %vm112, %v3978, 0
    %v3989 = vsel %vm117, %v3982, 0
    %v3991 = vsel %vm117, %v3983, 0
    %v3993 = vsel %vm117, %v3984, 0
    %v3995 = vsel %vm117, %v3985, 0
    %3997 = vmatpush.msra.mxu0 0.0
    %3998 = vmatpush.msra.mxu0 0.0
    %3999 = vmatpush.msra.mxu0 0.0
    %4000 = vmatpush.msra.mxu0 0.0
    %4001 = vmatpush.msra.mxu0 0.0
    %4002 = vmatpush.msra.mxu0 0.0
    %4003 = vmatpush.msra.mxu0 0.0
    %4004 = vmatpush.msra.mxu0 0.0
    %4005 = vmatpush.msra.mxu0 0.0
    %4006 = vmatpush.msra.mxu0 0.0
    %4007 = vmatpush.msra.mxu0 0.0
    %4008 = vmatpush.msra.mxu0 0.0
    %4009 = vmatpush.msra.mxu0 0.0
    %4010 = vmatpush.msra.mxu0 0.0
    %4011 = vmatpush.msra.mxu0 0.0
    %4012 = vmatpush.msra.mxu0 %v3989
    %4013 = vmatmul.f32.gmra.mxu0 %v3987
    %v4014 = vpop.f32.mrf.mxu0
    %v4015 = vadd.f32 0.0, %v4014
    %4016 = vdwg.mxu0
    %4017 = vmatpush.msra.mxu0 0.0
    %4018 = vmatpush.msra.mxu0 0.0
    %4019 = vmatpush.msra.mxu0 0.0
    %4020 = vmatpush.msra.mxu0 0.0
    %4021 = vmatpush.msra.mxu0 0.0
    %4022 = vmatpush.msra.mxu0 0.0
    %4023 = vmatpush.msra.mxu0 0.0
    %4024 = vmatpush.msra.mxu0 0.0
    %4025 = vmatpush.msra.mxu0 0.0
    %4026 = vmatpush.msra.mxu0 0.0
    %4027 = vmatpush.msra.mxu0 0.0
    %4028 = vmatpush.msra.mxu0 0.0
    %4029 = vmatpush.msra.mxu0 0.0
    %4030 = vmatpush.msra.mxu0 0.0
    %4031 = vmatpush.msra.mxu0 0.0
    %4032 = vmatpush.msra.mxu0 %v3991
    %4033 = vmatmul.f32.gmra.mxu0 %v3987
    %v4034 = vpop.f32.mrf.mxu0
    %v4035 = vadd.f32 0.0, %v4034
    %4036 = vdwg.mxu0
    %4037 = vmatpush.msra.mxu0 0.0
    %4038 = vmatpush.msra.mxu0 0.0
    %4039 = vmatpush.msra.mxu0 0.0
    %4040 = vmatpush.msra.mxu0 0.0
    %4041 = vmatpush.msra.mxu0 0.0
    %4042 = vmatpush.msra.mxu0 0.0
    %4043 = vmatpush.msra.mxu0 0.0
    %4044 = vmatpush.msra.mxu0 0.0
    %4045 = vmatpush.msra.mxu0 0.0
    %4046 = vmatpush.msra.mxu0 0.0
    %4047 = vmatpush.msra.mxu0 0.0
    %4048 = vmatpush.msra.mxu0 0.0
    %4049 = vmatpush.msra.mxu0 0.0
    %4050 = vmatpush.msra.mxu0 0.0
    %4051 = vmatpush.msra.mxu0 0.0
    %4052 = vmatpush.msra.mxu0 %v3993
    %4053 = vmatmul.f32.gmra.mxu0 %v3987
    %v4054 = vpop.f32.mrf.mxu0
    %v4055 = vadd.f32 0.0, %v4054
    %4056 = vdwg.mxu0
    %4057 = vmatpush.msra.mxu0 0.0
    %4058 = vmatpush.msra.mxu0 0.0
    %4059 = vmatpush.msra.mxu0 0.0
    %4060 = vmatpush.msra.mxu0 0.0
    %4061 = vmatpush.msra.mxu0 0.0
    %4062 = vmatpush.msra.mxu0 0.0
    %4063 = vmatpush.msra.mxu0 0.0
    %4064 = vmatpush.msra.mxu0 0.0
    %4065 = vmatpush.msra.mxu0 0.0
    %4066 = vmatpush.msra.mxu0 0.0
    %4067 = vmatpush.msra.mxu0 0.0
    %4068 = vmatpush.msra.mxu0 0.0
    %4069 = vmatpush.msra.mxu0 0.0
    %4070 = vmatpush.msra.mxu0 0.0
    %4071 = vmatpush.msra.mxu0 0.0
    %4072 = vmatpush.msra.mxu0 %v3995
    %4073 = vmatmul.f32.gmra.mxu0 %v3987
    %v4074 = vpop.f32.mrf.mxu0
    %v4075 = vadd.f32 0.0, %v4074
    %4076 = vdwg.mxu0
    %v4081 = vrot.slane %v4035, 6
    %v4082 = vrot.slane %v4055, 4
    %v4083 = vrot.slane %v4075, 2
    %v4084 = vsel %vm232, %v4015, %v4081
    %v4085 = vsel %vm234, %v4082, %v4083
    %v4086 = vsel %vm236, %v4084, %v4085
    %v4088 = vadd.f32 %v3347, %v4086
    %v4089 = vxor.u32 %v4088, 2147483648
    %v4090 = vmul.f32 %v4089, 1.442695
    %v4091 = vpow.pop %v4090
    %v4092 = vadd.f32 %v4091, 1.0
    %v4093 = vrcp.pop %v4092
    %v4094 = vmul.f32 %v4092, %v4093
    %v4095 = vsub.f32 1.0, %v4094
    %v4096 = vmul.f32 %v4093, %v4095
    %v4097 = vadd.f32 %v4093, %v4096
    %vm4098 = vweird.f32 %v4092
    %vm4099 = vweird.f32 %v4093
    %vm4100 = vmor %vm4098, %vm4099
    %v4101 = vsel %vm4100, %v4093, %v4097
    %v4102 = vand.u32 2147483647, %v4092
    %vm4103 = vcmp.eq.f32.partialorder %v4102, 8.507059e+37
    %v4104 = vand.u32 %v4092, 2147483648
    %v4105 = vor.u32 1.1754944e-38, %v4104
    %v4106 = vsel %vm4103, %v4105, %v4101
    %v4107 = vmul.f32 1.0, %v4106
    %v4109 = vrot.slane %v4088, 2
    %v4111 = vxor.u32 %v4109, 2147483648
    %v4112 = vmul.f32 %v4111, 1.442695
    %v4113 = vpow.pop %v4112
    %v4114 = vadd.f32 %v4113, 1.0
    %v4115 = vrcp.pop %v4114
    %v4116 = vmul.f32 %v4114, %v4115
    %v4117 = vsub.f32 1.0, %v4116
    %v4118 = vmul.f32 %v4115, %v4117
    %v4119 = vadd.f32 %v4115, %v4118
    %vm4120 = vweird.f32 %v4114
    %vm4121 = vweird.f32 %v4115
    %vm4122 = vmor %vm4120, %vm4121
    %v4123 = vsel %vm4122, %v4115, %v4119
    %v4124 = vand.u32 2147483647, %v4114
    %vm4125 = vcmp.eq.f32.partialorder %v4124, 8.507059e+37
    %v4126 = vand.u32 %v4114, 2147483648
    %v4127 = vor.u32 1.1754944e-38, %v4126
    %v4128 = vsel %vm4125, %v4127, %v4123
    %v4129 = vmul.f32 1.0, %v4128
    %v4130 = vrot.slane %v4088, 4
    %v4132 = vtanh.pop %v4130
    %v4133 = vrot.slane %v4088, 6
    %v4135 = vxor.u32 %v4133, 2147483648
    %v4136 = vmul.f32 %v4135, 1.442695
    %v4137 = vpow.pop %v4136
    %v4138 = vadd.f32 %v4137, 1.0
    %v4139 = vrcp.pop %v4138
    %v4140 = vmul.f32 %v4138, %v4139
    %v4141 = vsub.f32 1.0, %v4140
    %v4142 = vmul.f32 %v4139, %v4141
    %v4143 = vadd.f32 %v4139, %v4142
    %vm4144 = vweird.f32 %v4138
    %vm4145 = vweird.f32 %v4139
    %vm4146 = vmor %vm4144, %vm4145
    %v4147 = vsel %vm4146, %v4139, %v4143
    %v4148 = vand.u32 2147483647, %v4138
    %vm4149 = vcmp.eq.f32.partialorder %v4148, 8.507059e+37
    %v4150 = vand.u32 %v4138, 2147483648
    %v4151 = vor.u32 1.1754944e-38, %v4150
    %v4152 = vsel %vm4149, %v4151, %v4147
    %v4153 = vmul.f32 1.0, %v4152
    %v4154 = vmul.f32 %v4129, %v3976
    %v4155 = vmul.f32 %v4107, %v4132
    %v4156 = vadd.f32 %v4154, %v4155
    %v4157 = vtanh.pop %v4156
    %v4158 = vmul.f32 %v4153, %v4157
    %4159 = vst [vmem:[#allocation1] ss:$2 sm:$0xff] %v3188
    %s4160 = scalar_lea.vmem [#allocation1], 16
    %4161 = vst [vmem:[%s4160] ss:$2 sm:$0xff] %v3189
    %v4162 = vld.sshfl [vmem:[#allocation1] sm:$0xff pattern:$0x75316420]
    %v4163 = vld.sshfl [vmem:[#allocation1 + $0x8] sm:$0xff pattern:$0x75316420]
    %v4164 = vld.sshfl [vmem:[#allocation1 + $0x10] sm:$0xff pattern:$0x75316420]
    %v4165 = vld.sshfl [vmem:[#allocation1 + $0x18] sm:$0xff pattern:$0x75316420]
    %v4167 = vsel %vm112, %v4158, 0
    %v4169 = vsel %vm117, %v4162, 0
    %v4171 = vsel %vm117, %v4163, 0
    %v4173 = vsel %vm117, %v4164, 0
    %v4175 = vsel %vm117, %v4165, 0
    %4177 = vmatpush.msra.mxu0 0.0
    %4178 = vmatpush.msra.mxu0 0.0
    %4179 = vmatpush.msra.mxu0 0.0
    %4180 = vmatpush.msra.mxu0 0.0
    %4181 = vmatpush.msra.mxu0 0.0
    %4182 = vmatpush.msra.mxu0 0.0
    %4183 = vmatpush.msra.mxu0 0.0
    %4184 = vmatpush.msra.mxu0 0.0
    %4185 = vmatpush.msra.mxu0 0.0
    %4186 = vmatpush.msra.mxu0 0.0
    %4187 = vmatpush.msra.mxu0 0.0
    %4188 = vmatpush.msra.mxu0 0.0
    %4189 = vmatpush.msra.mxu0 0.0
    %4190 = vmatpush.msra.mxu0 0.0
    %4191 = vmatpush.msra.mxu0 0.0
    %4192 = vmatpush.msra.mxu0 %v4169
    %4193 = vmatmul.f32.gmra.mxu0 %v4167
    %v4194 = vpop.f32.mrf.mxu0
    %v4195 = vadd.f32 0.0, %v4194
    %4196 = vdwg.mxu0
    %4197 = vmatpush.msra.mxu0 0.0
    %4198 = vmatpush.msra.mxu0 0.0
    %4199 = vmatpush.msra.mxu0 0.0
    %4200 = vmatpush.msra.mxu0 0.0
    %4201 = vmatpush.msra.mxu0 0.0
    %4202 = vmatpush.msra.mxu0 0.0
    %4203 = vmatpush.msra.mxu0 0.0
    %4204 = vmatpush.msra.mxu0 0.0
    %4205 = vmatpush.msra.mxu0 0.0
    %4206 = vmatpush.msra.mxu0 0.0
    %4207 = vmatpush.msra.mxu0 0.0
    %4208 = vmatpush.msra.mxu0 0.0
    %4209 = vmatpush.msra.mxu0 0.0
    %4210 = vmatpush.msra.mxu0 0.0
    %4211 = vmatpush.msra.mxu0 0.0
    %4212 = vmatpush.msra.mxu0 %v4171
    %4213 = vmatmul.f32.gmra.mxu0 %v4167
    %v4214 = vpop.f32.mrf.mxu0
    %v4215 = vadd.f32 0.0, %v4214
    %4216 = vdwg.mxu0
    %4217 = vmatpush.msra.mxu0 0.0
    %4218 = vmatpush.msra.mxu0 0.0
    %4219 = vmatpush.msra.mxu0 0.0
    %4220 = vmatpush.msra.mxu0 0.0
    %4221 = vmatpush.msra.mxu0 0.0
    %4222 = vmatpush.msra.mxu0 0.0
    %4223 = vmatpush.msra.mxu0 0.0
    %4224 = vmatpush.msra.mxu0 0.0
    %4225 = vmatpush.msra.mxu0 0.0
    %4226 = vmatpush.msra.mxu0 0.0
    %4227 = vmatpush.msra.mxu0 0.0
    %4228 = vmatpush.msra.mxu0 0.0
    %4229 = vmatpush.msra.mxu0 0.0
    %4230 = vmatpush.msra.mxu0 0.0
    %4231 = vmatpush.msra.mxu0 0.0
    %4232 = vmatpush.msra.mxu0 %v4173
    %4233 = vmatmul.f32.gmra.mxu0 %v4167
    %v4234 = vpop.f32.mrf.mxu0
    %v4235 = vadd.f32 0.0, %v4234
    %4236 = vdwg.mxu0
    %4237 = vmatpush.msra.mxu0 0.0
    %4238 = vmatpush.msra.mxu0 0.0
    %4239 = vmatpush.msra.mxu0 0.0
    %4240 = vmatpush.msra.mxu0 0.0
    %4241 = vmatpush.msra.mxu0 0.0
    %4242 = vmatpush.msra.mxu0 0.0
    %4243 = vmatpush.msra.mxu0 0.0
    %4244 = vmatpush.msra.mxu0 0.0
    %4245 = vmatpush.msra.mxu0 0.0
    %4246 = vmatpush.msra.mxu0 0.0
    %4247 = vmatpush.msra.mxu0 0.0
    %4248 = vmatpush.msra.mxu0 0.0
    %4249 = vmatpush.msra.mxu0 0.0
    %4250 = vmatpush.msra.mxu0 0.0
    %4251 = vmatpush.msra.mxu0 0.0
    %4252 = vmatpush.msra.mxu0 %v4175
    %4253 = vmatmul.f32.gmra.mxu0 %v4167
    %v4254 = vpop.f32.mrf.mxu0
    %v4255 = vadd.f32 0.0, %v4254
    %4256 = vdwg.mxu0
    %v4261 = vrot.slane %v4215, 6
    %v4262 = vrot.slane %v4235, 4
    %v4263 = vrot.slane %v4255, 2
    %v4264 = vsel %vm232, %v4195, %v4261
    %v4265 = vsel %vm234, %v4262, %v4263
    %v4266 = vsel %vm236, %v4264, %v4265
    %v4268 = vadd.f32 %v3351, %v4266
    %v4269 = vxor.u32 %v4268, 2147483648
    %v4270 = vmul.f32 %v4269, 1.442695
    %v4271 = vpow.pop %v4270
    %v4272 = vadd.f32 %v4271, 1.0
    %v4273 = vrcp.pop %v4272
    %v4274 = vmul.f32 %v4272, %v4273
    %v4275 = vsub.f32 1.0, %v4274
    %v4276 = vmul.f32 %v4273, %v4275
    %v4277 = vadd.f32 %v4273, %v4276
    %vm4278 = vweird.f32 %v4272
    %vm4279 = vweird.f32 %v4273
    %vm4280 = vmor %vm4278, %vm4279
    %v4281 = vsel %vm4280, %v4273, %v4277
    %v4282 = vand.u32 2147483647, %v4272
    %vm4283 = vcmp.eq.f32.partialorder %v4282, 8.507059e+37
    %v4284 = vand.u32 %v4272, 2147483648
    %v4285 = vor.u32 1.1754944e-38, %v4284
    %v4286 = vsel %vm4283, %v4285, %v4281
    %v4287 = vmul.f32 1.0, %v4286
    %v4289 = vrot.slane %v4268, 2
    %v4291 = vxor.u32 %v4289, 2147483648
    %v4292 = vmul.f32 %v4291, 1.442695
    %v4293 = vpow.pop %v4292
    %v4294 = vadd.f32 %v4293, 1.0
    %v4295 = vrcp.pop %v4294
    %v4296 = vmul.f32 %v4294, %v4295
    %v4297 = vsub.f32 1.0, %v4296
    %v4298 = vmul.f32 %v4295, %v4297
    %v4299 = vadd.f32 %v4295, %v4298
    %vm4300 = vweird.f32 %v4294
    %vm4301 = vweird.f32 %v4295
    %vm4302 = vmor %vm4300, %vm4301
    %v4303 = vsel %vm4302, %v4295, %v4299
    %v4304 = vand.u32 2147483647, %v4294
    %vm4305 = vcmp.eq.f32.partialorder %v4304, 8.507059e+37
    %v4306 = vand.u32 %v4294, 2147483648
    %v4307 = vor.u32 1.1754944e-38, %v4306
    %v4308 = vsel %vm4305, %v4307, %v4303
    %v4309 = vmul.f32 1.0, %v4308
    %v4310 = vrot.slane %v4268, 4
    %v4312 = vtanh.pop %v4310
    %v4313 = vrot.slane %v4268, 6
    %v4315 = vxor.u32 %v4313, 2147483648
    %v4316 = vmul.f32 %v4315, 1.442695
    %v4317 = vpow.pop %v4316
    %v4318 = vadd.f32 %v4317, 1.0
    %v4319 = vrcp.pop %v4318
    %v4320 = vmul.f32 %v4318, %v4319
    %v4321 = vsub.f32 1.0, %v4320
    %v4322 = vmul.f32 %v4319, %v4321
    %v4323 = vadd.f32 %v4319, %v4322
    %vm4324 = vweird.f32 %v4318
    %vm4325 = vweird.f32 %v4319
    %vm4326 = vmor %vm4324, %vm4325
    %v4327 = vsel %vm4326, %v4319, %v4323
    %v4328 = vand.u32 2147483647, %v4318
    %vm4329 = vcmp.eq.f32.partialorder %v4328, 8.507059e+37
    %v4330 = vand.u32 %v4318, 2147483648
    %v4331 = vor.u32 1.1754944e-38, %v4330
    %v4332 = vsel %vm4329, %v4331, %v4327
    %v4333 = vmul.f32 1.0, %v4332
    %v4334 = vmul.f32 %v4309, %v4156
    %v4335 = vmul.f32 %v4287, %v4312
    %v4336 = vadd.f32 %v4334, %v4335
    %v4337 = vtanh.pop %v4336
    %v4338 = vmul.f32 %v4333, %v4337
    %4339 = vst [vmem:[#allocation1] ss:$2 sm:$0xff] %v3188
    %s4340 = scalar_lea.vmem [#allocation1], 16
    %4341 = vst [vmem:[%s4340] ss:$2 sm:$0xff] %v3189
    %v4342 = vld.sshfl [vmem:[#allocation1] sm:$0xff pattern:$0x75316420]
    %v4343 = vld.sshfl [vmem:[#allocation1 + $0x8] sm:$0xff pattern:$0x75316420]
    %v4344 = vld.sshfl [vmem:[#allocation1 + $0x10] sm:$0xff pattern:$0x75316420]
    %v4345 = vld.sshfl [vmem:[#allocation1 + $0x18] sm:$0xff pattern:$0x75316420]
    %v4347 = vsel %vm112, %v4338, 0
    %v4349 = vsel %vm117, %v4342, 0
    %v4351 = vsel %vm117, %v4343, 0
    %v4353 = vsel %vm117, %v4344, 0
    %v4355 = vsel %vm117, %v4345, 0
    %4357 = vmatpush.msra.mxu0 0.0
    %4358 = vmatpush.msra.mxu0 0.0
    %4359 = vmatpush.msra.mxu0 0.0
    %4360 = vmatpush.msra.mxu0 0.0
    %4361 = vmatpush.msra.mxu0 0.0
    %4362 = vmatpush.msra.mxu0 0.0
    %4363 = vmatpush.msra.mxu0 0.0
    %4364 = vmatpush.msra.mxu0 0.0
    %4365 = vmatpush.msra.mxu0 0.0
    %4366 = vmatpush.msra.mxu0 0.0
    %4367 = vmatpush.msra.mxu0 0.0
    %4368 = vmatpush.msra.mxu0 0.0
    %4369 = vmatpush.msra.mxu0 0.0
    %4370 = vmatpush.msra.mxu0 0.0
    %4371 = vmatpush.msra.mxu0 0.0
    %4372 = vmatpush.msra.mxu0 %v4349
    %4373 = vmatmul.f32.gmra.mxu0 %v4347
    %v4374 = vpop.f32.mrf.mxu0
    %v4375 = vadd.f32 0.0, %v4374
    %4376 = vdwg.mxu0
    %4377 = vmatpush.msra.mxu0 0.0
    %4378 = vmatpush.msra.mxu0 0.0
    %4379 = vmatpush.msra.mxu0 0.0
    %4380 = vmatpush.msra.mxu0 0.0
    %4381 = vmatpush.msra.mxu0 0.0
    %4382 = vmatpush.msra.mxu0 0.0
    %4383 = vmatpush.msra.mxu0 0.0
    %4384 = vmatpush.msra.mxu0 0.0
    %4385 = vmatpush.msra.mxu0 0.0
    %4386 = vmatpush.msra.mxu0 0.0
    %4387 = vmatpush.msra.mxu0 0.0
    %4388 = vmatpush.msra.mxu0 0.0
    %4389 = vmatpush.msra.mxu0 0.0
    %4390 = vmatpush.msra.mxu0 0.0
    %4391 = vmatpush.msra.mxu0 0.0
    %4392 = vmatpush.msra.mxu0 %v4351
    %4393 = vmatmul.f32.gmra.mxu0 %v4347
    %v4394 = vpop.f32.mrf.mxu0
    %v4395 = vadd.f32 0.0, %v4394
    %4396 = vdwg.mxu0
    %4397 = vmatpush.msra.mxu0 0.0
    %4398 = vmatpush.msra.mxu0 0.0
    %4399 = vmatpush.msra.mxu0 0.0
    %4400 = vmatpush.msra.mxu0 0.0
    %4401 = vmatpush.msra.mxu0 0.0
    %4402 = vmatpush.msra.mxu0 0.0
    %4403 = vmatpush.msra.mxu0 0.0
    %4404 = vmatpush.msra.mxu0 0.0
    %4405 = vmatpush.msra.mxu0 0.0
    %4406 = vmatpush.msra.mxu0 0.0
    %4407 = vmatpush.msra.mxu0 0.0
    %4408 = vmatpush.msra.mxu0 0.0
    %4409 = vmatpush.msra.mxu0 0.0
    %4410 = vmatpush.msra.mxu0 0.0
    %4411 = vmatpush.msra.mxu0 0.0
    %4412 = vmatpush.msra.mxu0 %v4353
    %4413 = vmatmul.f32.gmra.mxu0 %v4347
    %v4414 = vpop.f32.mrf.mxu0
    %v4415 = vadd.f32 0.0, %v4414
    %4416 = vdwg.mxu0
    %4417 = vmatpush.msra.mxu0 0.0
    %4418 = vmatpush.msra.mxu0 0.0
    %4419 = vmatpush.msra.mxu0 0.0
    %4420 = vmatpush.msra.mxu0 0.0
    %4421 = vmatpush.msra.mxu0 0.0
    %4422 = vmatpush.msra.mxu0 0.0
    %4423 = vmatpush.msra.mxu0 0.0
    %4424 = vmatpush.msra.mxu0 0.0
    %4425 = vmatpush.msra.mxu0 0.0
    %4426 = vmatpush.msra.mxu0 0.0
    %4427 = vmatpush.msra.mxu0 0.0
    %4428 = vmatpush.msra.mxu0 0.0
    %4429 = vmatpush.msra.mxu0 0.0
    %4430 = vmatpush.msra.mxu0 0.0
    %4431 = vmatpush.msra.mxu0 0.0
    %4432 = vmatpush.msra.mxu0 %v4355
    %4433 = vmatmul.f32.gmra.mxu0 %v4347
    %v4434 = vpop.f32.mrf.mxu0
    %v4435 = vadd.f32 0.0, %v4434
    %4436 = vdwg.mxu0
    %v4441 = vrot.slane %v4395, 6
    %v4442 = vrot.slane %v4415, 4
    %v4443 = vrot.slane %v4435, 2
    %v4444 = vsel %vm232, %v4375, %v4441
    %v4445 = vsel %vm234, %v4442, %v4443
    %v4446 = vsel %vm236, %v4444, %v4445
    %v4448 = vadd.f32 %v3355, %v4446
    %v4449 = vxor.u32 %v4448, 2147483648
    %v4450 = vmul.f32 %v4449, 1.442695
    %v4451 = vpow.pop %v4450
    %v4452 = vadd.f32 %v4451, 1.0
    %v4453 = vrcp.pop %v4452
    %v4454 = vmul.f32 %v4452, %v4453
    %v4455 = vsub.f32 1.0, %v4454
    %v4456 = vmul.f32 %v4453, %v4455
    %v4457 = vadd.f32 %v4453, %v4456
    %vm4458 = vweird.f32 %v4452
    %vm4459 = vweird.f32 %v4453
    %vm4460 = vmor %vm4458, %vm4459
    %v4461 = vsel %vm4460, %v4453, %v4457
    %v4462 = vand.u32 2147483647, %v4452
    %vm4463 = vcmp.eq.f32.partialorder %v4462, 8.507059e+37
    %v4464 = vand.u32 %v4452, 2147483648
    %v4465 = vor.u32 1.1754944e-38, %v4464
    %v4466 = vsel %vm4463, %v4465, %v4461
    %v4467 = vmul.f32 1.0, %v4466
    %v4469 = vrot.slane %v4448, 2
    %v4471 = vxor.u32 %v4469, 2147483648
    %v4472 = vmul.f32 %v4471, 1.442695
    %v4473 = vpow.pop %v4472
    %v4474 = vadd.f32 %v4473, 1.0
    %v4475 = vrcp.pop %v4474
    %v4476 = vmul.f32 %v4474, %v4475
    %v4477 = vsub.f32 1.0, %v4476
    %v4478 = vmul.f32 %v4475, %v4477
    %v4479 = vadd.f32 %v4475, %v4478
    %vm4480 = vweird.f32 %v4474
    %vm4481 = vweird.f32 %v4475
    %vm4482 = vmor %vm4480, %vm4481
    %v4483 = vsel %vm4482, %v4475, %v4479
    %v4484 = vand.u32 2147483647, %v4474
    %vm4485 = vcmp.eq.f32.partialorder %v4484, 8.507059e+37
    %v4486 = vand.u32 %v4474, 2147483648
    %v4487 = vor.u32 1.1754944e-38, %v4486
    %v4488 = vsel %vm4485, %v4487, %v4483
    %v4489 = vmul.f32 1.0, %v4488
    %v4490 = vrot.slane %v4448, 4
    %v4492 = vtanh.pop %v4490
    %v4493 = vrot.slane %v4448, 6
    %v4495 = vxor.u32 %v4493, 2147483648
    %v4496 = vmul.f32 %v4495, 1.442695
    %v4497 = vpow.pop %v4496
    %v4498 = vadd.f32 %v4497, 1.0
    %v4499 = vrcp.pop %v4498
    %v4500 = vmul.f32 %v4498, %v4499
    %v4501 = vsub.f32 1.0, %v4500
    %v4502 = vmul.f32 %v4499, %v4501
    %v4503 = vadd.f32 %v4499, %v4502
    %vm4504 = vweird.f32 %v4498
    %vm4505 = vweird.f32 %v4499
    %vm4506 = vmor %vm4504, %vm4505
    %v4507 = vsel %vm4506, %v4499, %v4503
    %v4508 = vand.u32 2147483647, %v4498
    %vm4509 = vcmp.eq.f32.partialorder %v4508, 8.507059e+37
    %v4510 = vand.u32 %v4498, 2147483648
    %v4511 = vor.u32 1.1754944e-38, %v4510
    %v4512 = vsel %vm4509, %v4511, %v4507
    %v4513 = vmul.f32 1.0, %v4512
    %v4514 = vmul.f32 %v4489, %v4336
    %v4515 = vmul.f32 %v4467, %v4492
    %v4516 = vadd.f32 %v4514, %v4515
    %v4517 = vtanh.pop %v4516
    %v4518 = vmul.f32 %v4513, %v4517
    %4519 = vst [vmem:[#allocation1] ss:$2 sm:$0xff] %v3188
    %s4520 = scalar_lea.vmem [#allocation1], 16
    %4521 = vst [vmem:[%s4520] ss:$2 sm:$0xff] %v3189
    %v4522 = vld.sshfl [vmem:[#allocation1] sm:$0xff pattern:$0x75316420]
    %v4523 = vld.sshfl [vmem:[#allocation1 + $0x8] sm:$0xff pattern:$0x75316420]
    %v4524 = vld.sshfl [vmem:[#allocation1 + $0x10] sm:$0xff pattern:$0x75316420]
    %v4525 = vld.sshfl [vmem:[#allocation1 + $0x18] sm:$0xff pattern:$0x75316420]
    %v4527 = vsel %vm112, %v4518, 0
    %v4529 = vsel %vm117, %v4522, 0
    %v4531 = vsel %vm117, %v4523, 0
    %v4533 = vsel %vm117, %v4524, 0
    %v4535 = vsel %vm117, %v4525, 0
    %4537 = vmatpush.msra.mxu0 0.0
    %4538 = vmatpush.msra.mxu0 0.0
    %4539 = vmatpush.msra.mxu0 0.0
    %4540 = vmatpush.msra.mxu0 0.0
    %4541 = vmatpush.msra.mxu0 0.0
    %4542 = vmatpush.msra.mxu0 0.0
    %4543 = vmatpush.msra.mxu0 0.0
    %4544 = vmatpush.msra.mxu0 0.0
    %4545 = vmatpush.msra.mxu0 0.0
    %4546 = vmatpush.msra.mxu0 0.0
    %4547 = vmatpush.msra.mxu0 0.0
    %4548 = vmatpush.msra.mxu0 0.0
    %4549 = vmatpush.msra.mxu0 0.0
    %4550 = vmatpush.msra.mxu0 0.0
    %4551 = vmatpush.msra.mxu0 0.0
    %4552 = vmatpush.msra.mxu0 %v4529
    %4553 = vmatmul.f32.gmra.mxu0 %v4527
    %v4554 = vpop.f32.mrf.mxu0
    %v4555 = vadd.f32 0.0, %v4554
    %4556 = vdwg.mxu0
    %4557 = vmatpush.msra.mxu0 0.0
    %4558 = vmatpush.msra.mxu0 0.0
    %4559 = vmatpush.msra.mxu0 0.0
    %4560 = vmatpush.msra.mxu0 0.0
    %4561 = vmatpush.msra.mxu0 0.0
    %4562 = vmatpush.msra.mxu0 0.0
    %4563 = vmatpush.msra.mxu0 0.0
    %4564 = vmatpush.msra.mxu0 0.0
    %4565 = vmatpush.msra.mxu0 0.0
    %4566 = vmatpush.msra.mxu0 0.0
    %4567 = vmatpush.msra.mxu0 0.0
    %4568 = vmatpush.msra.mxu0 0.0
    %4569 = vmatpush.msra.mxu0 0.0
    %4570 = vmatpush.msra.mxu0 0.0
    %4571 = vmatpush.msra.mxu0 0.0
    %4572 = vmatpush.msra.mxu0 %v4531
    %4573 = vmatmul.f32.gmra.mxu0 %v4527
    %v4574 = vpop.f32.mrf.mxu0
    %v4575 = vadd.f32 0.0, %v4574
    %4576 = vdwg.mxu0
    %4577 = vmatpush.msra.mxu0 0.0
    %4578 = vmatpush.msra.mxu0 0.0
    %4579 = vmatpush.msra.mxu0 0.0
    %4580 = vmatpush.msra.mxu0 0.0
    %4581 = vmatpush.msra.mxu0 0.0
    %4582 = vmatpush.msra.mxu0 0.0
    %4583 = vmatpush.msra.mxu0 0.0
    %4584 = vmatpush.msra.mxu0 0.0
    %4585 = vmatpush.msra.mxu0 0.0
    %4586 = vmatpush.msra.mxu0 0.0
    %4587 = vmatpush.msra.mxu0 0.0
    %4588 = vmatpush.msra.mxu0 0.0
    %4589 = vmatpush.msra.mxu0 0.0
    %4590 = vmatpush.msra.mxu0 0.0
    %4591 = vmatpush.msra.mxu0 0.0
    %4592 = vmatpush.msra.mxu0 %v4533
    %4593 = vmatmul.f32.gmra.mxu0 %v4527
    %v4594 = vpop.f32.mrf.mxu0
    %v4595 = vadd.f32 0.0, %v4594
    %4596 = vdwg.mxu0
    %4597 = vmatpush.msra.mxu0 0.0
    %4598 = vmatpush.msra.mxu0 0.0
    %4599 = vmatpush.msra.mxu0 0.0
    %4600 = vmatpush.msra.mxu0 0.0
    %4601 = vmatpush.msra.mxu0 0.0
    %4602 = vmatpush.msra.mxu0 0.0
    %4603 = vmatpush.msra.mxu0 0.0
    %4604 = vmatpush.msra.mxu0 0.0
    %4605 = vmatpush.msra.mxu0 0.0
    %4606 = vmatpush.msra.mxu0 0.0
    %4607 = vmatpush.msra.mxu0 0.0
    %4608 = vmatpush.msra.mxu0 0.0
    %4609 = vmatpush.msra.mxu0 0.0
    %4610 = vmatpush.msra.mxu0 0.0
    %4611 = vmatpush.msra.mxu0 0.0
    %4612 = vmatpush.msra.mxu0 %v4535
    %4613 = vmatmul.f32.gmra.mxu0 %v4527
    %v4614 = vpop.f32.mrf.mxu0
    %v4615 = vadd.f32 0.0, %v4614
    %4616 = vdwg.mxu0
    %v4621 = vrot.slane %v4575, 6
    %v4622 = vrot.slane %v4595, 4
    %v4623 = vrot.slane %v4615, 2
    %v4624 = vsel %vm232, %v4555, %v4621
    %v4625 = vsel %vm234, %v4622, %v4623
    %v4626 = vsel %vm236, %v4624, %v4625
    %v4628 = vadd.f32 %v3359, %v4626
    %v4629 = vxor.u32 %v4628, 2147483648
    %v4630 = vmul.f32 %v4629, 1.442695
    %v4631 = vpow.pop %v4630
    %v4632 = vadd.f32 %v4631, 1.0
    %v4633 = vrcp.pop %v4632
    %v4634 = vmul.f32 %v4632, %v4633
    %v4635 = vsub.f32 1.0, %v4634
    %v4636 = vmul.f32 %v4633, %v4635
    %v4637 = vadd.f32 %v4633, %v4636
    %vm4638 = vweird.f32 %v4632
    %vm4639 = vweird.f32 %v4633
    %vm4640 = vmor %vm4638, %vm4639
    %v4641 = vsel %vm4640, %v4633, %v4637
    %v4642 = vand.u32 2147483647, %v4632
    %vm4643 = vcmp.eq.f32.partialorder %v4642, 8.507059e+37
    %v4644 = vand.u32 %v4632, 2147483648
    %v4645 = vor.u32 1.1754944e-38, %v4644
    %v4646 = vsel %vm4643, %v4645, %v4641
    %v4647 = vmul.f32 1.0, %v4646
    %v4649 = vrot.slane %v4628, 2
    %v4651 = vxor.u32 %v4649, 2147483648
    %v4652 = vmul.f32 %v4651, 1.442695
    %v4653 = vpow.pop %v4652
    %v4654 = vadd.f32 %v4653, 1.0
    %v4655 = vrcp.pop %v4654
    %v4656 = vmul.f32 %v4654, %v4655
    %v4657 = vsub.f32 1.0, %v4656
    %v4658 = vmul.f32 %v4655, %v4657
    %v4659 = vadd.f32 %v4655, %v4658
    %vm4660 = vweird.f32 %v4654
    %vm4661 = vweird.f32 %v4655
    %vm4662 = vmor %vm4660, %vm4661
    %v4663 = vsel %vm4662, %v4655, %v4659
    %v4664 = vand.u32 2147483647, %v4654
    %vm4665 = vcmp.eq.f32.partialorder %v4664, 8.507059e+37
    %v4666 = vand.u32 %v4654, 2147483648
    %v4667 = vor.u32 1.1754944e-38, %v4666
    %v4668 = vsel %vm4665, %v4667, %v4663
    %v4669 = vmul.f32 1.0, %v4668
    %v4670 = vrot.slane %v4628, 4
    %v4672 = vtanh.pop %v4670
    %v4673 = vrot.slane %v4628, 6
    %v4675 = vxor.u32 %v4673, 2147483648
    %v4676 = vmul.f32 %v4675, 1.442695
    %v4677 = vpow.pop %v4676
    %v4678 = vadd.f32 %v4677, 1.0
    %v4679 = vrcp.pop %v4678
    %v4680 = vmul.f32 %v4678, %v4679
    %v4681 = vsub.f32 1.0, %v4680
    %v4682 = vmul.f32 %v4679, %v4681
    %v4683 = vadd.f32 %v4679, %v4682
    %vm4684 = vweird.f32 %v4678
    %vm4685 = vweird.f32 %v4679
    %vm4686 = vmor %vm4684, %vm4685
    %v4687 = vsel %vm4686, %v4679, %v4683
    %v4688 = vand.u32 2147483647, %v4678
    %vm4689 = vcmp.eq.f32.partialorder %v4688, 8.507059e+37
    %v4690 = vand.u32 %v4678, 2147483648
    %v4691 = vor.u32 1.1754944e-38, %v4690
    %v4692 = vsel %vm4689, %v4691, %v4687
    %v4693 = vmul.f32 1.0, %v4692
    %v4694 = vmul.f32 %v4669, %v4516
    %v4695 = vmul.f32 %v4647, %v4672
    %v4696 = vadd.f32 %v4694, %v4695
    %v4697 = vtanh.pop %v4696
    %v4698 = vmul.f32 %v4693, %v4697
    %s4699 = scalar_lea.vmem [#allocation1], 1
    %4700 = vst [vmem:[%s4699] ss:$4 sm:$0xff] %v3618
    %v4701 = vld.sshfl [vmem:[#allocation1] sm:$0xff pattern:$0x73625140]
    %s4703 = scalar_lea.vmem [#allocation1], 2
    %4704 = vst [vmem:[%s4703] ss:$4 sm:$0xff] %v3798
    %v4705 = vld.sshfl [vmem:[#allocation1] sm:$0xff pattern:$0x73625140]
    %s4707 = scalar_lea.vmem [#allocation1], 3
    %4708 = vst [vmem:[%s4707] ss:$4 sm:$0xff] %v3978
    %v4709 = vld.sshfl [vmem:[#allocation1] sm:$0xff pattern:$0x73625140]
    %s4711 = scalar_lea.vmem [#allocation1], 1
    %4712 = vst [vmem:[%s4711] ss:$4 sm:$0xff] %v4338
    %v4713 = vld.sshfl [vmem:[#allocation1] sm:$0xff pattern:$0x73625140]
    %s4715 = scalar_lea.vmem [#allocation1], 2
    %4716 = vst [vmem:[%s4715] ss:$4 sm:$0xff] %v4518
    %v4717 = vld.sshfl [vmem:[#allocation1] sm:$0xff pattern:$0x73625140]
    %s4720 = scalar_lea.vmem [#allocation1], 3
    %4721 = vst [vmem:[%s4720] ss:$4 sm:$0xff] %v4698
    %v4722 = vld.sshfl [vmem:[#allocation1] sm:$0xff pattern:$0x73625140]
    %v4724 = vsel %vm232, %v3436, %v4701
    %v4725 = vsel %vm236, %v4724, %v4705
    %v4726 = vsel %vm240, %v4725, %v4709
    %v4727 = vsel %vm232, %v4158, %v4713
    %v4728 = vsel %vm236, %v4727, %v4717
    %v4729 = vsel %vm240, %v4728, %v4722
    %s4730 = scalar_lea.vmem [#allocation2], 48
    %v4731 = vld [vmem:[%s4730] sm:$0x77]
    %v4732 = vld [vmem:[%s4730 + $0x8] sm:$0x77]
    %s4733 = scalar_lea.vmem [#allocation5], 48
    %v4734 = vld [vmem:[%s4733] sm:$0x77]
    %v4735 = vld [vmem:[%s4733 + $0x8] sm:$0x77]
    %s4736 = scalar_lea.vmem %s3, 12
    %v4737 = vld [vmem:[%s4736] sm:$0xf]
    %v4739 = vperm.slane %v4737, 0
    %v4740 = vperm.slane %v4737, 1
    %v4741 = vperm.slane %v4737, 2
    %v4742 = vperm.slane %v4737, 3
    %4749 = vst [vmem:[#allocation1] ss:$2 sm:$0xff] %v4731
    %s4750 = scalar_lea.vmem [#allocation1], 16
    %4751 = vst [vmem:[%s4750] ss:$2 sm:$0xff] %v4732
    %v4752 = vld.sshfl [vmem:[#allocation1] sm:$0xff pattern:$0x75316420]
    %v4753 = vld.sshfl [vmem:[#allocation1 + $0x8] sm:$0xff pattern:$0x75316420]
    %v4754 = vld.sshfl [vmem:[#allocation1 + $0x10] sm:$0xff pattern:$0x75316420]
    %v4755 = vld.sshfl [vmem:[#allocation1 + $0x18] sm:$0xff pattern:$0x75316420]
    %v4757 = vsel %vm112, %v4726, 0
    %v4760 = vsel %vm112, %v4729, 0
    %v4762 = vsel %vm117, %v4752, 0
    %v4764 = vsel %vm117, %v4753, 0
    %v4766 = vsel %vm117, %v4754, 0
    %v4768 = vsel %vm117, %v4755, 0
    %4770 = vmatpush.msra.mxu0 0.0
    %4771 = vmatpush.msra.mxu0 0.0
    %4772 = vmatpush.msra.mxu0 0.0
    %4773 = vmatpush.msra.mxu0 0.0
    %4774 = vmatpush.msra.mxu0 0.0
    %4775 = vmatpush.msra.mxu0 0.0
    %4776 = vmatpush.msra.mxu0 0.0
    %4777 = vmatpush.msra.mxu0 0.0
    %4778 = vmatpush.msra.mxu0 0.0
    %4779 = vmatpush.msra.mxu0 0.0
    %4780 = vmatpush.msra.mxu0 0.0
    %4781 = vmatpush.msra.mxu0 0.0
    %4782 = vmatpush.msra.mxu0 0.0
    %4783 = vmatpush.msra.mxu0 0.0
    %4784 = vmatpush.msra.mxu0 0.0
    %4785 = vmatpush.msra.mxu0 %v4762
    %4786 = vmatmul.f32.gmra.mxu0 %v4757
    %v4787 = vpop.f32.mrf.mxu0
    %v4788 = vadd.f32 %v4739, %v4787
    %4789 = vmatmul.f32.gmra.mxu0 %v4760
    %v4790 = vpop.f32.mrf.mxu0
    %v4791 = vadd.f32 %v4739, %v4790
    %4792 = vdwg.mxu0
    %4793 = vmatpush.msra.mxu0 0.0
    %4794 = vmatpush.msra.mxu0 0.0
    %4795 = vmatpush.msra.mxu0 0.0
    %4796 = vmatpush.msra.mxu0 0.0
    %4797 = vmatpush.msra.mxu0 0.0
    %4798 = vmatpush.msra.mxu0 0.0
    %4799 = vmatpush.msra.mxu0 0.0
    %4800 = vmatpush.msra.mxu0 0.0
    %4801 = vmatpush.msra.mxu0 0.0
    %4802 = vmatpush.msra.mxu0 0.0
    %4803 = vmatpush.msra.mxu0 0.0
    %4804 = vmatpush.msra.mxu0 0.0
    %4805 = vmatpush.msra.mxu0 0.0
    %4806 = vmatpush.msra.mxu0 0.0
    %4807 = vmatpush.msra.mxu0 0.0
    %4808 = vmatpush.msra.mxu0 %v4764
    %4809 = vmatmul.f32.gmra.mxu0 %v4757
    %v4810 = vpop.f32.mrf.mxu0
    %v4811 = vadd.f32 %v4740, %v4810
    %4812 = vmatmul.f32.gmra.mxu0 %v4760
    %v4813 = vpop.f32.mrf.mxu0
    %v4814 = vadd.f32 %v4740, %v4813
    %4815 = vdwg.mxu0
    %4816 = vmatpush.msra.mxu0 0.0
    %4817 = vmatpush.msra.mxu0 0.0
    %4818 = vmatpush.msra.mxu0 0.0
    %4819 = vmatpush.msra.mxu0 0.0
    %4820 = vmatpush.msra.mxu0 0.0
    %4821 = vmatpush.msra.mxu0 0.0
    %4822 = vmatpush.msra.mxu0 0.0
    %4823 = vmatpush.msra.mxu0 0.0
    %4824 = vmatpush.msra.mxu0 0.0
    %4825 = vmatpush.msra.mxu0 0.0
    %4826 = vmatpush.msra.mxu0 0.0
    %4827 = vmatpush.msra.mxu0 0.0
    %4828 = vmatpush.msra.mxu0 0.0
    %4829 = vmatpush.msra.mxu0 0.0
    %4830 = vmatpush.msra.mxu0 0.0
    %4831 = vmatpush.msra.mxu0 %v4766
    %4832 = vmatmul.f32.gmra.mxu0 %v4757
    %v4833 = vpop.f32.mrf.mxu0
    %v4834 = vadd.f32 %v4741, %v4833
    %4835 = vmatmul.f32.gmra.mxu0 %v4760
    %v4836 = vpop.f32.mrf.mxu0
    %v4837 = vadd.f32 %v4741, %v4836
    %4838 = vdwg.mxu0
    %4839 = vmatpush.msra.mxu0 0.0
    %4840 = vmatpush.msra.mxu0 0.0
    %4841 = vmatpush.msra.mxu0 0.0
    %4842 = vmatpush.msra.mxu0 0.0
    %4843 = vmatpush.msra.mxu0 0.0
    %4844 = vmatpush.msra.mxu0 0.0
    %4845 = vmatpush.msra.mxu0 0.0
    %4846 = vmatpush.msra.mxu0 0.0
    %4847 = vmatpush.msra.mxu0 0.0
    %4848 = vmatpush.msra.mxu0 0.0
    %4849 = vmatpush.msra.mxu0 0.0
    %4850 = vmatpush.msra.mxu0 0.0
    %4851 = vmatpush.msra.mxu0 0.0
    %4852 = vmatpush.msra.mxu0 0.0
    %4853 = vmatpush.msra.mxu0 0.0
    %4854 = vmatpush.msra.mxu0 %v4768
    %4855 = vmatmul.f32.gmra.mxu0 %v4757
    %v4856 = vpop.f32.mrf.mxu0
    %v4857 = vadd.f32 %v4742, %v4856
    %4858 = vmatmul.f32.gmra.mxu0 %v4760
    %v4859 = vpop.f32.mrf.mxu0
    %v4860 = vadd.f32 %v4742, %v4859
    %4861 = vdwg.mxu0
    %v4870 = vrot.slane %v4811, 6
    %v4871 = vrot.slane %v4834, 4
    %v4872 = vrot.slane %v4857, 2
    %v4873 = vrot.slane %v4814, 6
    %v4874 = vrot.slane %v4837, 4
    %v4875 = vrot.slane %v4860, 2
    %v4876 = vsel %vm232, %v4788, %v4870
    %v4877 = vsel %vm234, %v4871, %v4872
    %v4878 = vsel %vm236, %v4876, %v4877
    %v4879 = vsel %vm238, %v4788, %v4870
    %v4880 = vsel %vm240, %v4872, %v4871
    %v4881 = vsel %vm242, %v4879, %v4880
    %v4882 = vrot.slane %v4881, 2
    %v4883 = vsel %vm234, %v4788, %v4870
    %v4884 = vsel %vm232, %v4871, %v4872
    %v4885 = vsel %vm236, %v4884, %v4883
    %v4886 = vrot.slane %v4885, 4
    %v4887 = vsel %vm240, %v4870, %v4788
    %v4888 = vsel %vm238, %v4871, %v4872
    %v4889 = vsel %vm242, %v4888, %v4887
    %v4890 = vrot.slane %v4889, 6
    %v4891 = vsel %vm232, %v4791, %v4873
    %v4892 = vsel %vm234, %v4874, %v4875
    %v4893 = vsel %vm236, %v4891, %v4892
    %v4894 = vsel %vm238, %v4791, %v4873
    %v4895 = vsel %vm240, %v4875, %v4874
    %v4896 = vsel %vm242, %v4894, %v4895
    %v4897 = vrot.slane %v4896, 2
    %v4898 = vsel %vm234, %v4791, %v4873
    %v4899 = vsel %vm232, %v4874, %v4875
    %v4900 = vsel %vm236, %v4899, %v4898
    %v4901 = vrot.slane %v4900, 4
    %v4902 = vsel %vm240, %v4873, %v4791
    %v4903 = vsel %vm238, %v4874, %v4875
    %v4904 = vsel %vm242, %v4903, %v4902
    %v4905 = vrot.slane %v4904, 6
    %v4914 = vxor.u32 %v4878, 2147483648
    %v4915 = vmul.f32 %v4914, 1.442695
    %v4916 = vpow.pop %v4915
    %v4917 = vadd.f32 %v4916, 1.0
    %v4918 = vrcp.pop %v4917
    %v4919 = vmul.f32 %v4917, %v4918
    %v4920 = vsub.f32 1.0, %v4919
    %v4921 = vmul.f32 %v4918, %v4920
    %v4922 = vadd.f32 %v4918, %v4921
    %vm4923 = vweird.f32 %v4917
    %vm4924 = vweird.f32 %v4918
    %vm4925 = vmor %vm4923, %vm4924
    %v4926 = vsel %vm4925, %v4918, %v4922
    %v4927 = vand.u32 2147483647, %v4917
    %vm4928 = vcmp.eq.f32.partialorder %v4927, 8.507059e+37
    %v4929 = vand.u32 %v4917, 2147483648
    %v4930 = vor.u32 1.1754944e-38, %v4929
    %v4931 = vsel %vm4928, %v4930, %v4926
    %v4932 = vmul.f32 1.0, %v4931
    %v4933 = vrot.slane %v4878, 2
    %v4935 = vxor.u32 %v4933, 2147483648
    %v4936 = vmul.f32 %v4935, 1.442695
    %v4937 = vpow.pop %v4936
    %v4938 = vadd.f32 %v4937, 1.0
    %v4939 = vrcp.pop %v4938
    %v4940 = vmul.f32 %v4938, %v4939
    %v4941 = vsub.f32 1.0, %v4940
    %v4942 = vmul.f32 %v4939, %v4941
    %v4943 = vadd.f32 %v4939, %v4942
    %vm4944 = vweird.f32 %v4938
    %vm4945 = vweird.f32 %v4939
    %vm4946 = vmor %vm4944, %vm4945
    %v4947 = vsel %vm4946, %v4939, %v4943
    %v4948 = vand.u32 2147483647, %v4938
    %vm4949 = vcmp.eq.f32.partialorder %v4948, 8.507059e+37
    %v4950 = vand.u32 %v4938, 2147483648
    %v4951 = vor.u32 1.1754944e-38, %v4950
    %v4952 = vsel %vm4949, %v4951, %v4947
    %v4953 = vmul.f32 1.0, %v4952
    %v4954 = vrot.slane %v4878, 4
    %v4956 = vtanh.pop %v4954
    %v4957 = vrot.slane %v4878, 6
    %v4959 = vxor.u32 %v4957, 2147483648
    %v4960 = vmul.f32 %v4959, 1.442695
    %v4961 = vpow.pop %v4960
    %v4962 = vadd.f32 %v4961, 1.0
    %v4963 = vrcp.pop %v4962
    %v4964 = vmul.f32 %v4962, %v4963
    %v4965 = vsub.f32 1.0, %v4964
    %v4966 = vmul.f32 %v4963, %v4965
    %v4967 = vadd.f32 %v4963, %v4966
    %vm4968 = vweird.f32 %v4962
    %vm4969 = vweird.f32 %v4963
    %vm4970 = vmor %vm4968, %vm4969
    %v4971 = vsel %vm4970, %v4963, %v4967
    %v4972 = vand.u32 2147483647, %v4962
    %vm4973 = vcmp.eq.f32.partialorder %v4972, 8.507059e+37
    %v4974 = vand.u32 %v4962, 2147483648
    %v4975 = vor.u32 1.1754944e-38, %v4974
    %v4976 = vsel %vm4973, %v4975, %v4971
    %v4977 = vmul.f32 1.0, %v4976
    %v4978 = vmul.f32 %v4953, 0.0
    %v4979 = vmul.f32 %v4932, %v4956
    %v4980 = vadd.f32 %v4978, %v4979
    %v4981 = vtanh.pop %v4980
    %v4982 = vmul.f32 %v4977, %v4981
    %4985 = vst [vmem:[#allocation1] ss:$2 sm:$0xff] %v4734
    %s4986 = scalar_lea.vmem [#allocation1], 16
    %4987 = vst [vmem:[%s4986] ss:$2 sm:$0xff] %v4735
    %v4988 = vld.sshfl [vmem:[#allocation1] sm:$0xff pattern:$0x75316420]
    %v4989 = vld.sshfl [vmem:[#allocation1 + $0x8] sm:$0xff pattern:$0x75316420]
    %v4990 = vld.sshfl [vmem:[#allocation1 + $0x10] sm:$0xff pattern:$0x75316420]
    %v4991 = vld.sshfl [vmem:[#allocation1 + $0x18] sm:$0xff pattern:$0x75316420]
    %v4993 = vsel %vm112, %v4982, 0
    %v4995 = vsel %vm117, %v4988, 0
    %v4997 = vsel %vm117, %v4989, 0
    %v4999 = vsel %vm117, %v4990, 0
    %v5001 = vsel %vm117, %v4991, 0
    %5003 = vmatpush.msra.mxu0 0.0
    %5004 = vmatpush.msra.mxu0 0.0
    %5005 = vmatpush.msra.mxu0 0.0
    %5006 = vmatpush.msra.mxu0 0.0
    %5007 = vmatpush.msra.mxu0 0.0
    %5008 = vmatpush.msra.mxu0 0.0
    %5009 = vmatpush.msra.mxu0 0.0
    %5010 = vmatpush.msra.mxu0 0.0
    %5011 = vmatpush.msra.mxu0 0.0
    %5012 = vmatpush.msra.mxu0 0.0
    %5013 = vmatpush.msra.mxu0 0.0
    %5014 = vmatpush.msra.mxu0 0.0
    %5015 = vmatpush.msra.mxu0 0.0
    %5016 = vmatpush.msra.mxu0 0.0
    %5017 = vmatpush.msra.mxu0 0.0
    %5018 = vmatpush.msra.mxu0 %v4995
    %5019 = vmatmul.f32.gmra.mxu0 %v4993
    %v5020 = vpop.f32.mrf.mxu0
    %v5021 = vadd.f32 0.0, %v5020
    %5022 = vdwg.mxu0
    %5023 = vmatpush.msra.mxu0 0.0
    %5024 = vmatpush.msra.mxu0 0.0
    %5025 = vmatpush.msra.mxu0 0.0
    %5026 = vmatpush.msra.mxu0 0.0
    %5027 = vmatpush.msra.mxu0 0.0
    %5028 = vmatpush.msra.mxu0 0.0
    %5029 = vmatpush.msra.mxu0 0.0
    %5030 = vmatpush.msra.mxu0 0.0
    %5031 = vmatpush.msra.mxu0 0.0
    %5032 = vmatpush.msra.mxu0 0.0
    %5033 = vmatpush.msra.mxu0 0.0
    %5034 = vmatpush.msra.mxu0 0.0
    %5035 = vmatpush.msra.mxu0 0.0
    %5036 = vmatpush.msra.mxu0 0.0
    %5037 = vmatpush.msra.mxu0 0.0
    %5038 = vmatpush.msra.mxu0 %v4997
    %5039 = vmatmul.f32.gmra.mxu0 %v4993
    %v5040 = vpop.f32.mrf.mxu0
    %v5041 = vadd.f32 0.0, %v5040
    %5042 = vdwg.mxu0
    %5043 = vmatpush.msra.mxu0 0.0
    %5044 = vmatpush.msra.mxu0 0.0
    %5045 = vmatpush.msra.mxu0 0.0
    %5046 = vmatpush.msra.mxu0 0.0
    %5047 = vmatpush.msra.mxu0 0.0
    %5048 = vmatpush.msra.mxu0 0.0
    %5049 = vmatpush.msra.mxu0 0.0
    %5050 = vmatpush.msra.mxu0 0.0
    %5051 = vmatpush.msra.mxu0 0.0
    %5052 = vmatpush.msra.mxu0 0.0
    %5053 = vmatpush.msra.mxu0 0.0
    %5054 = vmatpush.msra.mxu0 0.0
    %5055 = vmatpush.msra.mxu0 0.0
    %5056 = vmatpush.msra.mxu0 0.0
    %5057 = vmatpush.msra.mxu0 0.0
    %5058 = vmatpush.msra.mxu0 %v4999
    %5059 = vmatmul.f32.gmra.mxu0 %v4993
    %v5060 = vpop.f32.mrf.mxu0
    %v5061 = vadd.f32 0.0, %v5060
    %5062 = vdwg.mxu0
    %5063 = vmatpush.msra.mxu0 0.0
    %5064 = vmatpush.msra.mxu0 0.0
    %5065 = vmatpush.msra.mxu0 0.0
    %5066 = vmatpush.msra.mxu0 0.0
    %5067 = vmatpush.msra.mxu0 0.0
    %5068 = vmatpush.msra.mxu0 0.0
    %5069 = vmatpush.msra.mxu0 0.0
    %5070 = vmatpush.msra.mxu0 0.0
    %5071 = vmatpush.msra.mxu0 0.0
    %5072 = vmatpush.msra.mxu0 0.0
    %5073 = vmatpush.msra.mxu0 0.0
    %5074 = vmatpush.msra.mxu0 0.0
    %5075 = vmatpush.msra.mxu0 0.0
    %5076 = vmatpush.msra.mxu0 0.0
    %5077 = vmatpush.msra.mxu0 0.0
    %5078 = vmatpush.msra.mxu0 %v5001
    %5079 = vmatmul.f32.gmra.mxu0 %v4993
    %v5080 = vpop.f32.mrf.mxu0
    %v5081 = vadd.f32 0.0, %v5080
    %5082 = vdwg.mxu0
    %v5087 = vrot.slane %v5041, 6
    %v5088 = vrot.slane %v5061, 4
    %v5089 = vrot.slane %v5081, 2
    %v5090 = vsel %vm232, %v5021, %v5087
    %v5091 = vsel %vm234, %v5088, %v5089
    %v5092 = vsel %vm236, %v5090, %v5091
    %v5094 = vadd.f32 %v4882, %v5092
    %v5095 = vxor.u32 %v5094, 2147483648
    %v5096 = vmul.f32 %v5095, 1.442695
    %v5097 = vpow.pop %v5096
    %v5098 = vadd.f32 %v5097, 1.0
    %v5099 = vrcp.pop %v5098
    %v5100 = vmul.f32 %v5098, %v5099
    %v5101 = vsub.f32 1.0, %v5100
    %v5102 = vmul.f32 %v5099, %v5101
    %v5103 = vadd.f32 %v5099, %v5102
    %vm5104 = vweird.f32 %v5098
    %vm5105 = vweird.f32 %v5099
    %vm5106 = vmor %vm5104, %vm5105
    %v5107 = vsel %vm5106, %v5099, %v5103
    %v5108 = vand.u32 2147483647, %v5098
    %vm5109 = vcmp.eq.f32.partialorder %v5108, 8.507059e+37
    %v5110 = vand.u32 %v5098, 2147483648
    %v5111 = vor.u32 1.1754944e-38, %v5110
    %v5112 = vsel %vm5109, %v5111, %v5107
    %v5113 = vmul.f32 1.0, %v5112
    %v5115 = vrot.slane %v5094, 2
    %v5117 = vxor.u32 %v5115, 2147483648
    %v5118 = vmul.f32 %v5117, 1.442695
    %v5119 = vpow.pop %v5118
    %v5120 = vadd.f32 %v5119, 1.0
    %v5121 = vrcp.pop %v5120
    %v5122 = vmul.f32 %v5120, %v5121
    %v5123 = vsub.f32 1.0, %v5122
    %v5124 = vmul.f32 %v5121, %v5123
    %v5125 = vadd.f32 %v5121, %v5124
    %vm5126 = vweird.f32 %v5120
    %vm5127 = vweird.f32 %v5121
    %vm5128 = vmor %vm5126, %vm5127
    %v5129 = vsel %vm5128, %v5121, %v5125
    %v5130 = vand.u32 2147483647, %v5120
    %vm5131 = vcmp.eq.f32.partialorder %v5130, 8.507059e+37
    %v5132 = vand.u32 %v5120, 2147483648
    %v5133 = vor.u32 1.1754944e-38, %v5132
    %v5134 = vsel %vm5131, %v5133, %v5129
    %v5135 = vmul.f32 1.0, %v5134
    %v5136 = vrot.slane %v5094, 4
    %v5138 = vtanh.pop %v5136
    %v5139 = vrot.slane %v5094, 6
    %v5141 = vxor.u32 %v5139, 2147483648
    %v5142 = vmul.f32 %v5141, 1.442695
    %v5143 = vpow.pop %v5142
    %v5144 = vadd.f32 %v5143, 1.0
    %v5145 = vrcp.pop %v5144
    %v5146 = vmul.f32 %v5144, %v5145
    %v5147 = vsub.f32 1.0, %v5146
    %v5148 = vmul.f32 %v5145, %v5147
    %v5149 = vadd.f32 %v5145, %v5148
    %vm5150 = vweird.f32 %v5144
    %vm5151 = vweird.f32 %v5145
    %vm5152 = vmor %vm5150, %vm5151
    %v5153 = vsel %vm5152, %v5145, %v5149
    %v5154 = vand.u32 2147483647, %v5144
    %vm5155 = vcmp.eq.f32.partialorder %v5154, 8.507059e+37
    %v5156 = vand.u32 %v5144, 2147483648
    %v5157 = vor.u32 1.1754944e-38, %v5156
    %v5158 = vsel %vm5155, %v5157, %v5153
    %v5159 = vmul.f32 1.0, %v5158
    %v5160 = vmul.f32 %v5135, %v4980
    %v5161 = vmul.f32 %v5113, %v5138
    %v5162 = vadd.f32 %v5160, %v5161
    %v5163 = vtanh.pop %v5162
    %v5164 = vmul.f32 %v5159, %v5163
    %5165 = vst [vmem:[#allocation1] ss:$2 sm:$0xff] %v4734
    %s5166 = scalar_lea.vmem [#allocation1], 16
    %5167 = vst [vmem:[%s5166] ss:$2 sm:$0xff] %v4735
    %v5168 = vld.sshfl [vmem:[#allocation1] sm:$0xff pattern:$0x75316420]
    %v5169 = vld.sshfl [vmem:[#allocation1 + $0x8] sm:$0xff pattern:$0x75316420]
    %v5170 = vld.sshfl [vmem:[#allocation1 + $0x10] sm:$0xff pattern:$0x75316420]
    %v5171 = vld.sshfl [vmem:[#allocation1 + $0x18] sm:$0xff pattern:$0x75316420]
    %v5173 = vsel %vm112, %v5164, 0
    %v5175 = vsel %vm117, %v5168, 0
    %v5177 = vsel %vm117, %v5169, 0
    %v5179 = vsel %vm117, %v5170, 0
    %v5181 = vsel %vm117, %v5171, 0
    %5183 = vmatpush.msra.mxu0 0.0
    %5184 = vmatpush.msra.mxu0 0.0
    %5185 = vmatpush.msra.mxu0 0.0
    %5186 = vmatpush.msra.mxu0 0.0
    %5187 = vmatpush.msra.mxu0 0.0
    %5188 = vmatpush.msra.mxu0 0.0
    %5189 = vmatpush.msra.mxu0 0.0
    %5190 = vmatpush.msra.mxu0 0.0
    %5191 = vmatpush.msra.mxu0 0.0
    %5192 = vmatpush.msra.mxu0 0.0
    %5193 = vmatpush.msra.mxu0 0.0
    %5194 = vmatpush.msra.mxu0 0.0
    %5195 = vmatpush.msra.mxu0 0.0
    %5196 = vmatpush.msra.mxu0 0.0
    %5197 = vmatpush.msra.mxu0 0.0
    %5198 = vmatpush.msra.mxu0 %v5175
    %5199 = vmatmul.f32.gmra.mxu0 %v5173
    %v5200 = vpop.f32.mrf.mxu0
    %v5201 = vadd.f32 0.0, %v5200
    %5202 = vdwg.mxu0
    %5203 = vmatpush.msra.mxu0 0.0
    %5204 = vmatpush.msra.mxu0 0.0
    %5205 = vmatpush.msra.mxu0 0.0
    %5206 = vmatpush.msra.mxu0 0.0
    %5207 = vmatpush.msra.mxu0 0.0
    %5208 = vmatpush.msra.mxu0 0.0
    %5209 = vmatpush.msra.mxu0 0.0
    %5210 = vmatpush.msra.mxu0 0.0
    %5211 = vmatpush.msra.mxu0 0.0
    %5212 = vmatpush.msra.mxu0 0.0
    %5213 = vmatpush.msra.mxu0 0.0
    %5214 = vmatpush.msra.mxu0 0.0
    %5215 = vmatpush.msra.mxu0 0.0
    %5216 = vmatpush.msra.mxu0 0.0
    %5217 = vmatpush.msra.mxu0 0.0
    %5218 = vmatpush.msra.mxu0 %v5177
    %5219 = vmatmul.f32.gmra.mxu0 %v5173
    %v5220 = vpop.f32.mrf.mxu0
    %v5221 = vadd.f32 0.0, %v5220
    %5222 = vdwg.mxu0
    %5223 = vmatpush.msra.mxu0 0.0
    %5224 = vmatpush.msra.mxu0 0.0
    %5225 = vmatpush.msra.mxu0 0.0
    %5226 = vmatpush.msra.mxu0 0.0
    %5227 = vmatpush.msra.mxu0 0.0
    %5228 = vmatpush.msra.mxu0 0.0
    %5229 = vmatpush.msra.mxu0 0.0
    %5230 = vmatpush.msra.mxu0 0.0
    %5231 = vmatpush.msra.mxu0 0.0
    %5232 = vmatpush.msra.mxu0 0.0
    %5233 = vmatpush.msra.mxu0 0.0
    %5234 = vmatpush.msra.mxu0 0.0
    %5235 = vmatpush.msra.mxu0 0.0
    %5236 = vmatpush.msra.mxu0 0.0
    %5237 = vmatpush.msra.mxu0 0.0
    %5238 = vmatpush.msra.mxu0 %v5179
    %5239 = vmatmul.f32.gmra.mxu0 %v5173
    %v5240 = vpop.f32.mrf.mxu0
    %v5241 = vadd.f32 0.0, %v5240
    %5242 = vdwg.mxu0
    %5243 = vmatpush.msra.mxu0 0.0
    %5244 = vmatpush.msra.mxu0 0.0
    %5245 = vmatpush.msra.mxu0 0.0
    %5246 = vmatpush.msra.mxu0 0.0
    %5247 = vmatpush.msra.mxu0 0.0
    %5248 = vmatpush.msra.mxu0 0.0
    %5249 = vmatpush.msra.mxu0 0.0
    %5250 = vmatpush.msra.mxu0 0.0
    %5251 = vmatpush.msra.mxu0 0.0
    %5252 = vmatpush.msra.mxu0 0.0
    %5253 = vmatpush.msra.mxu0 0.0
    %5254 = vmatpush.msra.mxu0 0.0
    %5255 = vmatpush.msra.mxu0 0.0
    %5256 = vmatpush.msra.mxu0 0.0
    %5257 = vmatpush.msra.mxu0 0.0
    %5258 = vmatpush.msra.mxu0 %v5181
    %5259 = vmatmul.f32.gmra.mxu0 %v5173
    %v5260 = vpop.f32.mrf.mxu0
    %v5261 = vadd.f32 0.0, %v5260
    %5262 = vdwg.mxu0
    %v5267 = vrot.slane %v5221, 6
    %v5268 = vrot.slane %v5241, 4
    %v5269 = vrot.slane %v5261, 2
    %v5270 = vsel %vm232, %v5201, %v5267
    %v5271 = vsel %vm234, %v5268, %v5269
    %v5272 = vsel %vm236, %v5270, %v5271
    %v5274 = vadd.f32 %v4886, %v5272
    %v5275 = vxor.u32 %v5274, 2147483648
    %v5276 = vmul.f32 %v5275, 1.442695
    %v5277 = vpow.pop %v5276
    %v5278 = vadd.f32 %v5277, 1.0
    %v5279 = vrcp.pop %v5278
    %v5280 = vmul.f32 %v5278, %v5279
    %v5281 = vsub.f32 1.0, %v5280
    %v5282 = vmul.f32 %v5279, %v5281
    %v5283 = vadd.f32 %v5279, %v5282
    %vm5284 = vweird.f32 %v5278
    %vm5285 = vweird.f32 %v5279
    %vm5286 = vmor %vm5284, %vm5285
    %v5287 = vsel %vm5286, %v5279, %v5283
    %v5288 = vand.u32 2147483647, %v5278
    %vm5289 = vcmp.eq.f32.partialorder %v5288, 8.507059e+37
    %v5290 = vand.u32 %v5278, 2147483648
    %v5291 = vor.u32 1.1754944e-38, %v5290
    %v5292 = vsel %vm5289, %v5291, %v5287
    %v5293 = vmul.f32 1.0, %v5292
    %v5295 = vrot.slane %v5274, 2
    %v5297 = vxor.u32 %v5295, 2147483648
    %v5298 = vmul.f32 %v5297, 1.442695
    %v5299 = vpow.pop %v5298
    %v5300 = vadd.f32 %v5299, 1.0
    %v5301 = vrcp.pop %v5300
    %v5302 = vmul.f32 %v5300, %v5301
    %v5303 = vsub.f32 1.0, %v5302
    %v5304 = vmul.f32 %v5301, %v5303
    %v5305 = vadd.f32 %v5301, %v5304
    %vm5306 = vweird.f32 %v5300
    %vm5307 = vweird.f32 %v5301
    %vm5308 = vmor %vm5306, %vm5307
    %v5309 = vsel %vm5308, %v5301, %v5305
    %v5310 = vand.u32 2147483647, %v5300
    %vm5311 = vcmp.eq.f32.partialorder %v5310, 8.507059e+37
    %v5312 = vand.u32 %v5300, 2147483648
    %v5313 = vor.u32 1.1754944e-38, %v5312
    %v5314 = vsel %vm5311, %v5313, %v5309
    %v5315 = vmul.f32 1.0, %v5314
    %v5316 = vrot.slane %v5274, 4
    %v5318 = vtanh.pop %v5316
    %v5319 = vrot.slane %v5274, 6
    %v5321 = vxor.u32 %v5319, 2147483648
    %v5322 = vmul.f32 %v5321, 1.442695
    %v5323 = vpow.pop %v5322
    %v5324 = vadd.f32 %v5323, 1.0
    %v5325 = vrcp.pop %v5324
    %v5326 = vmul.f32 %v5324, %v5325
    %v5327 = vsub.f32 1.0, %v5326
    %v5328 = vmul.f32 %v5325, %v5327
    %v5329 = vadd.f32 %v5325, %v5328
    %vm5330 = vweird.f32 %v5324
    %vm5331 = vweird.f32 %v5325
    %vm5332 = vmor %vm5330, %vm5331
    %v5333 = vsel %vm5332, %v5325, %v5329
    %v5334 = vand.u32 2147483647, %v5324
    %vm5335 = vcmp.eq.f32.partialorder %v5334, 8.507059e+37
    %v5336 = vand.u32 %v5324, 2147483648
    %v5337 = vor.u32 1.1754944e-38, %v5336
    %v5338 = vsel %vm5335, %v5337, %v5333
    %v5339 = vmul.f32 1.0, %v5338
    %v5340 = vmul.f32 %v5315, %v5162
    %v5341 = vmul.f32 %v5293, %v5318
    %v5342 = vadd.f32 %v5340, %v5341
    %v5343 = vtanh.pop %v5342
    %v5344 = vmul.f32 %v5339, %v5343
    %5345 = vst [vmem:[#allocation1] ss:$2 sm:$0xff] %v4734
    %s5346 = scalar_lea.vmem [#allocation1], 16
    %5347 = vst [vmem:[%s5346] ss:$2 sm:$0xff] %v4735
    %v5348 = vld.sshfl [vmem:[#allocation1] sm:$0xff pattern:$0x75316420]
    %v5349 = vld.sshfl [vmem:[#allocation1 + $0x8] sm:$0xff pattern:$0x75316420]
    %v5350 = vld.sshfl [vmem:[#allocation1 + $0x10] sm:$0xff pattern:$0x75316420]
    %v5351 = vld.sshfl [vmem:[#allocation1 + $0x18] sm:$0xff pattern:$0x75316420]
    %v5353 = vsel %vm112, %v5344, 0
    %v5355 = vsel %vm117, %v5348, 0
    %v5357 = vsel %vm117, %v5349, 0
    %v5359 = vsel %vm117, %v5350, 0
    %v5361 = vsel %vm117, %v5351, 0
    %5363 = vmatpush.msra.mxu0 0.0
    %5364 = vmatpush.msra.mxu0 0.0
    %5365 = vmatpush.msra.mxu0 0.0
    %5366 = vmatpush.msra.mxu0 0.0
    %5367 = vmatpush.msra.mxu0 0.0
    %5368 = vmatpush.msra.mxu0 0.0
    %5369 = vmatpush.msra.mxu0 0.0
    %5370 = vmatpush.msra.mxu0 0.0
    %5371 = vmatpush.msra.mxu0 0.0
    %5372 = vmatpush.msra.mxu0 0.0
    %5373 = vmatpush.msra.mxu0 0.0
    %5374 = vmatpush.msra.mxu0 0.0
    %5375 = vmatpush.msra.mxu0 0.0
    %5376 = vmatpush.msra.mxu0 0.0
    %5377 = vmatpush.msra.mxu0 0.0
    %5378 = vmatpush.msra.mxu0 %v5355
    %5379 = vmatmul.f32.gmra.mxu0 %v5353
    %v5380 = vpop.f32.mrf.mxu0
    %v5381 = vadd.f32 0.0, %v5380
    %5382 = vdwg.mxu0
    %5383 = vmatpush.msra.mxu0 0.0
    %5384 = vmatpush.msra.mxu0 0.0
    %5385 = vmatpush.msra.mxu0 0.0
    %5386 = vmatpush.msra.mxu0 0.0
    %5387 = vmatpush.msra.mxu0 0.0
    %5388 = vmatpush.msra.mxu0 0.0
    %5389 = vmatpush.msra.mxu0 0.0
    %5390 = vmatpush.msra.mxu0 0.0
    %5391 = vmatpush.msra.mxu0 0.0
    %5392 = vmatpush.msra.mxu0 0.0
    %5393 = vmatpush.msra.mxu0 0.0
    %5394 = vmatpush.msra.mxu0 0.0
    %5395 = vmatpush.msra.mxu0 0.0
    %5396 = vmatpush.msra.mxu0 0.0
    %5397 = vmatpush.msra.mxu0 0.0
    %5398 = vmatpush.msra.mxu0 %v5357
    %5399 = vmatmul.f32.gmra.mxu0 %v5353
    %v5400 = vpop.f32.mrf.mxu0
    %v5401 = vadd.f32 0.0, %v5400
    %5402 = vdwg.mxu0
    %5403 = vmatpush.msra.mxu0 0.0
    %5404 = vmatpush.msra.mxu0 0.0
    %5405 = vmatpush.msra.mxu0 0.0
    %5406 = vmatpush.msra.mxu0 0.0
    %5407 = vmatpush.msra.mxu0 0.0
    %5408 = vmatpush.msra.mxu0 0.0
    %5409 = vmatpush.msra.mxu0 0.0
    %5410 = vmatpush.msra.mxu0 0.0
    %5411 = vmatpush.msra.mxu0 0.0
    %5412 = vmatpush.msra.mxu0 0.0
    %5413 = vmatpush.msra.mxu0 0.0
    %5414 = vmatpush.msra.mxu0 0.0
    %5415 = vmatpush.msra.mxu0 0.0
    %5416 = vmatpush.msra.mxu0 0.0
    %5417 = vmatpush.msra.mxu0 0.0
    %5418 = vmatpush.msra.mxu0 %v5359
    %5419 = vmatmul.f32.gmra.mxu0 %v5353
    %v5420 = vpop.f32.mrf.mxu0
    %v5421 = vadd.f32 0.0, %v5420
    %5422 = vdwg.mxu0
    %5423 = vmatpush.msra.mxu0 0.0
    %5424 = vmatpush.msra.mxu0 0.0
    %5425 = vmatpush.msra.mxu0 0.0
    %5426 = vmatpush.msra.mxu0 0.0
    %5427 = vmatpush.msra.mxu0 0.0
    %5428 = vmatpush.msra.mxu0 0.0
    %5429 = vmatpush.msra.mxu0 0.0
    %5430 = vmatpush.msra.mxu0 0.0
    %5431 = vmatpush.msra.mxu0 0.0
    %5432 = vmatpush.msra.mxu0 0.0
    %5433 = vmatpush.msra.mxu0 0.0
    %5434 = vmatpush.msra.mxu0 0.0
    %5435 = vmatpush.msra.mxu0 0.0
    %5436 = vmatpush.msra.mxu0 0.0
    %5437 = vmatpush.msra.mxu0 0.0
    %5438 = vmatpush.msra.mxu0 %v5361
    %5439 = vmatmul.f32.gmra.mxu0 %v5353
    %v5440 = vpop.f32.mrf.mxu0
    %v5441 = vadd.f32 0.0, %v5440
    %5442 = vdwg.mxu0
    %v5447 = vrot.slane %v5401, 6
    %v5448 = vrot.slane %v5421, 4
    %v5449 = vrot.slane %v5441, 2
    %v5450 = vsel %vm232, %v5381, %v5447
    %v5451 = vsel %vm234, %v5448, %v5449
    %v5452 = vsel %vm236, %v5450, %v5451
    %v5454 = vadd.f32 %v4890, %v5452
    %v5455 = vxor.u32 %v5454, 2147483648
    %v5456 = vmul.f32 %v5455, 1.442695
    %v5457 = vpow.pop %v5456
    %v5458 = vadd.f32 %v5457, 1.0
    %v5459 = vrcp.pop %v5458
    %v5460 = vmul.f32 %v5458, %v5459
    %v5461 = vsub.f32 1.0, %v5460
    %v5462 = vmul.f32 %v5459, %v5461
    %v5463 = vadd.f32 %v5459, %v5462
    %vm5464 = vweird.f32 %v5458
    %vm5465 = vweird.f32 %v5459
    %vm5466 = vmor %vm5464, %vm5465
    %v5467 = vsel %vm5466, %v5459, %v5463
    %v5468 = vand.u32 2147483647, %v5458
    %vm5469 = vcmp.eq.f32.partialorder %v5468, 8.507059e+37
    %v5470 = vand.u32 %v5458, 2147483648
    %v5471 = vor.u32 1.1754944e-38, %v5470
    %v5472 = vsel %vm5469, %v5471, %v5467
    %v5473 = vmul.f32 1.0, %v5472
    %v5475 = vrot.slane %v5454, 2
    %v5477 = vxor.u32 %v5475, 2147483648
    %v5478 = vmul.f32 %v5477, 1.442695
    %v5479 = vpow.pop %v5478
    %v5480 = vadd.f32 %v5479, 1.0
    %v5481 = vrcp.pop %v5480
    %v5482 = vmul.f32 %v5480, %v5481
    %v5483 = vsub.f32 1.0, %v5482
    %v5484 = vmul.f32 %v5481, %v5483
    %v5485 = vadd.f32 %v5481, %v5484
    %vm5486 = vweird.f32 %v5480
    %vm5487 = vweird.f32 %v5481
    %vm5488 = vmor %vm5486, %vm5487
    %v5489 = vsel %vm5488, %v5481, %v5485
    %v5490 = vand.u32 2147483647, %v5480
    %vm5491 = vcmp.eq.f32.partialorder %v5490, 8.507059e+37
    %v5492 = vand.u32 %v5480, 2147483648
    %v5493 = vor.u32 1.1754944e-38, %v5492
    %v5494 = vsel %vm5491, %v5493, %v5489
    %v5495 = vmul.f32 1.0, %v5494
    %v5496 = vrot.slane %v5454, 4
    %v5498 = vtanh.pop %v5496
    %v5499 = vrot.slane %v5454, 6
    %v5501 = vxor.u32 %v5499, 2147483648
    %v5502 = vmul.f32 %v5501, 1.442695
    %v5503 = vpow.pop %v5502
    %v5504 = vadd.f32 %v5503, 1.0
    %v5505 = vrcp.pop %v5504
    %v5506 = vmul.f32 %v5504, %v5505
    %v5507 = vsub.f32 1.0, %v5506
    %v5508 = vmul.f32 %v5505, %v5507
    %v5509 = vadd.f32 %v5505, %v5508
    %vm5510 = vweird.f32 %v5504
    %vm5511 = vweird.f32 %v5505
    %vm5512 = vmor %vm5510, %vm5511
    %v5513 = vsel %vm5512, %v5505, %v5509
    %v5514 = vand.u32 2147483647, %v5504
    %vm5515 = vcmp.eq.f32.partialorder %v5514, 8.507059e+37
    %v5516 = vand.u32 %v5504, 2147483648
    %v5517 = vor.u32 1.1754944e-38, %v5516
    %v5518 = vsel %vm5515, %v5517, %v5513
    %v5519 = vmul.f32 1.0, %v5518
    %v5520 = vmul.f32 %v5495, %v5342
    %v5521 = vmul.f32 %v5473, %v5498
    %v5522 = vadd.f32 %v5520, %v5521
    %v5523 = vtanh.pop %v5522
    %v5524 = vmul.f32 %v5519, %v5523
    %5525 = vst [vmem:[#allocation1] ss:$2 sm:$0xff] %v4734
    %s5526 = scalar_lea.vmem [#allocation1], 16
    %5527 = vst [vmem:[%s5526] ss:$2 sm:$0xff] %v4735
    %v5528 = vld.sshfl [vmem:[#allocation1] sm:$0xff pattern:$0x75316420]
    %v5529 = vld.sshfl [vmem:[#allocation1 + $0x8] sm:$0xff pattern:$0x75316420]
    %v5530 = vld.sshfl [vmem:[#allocation1 + $0x10] sm:$0xff pattern:$0x75316420]
    %v5531 = vld.sshfl [vmem:[#allocation1 + $0x18] sm:$0xff pattern:$0x75316420]
    %v5533 = vsel %vm112, %v5524, 0
    %v5535 = vsel %vm117, %v5528, 0
    %v5537 = vsel %vm117, %v5529, 0
    %v5539 = vsel %vm117, %v5530, 0
    %v5541 = vsel %vm117, %v5531, 0
    %5543 = vmatpush.msra.mxu0 0.0
    %5544 = vmatpush.msra.mxu0 0.0
    %5545 = vmatpush.msra.mxu0 0.0
    %5546 = vmatpush.msra.mxu0 0.0
    %5547 = vmatpush.msra.mxu0 0.0
    %5548 = vmatpush.msra.mxu0 0.0
    %5549 = vmatpush.msra.mxu0 0.0
    %5550 = vmatpush.msra.mxu0 0.0
    %5551 = vmatpush.msra.mxu0 0.0
    %5552 = vmatpush.msra.mxu0 0.0
    %5553 = vmatpush.msra.mxu0 0.0
    %5554 = vmatpush.msra.mxu0 0.0
    %5555 = vmatpush.msra.mxu0 0.0
    %5556 = vmatpush.msra.mxu0 0.0
    %5557 = vmatpush.msra.mxu0 0.0
    %5558 = vmatpush.msra.mxu0 %v5535
    %5559 = vmatmul.f32.gmra.mxu0 %v5533
    %v5560 = vpop.f32.mrf.mxu0
    %v5561 = vadd.f32 0.0, %v5560
    %5562 = vdwg.mxu0
    %5563 = vmatpush.msra.mxu0 0.0
    %5564 = vmatpush.msra.mxu0 0.0
    %5565 = vmatpush.msra.mxu0 0.0
    %5566 = vmatpush.msra.mxu0 0.0
    %5567 = vmatpush.msra.mxu0 0.0
    %5568 = vmatpush.msra.mxu0 0.0
    %5569 = vmatpush.msra.mxu0 0.0
    %5570 = vmatpush.msra.mxu0 0.0
    %5571 = vmatpush.msra.mxu0 0.0
    %5572 = vmatpush.msra.mxu0 0.0
    %5573 = vmatpush.msra.mxu0 0.0
    %5574 = vmatpush.msra.mxu0 0.0
    %5575 = vmatpush.msra.mxu0 0.0
    %5576 = vmatpush.msra.mxu0 0.0
    %5577 = vmatpush.msra.mxu0 0.0
    %5578 = vmatpush.msra.mxu0 %v5537
    %5579 = vmatmul.f32.gmra.mxu0 %v5533
    %v5580 = vpop.f32.mrf.mxu0
    %v5581 = vadd.f32 0.0, %v5580
    %5582 = vdwg.mxu0
    %5583 = vmatpush.msra.mxu0 0.0
    %5584 = vmatpush.msra.mxu0 0.0
    %5585 = vmatpush.msra.mxu0 0.0
    %5586 = vmatpush.msra.mxu0 0.0
    %5587 = vmatpush.msra.mxu0 0.0
    %5588 = vmatpush.msra.mxu0 0.0
    %5589 = vmatpush.msra.mxu0 0.0
    %5590 = vmatpush.msra.mxu0 0.0
    %5591 = vmatpush.msra.mxu0 0.0
    %5592 = vmatpush.msra.mxu0 0.0
    %5593 = vmatpush.msra.mxu0 0.0
    %5594 = vmatpush.msra.mxu0 0.0
    %5595 = vmatpush.msra.mxu0 0.0
    %5596 = vmatpush.msra.mxu0 0.0
    %5597 = vmatpush.msra.mxu0 0.0
    %5598 = vmatpush.msra.mxu0 %v5539
    %5599 = vmatmul.f32.gmra.mxu0 %v5533
    %v5600 = vpop.f32.mrf.mxu0
    %v5601 = vadd.f32 0.0, %v5600
    %5602 = vdwg.mxu0
    %5603 = vmatpush.msra.mxu0 0.0
    %5604 = vmatpush.msra.mxu0 0.0
    %5605 = vmatpush.msra.mxu0 0.0
    %5606 = vmatpush.msra.mxu0 0.0
    %5607 = vmatpush.msra.mxu0 0.0
    %5608 = vmatpush.msra.mxu0 0.0
    %5609 = vmatpush.msra.mxu0 0.0
    %5610 = vmatpush.msra.mxu0 0.0
    %5611 = vmatpush.msra.mxu0 0.0
    %5612 = vmatpush.msra.mxu0 0.0
    %5613 = vmatpush.msra.mxu0 0.0
    %5614 = vmatpush.msra.mxu0 0.0
    %5615 = vmatpush.msra.mxu0 0.0
    %5616 = vmatpush.msra.mxu0 0.0
    %5617 = vmatpush.msra.mxu0 0.0
    %5618 = vmatpush.msra.mxu0 %v5541
    %5619 = vmatmul.f32.gmra.mxu0 %v5533
    %v5620 = vpop.f32.mrf.mxu0
    %v5621 = vadd.f32 0.0, %v5620
    %5622 = vdwg.mxu0
    %v5627 = vrot.slane %v5581, 6
    %v5628 = vrot.slane %v5601, 4
    %v5629 = vrot.slane %v5621, 2
    %v5630 = vsel %vm232, %v5561, %v5627
    %v5631 = vsel %vm234, %v5628, %v5629
    %v5632 = vsel %vm236, %v5630, %v5631
    %v5634 = vadd.f32 %v4893, %v5632
    %v5635 = vxor.u32 %v5634, 2147483648
    %v5636 = vmul.f32 %v5635, 1.442695
    %v5637 = vpow.pop %v5636
    %v5638 = vadd.f32 %v5637, 1.0
    %v5639 = vrcp.pop %v5638
    %v5640 = vmul.f32 %v5638, %v5639
    %v5641 = vsub.f32 1.0, %v5640
    %v5642 = vmul.f32 %v5639, %v5641
    %v5643 = vadd.f32 %v5639, %v5642
    %vm5644 = vweird.f32 %v5638
    %vm5645 = vweird.f32 %v5639
    %vm5646 = vmor %vm5644, %vm5645
    %v5647 = vsel %vm5646, %v5639, %v5643
    %v5648 = vand.u32 2147483647, %v5638
    %vm5649 = vcmp.eq.f32.partialorder %v5648, 8.507059e+37
    %v5650 = vand.u32 %v5638, 2147483648
    %v5651 = vor.u32 1.1754944e-38, %v5650
    %v5652 = vsel %vm5649, %v5651, %v5647
    %v5653 = vmul.f32 1.0, %v5652
    %v5655 = vrot.slane %v5634, 2
    %v5657 = vxor.u32 %v5655, 2147483648
    %v5658 = vmul.f32 %v5657, 1.442695
    %v5659 = vpow.pop %v5658
    %v5660 = vadd.f32 %v5659, 1.0
    %v5661 = vrcp.pop %v5660
    %v5662 = vmul.f32 %v5660, %v5661
    %v5663 = vsub.f32 1.0, %v5662
    %v5664 = vmul.f32 %v5661, %v5663
    %v5665 = vadd.f32 %v5661, %v5664
    %vm5666 = vweird.f32 %v5660
    %vm5667 = vweird.f32 %v5661
    %vm5668 = vmor %vm5666, %vm5667
    %v5669 = vsel %vm5668, %v5661, %v5665
    %v5670 = vand.u32 2147483647, %v5660
    %vm5671 = vcmp.eq.f32.partialorder %v5670, 8.507059e+37
    %v5672 = vand.u32 %v5660, 2147483648
    %v5673 = vor.u32 1.1754944e-38, %v5672
    %v5674 = vsel %vm5671, %v5673, %v5669
    %v5675 = vmul.f32 1.0, %v5674
    %v5676 = vrot.slane %v5634, 4
    %v5678 = vtanh.pop %v5676
    %v5679 = vrot.slane %v5634, 6
    %v5681 = vxor.u32 %v5679, 2147483648
    %v5682 = vmul.f32 %v5681, 1.442695
    %v5683 = vpow.pop %v5682
    %v5684 = vadd.f32 %v5683, 1.0
    %v5685 = vrcp.pop %v5684
    %v5686 = vmul.f32 %v5684, %v5685
    %v5687 = vsub.f32 1.0, %v5686
    %v5688 = vmul.f32 %v5685, %v5687
    %v5689 = vadd.f32 %v5685, %v5688
    %vm5690 = vweird.f32 %v5684
    %vm5691 = vweird.f32 %v5685
    %vm5692 = vmor %vm5690, %vm5691
    %v5693 = vsel %vm5692, %v5685, %v5689
    %v5694 = vand.u32 2147483647, %v5684
    %vm5695 = vcmp.eq.f32.partialorder %v5694, 8.507059e+37
    %v5696 = vand.u32 %v5684, 2147483648
    %v5697 = vor.u32 1.1754944e-38, %v5696
    %v5698 = vsel %vm5695, %v5697, %v5693
    %v5699 = vmul.f32 1.0, %v5698
    %v5700 = vmul.f32 %v5675, %v5522
    %v5701 = vmul.f32 %v5653, %v5678
    %v5702 = vadd.f32 %v5700, %v5701
    %v5703 = vtanh.pop %v5702
    %v5704 = vmul.f32 %v5699, %v5703
    %5705 = vst [vmem:[#allocation1] ss:$2 sm:$0xff] %v4734
    %s5706 = scalar_lea.vmem [#allocation1], 16
    %5707 = vst [vmem:[%s5706] ss:$2 sm:$0xff] %v4735
    %v5708 = vld.sshfl [vmem:[#allocation1] sm:$0xff pattern:$0x75316420]
    %v5709 = vld.sshfl [vmem:[#allocation1 + $0x8] sm:$0xff pattern:$0x75316420]
    %v5710 = vld.sshfl [vmem:[#allocation1 + $0x10] sm:$0xff pattern:$0x75316420]
    %v5711 = vld.sshfl [vmem:[#allocation1 + $0x18] sm:$0xff pattern:$0x75316420]
    %v5713 = vsel %vm112, %v5704, 0
    %v5715 = vsel %vm117, %v5708, 0
    %v5717 = vsel %vm117, %v5709, 0
    %v5719 = vsel %vm117, %v5710, 0
    %v5721 = vsel %vm117, %v5711, 0
    %5723 = vmatpush.msra.mxu0 0.0
    %5724 = vmatpush.msra.mxu0 0.0
    %5725 = vmatpush.msra.mxu0 0.0
    %5726 = vmatpush.msra.mxu0 0.0
    %5727 = vmatpush.msra.mxu0 0.0
    %5728 = vmatpush.msra.mxu0 0.0
    %5729 = vmatpush.msra.mxu0 0.0
    %5730 = vmatpush.msra.mxu0 0.0
    %5731 = vmatpush.msra.mxu0 0.0
    %5732 = vmatpush.msra.mxu0 0.0
    %5733 = vmatpush.msra.mxu0 0.0
    %5734 = vmatpush.msra.mxu0 0.0
    %5735 = vmatpush.msra.mxu0 0.0
    %5736 = vmatpush.msra.mxu0 0.0
    %5737 = vmatpush.msra.mxu0 0.0
    %5738 = vmatpush.msra.mxu0 %v5715
    %5739 = vmatmul.f32.gmra.mxu0 %v5713
    %v5740 = vpop.f32.mrf.mxu0
    %v5741 = vadd.f32 0.0, %v5740
    %5742 = vdwg.mxu0
    %5743 = vmatpush.msra.mxu0 0.0
    %5744 = vmatpush.msra.mxu0 0.0
    %5745 = vmatpush.msra.mxu0 0.0
    %5746 = vmatpush.msra.mxu0 0.0
    %5747 = vmatpush.msra.mxu0 0.0
    %5748 = vmatpush.msra.mxu0 0.0
    %5749 = vmatpush.msra.mxu0 0.0
    %5750 = vmatpush.msra.mxu0 0.0
    %5751 = vmatpush.msra.mxu0 0.0
    %5752 = vmatpush.msra.mxu0 0.0
    %5753 = vmatpush.msra.mxu0 0.0
    %5754 = vmatpush.msra.mxu0 0.0
    %5755 = vmatpush.msra.mxu0 0.0
    %5756 = vmatpush.msra.mxu0 0.0
    %5757 = vmatpush.msra.mxu0 0.0
    %5758 = vmatpush.msra.mxu0 %v5717
    %5759 = vmatmul.f32.gmra.mxu0 %v5713
    %v5760 = vpop.f32.mrf.mxu0
    %v5761 = vadd.f32 0.0, %v5760
    %5762 = vdwg.mxu0
    %5763 = vmatpush.msra.mxu0 0.0
    %5764 = vmatpush.msra.mxu0 0.0
    %5765 = vmatpush.msra.mxu0 0.0
    %5766 = vmatpush.msra.mxu0 0.0
    %5767 = vmatpush.msra.mxu0 0.0
    %5768 = vmatpush.msra.mxu0 0.0
    %5769 = vmatpush.msra.mxu0 0.0
    %5770 = vmatpush.msra.mxu0 0.0
    %5771 = vmatpush.msra.mxu0 0.0
    %5772 = vmatpush.msra.mxu0 0.0
    %5773 = vmatpush.msra.mxu0 0.0
    %5774 = vmatpush.msra.mxu0 0.0
    %5775 = vmatpush.msra.mxu0 0.0
    %5776 = vmatpush.msra.mxu0 0.0
    %5777 = vmatpush.msra.mxu0 0.0
    %5778 = vmatpush.msra.mxu0 %v5719
    %5779 = vmatmul.f32.gmra.mxu0 %v5713
    %v5780 = vpop.f32.mrf.mxu0
    %v5781 = vadd.f32 0.0, %v5780
    %5782 = vdwg.mxu0
    %5783 = vmatpush.msra.mxu0 0.0
    %5784 = vmatpush.msra.mxu0 0.0
    %5785 = vmatpush.msra.mxu0 0.0
    %5786 = vmatpush.msra.mxu0 0.0
    %5787 = vmatpush.msra.mxu0 0.0
    %5788 = vmatpush.msra.mxu0 0.0
    %5789 = vmatpush.msra.mxu0 0.0
    %5790 = vmatpush.msra.mxu0 0.0
    %5791 = vmatpush.msra.mxu0 0.0
    %5792 = vmatpush.msra.mxu0 0.0
    %5793 = vmatpush.msra.mxu0 0.0
    %5794 = vmatpush.msra.mxu0 0.0
    %5795 = vmatpush.msra.mxu0 0.0
    %5796 = vmatpush.msra.mxu0 0.0
    %5797 = vmatpush.msra.mxu0 0.0
    %5798 = vmatpush.msra.mxu0 %v5721
    %5799 = vmatmul.f32.gmra.mxu0 %v5713
    %v5800 = vpop.f32.mrf.mxu0
    %v5801 = vadd.f32 0.0, %v5800
    %5802 = vdwg.mxu0
    %v5807 = vrot.slane %v5761, 6
    %v5808 = vrot.slane %v5781, 4
    %v5809 = vrot.slane %v5801, 2
    %v5810 = vsel %vm232, %v5741, %v5807
    %v5811 = vsel %vm234, %v5808, %v5809
    %v5812 = vsel %vm236, %v5810, %v5811
    %v5814 = vadd.f32 %v4897, %v5812
    %v5815 = vxor.u32 %v5814, 2147483648
    %v5816 = vmul.f32 %v5815, 1.442695
    %v5817 = vpow.pop %v5816
    %v5818 = vadd.f32 %v5817, 1.0
    %v5819 = vrcp.pop %v5818
    %v5820 = vmul.f32 %v5818, %v5819
    %v5821 = vsub.f32 1.0, %v5820
    %v5822 = vmul.f32 %v5819, %v5821
    %v5823 = vadd.f32 %v5819, %v5822
    %vm5824 = vweird.f32 %v5818
    %vm5825 = vweird.f32 %v5819
    %vm5826 = vmor %vm5824, %vm5825
    %v5827 = vsel %vm5826, %v5819, %v5823
    %v5828 = vand.u32 2147483647, %v5818
    %vm5829 = vcmp.eq.f32.partialorder %v5828, 8.507059e+37
    %v5830 = vand.u32 %v5818, 2147483648
    %v5831 = vor.u32 1.1754944e-38, %v5830
    %v5832 = vsel %vm5829, %v5831, %v5827
    %v5833 = vmul.f32 1.0, %v5832
    %v5835 = vrot.slane %v5814, 2
    %v5837 = vxor.u32 %v5835, 2147483648
    %v5838 = vmul.f32 %v5837, 1.442695
    %v5839 = vpow.pop %v5838
    %v5840 = vadd.f32 %v5839, 1.0
    %v5841 = vrcp.pop %v5840
    %v5842 = vmul.f32 %v5840, %v5841
    %v5843 = vsub.f32 1.0, %v5842
    %v5844 = vmul.f32 %v5841, %v5843
    %v5845 = vadd.f32 %v5841, %v5844
    %vm5846 = vweird.f32 %v5840
    %vm5847 = vweird.f32 %v5841
    %vm5848 = vmor %vm5846, %vm5847
    %v5849 = vsel %vm5848, %v5841, %v5845
    %v5850 = vand.u32 2147483647, %v5840
    %vm5851 = vcmp.eq.f32.partialorder %v5850, 8.507059e+37
    %v5852 = vand.u32 %v5840, 2147483648
    %v5853 = vor.u32 1.1754944e-38, %v5852
    %v5854 = vsel %vm5851, %v5853, %v5849
    %v5855 = vmul.f32 1.0, %v5854
    %v5856 = vrot.slane %v5814, 4
    %v5858 = vtanh.pop %v5856
    %v5859 = vrot.slane %v5814, 6
    %v5861 = vxor.u32 %v5859, 2147483648
    %v5862 = vmul.f32 %v5861, 1.442695
    %v5863 = vpow.pop %v5862
    %v5864 = vadd.f32 %v5863, 1.0
    %v5865 = vrcp.pop %v5864
    %v5866 = vmul.f32 %v5864, %v5865
    %v5867 = vsub.f32 1.0, %v5866
    %v5868 = vmul.f32 %v5865, %v5867
    %v5869 = vadd.f32 %v5865, %v5868
    %vm5870 = vweird.f32 %v5864
    %vm5871 = vweird.f32 %v5865
    %vm5872 = vmor %vm5870, %vm5871
    %v5873 = vsel %vm5872, %v5865, %v5869
    %v5874 = vand.u32 2147483647, %v5864
    %vm5875 = vcmp.eq.f32.partialorder %v5874, 8.507059e+37
    %v5876 = vand.u32 %v5864, 2147483648
    %v5877 = vor.u32 1.1754944e-38, %v5876
    %v5878 = vsel %vm5875, %v5877, %v5873
    %v5879 = vmul.f32 1.0, %v5878
    %v5880 = vmul.f32 %v5855, %v5702
    %v5881 = vmul.f32 %v5833, %v5858
    %v5882 = vadd.f32 %v5880, %v5881
    %v5883 = vtanh.pop %v5882
    %v5884 = vmul.f32 %v5879, %v5883
    %5885 = vst [vmem:[#allocation1] ss:$2 sm:$0xff] %v4734
    %s5886 = scalar_lea.vmem [#allocation1], 16
    %5887 = vst [vmem:[%s5886] ss:$2 sm:$0xff] %v4735
    %v5888 = vld.sshfl [vmem:[#allocation1] sm:$0xff pattern:$0x75316420]
    %v5889 = vld.sshfl [vmem:[#allocation1 + $0x8] sm:$0xff pattern:$0x75316420]
    %v5890 = vld.sshfl [vmem:[#allocation1 + $0x10] sm:$0xff pattern:$0x75316420]
    %v5891 = vld.sshfl [vmem:[#allocation1 + $0x18] sm:$0xff pattern:$0x75316420]
    %v5893 = vsel %vm112, %v5884, 0
    %v5895 = vsel %vm117, %v5888, 0
    %v5897 = vsel %vm117, %v5889, 0
    %v5899 = vsel %vm117, %v5890, 0
    %v5901 = vsel %vm117, %v5891, 0
    %5903 = vmatpush.msra.mxu0 0.0
    %5904 = vmatpush.msra.mxu0 0.0
    %5905 = vmatpush.msra.mxu0 0.0
    %5906 = vmatpush.msra.mxu0 0.0
    %5907 = vmatpush.msra.mxu0 0.0
    %5908 = vmatpush.msra.mxu0 0.0
    %5909 = vmatpush.msra.mxu0 0.0
    %5910 = vmatpush.msra.mxu0 0.0
    %5911 = vmatpush.msra.mxu0 0.0
    %5912 = vmatpush.msra.mxu0 0.0
    %5913 = vmatpush.msra.mxu0 0.0
    %5914 = vmatpush.msra.mxu0 0.0
    %5915 = vmatpush.msra.mxu0 0.0
    %5916 = vmatpush.msra.mxu0 0.0
    %5917 = vmatpush.msra.mxu0 0.0
    %5918 = vmatpush.msra.mxu0 %v5895
    %5919 = vmatmul.f32.gmra.mxu0 %v5893
    %v5920 = vpop.f32.mrf.mxu0
    %v5921 = vadd.f32 0.0, %v5920
    %5922 = vdwg.mxu0
    %5923 = vmatpush.msra.mxu0 0.0
    %5924 = vmatpush.msra.mxu0 0.0
    %5925 = vmatpush.msra.mxu0 0.0
    %5926 = vmatpush.msra.mxu0 0.0
    %5927 = vmatpush.msra.mxu0 0.0
    %5928 = vmatpush.msra.mxu0 0.0
    %5929 = vmatpush.msra.mxu0 0.0
    %5930 = vmatpush.msra.mxu0 0.0
    %5931 = vmatpush.msra.mxu0 0.0
    %5932 = vmatpush.msra.mxu0 0.0
    %5933 = vmatpush.msra.mxu0 0.0
    %5934 = vmatpush.msra.mxu0 0.0
    %5935 = vmatpush.msra.mxu0 0.0
    %5936 = vmatpush.msra.mxu0 0.0
    %5937 = vmatpush.msra.mxu0 0.0
    %5938 = vmatpush.msra.mxu0 %v5897
    %5939 = vmatmul.f32.gmra.mxu0 %v5893
    %v5940 = vpop.f32.mrf.mxu0
    %v5941 = vadd.f32 0.0, %v5940
    %5942 = vdwg.mxu0
    %5943 = vmatpush.msra.mxu0 0.0
    %5944 = vmatpush.msra.mxu0 0.0
    %5945 = vmatpush.msra.mxu0 0.0
    %5946 = vmatpush.msra.mxu0 0.0
    %5947 = vmatpush.msra.mxu0 0.0
    %5948 = vmatpush.msra.mxu0 0.0
    %5949 = vmatpush.msra.mxu0 0.0
    %5950 = vmatpush.msra.mxu0 0.0
    %5951 = vmatpush.msra.mxu0 0.0
    %5952 = vmatpush.msra.mxu0 0.0
    %5953 = vmatpush.msra.mxu0 0.0
    %5954 = vmatpush.msra.mxu0 0.0
    %5955 = vmatpush.msra.mxu0 0.0
    %5956 = vmatpush.msra.mxu0 0.0
    %5957 = vmatpush.msra.mxu0 0.0
    %5958 = vmatpush.msra.mxu0 %v5899
    %5959 = vmatmul.f32.gmra.mxu0 %v5893
    %v5960 = vpop.f32.mrf.mxu0
    %v5961 = vadd.f32 0.0, %v5960
    %5962 = vdwg.mxu0
    %5963 = vmatpush.msra.mxu0 0.0
    %5964 = vmatpush.msra.mxu0 0.0
    %5965 = vmatpush.msra.mxu0 0.0
    %5966 = vmatpush.msra.mxu0 0.0
    %5967 = vmatpush.msra.mxu0 0.0
    %5968 = vmatpush.msra.mxu0 0.0
    %5969 = vmatpush.msra.mxu0 0.0
    %5970 = vmatpush.msra.mxu0 0.0
    %5971 = vmatpush.msra.mxu0 0.0
    %5972 = vmatpush.msra.mxu0 0.0
    %5973 = vmatpush.msra.mxu0 0.0
    %5974 = vmatpush.msra.mxu0 0.0
    %5975 = vmatpush.msra.mxu0 0.0
    %5976 = vmatpush.msra.mxu0 0.0
    %5977 = vmatpush.msra.mxu0 0.0
    %5978 = vmatpush.msra.mxu0 %v5901
    %5979 = vmatmul.f32.gmra.mxu0 %v5893
    %v5980 = vpop.f32.mrf.mxu0
    %v5981 = vadd.f32 0.0, %v5980
    %5982 = vdwg.mxu0
    %v5987 = vrot.slane %v5941, 6
    %v5988 = vrot.slane %v5961, 4
    %v5989 = vrot.slane %v5981, 2
    %v5990 = vsel %vm232, %v5921, %v5987
    %v5991 = vsel %vm234, %v5988, %v5989
    %v5992 = vsel %vm236, %v5990, %v5991
    %v5994 = vadd.f32 %v4901, %v5992
    %v5995 = vxor.u32 %v5994, 2147483648
    %v5996 = vmul.f32 %v5995, 1.442695
    %v5997 = vpow.pop %v5996
    %v5998 = vadd.f32 %v5997, 1.0
    %v5999 = vrcp.pop %v5998
    %v6000 = vmul.f32 %v5998, %v5999
    %v6001 = vsub.f32 1.0, %v6000
    %v6002 = vmul.f32 %v5999, %v6001
    %v6003 = vadd.f32 %v5999, %v6002
    %vm6004 = vweird.f32 %v5998
    %vm6005 = vweird.f32 %v5999
    %vm6006 = vmor %vm6004, %vm6005
    %v6007 = vsel %vm6006, %v5999, %v6003
    %v6008 = vand.u32 2147483647, %v5998
    %vm6009 = vcmp.eq.f32.partialorder %v6008, 8.507059e+37
    %v6010 = vand.u32 %v5998, 2147483648
    %v6011 = vor.u32 1.1754944e-38, %v6010
    %v6012 = vsel %vm6009, %v6011, %v6007
    %v6013 = vmul.f32 1.0, %v6012
    %v6015 = vrot.slane %v5994, 2
    %v6017 = vxor.u32 %v6015, 2147483648
    %v6018 = vmul.f32 %v6017, 1.442695
    %v6019 = vpow.pop %v6018
    %v6020 = vadd.f32 %v6019, 1.0
    %v6021 = vrcp.pop %v6020
    %v6022 = vmul.f32 %v6020, %v6021
    %v6023 = vsub.f32 1.0, %v6022
    %v6024 = vmul.f32 %v6021, %v6023
    %v6025 = vadd.f32 %v6021, %v6024
    %vm6026 = vweird.f32 %v6020
    %vm6027 = vweird.f32 %v6021
    %vm6028 = vmor %vm6026, %vm6027
    %v6029 = vsel %vm6028, %v6021, %v6025
    %v6030 = vand.u32 2147483647, %v6020
    %vm6031 = vcmp.eq.f32.partialorder %v6030, 8.507059e+37
    %v6032 = vand.u32 %v6020, 2147483648
    %v6033 = vor.u32 1.1754944e-38, %v6032
    %v6034 = vsel %vm6031, %v6033, %v6029
    %v6035 = vmul.f32 1.0, %v6034
    %v6036 = vrot.slane %v5994, 4
    %v6038 = vtanh.pop %v6036
    %v6039 = vrot.slane %v5994, 6
    %v6041 = vxor.u32 %v6039, 2147483648
    %v6042 = vmul.f32 %v6041, 1.442695
    %v6043 = vpow.pop %v6042
    %v6044 = vadd.f32 %v6043, 1.0
    %v6045 = vrcp.pop %v6044
    %v6046 = vmul.f32 %v6044, %v6045
    %v6047 = vsub.f32 1.0, %v6046
    %v6048 = vmul.f32 %v6045, %v6047
    %v6049 = vadd.f32 %v6045, %v6048
    %vm6050 = vweird.f32 %v6044
    %vm6051 = vweird.f32 %v6045
    %vm6052 = vmor %vm6050, %vm6051
    %v6053 = vsel %vm6052, %v6045, %v6049
    %v6054 = vand.u32 2147483647, %v6044
    %vm6055 = vcmp.eq.f32.partialorder %v6054, 8.507059e+37
    %v6056 = vand.u32 %v6044, 2147483648
    %v6057 = vor.u32 1.1754944e-38, %v6056
    %v6058 = vsel %vm6055, %v6057, %v6053
    %v6059 = vmul.f32 1.0, %v6058
    %v6060 = vmul.f32 %v6035, %v5882
    %v6061 = vmul.f32 %v6013, %v6038
    %v6062 = vadd.f32 %v6060, %v6061
    %v6063 = vtanh.pop %v6062
    %v6064 = vmul.f32 %v6059, %v6063
    %6065 = vst [vmem:[#allocation1] ss:$2 sm:$0xff] %v4734
    %s6066 = scalar_lea.vmem [#allocation1], 16
    %6067 = vst [vmem:[%s6066] ss:$2 sm:$0xff] %v4735
    %v6068 = vld.sshfl [vmem:[#allocation1] sm:$0xff pattern:$0x75316420]
    %v6069 = vld.sshfl [vmem:[#allocation1 + $0x8] sm:$0xff pattern:$0x75316420]
    %v6070 = vld.sshfl [vmem:[#allocation1 + $0x10] sm:$0xff pattern:$0x75316420]
    %v6071 = vld.sshfl [vmem:[#allocation1 + $0x18] sm:$0xff pattern:$0x75316420]
    %v6073 = vsel %vm112, %v6064, 0
    %v6075 = vsel %vm117, %v6068, 0
    %v6077 = vsel %vm117, %v6069, 0
    %v6079 = vsel %vm117, %v6070, 0
    %v6081 = vsel %vm117, %v6071, 0
    %6083 = vmatpush.msra.mxu0 0.0
    %6084 = vmatpush.msra.mxu0 0.0
    %6085 = vmatpush.msra.mxu0 0.0
    %6086 = vmatpush.msra.mxu0 0.0
    %6087 = vmatpush.msra.mxu0 0.0
    %6088 = vmatpush.msra.mxu0 0.0
    %6089 = vmatpush.msra.mxu0 0.0
    %6090 = vmatpush.msra.mxu0 0.0
    %6091 = vmatpush.msra.mxu0 0.0
    %6092 = vmatpush.msra.mxu0 0.0
    %6093 = vmatpush.msra.mxu0 0.0
    %6094 = vmatpush.msra.mxu0 0.0
    %6095 = vmatpush.msra.mxu0 0.0
    %6096 = vmatpush.msra.mxu0 0.0
    %6097 = vmatpush.msra.mxu0 0.0
    %6098 = vmatpush.msra.mxu0 %v6075
    %6099 = vmatmul.f32.gmra.mxu0 %v6073
    %v6100 = vpop.f32.mrf.mxu0
    %v6101 = vadd.f32 0.0, %v6100
    %6102 = vdwg.mxu0
    %6103 = vmatpush.msra.mxu0 0.0
    %6104 = vmatpush.msra.mxu0 0.0
    %6105 = vmatpush.msra.mxu0 0.0
    %6106 = vmatpush.msra.mxu0 0.0
    %6107 = vmatpush.msra.mxu0 0.0
    %6108 = vmatpush.msra.mxu0 0.0
    %6109 = vmatpush.msra.mxu0 0.0
    %6110 = vmatpush.msra.mxu0 0.0
    %6111 = vmatpush.msra.mxu0 0.0
    %6112 = vmatpush.msra.mxu0 0.0
    %6113 = vmatpush.msra.mxu0 0.0
    %6114 = vmatpush.msra.mxu0 0.0
    %6115 = vmatpush.msra.mxu0 0.0
    %6116 = vmatpush.msra.mxu0 0.0
    %6117 = vmatpush.msra.mxu0 0.0
    %6118 = vmatpush.msra.mxu0 %v6077
    %6119 = vmatmul.f32.gmra.mxu0 %v6073
    %v6120 = vpop.f32.mrf.mxu0
    %v6121 = vadd.f32 0.0, %v6120
    %6122 = vdwg.mxu0
    %6123 = vmatpush.msra.mxu0 0.0
    %6124 = vmatpush.msra.mxu0 0.0
    %6125 = vmatpush.msra.mxu0 0.0
    %6126 = vmatpush.msra.mxu0 0.0
    %6127 = vmatpush.msra.mxu0 0.0
    %6128 = vmatpush.msra.mxu0 0.0
    %6129 = vmatpush.msra.mxu0 0.0
    %6130 = vmatpush.msra.mxu0 0.0
    %6131 = vmatpush.msra.mxu0 0.0
    %6132 = vmatpush.msra.mxu0 0.0
    %6133 = vmatpush.msra.mxu0 0.0
    %6134 = vmatpush.msra.mxu0 0.0
    %6135 = vmatpush.msra.mxu0 0.0
    %6136 = vmatpush.msra.mxu0 0.0
    %6137 = vmatpush.msra.mxu0 0.0
    %6138 = vmatpush.msra.mxu0 %v6079
    %6139 = vmatmul.f32.gmra.mxu0 %v6073
    %v6140 = vpop.f32.mrf.mxu0
    %v6141 = vadd.f32 0.0, %v6140
    %6142 = vdwg.mxu0
    %6143 = vmatpush.msra.mxu0 0.0
    %6144 = vmatpush.msra.mxu0 0.0
    %6145 = vmatpush.msra.mxu0 0.0
    %6146 = vmatpush.msra.mxu0 0.0
    %6147 = vmatpush.msra.mxu0 0.0
    %6148 = vmatpush.msra.mxu0 0.0
    %6149 = vmatpush.msra.mxu0 0.0
    %6150 = vmatpush.msra.mxu0 0.0
    %6151 = vmatpush.msra.mxu0 0.0
    %6152 = vmatpush.msra.mxu0 0.0
    %6153 = vmatpush.msra.mxu0 0.0
    %6154 = vmatpush.msra.mxu0 0.0
    %6155 = vmatpush.msra.mxu0 0.0
    %6156 = vmatpush.msra.mxu0 0.0
    %6157 = vmatpush.msra.mxu0 0.0
    %6158 = vmatpush.msra.mxu0 %v6081
    %6159 = vmatmul.f32.gmra.mxu0 %v6073
    %v6160 = vpop.f32.mrf.mxu0
    %v6161 = vadd.f32 0.0, %v6160
    %6162 = vdwg.mxu0
    %v6167 = vrot.slane %v6121, 6
    %v6168 = vrot.slane %v6141, 4
    %v6169 = vrot.slane %v6161, 2
    %v6170 = vsel %vm232, %v6101, %v6167
    %v6171 = vsel %vm234, %v6168, %v6169
    %v6172 = vsel %vm236, %v6170, %v6171
    %v6174 = vadd.f32 %v4905, %v6172
    %v6175 = vxor.u32 %v6174, 2147483648
    %v6176 = vmul.f32 %v6175, 1.442695
    %v6177 = vpow.pop %v6176
    %v6178 = vadd.f32 %v6177, 1.0
    %v6179 = vrcp.pop %v6178
    %v6180 = vmul.f32 %v6178, %v6179
    %v6181 = vsub.f32 1.0, %v6180
    %v6182 = vmul.f32 %v6179, %v6181
    %v6183 = vadd.f32 %v6179, %v6182
    %vm6184 = vweird.f32 %v6178
    %vm6185 = vweird.f32 %v6179
    %vm6186 = vmor %vm6184, %vm6185
    %v6187 = vsel %vm6186, %v6179, %v6183
    %v6188 = vand.u32 2147483647, %v6178
    %vm6189 = vcmp.eq.f32.partialorder %v6188, 8.507059e+37
    %v6190 = vand.u32 %v6178, 2147483648
    %v6191 = vor.u32 1.1754944e-38, %v6190
    %v6192 = vsel %vm6189, %v6191, %v6187
    %v6193 = vmul.f32 1.0, %v6192
    %v6195 = vrot.slane %v6174, 2
    %v6197 = vxor.u32 %v6195, 2147483648
    %v6198 = vmul.f32 %v6197, 1.442695
    %v6199 = vpow.pop %v6198
    %v6200 = vadd.f32 %v6199, 1.0
    %v6201 = vrcp.pop %v6200
    %v6202 = vmul.f32 %v6200, %v6201
    %v6203 = vsub.f32 1.0, %v6202
    %v6204 = vmul.f32 %v6201, %v6203
    %v6205 = vadd.f32 %v6201, %v6204
    %vm6206 = vweird.f32 %v6200
    %vm6207 = vweird.f32 %v6201
    %vm6208 = vmor %vm6206, %vm6207
    %v6209 = vsel %vm6208, %v6201, %v6205
    %v6210 = vand.u32 2147483647, %v6200
    %vm6211 = vcmp.eq.f32.partialorder %v6210, 8.507059e+37
    %v6212 = vand.u32 %v6200, 2147483648
    %v6213 = vor.u32 1.1754944e-38, %v6212
    %v6214 = vsel %vm6211, %v6213, %v6209
    %v6215 = vmul.f32 1.0, %v6214
    %v6216 = vrot.slane %v6174, 4
    %v6218 = vtanh.pop %v6216
    %v6219 = vrot.slane %v6174, 6
    %v6221 = vxor.u32 %v6219, 2147483648
    %v6222 = vmul.f32 %v6221, 1.442695
    %v6223 = vpow.pop %v6222
    %v6224 = vadd.f32 %v6223, 1.0
    %v6225 = vrcp.pop %v6224
    %v6226 = vmul.f32 %v6224, %v6225
    %v6227 = vsub.f32 1.0, %v6226
    %v6228 = vmul.f32 %v6225, %v6227
    %v6229 = vadd.f32 %v6225, %v6228
    %vm6230 = vweird.f32 %v6224
    %vm6231 = vweird.f32 %v6225
    %vm6232 = vmor %vm6230, %vm6231
    %v6233 = vsel %vm6232, %v6225, %v6229
    %v6234 = vand.u32 2147483647, %v6224
    %vm6235 = vcmp.eq.f32.partialorder %v6234, 8.507059e+37
    %v6236 = vand.u32 %v6224, 2147483648
    %v6237 = vor.u32 1.1754944e-38, %v6236
    %v6238 = vsel %vm6235, %v6237, %v6233
    %v6239 = vmul.f32 1.0, %v6238
    %v6240 = vmul.f32 %v6215, %v6062
    %v6241 = vmul.f32 %v6193, %v6218
    %v6242 = vadd.f32 %v6240, %v6241
    %v6243 = vtanh.pop %v6242
    %v6244 = vmul.f32 %v6239, %v6243
    %s6245 = scalar_lea.vmem [#allocation1], 1
    %6246 = vst [vmem:[%s6245] ss:$4 sm:$0xff] %v5164
    %v6247 = vld.sshfl [vmem:[#allocation1] sm:$0xff pattern:$0x73625140]
    %s6249 = scalar_lea.vmem [#allocation1], 2
    %6250 = vst [vmem:[%s6249] ss:$4 sm:$0xff] %v5344
    %v6251 = vld.sshfl [vmem:[#allocation1] sm:$0xff pattern:$0x73625140]
    %s6253 = scalar_lea.vmem [#allocation1], 3
    %6254 = vst [vmem:[%s6253] ss:$4 sm:$0xff] %v5524
    %v6255 = vld.sshfl [vmem:[#allocation1] sm:$0xff pattern:$0x73625140]
    %s6257 = scalar_lea.vmem [#allocation1], 1
    %6258 = vst [vmem:[%s6257] ss:$4 sm:$0xff] %v5884
    %v6259 = vld.sshfl [vmem:[#allocation1] sm:$0xff pattern:$0x73625140]
    %s6261 = scalar_lea.vmem [#allocation1], 2
    %6262 = vst [vmem:[%s6261] ss:$4 sm:$0xff] %v6064
    %v6263 = vld.sshfl [vmem:[#allocation1] sm:$0xff pattern:$0x73625140]
    %s6266 = scalar_lea.vmem [#allocation1], 3
    %6267 = vst [vmem:[%s6266] ss:$4 sm:$0xff] %v6244
    %v6268 = vld.sshfl [vmem:[#allocation1] sm:$0xff pattern:$0x73625140]
    %v6270 = vsel %vm232, %v4982, %v6247
    %v6271 = vsel %vm236, %v6270, %v6251
    %v6272 = vsel %vm240, %v6271, %v6255
    %v6273 = vsel %vm232, %v5704, %v6259
    %v6274 = vsel %vm236, %v6273, %v6263
    %v6275 = vsel %vm240, %v6274, %v6268
    %s6276 = scalar_lea.vmem [#allocation2], 64
    %v6277 = vld [vmem:[%s6276] sm:$0x77]
    %v6278 = vld [vmem:[%s6276 + $0x8] sm:$0x77]
    %s6279 = scalar_lea.vmem [#allocation5], 64
    %v6280 = vld [vmem:[%s6279] sm:$0x77]
    %v6281 = vld [vmem:[%s6279 + $0x8] sm:$0x77]
    %s6282 = scalar_lea.vmem %s3, 16
    %v6283 = vld [vmem:[%s6282] sm:$0xf]
    %v6285 = vperm.slane %v6283, 0
    %v6286 = vperm.slane %v6283, 1
    %v6287 = vperm.slane %v6283, 2
    %v6288 = vperm.slane %v6283, 3
    %6295 = vst [vmem:[#allocation1] ss:$2 sm:$0xff] %v6277
    %s6296 = scalar_lea.vmem [#allocation1], 16
    %6297 = vst [vmem:[%s6296] ss:$2 sm:$0xff] %v6278
    %v6298 = vld.sshfl [vmem:[#allocation1] sm:$0xff pattern:$0x75316420]
    %v6299 = vld.sshfl [vmem:[#allocation1 + $0x8] sm:$0xff pattern:$0x75316420]
    %v6300 = vld.sshfl [vmem:[#allocation1 + $0x10] sm:$0xff pattern:$0x75316420]
    %v6301 = vld.sshfl [vmem:[#allocation1 + $0x18] sm:$0xff pattern:$0x75316420]
    %v6303 = vsel %vm112, %v6272, 0
    %v6306 = vsel %vm112, %v6275, 0
    %v6308 = vsel %vm117, %v6298, 0
    %v6310 = vsel %vm117, %v6299, 0
    %v6312 = vsel %vm117, %v6300, 0
    %v6314 = vsel %vm117, %v6301, 0
    %6316 = vmatpush.msra.mxu0 0.0
    %6317 = vmatpush.msra.mxu0 0.0
    %6318 = vmatpush.msra.mxu0 0.0
    %6319 = vmatpush.msra.mxu0 0.0
    %6320 = vmatpush.msra.mxu0 0.0
    %6321 = vmatpush.msra.mxu0 0.0
    %6322 = vmatpush.msra.mxu0 0.0
    %6323 = vmatpush.msra.mxu0 0.0
    %6324 = vmatpush.msra.mxu0 0.0
    %6325 = vmatpush.msra.mxu0 0.0
    %6326 = vmatpush.msra.mxu0 0.0
    %6327 = vmatpush.msra.mxu0 0.0
    %6328 = vmatpush.msra.mxu0 0.0
    %6329 = vmatpush.msra.mxu0 0.0
    %6330 = vmatpush.msra.mxu0 0.0
    %6331 = vmatpush.msra.mxu0 %v6308
    %6332 = vmatmul.f32.gmra.mxu0 %v6303
    %v6333 = vpop.f32.mrf.mxu0
    %v6334 = vadd.f32 %v6285, %v6333
    %6335 = vmatmul.f32.gmra.mxu0 %v6306
    %v6336 = vpop.f32.mrf.mxu0
    %v6337 = vadd.f32 %v6285, %v6336
    %6338 = vdwg.mxu0
    %6339 = vmatpush.msra.mxu0 0.0
    %6340 = vmatpush.msra.mxu0 0.0
    %6341 = vmatpush.msra.mxu0 0.0
    %6342 = vmatpush.msra.mxu0 0.0
    %6343 = vmatpush.msra.mxu0 0.0
    %6344 = vmatpush.msra.mxu0 0.0
    %6345 = vmatpush.msra.mxu0 0.0
    %6346 = vmatpush.msra.mxu0 0.0
    %6347 = vmatpush.msra.mxu0 0.0
    %6348 = vmatpush.msra.mxu0 0.0
    %6349 = vmatpush.msra.mxu0 0.0
    %6350 = vmatpush.msra.mxu0 0.0
    %6351 = vmatpush.msra.mxu0 0.0
    %6352 = vmatpush.msra.mxu0 0.0
    %6353 = vmatpush.msra.mxu0 0.0
    %6354 = vmatpush.msra.mxu0 %v6310
    %6355 = vmatmul.f32.gmra.mxu0 %v6303
    %v6356 = vpop.f32.mrf.mxu0
    %v6357 = vadd.f32 %v6286, %v6356
    %6358 = vmatmul.f32.gmra.mxu0 %v6306
    %v6359 = vpop.f32.mrf.mxu0
    %v6360 = vadd.f32 %v6286, %v6359
    %6361 = vdwg.mxu0
    %6362 = vmatpush.msra.mxu0 0.0
    %6363 = vmatpush.msra.mxu0 0.0
    %6364 = vmatpush.msra.mxu0 0.0
    %6365 = vmatpush.msra.mxu0 0.0
    %6366 = vmatpush.msra.mxu0 0.0
    %6367 = vmatpush.msra.mxu0 0.0
    %6368 = vmatpush.msra.mxu0 0.0
    %6369 = vmatpush.msra.mxu0 0.0
    %6370 = vmatpush.msra.mxu0 0.0
    %6371 = vmatpush.msra.mxu0 0.0
    %6372 = vmatpush.msra.mxu0 0.0
    %6373 = vmatpush.msra.mxu0 0.0
    %6374 = vmatpush.msra.mxu0 0.0
    %6375 = vmatpush.msra.mxu0 0.0
    %6376 = vmatpush.msra.mxu0 0.0
    %6377 = vmatpush.msra.mxu0 %v6312
    %6378 = vmatmul.f32.gmra.mxu0 %v6303
    %v6379 = vpop.f32.mrf.mxu0
    %v6380 = vadd.f32 %v6287, %v6379
    %6381 = vmatmul.f32.gmra.mxu0 %v6306
    %v6382 = vpop.f32.mrf.mxu0
    %v6383 = vadd.f32 %v6287, %v6382
    %6384 = vdwg.mxu0
    %6385 = vmatpush.msra.mxu0 0.0
    %6386 = vmatpush.msra.mxu0 0.0
    %6387 = vmatpush.msra.mxu0 0.0
    %6388 = vmatpush.msra.mxu0 0.0
    %6389 = vmatpush.msra.mxu0 0.0
    %6390 = vmatpush.msra.mxu0 0.0
    %6391 = vmatpush.msra.mxu0 0.0
    %6392 = vmatpush.msra.mxu0 0.0
    %6393 = vmatpush.msra.mxu0 0.0
    %6394 = vmatpush.msra.mxu0 0.0
    %6395 = vmatpush.msra.mxu0 0.0
    %6396 = vmatpush.msra.mxu0 0.0
    %6397 = vmatpush.msra.mxu0 0.0
    %6398 = vmatpush.msra.mxu0 0.0
    %6399 = vmatpush.msra.mxu0 0.0
    %6400 = vmatpush.msra.mxu0 %v6314
    %6401 = vmatmul.f32.gmra.mxu0 %v6303
    %v6402 = vpop.f32.mrf.mxu0
    %v6403 = vadd.f32 %v6288, %v6402
    %6404 = vmatmul.f32.gmra.mxu0 %v6306
    %v6405 = vpop.f32.mrf.mxu0
    %v6406 = vadd.f32 %v6288, %v6405
    %6407 = vdwg.mxu0
    %v6416 = vrot.slane %v6357, 6
    %v6417 = vrot.slane %v6380, 4
    %v6418 = vrot.slane %v6403, 2
    %v6419 = vrot.slane %v6360, 6
    %v6420 = vrot.slane %v6383, 4
    %v6421 = vrot.slane %v6406, 2
    %v6422 = vsel %vm232, %v6334, %v6416
    %v6423 = vsel %vm234, %v6417, %v6418
    %v6424 = vsel %vm236, %v6422, %v6423
    %v6425 = vsel %vm238, %v6334, %v6416
    %v6426 = vsel %vm240, %v6418, %v6417
    %v6427 = vsel %vm242, %v6425, %v6426
    %v6428 = vrot.slane %v6427, 2
    %v6429 = vsel %vm234, %v6334, %v6416
    %v6430 = vsel %vm232, %v6417, %v6418
    %v6431 = vsel %vm236, %v6430, %v6429
    %v6432 = vrot.slane %v6431, 4
    %v6433 = vsel %vm240, %v6416, %v6334
    %v6434 = vsel %vm238, %v6417, %v6418
    %v6435 = vsel %vm242, %v6434, %v6433
    %v6436 = vrot.slane %v6435, 6
    %v6437 = vsel %vm232, %v6337, %v6419
    %v6438 = vsel %vm234, %v6420, %v6421
    %v6439 = vsel %vm236, %v6437, %v6438
    %v6440 = vsel %vm238, %v6337, %v6419
    %v6441 = vsel %vm240, %v6421, %v6420
    %v6442 = vsel %vm242, %v6440, %v6441
    %v6443 = vrot.slane %v6442, 2
    %v6444 = vsel %vm234, %v6337, %v6419
    %v6445 = vsel %vm232, %v6420, %v6421
    %v6446 = vsel %vm236, %v6445, %v6444
    %v6447 = vrot.slane %v6446, 4
    %v6448 = vsel %vm240, %v6419, %v6337
    %v6449 = vsel %vm238, %v6420, %v6421
    %v6450 = vsel %vm242, %v6449, %v6448
    %v6451 = vrot.slane %v6450, 6
    %v6460 = vxor.u32 %v6424, 2147483648
    %v6461 = vmul.f32 %v6460, 1.442695
    %v6462 = vpow.pop %v6461
    %v6463 = vadd.f32 %v6462, 1.0
    %v6464 = vrcp.pop %v6463
    %v6465 = vmul.f32 %v6463, %v6464
    %v6466 = vsub.f32 1.0, %v6465
    %v6467 = vmul.f32 %v6464, %v6466
    %v6468 = vadd.f32 %v6464, %v6467
    %vm6469 = vweird.f32 %v6463
    %vm6470 = vweird.f32 %v6464
    %vm6471 = vmor %vm6469, %vm6470
    %v6472 = vsel %vm6471, %v6464, %v6468
    %v6473 = vand.u32 2147483647, %v6463
    %vm6474 = vcmp.eq.f32.partialorder %v6473, 8.507059e+37
    %v6475 = vand.u32 %v6463, 2147483648
    %v6476 = vor.u32 1.1754944e-38, %v6475
    %v6477 = vsel %vm6474, %v6476, %v6472
    %v6478 = vmul.f32 1.0, %v6477
    %v6479 = vrot.slane %v6424, 2
    %v6481 = vxor.u32 %v6479, 2147483648
    %v6482 = vmul.f32 %v6481, 1.442695
    %v6483 = vpow.pop %v6482
    %v6484 = vadd.f32 %v6483, 1.0
    %v6485 = vrcp.pop %v6484
    %v6486 = vmul.f32 %v6484, %v6485
    %v6487 = vsub.f32 1.0, %v6486
    %v6488 = vmul.f32 %v6485, %v6487
    %v6489 = vadd.f32 %v6485, %v6488
    %vm6490 = vweird.f32 %v6484
    %vm6491 = vweird.f32 %v6485
    %vm6492 = vmor %vm6490, %vm6491
    %v6493 = vsel %vm6492, %v6485, %v6489
    %v6494 = vand.u32 2147483647, %v6484
    %vm6495 = vcmp.eq.f32.partialorder %v6494, 8.507059e+37
    %v6496 = vand.u32 %v6484, 2147483648
    %v6497 = vor.u32 1.1754944e-38, %v6496
    %v6498 = vsel %vm6495, %v6497, %v6493
    %v6499 = vmul.f32 1.0, %v6498
    %v6500 = vrot.slane %v6424, 4
    %v6502 = vtanh.pop %v6500
    %v6503 = vrot.slane %v6424, 6
    %v6505 = vxor.u32 %v6503, 2147483648
    %v6506 = vmul.f32 %v6505, 1.442695
    %v6507 = vpow.pop %v6506
    %v6508 = vadd.f32 %v6507, 1.0
    %v6509 = vrcp.pop %v6508
    %v6510 = vmul.f32 %v6508, %v6509
    %v6511 = vsub.f32 1.0, %v6510
    %v6512 = vmul.f32 %v6509, %v6511
    %v6513 = vadd.f32 %v6509, %v6512
    %vm6514 = vweird.f32 %v6508
    %vm6515 = vweird.f32 %v6509
    %vm6516 = vmor %vm6514, %vm6515
    %v6517 = vsel %vm6516, %v6509, %v6513
    %v6518 = vand.u32 2147483647, %v6508
    %vm6519 = vcmp.eq.f32.partialorder %v6518, 8.507059e+37
    %v6520 = vand.u32 %v6508, 2147483648
    %v6521 = vor.u32 1.1754944e-38, %v6520
    %v6522 = vsel %vm6519, %v6521, %v6517
    %v6523 = vmul.f32 1.0, %v6522
    %v6524 = vmul.f32 %v6499, 0.0
    %v6525 = vmul.f32 %v6478, %v6502
    %v6526 = vadd.f32 %v6524, %v6525
    %v6527 = vtanh.pop %v6526
    %v6528 = vmul.f32 %v6523, %v6527
    %6531 = vst [vmem:[#allocation1] ss:$2 sm:$0xff] %v6280
    %s6532 = scalar_lea.vmem [#allocation1], 16
    %6533 = vst [vmem:[%s6532] ss:$2 sm:$0xff] %v6281
    %v6534 = vld.sshfl [vmem:[#allocation1] sm:$0xff pattern:$0x75316420]
    %v6535 = vld.sshfl [vmem:[#allocation1 + $0x8] sm:$0xff pattern:$0x75316420]
    %v6536 = vld.sshfl [vmem:[#allocation1 + $0x10] sm:$0xff pattern:$0x75316420]
    %v6537 = vld.sshfl [vmem:[#allocation1 + $0x18] sm:$0xff pattern:$0x75316420]
    %v6539 = vsel %vm112, %v6528, 0
    %v6541 = vsel %vm117, %v6534, 0
    %v6543 = vsel %vm117, %v6535, 0
    %v6545 = vsel %vm117, %v6536, 0
    %v6547 = vsel %vm117, %v6537, 0
    %6549 = vmatpush.msra.mxu0 0.0
    %6550 = vmatpush.msra.mxu0 0.0
    %6551 = vmatpush.msra.mxu0 0.0
    %6552 = vmatpush.msra.mxu0 0.0
    %6553 = vmatpush.msra.mxu0 0.0
    %6554 = vmatpush.msra.mxu0 0.0
    %6555 = vmatpush.msra.mxu0 0.0
    %6556 = vmatpush.msra.mxu0 0.0
    %6557 = vmatpush.msra.mxu0 0.0
    %6558 = vmatpush.msra.mxu0 0.0
    %6559 = vmatpush.msra.mxu0 0.0
    %6560 = vmatpush.msra.mxu0 0.0
    %6561 = vmatpush.msra.mxu0 0.0
    %6562 = vmatpush.msra.mxu0 0.0
    %6563 = vmatpush.msra.mxu0 0.0
    %6564 = vmatpush.msra.mxu0 %v6541
    %6565 = vmatmul.f32.gmra.mxu0 %v6539
    %v6566 = vpop.f32.mrf.mxu0
    %v6567 = vadd.f32 0.0, %v6566
    %6568 = vdwg.mxu0
    %6569 = vmatpush.msra.mxu0 0.0
    %6570 = vmatpush.msra.mxu0 0.0
    %6571 = vmatpush.msra.mxu0 0.0
    %6572 = vmatpush.msra.mxu0 0.0
    %6573 = vmatpush.msra.mxu0 0.0
    %6574 = vmatpush.msra.mxu0 0.0
    %6575 = vmatpush.msra.mxu0 0.0
    %6576 = vmatpush.msra.mxu0 0.0
    %6577 = vmatpush.msra.mxu0 0.0
    %6578 = vmatpush.msra.mxu0 0.0
    %6579 = vmatpush.msra.mxu0 0.0
    %6580 = vmatpush.msra.mxu0 0.0
    %6581 = vmatpush.msra.mxu0 0.0
    %6582 = vmatpush.msra.mxu0 0.0
    %6583 = vmatpush.msra.mxu0 0.0
    %6584 = vmatpush.msra.mxu0 %v6543
    %6585 = vmatmul.f32.gmra.mxu0 %v6539
    %v6586 = vpop.f32.mrf.mxu0
    %v6587 = vadd.f32 0.0, %v6586
    %6588 = vdwg.mxu0
    %6589 = vmatpush.msra.mxu0 0.0
    %6590 = vmatpush.msra.mxu0 0.0
    %6591 = vmatpush.msra.mxu0 0.0
    %6592 = vmatpush.msra.mxu0 0.0
    %6593 = vmatpush.msra.mxu0 0.0
    %6594 = vmatpush.msra.mxu0 0.0
    %6595 = vmatpush.msra.mxu0 0.0
    %6596 = vmatpush.msra.mxu0 0.0
    %6597 = vmatpush.msra.mxu0 0.0
    %6598 = vmatpush.msra.mxu0 0.0
    %6599 = vmatpush.msra.mxu0 0.0
    %6600 = vmatpush.msra.mxu0 0.0
    %6601 = vmatpush.msra.mxu0 0.0
    %6602 = vmatpush.msra.mxu0 0.0
    %6603 = vmatpush.msra.mxu0 0.0
    %6604 = vmatpush.msra.mxu0 %v6545
    %6605 = vmatmul.f32.gmra.mxu0 %v6539
    %v6606 = vpop.f32.mrf.mxu0
    %v6607 = vadd.f32 0.0, %v6606
    %6608 = vdwg.mxu0
    %6609 = vmatpush.msra.mxu0 0.0
    %6610 = vmatpush.msra.mxu0 0.0
    %6611 = vmatpush.msra.mxu0 0.0
    %6612 = vmatpush.msra.mxu0 0.0
    %6613 = vmatpush.msra.mxu0 0.0
    %6614 = vmatpush.msra.mxu0 0.0
    %6615 = vmatpush.msra.mxu0 0.0
    %6616 = vmatpush.msra.mxu0 0.0
    %6617 = vmatpush.msra.mxu0 0.0
    %6618 = vmatpush.msra.mxu0 0.0
    %6619 = vmatpush.msra.mxu0 0.0
    %6620 = vmatpush.msra.mxu0 0.0
    %6621 = vmatpush.msra.mxu0 0.0
    %6622 = vmatpush.msra.mxu0 0.0
    %6623 = vmatpush.msra.mxu0 0.0
    %6624 = vmatpush.msra.mxu0 %v6547
    %6625 = vmatmul.f32.gmra.mxu0 %v6539
    %v6626 = vpop.f32.mrf.mxu0
    %v6627 = vadd.f32 0.0, %v6626
    %6628 = vdwg.mxu0
    %v6633 = vrot.slane %v6587, 6
    %v6634 = vrot.slane %v6607, 4
    %v6635 = vrot.slane %v6627, 2
    %v6636 = vsel %vm232, %v6567, %v6633
    %v6637 = vsel %vm234, %v6634, %v6635
    %v6638 = vsel %vm236, %v6636, %v6637
    %v6640 = vadd.f32 %v6428, %v6638
    %v6641 = vxor.u32 %v6640, 2147483648
    %v6642 = vmul.f32 %v6641, 1.442695
    %v6643 = vpow.pop %v6642
    %v6644 = vadd.f32 %v6643, 1.0
    %v6645 = vrcp.pop %v6644
    %v6646 = vmul.f32 %v6644, %v6645
    %v6647 = vsub.f32 1.0, %v6646
    %v6648 = vmul.f32 %v6645, %v6647
    %v6649 = vadd.f32 %v6645, %v6648
    %vm6650 = vweird.f32 %v6644
    %vm6651 = vweird.f32 %v6645
    %vm6652 = vmor %vm6650, %vm6651
    %v6653 = vsel %vm6652, %v6645, %v6649
    %v6654 = vand.u32 2147483647, %v6644
    %vm6655 = vcmp.eq.f32.partialorder %v6654, 8.507059e+37
    %v6656 = vand.u32 %v6644, 2147483648
    %v6657 = vor.u32 1.1754944e-38, %v6656
    %v6658 = vsel %vm6655, %v6657, %v6653
    %v6659 = vmul.f32 1.0, %v6658
    %v6661 = vrot.slane %v6640, 2
    %v6663 = vxor.u32 %v6661, 2147483648
    %v6664 = vmul.f32 %v6663, 1.442695
    %v6665 = vpow.pop %v6664
    %v6666 = vadd.f32 %v6665, 1.0
    %v6667 = vrcp.pop %v6666
    %v6668 = vmul.f32 %v6666, %v6667
    %v6669 = vsub.f32 1.0, %v6668
    %v6670 = vmul.f32 %v6667, %v6669
    %v6671 = vadd.f32 %v6667, %v6670
    %vm6672 = vweird.f32 %v6666
    %vm6673 = vweird.f32 %v6667
    %vm6674 = vmor %vm6672, %vm6673
    %v6675 = vsel %vm6674, %v6667, %v6671
    %v6676 = vand.u32 2147483647, %v6666
    %vm6677 = vcmp.eq.f32.partialorder %v6676, 8.507059e+37
    %v6678 = vand.u32 %v6666, 2147483648
    %v6679 = vor.u32 1.1754944e-38, %v6678
    %v6680 = vsel %vm6677, %v6679, %v6675
    %v6681 = vmul.f32 1.0, %v6680
    %v6682 = vrot.slane %v6640, 4
    %v6684 = vtanh.pop %v6682
    %v6685 = vrot.slane %v6640, 6
    %v6687 = vxor.u32 %v6685, 2147483648
    %v6688 = vmul.f32 %v6687, 1.442695
    %v6689 = vpow.pop %v6688
    %v6690 = vadd.f32 %v6689, 1.0
    %v6691 = vrcp.pop %v6690
    %v6692 = vmul.f32 %v6690, %v6691
    %v6693 = vsub.f32 1.0, %v6692
    %v6694 = vmul.f32 %v6691, %v6693
    %v6695 = vadd.f32 %v6691, %v6694
    %vm6696 = vweird.f32 %v6690
    %vm6697 = vweird.f32 %v6691
    %vm6698 = vmor %vm6696, %vm6697
    %v6699 = vsel %vm6698, %v6691, %v6695
    %v6700 = vand.u32 2147483647, %v6690
    %vm6701 = vcmp.eq.f32.partialorder %v6700, 8.507059e+37
    %v6702 = vand.u32 %v6690, 2147483648
    %v6703 = vor.u32 1.1754944e-38, %v6702
    %v6704 = vsel %vm6701, %v6703, %v6699
    %v6705 = vmul.f32 1.0, %v6704
    %v6706 = vmul.f32 %v6681, %v6526
    %v6707 = vmul.f32 %v6659, %v6684
    %v6708 = vadd.f32 %v6706, %v6707
    %v6709 = vtanh.pop %v6708
    %v6710 = vmul.f32 %v6705, %v6709
    %6711 = vst [vmem:[#allocation1] ss:$2 sm:$0xff] %v6280
    %s6712 = scalar_lea.vmem [#allocation1], 16
    %6713 = vst [vmem:[%s6712] ss:$2 sm:$0xff] %v6281
    %v6714 = vld.sshfl [vmem:[#allocation1] sm:$0xff pattern:$0x75316420]
    %v6715 = vld.sshfl [vmem:[#allocation1 + $0x8] sm:$0xff pattern:$0x75316420]
    %v6716 = vld.sshfl [vmem:[#allocation1 + $0x10] sm:$0xff pattern:$0x75316420]
    %v6717 = vld.sshfl [vmem:[#allocation1 + $0x18] sm:$0xff pattern:$0x75316420]
    %v6719 = vsel %vm112, %v6710, 0
    %v6721 = vsel %vm117, %v6714, 0
    %v6723 = vsel %vm117, %v6715, 0
    %v6725 = vsel %vm117, %v6716, 0
    %v6727 = vsel %vm117, %v6717, 0
    %6729 = vmatpush.msra.mxu0 0.0
    %6730 = vmatpush.msra.mxu0 0.0
    %6731 = vmatpush.msra.mxu0 0.0
    %6732 = vmatpush.msra.mxu0 0.0
    %6733 = vmatpush.msra.mxu0 0.0
    %6734 = vmatpush.msra.mxu0 0.0
    %6735 = vmatpush.msra.mxu0 0.0
    %6736 = vmatpush.msra.mxu0 0.0
    %6737 = vmatpush.msra.mxu0 0.0
    %6738 = vmatpush.msra.mxu0 0.0
    %6739 = vmatpush.msra.mxu0 0.0
    %6740 = vmatpush.msra.mxu0 0.0
    %6741 = vmatpush.msra.mxu0 0.0
    %6742 = vmatpush.msra.mxu0 0.0
    %6743 = vmatpush.msra.mxu0 0.0
    %6744 = vmatpush.msra.mxu0 %v6721
    %6745 = vmatmul.f32.gmra.mxu0 %v6719
    %v6746 = vpop.f32.mrf.mxu0
    %v6747 = vadd.f32 0.0, %v6746
    %6748 = vdwg.mxu0
    %6749 = vmatpush.msra.mxu0 0.0
    %6750 = vmatpush.msra.mxu0 0.0
    %6751 = vmatpush.msra.mxu0 0.0
    %6752 = vmatpush.msra.mxu0 0.0
    %6753 = vmatpush.msra.mxu0 0.0
    %6754 = vmatpush.msra.mxu0 0.0
    %6755 = vmatpush.msra.mxu0 0.0
    %6756 = vmatpush.msra.mxu0 0.0
    %6757 = vmatpush.msra.mxu0 0.0
    %6758 = vmatpush.msra.mxu0 0.0
    %6759 = vmatpush.msra.mxu0 0.0
    %6760 = vmatpush.msra.mxu0 0.0
    %6761 = vmatpush.msra.mxu0 0.0
    %6762 = vmatpush.msra.mxu0 0.0
    %6763 = vmatpush.msra.mxu0 0.0
    %6764 = vmatpush.msra.mxu0 %v6723
    %6765 = vmatmul.f32.gmra.mxu0 %v6719
    %v6766 = vpop.f32.mrf.mxu0
    %v6767 = vadd.f32 0.0, %v6766
    %6768 = vdwg.mxu0
    %6769 = vmatpush.msra.mxu0 0.0
    %6770 = vmatpush.msra.mxu0 0.0
    %6771 = vmatpush.msra.mxu0 0.0
    %6772 = vmatpush.msra.mxu0 0.0
    %6773 = vmatpush.msra.mxu0 0.0
    %6774 = vmatpush.msra.mxu0 0.0
    %6775 = vmatpush.msra.mxu0 0.0
    %6776 = vmatpush.msra.mxu0 0.0
    %6777 = vmatpush.msra.mxu0 0.0
    %6778 = vmatpush.msra.mxu0 0.0
    %6779 = vmatpush.msra.mxu0 0.0
    %6780 = vmatpush.msra.mxu0 0.0
    %6781 = vmatpush.msra.mxu0 0.0
    %6782 = vmatpush.msra.mxu0 0.0
    %6783 = vmatpush.msra.mxu0 0.0
    %6784 = vmatpush.msra.mxu0 %v6725
    %6785 = vmatmul.f32.gmra.mxu0 %v6719
    %v6786 = vpop.f32.mrf.mxu0
    %v6787 = vadd.f32 0.0, %v6786
    %6788 = vdwg.mxu0
    %6789 = vmatpush.msra.mxu0 0.0
    %6790 = vmatpush.msra.mxu0 0.0
    %6791 = vmatpush.msra.mxu0 0.0
    %6792 = vmatpush.msra.mxu0 0.0
    %6793 = vmatpush.msra.mxu0 0.0
    %6794 = vmatpush.msra.mxu0 0.0
    %6795 = vmatpush.msra.mxu0 0.0
    %6796 = vmatpush.msra.mxu0 0.0
    %6797 = vmatpush.msra.mxu0 0.0
    %6798 = vmatpush.msra.mxu0 0.0
    %6799 = vmatpush.msra.mxu0 0.0
    %6800 = vmatpush.msra.mxu0 0.0
    %6801 = vmatpush.msra.mxu0 0.0
    %6802 = vmatpush.msra.mxu0 0.0
    %6803 = vmatpush.msra.mxu0 0.0
    %6804 = vmatpush.msra.mxu0 %v6727
    %6805 = vmatmul.f32.gmra.mxu0 %v6719
    %v6806 = vpop.f32.mrf.mxu0
    %v6807 = vadd.f32 0.0, %v6806
    %6808 = vdwg.mxu0
    %v6813 = vrot.slane %v6767, 6
    %v6814 = vrot.slane %v6787, 4
    %v6815 = vrot.slane %v6807, 2
    %v6816 = vsel %vm232, %v6747, %v6813
    %v6817 = vsel %vm234, %v6814, %v6815
    %v6818 = vsel %vm236, %v6816, %v6817
    %v6820 = vadd.f32 %v6432, %v6818
    %v6821 = vxor.u32 %v6820, 2147483648
    %v6822 = vmul.f32 %v6821, 1.442695
    %v6823 = vpow.pop %v6822
    %v6824 = vadd.f32 %v6823, 1.0
    %v6825 = vrcp.pop %v6824
    %v6826 = vmul.f32 %v6824, %v6825
    %v6827 = vsub.f32 1.0, %v6826
    %v6828 = vmul.f32 %v6825, %v6827
    %v6829 = vadd.f32 %v6825, %v6828
    %vm6830 = vweird.f32 %v6824
    %vm6831 = vweird.f32 %v6825
    %vm6832 = vmor %vm6830, %vm6831
    %v6833 = vsel %vm6832, %v6825, %v6829
    %v6834 = vand.u32 2147483647, %v6824
    %vm6835 = vcmp.eq.f32.partialorder %v6834, 8.507059e+37
    %v6836 = vand.u32 %v6824, 2147483648
    %v6837 = vor.u32 1.1754944e-38, %v6836
    %v6838 = vsel %vm6835, %v6837, %v6833
    %v6839 = vmul.f32 1.0, %v6838
    %v6841 = vrot.slane %v6820, 2
    %v6843 = vxor.u32 %v6841, 2147483648
    %v6844 = vmul.f32 %v6843, 1.442695
    %v6845 = vpow.pop %v6844
    %v6846 = vadd.f32 %v6845, 1.0
    %v6847 = vrcp.pop %v6846
    %v6848 = vmul.f32 %v6846, %v6847
    %v6849 = vsub.f32 1.0, %v6848
    %v6850 = vmul.f32 %v6847, %v6849
    %v6851 = vadd.f32 %v6847, %v6850
    %vm6852 = vweird.f32 %v6846
    %vm6853 = vweird.f32 %v6847
    %vm6854 = vmor %vm6852, %vm6853
    %v6855 = vsel %vm6854, %v6847, %v6851
    %v6856 = vand.u32 2147483647, %v6846
    %vm6857 = vcmp.eq.f32.partialorder %v6856, 8.507059e+37
    %v6858 = vand.u32 %v6846, 2147483648
    %v6859 = vor.u32 1.1754944e-38, %v6858
    %v6860 = vsel %vm6857, %v6859, %v6855
    %v6861 = vmul.f32 1.0, %v6860
    %v6862 = vrot.slane %v6820, 4
    %v6864 = vtanh.pop %v6862
    %v6865 = vrot.slane %v6820, 6
    %v6867 = vxor.u32 %v6865, 2147483648
    %v6868 = vmul.f32 %v6867, 1.442695
    %v6869 = vpow.pop %v6868
    %v6870 = vadd.f32 %v6869, 1.0
    %v6871 = vrcp.pop %v6870
    %v6872 = vmul.f32 %v6870, %v6871
    %v6873 = vsub.f32 1.0, %v6872
    %v6874 = vmul.f32 %v6871, %v6873
    %v6875 = vadd.f32 %v6871, %v6874
    %vm6876 = vweird.f32 %v6870
    %vm6877 = vweird.f32 %v6871
    %vm6878 = vmor %vm6876, %vm6877
    %v6879 = vsel %vm6878, %v6871, %v6875
    %v6880 = vand.u32 2147483647, %v6870
    %vm6881 = vcmp.eq.f32.partialorder %v6880, 8.507059e+37
    %v6882 = vand.u32 %v6870, 2147483648
    %v6883 = vor.u32 1.1754944e-38, %v6882
    %v6884 = vsel %vm6881, %v6883, %v6879
    %v6885 = vmul.f32 1.0, %v6884
    %v6886 = vmul.f32 %v6861, %v6708
    %v6887 = vmul.f32 %v6839, %v6864
    %v6888 = vadd.f32 %v6886, %v6887
    %v6889 = vtanh.pop %v6888
    %v6890 = vmul.f32 %v6885, %v6889
    %6891 = vst [vmem:[#allocation1] ss:$2 sm:$0xff] %v6280
    %s6892 = scalar_lea.vmem [#allocation1], 16
    %6893 = vst [vmem:[%s6892] ss:$2 sm:$0xff] %v6281
    %v6894 = vld.sshfl [vmem:[#allocation1] sm:$0xff pattern:$0x75316420]
    %v6895 = vld.sshfl [vmem:[#allocation1 + $0x8] sm:$0xff pattern:$0x75316420]
    %v6896 = vld.sshfl [vmem:[#allocation1 + $0x10] sm:$0xff pattern:$0x75316420]
    %v6897 = vld.sshfl [vmem:[#allocation1 + $0x18] sm:$0xff pattern:$0x75316420]
    %v6899 = vsel %vm112, %v6890, 0
    %v6901 = vsel %vm117, %v6894, 0
    %v6903 = vsel %vm117, %v6895, 0
    %v6905 = vsel %vm117, %v6896, 0
    %v6907 = vsel %vm117, %v6897, 0
    %6909 = vmatpush.msra.mxu0 0.0
    %6910 = vmatpush.msra.mxu0 0.0
    %6911 = vmatpush.msra.mxu0 0.0
    %6912 = vmatpush.msra.mxu0 0.0
    %6913 = vmatpush.msra.mxu0 0.0
    %6914 = vmatpush.msra.mxu0 0.0
    %6915 = vmatpush.msra.mxu0 0.0
    %6916 = vmatpush.msra.mxu0 0.0
    %6917 = vmatpush.msra.mxu0 0.0
    %6918 = vmatpush.msra.mxu0 0.0
    %6919 = vmatpush.msra.mxu0 0.0
    %6920 = vmatpush.msra.mxu0 0.0
    %6921 = vmatpush.msra.mxu0 0.0
    %6922 = vmatpush.msra.mxu0 0.0
    %6923 = vmatpush.msra.mxu0 0.0
    %6924 = vmatpush.msra.mxu0 %v6901
    %6925 = vmatmul.f32.gmra.mxu0 %v6899
    %v6926 = vpop.f32.mrf.mxu0
    %v6927 = vadd.f32 0.0, %v6926
    %6928 = vdwg.mxu0
    %6929 = vmatpush.msra.mxu0 0.0
    %6930 = vmatpush.msra.mxu0 0.0
    %6931 = vmatpush.msra.mxu0 0.0
    %6932 = vmatpush.msra.mxu0 0.0
    %6933 = vmatpush.msra.mxu0 0.0
    %6934 = vmatpush.msra.mxu0 0.0
    %6935 = vmatpush.msra.mxu0 0.0
    %6936 = vmatpush.msra.mxu0 0.0
    %6937 = vmatpush.msra.mxu0 0.0
    %6938 = vmatpush.msra.mxu0 0.0
    %6939 = vmatpush.msra.mxu0 0.0
    %6940 = vmatpush.msra.mxu0 0.0
    %6941 = vmatpush.msra.mxu0 0.0
    %6942 = vmatpush.msra.mxu0 0.0
    %6943 = vmatpush.msra.mxu0 0.0
    %6944 = vmatpush.msra.mxu0 %v6903
    %6945 = vmatmul.f32.gmra.mxu0 %v6899
    %v6946 = vpop.f32.mrf.mxu0
    %v6947 = vadd.f32 0.0, %v6946
    %6948 = vdwg.mxu0
    %6949 = vmatpush.msra.mxu0 0.0
    %6950 = vmatpush.msra.mxu0 0.0
    %6951 = vmatpush.msra.mxu0 0.0
    %6952 = vmatpush.msra.mxu0 0.0
    %6953 = vmatpush.msra.mxu0 0.0
    %6954 = vmatpush.msra.mxu0 0.0
    %6955 = vmatpush.msra.mxu0 0.0
    %6956 = vmatpush.msra.mxu0 0.0
    %6957 = vmatpush.msra.mxu0 0.0
    %6958 = vmatpush.msra.mxu0 0.0
    %6959 = vmatpush.msra.mxu0 0.0
    %6960 = vmatpush.msra.mxu0 0.0
    %6961 = vmatpush.msra.mxu0 0.0
    %6962 = vmatpush.msra.mxu0 0.0
    %6963 = vmatpush.msra.mxu0 0.0
    %6964 = vmatpush.msra.mxu0 %v6905
    %6965 = vmatmul.f32.gmra.mxu0 %v6899
    %v6966 = vpop.f32.mrf.mxu0
    %v6967 = vadd.f32 0.0, %v6966
    %6968 = vdwg.mxu0
    %6969 = vmatpush.msra.mxu0 0.0
    %6970 = vmatpush.msra.mxu0 0.0
    %6971 = vmatpush.msra.mxu0 0.0
    %6972 = vmatpush.msra.mxu0 0.0
    %6973 = vmatpush.msra.mxu0 0.0
    %6974 = vmatpush.msra.mxu0 0.0
    %6975 = vmatpush.msra.mxu0 0.0
    %6976 = vmatpush.msra.mxu0 0.0
    %6977 = vmatpush.msra.mxu0 0.0
    %6978 = vmatpush.msra.mxu0 0.0
    %6979 = vmatpush.msra.mxu0 0.0
    %6980 = vmatpush.msra.mxu0 0.0
    %6981 = vmatpush.msra.mxu0 0.0
    %6982 = vmatpush.msra.mxu0 0.0
    %6983 = vmatpush.msra.mxu0 0.0
    %6984 = vmatpush.msra.mxu0 %v6907
    %6985 = vmatmul.f32.gmra.mxu0 %v6899
    %v6986 = vpop.f32.mrf.mxu0
    %v6987 = vadd.f32 0.0, %v6986
    %6988 = vdwg.mxu0
    %v6993 = vrot.slane %v6947, 6
    %v6994 = vrot.slane %v6967, 4
    %v6995 = vrot.slane %v6987, 2
    %v6996 = vsel %vm232, %v6927, %v6993
    %v6997 = vsel %vm234, %v6994, %v6995
    %v6998 = vsel %vm236, %v6996, %v6997
    %v7000 = vadd.f32 %v6436, %v6998
    %v7001 = vxor.u32 %v7000, 2147483648
    %v7002 = vmul.f32 %v7001, 1.442695
    %v7003 = vpow.pop %v7002
    %v7004 = vadd.f32 %v7003, 1.0
    %v7005 = vrcp.pop %v7004
    %v7006 = vmul.f32 %v7004, %v7005
    %v7007 = vsub.f32 1.0, %v7006
    %v7008 = vmul.f32 %v7005, %v7007
    %v7009 = vadd.f32 %v7005, %v7008
    %vm7010 = vweird.f32 %v7004
    %vm7011 = vweird.f32 %v7005
    %vm7012 = vmor %vm7010, %vm7011
    %v7013 = vsel %vm7012, %v7005, %v7009
    %v7014 = vand.u32 2147483647, %v7004
    %vm7015 = vcmp.eq.f32.partialorder %v7014, 8.507059e+37
    %v7016 = vand.u32 %v7004, 2147483648
    %v7017 = vor.u32 1.1754944e-38, %v7016
    %v7018 = vsel %vm7015, %v7017, %v7013
    %v7019 = vmul.f32 1.0, %v7018
    %v7021 = vrot.slane %v7000, 2
    %v7023 = vxor.u32 %v7021, 2147483648
    %v7024 = vmul.f32 %v7023, 1.442695
    %v7025 = vpow.pop %v7024
    %v7026 = vadd.f32 %v7025, 1.0
    %v7027 = vrcp.pop %v7026
    %v7028 = vmul.f32 %v7026, %v7027
    %v7029 = vsub.f32 1.0, %v7028
    %v7030 = vmul.f32 %v7027, %v7029
    %v7031 = vadd.f32 %v7027, %v7030
    %vm7032 = vweird.f32 %v7026
    %vm7033 = vweird.f32 %v7027
    %vm7034 = vmor %vm7032, %vm7033
    %v7035 = vsel %vm7034, %v7027, %v7031
    %v7036 = vand.u32 2147483647, %v7026
    %vm7037 = vcmp.eq.f32.partialorder %v7036, 8.507059e+37
    %v7038 = vand.u32 %v7026, 2147483648
    %v7039 = vor.u32 1.1754944e-38, %v7038
    %v7040 = vsel %vm7037, %v7039, %v7035
    %v7041 = vmul.f32 1.0, %v7040
    %v7042 = vrot.slane %v7000, 4
    %v7044 = vtanh.pop %v7042
    %v7045 = vrot.slane %v7000, 6
    %v7047 = vxor.u32 %v7045, 2147483648
    %v7048 = vmul.f32 %v7047, 1.442695
    %v7049 = vpow.pop %v7048
    %v7050 = vadd.f32 %v7049, 1.0
    %v7051 = vrcp.pop %v7050
    %v7052 = vmul.f32 %v7050, %v7051
    %v7053 = vsub.f32 1.0, %v7052
    %v7054 = vmul.f32 %v7051, %v7053
    %v7055 = vadd.f32 %v7051, %v7054
    %vm7056 = vweird.f32 %v7050
    %vm7057 = vweird.f32 %v7051
    %vm7058 = vmor %vm7056, %vm7057
    %v7059 = vsel %vm7058, %v7051, %v7055
    %v7060 = vand.u32 2147483647, %v7050
    %vm7061 = vcmp.eq.f32.partialorder %v7060, 8.507059e+37
    %v7062 = vand.u32 %v7050, 2147483648
    %v7063 = vor.u32 1.1754944e-38, %v7062
    %v7064 = vsel %vm7061, %v7063, %v7059
    %v7065 = vmul.f32 1.0, %v7064
    %v7066 = vmul.f32 %v7041, %v6888
    %v7067 = vmul.f32 %v7019, %v7044
    %v7068 = vadd.f32 %v7066, %v7067
    %v7069 = vtanh.pop %v7068
    %v7070 = vmul.f32 %v7065, %v7069
    %7071 = vst [vmem:[#allocation1] ss:$2 sm:$0xff] %v6280
    %s7072 = scalar_lea.vmem [#allocation1], 16
    %7073 = vst [vmem:[%s7072] ss:$2 sm:$0xff] %v6281
    %v7074 = vld.sshfl [vmem:[#allocation1] sm:$0xff pattern:$0x75316420]
    %v7075 = vld.sshfl [vmem:[#allocation1 + $0x8] sm:$0xff pattern:$0x75316420]
    %v7076 = vld.sshfl [vmem:[#allocation1 + $0x10] sm:$0xff pattern:$0x75316420]
    %v7077 = vld.sshfl [vmem:[#allocation1 + $0x18] sm:$0xff pattern:$0x75316420]
    %v7079 = vsel %vm112, %v7070, 0
    %v7081 = vsel %vm117, %v7074, 0
    %v7083 = vsel %vm117, %v7075, 0
    %v7085 = vsel %vm117, %v7076, 0
    %v7087 = vsel %vm117, %v7077, 0
    %7089 = vmatpush.msra.mxu0 0.0
    %7090 = vmatpush.msra.mxu0 0.0
    %7091 = vmatpush.msra.mxu0 0.0
    %7092 = vmatpush.msra.mxu0 0.0
    %7093 = vmatpush.msra.mxu0 0.0
    %7094 = vmatpush.msra.mxu0 0.0
    %7095 = vmatpush.msra.mxu0 0.0
    %7096 = vmatpush.msra.mxu0 0.0
    %7097 = vmatpush.msra.mxu0 0.0
    %7098 = vmatpush.msra.mxu0 0.0
    %7099 = vmatpush.msra.mxu0 0.0
    %7100 = vmatpush.msra.mxu0 0.0
    %7101 = vmatpush.msra.mxu0 0.0
    %7102 = vmatpush.msra.mxu0 0.0
    %7103 = vmatpush.msra.mxu0 0.0
    %7104 = vmatpush.msra.mxu0 %v7081
    %7105 = vmatmul.f32.gmra.mxu0 %v7079
    %v7106 = vpop.f32.mrf.mxu0
    %v7107 = vadd.f32 0.0, %v7106
    %7108 = vdwg.mxu0
    %7109 = vmatpush.msra.mxu0 0.0
    %7110 = vmatpush.msra.mxu0 0.0
    %7111 = vmatpush.msra.mxu0 0.0
    %7112 = vmatpush.msra.mxu0 0.0
    %7113 = vmatpush.msra.mxu0 0.0
    %7114 = vmatpush.msra.mxu0 0.0
    %7115 = vmatpush.msra.mxu0 0.0
    %7116 = vmatpush.msra.mxu0 0.0
    %7117 = vmatpush.msra.mxu0 0.0
    %7118 = vmatpush.msra.mxu0 0.0
    %7119 = vmatpush.msra.mxu0 0.0
    %7120 = vmatpush.msra.mxu0 0.0
    %7121 = vmatpush.msra.mxu0 0.0
    %7122 = vmatpush.msra.mxu0 0.0
    %7123 = vmatpush.msra.mxu0 0.0
    %7124 = vmatpush.msra.mxu0 %v7083
    %7125 = vmatmul.f32.gmra.mxu0 %v7079
    %v7126 = vpop.f32.mrf.mxu0
    %v7127 = vadd.f32 0.0, %v7126
    %7128 = vdwg.mxu0
    %7129 = vmatpush.msra.mxu0 0.0
    %7130 = vmatpush.msra.mxu0 0.0
    %7131 = vmatpush.msra.mxu0 0.0
    %7132 = vmatpush.msra.mxu0 0.0
    %7133 = vmatpush.msra.mxu0 0.0
    %7134 = vmatpush.msra.mxu0 0.0
    %7135 = vmatpush.msra.mxu0 0.0
    %7136 = vmatpush.msra.mxu0 0.0
    %7137 = vmatpush.msra.mxu0 0.0
    %7138 = vmatpush.msra.mxu0 0.0
    %7139 = vmatpush.msra.mxu0 0.0
    %7140 = vmatpush.msra.mxu0 0.0
    %7141 = vmatpush.msra.mxu0 0.0
    %7142 = vmatpush.msra.mxu0 0.0
    %7143 = vmatpush.msra.mxu0 0.0
    %7144 = vmatpush.msra.mxu0 %v7085
    %7145 = vmatmul.f32.gmra.mxu0 %v7079
    %v7146 = vpop.f32.mrf.mxu0
    %v7147 = vadd.f32 0.0, %v7146
    %7148 = vdwg.mxu0
    %7149 = vmatpush.msra.mxu0 0.0
    %7150 = vmatpush.msra.mxu0 0.0
    %7151 = vmatpush.msra.mxu0 0.0
    %7152 = vmatpush.msra.mxu0 0.0
    %7153 = vmatpush.msra.mxu0 0.0
    %7154 = vmatpush.msra.mxu0 0.0
    %7155 = vmatpush.msra.mxu0 0.0
    %7156 = vmatpush.msra.mxu0 0.0
    %7157 = vmatpush.msra.mxu0 0.0
    %7158 = vmatpush.msra.mxu0 0.0
    %7159 = vmatpush.msra.mxu0 0.0
    %7160 = vmatpush.msra.mxu0 0.0
    %7161 = vmatpush.msra.mxu0 0.0
    %7162 = vmatpush.msra.mxu0 0.0
    %7163 = vmatpush.msra.mxu0 0.0
    %7164 = vmatpush.msra.mxu0 %v7087
    %7165 = vmatmul.f32.gmra.mxu0 %v7079
    %v7166 = vpop.f32.mrf.mxu0
    %v7167 = vadd.f32 0.0, %v7166
    %7168 = vdwg.mxu0
    %v7173 = vrot.slane %v7127, 6
    %v7174 = vrot.slane %v7147, 4
    %v7175 = vrot.slane %v7167, 2
    %v7176 = vsel %vm232, %v7107, %v7173
    %v7177 = vsel %vm234, %v7174, %v7175
    %v7178 = vsel %vm236, %v7176, %v7177
    %v7180 = vadd.f32 %v6439, %v7178
    %v7181 = vxor.u32 %v7180, 2147483648
    %v7182 = vmul.f32 %v7181, 1.442695
    %v7183 = vpow.pop %v7182
    %v7184 = vadd.f32 %v7183, 1.0
    %v7185 = vrcp.pop %v7184
    %v7186 = vmul.f32 %v7184, %v7185
    %v7187 = vsub.f32 1.0, %v7186
    %v7188 = vmul.f32 %v7185, %v7187
    %v7189 = vadd.f32 %v7185, %v7188
    %vm7190 = vweird.f32 %v7184
    %vm7191 = vweird.f32 %v7185
    %vm7192 = vmor %vm7190, %vm7191
    %v7193 = vsel %vm7192, %v7185, %v7189
    %v7194 = vand.u32 2147483647, %v7184
    %vm7195 = vcmp.eq.f32.partialorder %v7194, 8.507059e+37
    %v7196 = vand.u32 %v7184, 2147483648
    %v7197 = vor.u32 1.1754944e-38, %v7196
    %v7198 = vsel %vm7195, %v7197, %v7193
    %v7199 = vmul.f32 1.0, %v7198
    %v7201 = vrot.slane %v7180, 2
    %v7203 = vxor.u32 %v7201, 2147483648
    %v7204 = vmul.f32 %v7203, 1.442695
    %v7205 = vpow.pop %v7204
    %v7206 = vadd.f32 %v7205, 1.0
    %v7207 = vrcp.pop %v7206
    %v7208 = vmul.f32 %v7206, %v7207
    %v7209 = vsub.f32 1.0, %v7208
    %v7210 = vmul.f32 %v7207, %v7209
    %v7211 = vadd.f32 %v7207, %v7210
    %vm7212 = vweird.f32 %v7206
    %vm7213 = vweird.f32 %v7207
    %vm7214 = vmor %vm7212, %vm7213
    %v7215 = vsel %vm7214, %v7207, %v7211
    %v7216 = vand.u32 2147483647, %v7206
    %vm7217 = vcmp.eq.f32.partialorder %v7216, 8.507059e+37
    %v7218 = vand.u32 %v7206, 2147483648
    %v7219 = vor.u32 1.1754944e-38, %v7218
    %v7220 = vsel %vm7217, %v7219, %v7215
    %v7221 = vmul.f32 1.0, %v7220
    %v7222 = vrot.slane %v7180, 4
    %v7224 = vtanh.pop %v7222
    %v7225 = vrot.slane %v7180, 6
    %v7227 = vxor.u32 %v7225, 2147483648
    %v7228 = vmul.f32 %v7227, 1.442695
    %v7229 = vpow.pop %v7228
    %v7230 = vadd.f32 %v7229, 1.0
    %v7231 = vrcp.pop %v7230
    %v7232 = vmul.f32 %v7230, %v7231
    %v7233 = vsub.f32 1.0, %v7232
    %v7234 = vmul.f32 %v7231, %v7233
    %v7235 = vadd.f32 %v7231, %v7234
    %vm7236 = vweird.f32 %v7230
    %vm7237 = vweird.f32 %v7231
    %vm7238 = vmor %vm7236, %vm7237
    %v7239 = vsel %vm7238, %v7231, %v7235
    %v7240 = vand.u32 2147483647, %v7230
    %vm7241 = vcmp.eq.f32.partialorder %v7240, 8.507059e+37
    %v7242 = vand.u32 %v7230, 2147483648
    %v7243 = vor.u32 1.1754944e-38, %v7242
    %v7244 = vsel %vm7241, %v7243, %v7239
    %v7245 = vmul.f32 1.0, %v7244
    %v7246 = vmul.f32 %v7221, %v7068
    %v7247 = vmul.f32 %v7199, %v7224
    %v7248 = vadd.f32 %v7246, %v7247
    %v7249 = vtanh.pop %v7248
    %v7250 = vmul.f32 %v7245, %v7249
    %7251 = vst [vmem:[#allocation1] ss:$2 sm:$0xff] %v6280
    %s7252 = scalar_lea.vmem [#allocation1], 16
    %7253 = vst [vmem:[%s7252] ss:$2 sm:$0xff] %v6281
    %v7254 = vld.sshfl [vmem:[#allocation1] sm:$0xff pattern:$0x75316420]
    %v7255 = vld.sshfl [vmem:[#allocation1 + $0x8] sm:$0xff pattern:$0x75316420]
    %v7256 = vld.sshfl [vmem:[#allocation1 + $0x10] sm:$0xff pattern:$0x75316420]
    %v7257 = vld.sshfl [vmem:[#allocation1 + $0x18] sm:$0xff pattern:$0x75316420]
    %v7259 = vsel %vm112, %v7250, 0
    %v7261 = vsel %vm117, %v7254, 0
    %v7263 = vsel %vm117, %v7255, 0
    %v7265 = vsel %vm117, %v7256, 0
    %v7267 = vsel %vm117, %v7257, 0
    %7269 = vmatpush.msra.mxu0 0.0
    %7270 = vmatpush.msra.mxu0 0.0
    %7271 = vmatpush.msra.mxu0 0.0
    %7272 = vmatpush.msra.mxu0 0.0
    %7273 = vmatpush.msra.mxu0 0.0
    %7274 = vmatpush.msra.mxu0 0.0
    %7275 = vmatpush.msra.mxu0 0.0
    %7276 = vmatpush.msra.mxu0 0.0
    %7277 = vmatpush.msra.mxu0 0.0
    %7278 = vmatpush.msra.mxu0 0.0
    %7279 = vmatpush.msra.mxu0 0.0
    %7280 = vmatpush.msra.mxu0 0.0
    %7281 = vmatpush.msra.mxu0 0.0
    %7282 = vmatpush.msra.mxu0 0.0
    %7283 = vmatpush.msra.mxu0 0.0
    %7284 = vmatpush.msra.mxu0 %v7261
    %7285 = vmatmul.f32.gmra.mxu0 %v7259
    %v7286 = vpop.f32.mrf.mxu0
    %v7287 = vadd.f32 0.0, %v7286
    %7288 = vdwg.mxu0
    %7289 = vmatpush.msra.mxu0 0.0
    %7290 = vmatpush.msra.mxu0 0.0
    %7291 = vmatpush.msra.mxu0 0.0
    %7292 = vmatpush.msra.mxu0 0.0
    %7293 = vmatpush.msra.mxu0 0.0
    %7294 = vmatpush.msra.mxu0 0.0
    %7295 = vmatpush.msra.mxu0 0.0
    %7296 = vmatpush.msra.mxu0 0.0
    %7297 = vmatpush.msra.mxu0 0.0
    %7298 = vmatpush.msra.mxu0 0.0
    %7299 = vmatpush.msra.mxu0 0.0
    %7300 = vmatpush.msra.mxu0 0.0
    %7301 = vmatpush.msra.mxu0 0.0
    %7302 = vmatpush.msra.mxu0 0.0
    %7303 = vmatpush.msra.mxu0 0.0
    %7304 = vmatpush.msra.mxu0 %v7263
    %7305 = vmatmul.f32.gmra.mxu0 %v7259
    %v7306 = vpop.f32.mrf.mxu0
    %v7307 = vadd.f32 0.0, %v7306
    %7308 = vdwg.mxu0
    %7309 = vmatpush.msra.mxu0 0.0
    %7310 = vmatpush.msra.mxu0 0.0
    %7311 = vmatpush.msra.mxu0 0.0
    %7312 = vmatpush.msra.mxu0 0.0
    %7313 = vmatpush.msra.mxu0 0.0
    %7314 = vmatpush.msra.mxu0 0.0
    %7315 = vmatpush.msra.mxu0 0.0
    %7316 = vmatpush.msra.mxu0 0.0
    %7317 = vmatpush.msra.mxu0 0.0
    %7318 = vmatpush.msra.mxu0 0.0
    %7319 = vmatpush.msra.mxu0 0.0
    %7320 = vmatpush.msra.mxu0 0.0
    %7321 = vmatpush.msra.mxu0 0.0
    %7322 = vmatpush.msra.mxu0 0.0
    %7323 = vmatpush.msra.mxu0 0.0
    %7324 = vmatpush.msra.mxu0 %v7265
    %7325 = vmatmul.f32.gmra.mxu0 %v7259
    %v7326 = vpop.f32.mrf.mxu0
    %v7327 = vadd.f32 0.0, %v7326
    %7328 = vdwg.mxu0
    %7329 = vmatpush.msra.mxu0 0.0
    %7330 = vmatpush.msra.mxu0 0.0
    %7331 = vmatpush.msra.mxu0 0.0
    %7332 = vmatpush.msra.mxu0 0.0
    %7333 = vmatpush.msra.mxu0 0.0
    %7334 = vmatpush.msra.mxu0 0.0
    %7335 = vmatpush.msra.mxu0 0.0
    %7336 = vmatpush.msra.mxu0 0.0
    %7337 = vmatpush.msra.mxu0 0.0
    %7338 = vmatpush.msra.mxu0 0.0
    %7339 = vmatpush.msra.mxu0 0.0
    %7340 = vmatpush.msra.mxu0 0.0
    %7341 = vmatpush.msra.mxu0 0.0
    %7342 = vmatpush.msra.mxu0 0.0
    %7343 = vmatpush.msra.mxu0 0.0
    %7344 = vmatpush.msra.mxu0 %v7267
    %7345 = vmatmul.f32.gmra.mxu0 %v7259
    %v7346 = vpop.f32.mrf.mxu0
    %v7347 = vadd.f32 0.0, %v7346
    %7348 = vdwg.mxu0
    %v7353 = vrot.slane %v7307, 6
    %v7354 = vrot.slane %v7327, 4
    %v7355 = vrot.slane %v7347, 2
    %v7356 = vsel %vm232, %v7287, %v7353
    %v7357 = vsel %vm234, %v7354, %v7355
    %v7358 = vsel %vm236, %v7356, %v7357
    %v7360 = vadd.f32 %v6443, %v7358
    %v7361 = vxor.u32 %v7360, 2147483648
    %v7362 = vmul.f32 %v7361, 1.442695
    %v7363 = vpow.pop %v7362
    %v7364 = vadd.f32 %v7363, 1.0
    %v7365 = vrcp.pop %v7364
    %v7366 = vmul.f32 %v7364, %v7365
    %v7367 = vsub.f32 1.0, %v7366
    %v7368 = vmul.f32 %v7365, %v7367
    %v7369 = vadd.f32 %v7365, %v7368
    %vm7370 = vweird.f32 %v7364
    %vm7371 = vweird.f32 %v7365
    %vm7372 = vmor %vm7370, %vm7371
    %v7373 = vsel %vm7372, %v7365, %v7369
    %v7374 = vand.u32 2147483647, %v7364
    %vm7375 = vcmp.eq.f32.partialorder %v7374, 8.507059e+37
    %v7376 = vand.u32 %v7364, 2147483648
    %v7377 = vor.u32 1.1754944e-38, %v7376
    %v7378 = vsel %vm7375, %v7377, %v7373
    %v7379 = vmul.f32 1.0, %v7378
    %v7381 = vrot.slane %v7360, 2
    %v7383 = vxor.u32 %v7381, 2147483648
    %v7384 = vmul.f32 %v7383, 1.442695
    %v7385 = vpow.pop %v7384
    %v7386 = vadd.f32 %v7385, 1.0
    %v7387 = vrcp.pop %v7386
    %v7388 = vmul.f32 %v7386, %v7387
    %v7389 = vsub.f32 1.0, %v7388
    %v7390 = vmul.f32 %v7387, %v7389
    %v7391 = vadd.f32 %v7387, %v7390
    %vm7392 = vweird.f32 %v7386
    %vm7393 = vweird.f32 %v7387
    %vm7394 = vmor %vm7392, %vm7393
    %v7395 = vsel %vm7394, %v7387, %v7391
    %v7396 = vand.u32 2147483647, %v7386
    %vm7397 = vcmp.eq.f32.partialorder %v7396, 8.507059e+37
    %v7398 = vand.u32 %v7386, 2147483648
    %v7399 = vor.u32 1.1754944e-38, %v7398
    %v7400 = vsel %vm7397, %v7399, %v7395
    %v7401 = vmul.f32 1.0, %v7400
    %v7402 = vrot.slane %v7360, 4
    %v7404 = vtanh.pop %v7402
    %v7405 = vrot.slane %v7360, 6
    %v7407 = vxor.u32 %v7405, 2147483648
    %v7408 = vmul.f32 %v7407, 1.442695
    %v7409 = vpow.pop %v7408
    %v7410 = vadd.f32 %v7409, 1.0
    %v7411 = vrcp.pop %v7410
    %v7412 = vmul.f32 %v7410, %v7411
    %v7413 = vsub.f32 1.0, %v7412
    %v7414 = vmul.f32 %v7411, %v7413
    %v7415 = vadd.f32 %v7411, %v7414
    %vm7416 = vweird.f32 %v7410
    %vm7417 = vweird.f32 %v7411
    %vm7418 = vmor %vm7416, %vm7417
    %v7419 = vsel %vm7418, %v7411, %v7415
    %v7420 = vand.u32 2147483647, %v7410
    %vm7421 = vcmp.eq.f32.partialorder %v7420, 8.507059e+37
    %v7422 = vand.u32 %v7410, 2147483648
    %v7423 = vor.u32 1.1754944e-38, %v7422
    %v7424 = vsel %vm7421, %v7423, %v7419
    %v7425 = vmul.f32 1.0, %v7424
    %v7426 = vmul.f32 %v7401, %v7248
    %v7427 = vmul.f32 %v7379, %v7404
    %v7428 = vadd.f32 %v7426, %v7427
    %v7429 = vtanh.pop %v7428
    %v7430 = vmul.f32 %v7425, %v7429
    %7431 = vst [vmem:[#allocation1] ss:$2 sm:$0xff] %v6280
    %s7432 = scalar_lea.vmem [#allocation1], 16
    %7433 = vst [vmem:[%s7432] ss:$2 sm:$0xff] %v6281
    %v7434 = vld.sshfl [vmem:[#allocation1] sm:$0xff pattern:$0x75316420]
    %v7435 = vld.sshfl [vmem:[#allocation1 + $0x8] sm:$0xff pattern:$0x75316420]
    %v7436 = vld.sshfl [vmem:[#allocation1 + $0x10] sm:$0xff pattern:$0x75316420]
    %v7437 = vld.sshfl [vmem:[#allocation1 + $0x18] sm:$0xff pattern:$0x75316420]
    %v7439 = vsel %vm112, %v7430, 0
    %v7441 = vsel %vm117, %v7434, 0
    %v7443 = vsel %vm117, %v7435, 0
    %v7445 = vsel %vm117, %v7436, 0
    %v7447 = vsel %vm117, %v7437, 0
    %7449 = vmatpush.msra.mxu0 0.0
    %7450 = vmatpush.msra.mxu0 0.0
    %7451 = vmatpush.msra.mxu0 0.0
    %7452 = vmatpush.msra.mxu0 0.0
    %7453 = vmatpush.msra.mxu0 0.0
    %7454 = vmatpush.msra.mxu0 0.0
    %7455 = vmatpush.msra.mxu0 0.0
    %7456 = vmatpush.msra.mxu0 0.0
    %7457 = vmatpush.msra.mxu0 0.0
    %7458 = vmatpush.msra.mxu0 0.0
    %7459 = vmatpush.msra.mxu0 0.0
    %7460 = vmatpush.msra.mxu0 0.0
    %7461 = vmatpush.msra.mxu0 0.0
    %7462 = vmatpush.msra.mxu0 0.0
    %7463 = vmatpush.msra.mxu0 0.0
    %7464 = vmatpush.msra.mxu0 %v7441
    %7465 = vmatmul.f32.gmra.mxu0 %v7439
    %v7466 = vpop.f32.mrf.mxu0
    %v7467 = vadd.f32 0.0, %v7466
    %7468 = vdwg.mxu0
    %7469 = vmatpush.msra.mxu0 0.0
    %7470 = vmatpush.msra.mxu0 0.0
    %7471 = vmatpush.msra.mxu0 0.0
    %7472 = vmatpush.msra.mxu0 0.0
    %7473 = vmatpush.msra.mxu0 0.0
    %7474 = vmatpush.msra.mxu0 0.0
    %7475 = vmatpush.msra.mxu0 0.0
    %7476 = vmatpush.msra.mxu0 0.0
    %7477 = vmatpush.msra.mxu0 0.0
    %7478 = vmatpush.msra.mxu0 0.0
    %7479 = vmatpush.msra.mxu0 0.0
    %7480 = vmatpush.msra.mxu0 0.0
    %7481 = vmatpush.msra.mxu0 0.0
    %7482 = vmatpush.msra.mxu0 0.0
    %7483 = vmatpush.msra.mxu0 0.0
    %7484 = vmatpush.msra.mxu0 %v7443
    %7485 = vmatmul.f32.gmra.mxu0 %v7439
    %v7486 = vpop.f32.mrf.mxu0
    %v7487 = vadd.f32 0.0, %v7486
    %7488 = vdwg.mxu0
    %7489 = vmatpush.msra.mxu0 0.0
    %7490 = vmatpush.msra.mxu0 0.0
    %7491 = vmatpush.msra.mxu0 0.0
    %7492 = vmatpush.msra.mxu0 0.0
    %7493 = vmatpush.msra.mxu0 0.0
    %7494 = vmatpush.msra.mxu0 0.0
    %7495 = vmatpush.msra.mxu0 0.0
    %7496 = vmatpush.msra.mxu0 0.0
    %7497 = vmatpush.msra.mxu0 0.0
    %7498 = vmatpush.msra.mxu0 0.0
    %7499 = vmatpush.msra.mxu0 0.0
    %7500 = vmatpush.msra.mxu0 0.0
    %7501 = vmatpush.msra.mxu0 0.0
    %7502 = vmatpush.msra.mxu0 0.0
    %7503 = vmatpush.msra.mxu0 0.0
    %7504 = vmatpush.msra.mxu0 %v7445
    %7505 = vmatmul.f32.gmra.mxu0 %v7439
    %v7506 = vpop.f32.mrf.mxu0
    %v7507 = vadd.f32 0.0, %v7506
    %7508 = vdwg.mxu0
    %7509 = vmatpush.msra.mxu0 0.0
    %7510 = vmatpush.msra.mxu0 0.0
    %7511 = vmatpush.msra.mxu0 0.0
    %7512 = vmatpush.msra.mxu0 0.0
    %7513 = vmatpush.msra.mxu0 0.0
    %7514 = vmatpush.msra.mxu0 0.0
    %7515 = vmatpush.msra.mxu0 0.0
    %7516 = vmatpush.msra.mxu0 0.0
    %7517 = vmatpush.msra.mxu0 0.0
    %7518 = vmatpush.msra.mxu0 0.0
    %7519 = vmatpush.msra.mxu0 0.0
    %7520 = vmatpush.msra.mxu0 0.0
    %7521 = vmatpush.msra.mxu0 0.0
    %7522 = vmatpush.msra.mxu0 0.0
    %7523 = vmatpush.msra.mxu0 0.0
    %7524 = vmatpush.msra.mxu0 %v7447
    %7525 = vmatmul.f32.gmra.mxu0 %v7439
    %v7526 = vpop.f32.mrf.mxu0
    %v7527 = vadd.f32 0.0, %v7526
    %7528 = vdwg.mxu0
    %v7533 = vrot.slane %v7487, 6
    %v7534 = vrot.slane %v7507, 4
    %v7535 = vrot.slane %v7527, 2
    %v7536 = vsel %vm232, %v7467, %v7533
    %v7537 = vsel %vm234, %v7534, %v7535
    %v7538 = vsel %vm236, %v7536, %v7537
    %v7540 = vadd.f32 %v6447, %v7538
    %v7541 = vxor.u32 %v7540, 2147483648
    %v7542 = vmul.f32 %v7541, 1.442695
    %v7543 = vpow.pop %v7542
    %v7544 = vadd.f32 %v7543, 1.0
    %v7545 = vrcp.pop %v7544
    %v7546 = vmul.f32 %v7544, %v7545
    %v7547 = vsub.f32 1.0, %v7546
    %v7548 = vmul.f32 %v7545, %v7547
    %v7549 = vadd.f32 %v7545, %v7548
    %vm7550 = vweird.f32 %v7544
    %vm7551 = vweird.f32 %v7545
    %vm7552 = vmor %vm7550, %vm7551
    %v7553 = vsel %vm7552, %v7545, %v7549
    %v7554 = vand.u32 2147483647, %v7544
    %vm7555 = vcmp.eq.f32.partialorder %v7554, 8.507059e+37
    %v7556 = vand.u32 %v7544, 2147483648
    %v7557 = vor.u32 1.1754944e-38, %v7556
    %v7558 = vsel %vm7555, %v7557, %v7553
    %v7559 = vmul.f32 1.0, %v7558
    %v7561 = vrot.slane %v7540, 2
    %v7563 = vxor.u32 %v7561, 2147483648
    %v7564 = vmul.f32 %v7563, 1.442695
    %v7565 = vpow.pop %v7564
    %v7566 = vadd.f32 %v7565, 1.0
    %v7567 = vrcp.pop %v7566
    %v7568 = vmul.f32 %v7566, %v7567
    %v7569 = vsub.f32 1.0, %v7568
    %v7570 = vmul.f32 %v7567, %v7569
    %v7571 = vadd.f32 %v7567, %v7570
    %vm7572 = vweird.f32 %v7566
    %vm7573 = vweird.f32 %v7567
    %vm7574 = vmor %vm7572, %vm7573
    %v7575 = vsel %vm7574, %v7567, %v7571
    %v7576 = vand.u32 2147483647, %v7566
    %vm7577 = vcmp.eq.f32.partialorder %v7576, 8.507059e+37
    %v7578 = vand.u32 %v7566, 2147483648
    %v7579 = vor.u32 1.1754944e-38, %v7578
    %v7580 = vsel %vm7577, %v7579, %v7575
    %v7581 = vmul.f32 1.0, %v7580
    %v7582 = vrot.slane %v7540, 4
    %v7584 = vtanh.pop %v7582
    %v7585 = vrot.slane %v7540, 6
    %v7587 = vxor.u32 %v7585, 2147483648
    %v7588 = vmul.f32 %v7587, 1.442695
    %v7589 = vpow.pop %v7588
    %v7590 = vadd.f32 %v7589, 1.0
    %v7591 = vrcp.pop %v7590
    %v7592 = vmul.f32 %v7590, %v7591
    %v7593 = vsub.f32 1.0, %v7592
    %v7594 = vmul.f32 %v7591, %v7593
    %v7595 = vadd.f32 %v7591, %v7594
    %vm7596 = vweird.f32 %v7590
    %vm7597 = vweird.f32 %v7591
    %vm7598 = vmor %vm7596, %vm7597
    %v7599 = vsel %vm7598, %v7591, %v7595
    %v7600 = vand.u32 2147483647, %v7590
    %vm7601 = vcmp.eq.f32.partialorder %v7600, 8.507059e+37
    %v7602 = vand.u32 %v7590, 2147483648
    %v7603 = vor.u32 1.1754944e-38, %v7602
    %v7604 = vsel %vm7601, %v7603, %v7599
    %v7605 = vmul.f32 1.0, %v7604
    %v7606 = vmul.f32 %v7581, %v7428
    %v7607 = vmul.f32 %v7559, %v7584
    %v7608 = vadd.f32 %v7606, %v7607
    %v7609 = vtanh.pop %v7608
    %v7610 = vmul.f32 %v7605, %v7609
    %7611 = vst [vmem:[#allocation1] ss:$2 sm:$0xff] %v6280
    %s7612 = scalar_lea.vmem [#allocation1], 16
    %7613 = vst [vmem:[%s7612] ss:$2 sm:$0xff] %v6281
    %v7614 = vld.sshfl [vmem:[#allocation1] sm:$0xff pattern:$0x75316420]
    %v7615 = vld.sshfl [vmem:[#allocation1 + $0x8] sm:$0xff pattern:$0x75316420]
    %v7616 = vld.sshfl [vmem:[#allocation1 + $0x10] sm:$0xff pattern:$0x75316420]
    %v7617 = vld.sshfl [vmem:[#allocation1 + $0x18] sm:$0xff pattern:$0x75316420]
    %v7619 = vsel %vm112, %v7610, 0
    %v7621 = vsel %vm117, %v7614, 0
    %v7623 = vsel %vm117, %v7615, 0
    %v7625 = vsel %vm117, %v7616, 0
    %v7627 = vsel %vm117, %v7617, 0
    %7629 = vmatpush.msra.mxu0 0.0
    %7630 = vmatpush.msra.mxu0 0.0
    %7631 = vmatpush.msra.mxu0 0.0
    %7632 = vmatpush.msra.mxu0 0.0
    %7633 = vmatpush.msra.mxu0 0.0
    %7634 = vmatpush.msra.mxu0 0.0
    %7635 = vmatpush.msra.mxu0 0.0
    %7636 = vmatpush.msra.mxu0 0.0
    %7637 = vmatpush.msra.mxu0 0.0
    %7638 = vmatpush.msra.mxu0 0.0
    %7639 = vmatpush.msra.mxu0 0.0
    %7640 = vmatpush.msra.mxu0 0.0
    %7641 = vmatpush.msra.mxu0 0.0
    %7642 = vmatpush.msra.mxu0 0.0
    %7643 = vmatpush.msra.mxu0 0.0
    %7644 = vmatpush.msra.mxu0 %v7621
    %7645 = vmatmul.f32.gmra.mxu0 %v7619
    %v7646 = vpop.f32.mrf.mxu0
    %v7647 = vadd.f32 0.0, %v7646
    %7648 = vdwg.mxu0
    %7649 = vmatpush.msra.mxu0 0.0
    %7650 = vmatpush.msra.mxu0 0.0
    %7651 = vmatpush.msra.mxu0 0.0
    %7652 = vmatpush.msra.mxu0 0.0
    %7653 = vmatpush.msra.mxu0 0.0
    %7654 = vmatpush.msra.mxu0 0.0
    %7655 = vmatpush.msra.mxu0 0.0
    %7656 = vmatpush.msra.mxu0 0.0
    %7657 = vmatpush.msra.mxu0 0.0
    %7658 = vmatpush.msra.mxu0 0.0
    %7659 = vmatpush.msra.mxu0 0.0
    %7660 = vmatpush.msra.mxu0 0.0
    %7661 = vmatpush.msra.mxu0 0.0
    %7662 = vmatpush.msra.mxu0 0.0
    %7663 = vmatpush.msra.mxu0 0.0
    %7664 = vmatpush.msra.mxu0 %v7623
    %7665 = vmatmul.f32.gmra.mxu0 %v7619
    %v7666 = vpop.f32.mrf.mxu0
    %v7667 = vadd.f32 0.0, %v7666
    %7668 = vdwg.mxu0
    %7669 = vmatpush.msra.mxu0 0.0
    %7670 = vmatpush.msra.mxu0 0.0
    %7671 = vmatpush.msra.mxu0 0.0
    %7672 = vmatpush.msra.mxu0 0.0
    %7673 = vmatpush.msra.mxu0 0.0
    %7674 = vmatpush.msra.mxu0 0.0
    %7675 = vmatpush.msra.mxu0 0.0
    %7676 = vmatpush.msra.mxu0 0.0
    %7677 = vmatpush.msra.mxu0 0.0
    %7678 = vmatpush.msra.mxu0 0.0
    %7679 = vmatpush.msra.mxu0 0.0
    %7680 = vmatpush.msra.mxu0 0.0
    %7681 = vmatpush.msra.mxu0 0.0
    %7682 = vmatpush.msra.mxu0 0.0
    %7683 = vmatpush.msra.mxu0 0.0
    %7684 = vmatpush.msra.mxu0 %v7625
    %7685 = vmatmul.f32.gmra.mxu0 %v7619
    %v7686 = vpop.f32.mrf.mxu0
    %v7687 = vadd.f32 0.0, %v7686
    %7688 = vdwg.mxu0
    %7689 = vmatpush.msra.mxu0 0.0
    %7690 = vmatpush.msra.mxu0 0.0
    %7691 = vmatpush.msra.mxu0 0.0
    %7692 = vmatpush.msra.mxu0 0.0
    %7693 = vmatpush.msra.mxu0 0.0
    %7694 = vmatpush.msra.mxu0 0.0
    %7695 = vmatpush.msra.mxu0 0.0
    %7696 = vmatpush.msra.mxu0 0.0
    %7697 = vmatpush.msra.mxu0 0.0
    %7698 = vmatpush.msra.mxu0 0.0
    %7699 = vmatpush.msra.mxu0 0.0
    %7700 = vmatpush.msra.mxu0 0.0
    %7701 = vmatpush.msra.mxu0 0.0
    %7702 = vmatpush.msra.mxu0 0.0
    %7703 = vmatpush.msra.mxu0 0.0
    %7704 = vmatpush.msra.mxu0 %v7627
    %7705 = vmatmul.f32.gmra.mxu0 %v7619
    %v7706 = vpop.f32.mrf.mxu0
    %v7707 = vadd.f32 0.0, %v7706
    %7708 = vdwg.mxu0
    %v7713 = vrot.slane %v7667, 6
    %v7714 = vrot.slane %v7687, 4
    %v7715 = vrot.slane %v7707, 2
    %v7716 = vsel %vm232, %v7647, %v7713
    %v7717 = vsel %vm234, %v7714, %v7715
    %v7718 = vsel %vm236, %v7716, %v7717
    %v7720 = vadd.f32 %v6451, %v7718
    %v7721 = vxor.u32 %v7720, 2147483648
    %v7722 = vmul.f32 %v7721, 1.442695
    %v7723 = vpow.pop %v7722
    %v7724 = vadd.f32 %v7723, 1.0
    %v7725 = vrcp.pop %v7724
    %v7726 = vmul.f32 %v7724, %v7725
    %v7727 = vsub.f32 1.0, %v7726
    %v7728 = vmul.f32 %v7725, %v7727
    %v7729 = vadd.f32 %v7725, %v7728
    %vm7730 = vweird.f32 %v7724
    %vm7731 = vweird.f32 %v7725
    %vm7732 = vmor %vm7730, %vm7731
    %v7733 = vsel %vm7732, %v7725, %v7729
    %v7734 = vand.u32 2147483647, %v7724
    %vm7735 = vcmp.eq.f32.partialorder %v7734, 8.507059e+37
    %v7736 = vand.u32 %v7724, 2147483648
    %v7737 = vor.u32 1.1754944e-38, %v7736
    %v7738 = vsel %vm7735, %v7737, %v7733
    %v7739 = vmul.f32 1.0, %v7738
    %v7741 = vrot.slane %v7720, 2
    %v7743 = vxor.u32 %v7741, 2147483648
    %v7744 = vmul.f32 %v7743, 1.442695
    %v7745 = vpow.pop %v7744
    %v7746 = vadd.f32 %v7745, 1.0
    %v7747 = vrcp.pop %v7746
    %v7748 = vmul.f32 %v7746, %v7747
    %v7749 = vsub.f32 1.0, %v7748
    %v7750 = vmul.f32 %v7747, %v7749
    %v7751 = vadd.f32 %v7747, %v7750
    %vm7752 = vweird.f32 %v7746
    %vm7753 = vweird.f32 %v7747
    %vm7754 = vmor %vm7752, %vm7753
    %v7755 = vsel %vm7754, %v7747, %v7751
    %v7756 = vand.u32 2147483647, %v7746
    %vm7757 = vcmp.eq.f32.partialorder %v7756, 8.507059e+37
    %v7758 = vand.u32 %v7746, 2147483648
    %v7759 = vor.u32 1.1754944e-38, %v7758
    %v7760 = vsel %vm7757, %v7759, %v7755
    %v7761 = vmul.f32 1.0, %v7760
    %v7762 = vrot.slane %v7720, 4
    %v7764 = vtanh.pop %v7762
    %v7765 = vrot.slane %v7720, 6
    %v7767 = vxor.u32 %v7765, 2147483648
    %v7768 = vmul.f32 %v7767, 1.442695
    %v7769 = vpow.pop %v7768
    %v7770 = vadd.f32 %v7769, 1.0
    %v7771 = vrcp.pop %v7770
    %v7772 = vmul.f32 %v7770, %v7771
    %v7773 = vsub.f32 1.0, %v7772
    %v7774 = vmul.f32 %v7771, %v7773
    %v7775 = vadd.f32 %v7771, %v7774
    %vm7776 = vweird.f32 %v7770
    %vm7777 = vweird.f32 %v7771
    %vm7778 = vmor %vm7776, %vm7777
    %v7779 = vsel %vm7778, %v7771, %v7775
    %v7780 = vand.u32 2147483647, %v7770
    %vm7781 = vcmp.eq.f32.partialorder %v7780, 8.507059e+37
    %v7782 = vand.u32 %v7770, 2147483648
    %v7783 = vor.u32 1.1754944e-38, %v7782
    %v7784 = vsel %vm7781, %v7783, %v7779
    %v7785 = vmul.f32 1.0, %v7784
    %v7786 = vmul.f32 %v7761, %v7608
    %v7787 = vmul.f32 %v7739, %v7764
    %v7788 = vadd.f32 %v7786, %v7787
    %v7789 = vtanh.pop %v7788
    %v7790 = vmul.f32 %v7785, %v7789
    %v7791 = vld [vmem:[%s4] sm:$0x7]
    %v7792 = vld [vmem:[%s5] sm:$0x1]
    %v7794 = vperm.slane %v7792, 0
    %v7797 = vsel %vm112, %v7790, 0
    %v7800 = vsel %vm117, %v7791, 0
    %7802 = vmatpush.msra.mxu0 0.0
    %7803 = vmatpush.msra.mxu0 0.0
    %7804 = vmatpush.msra.mxu0 0.0
    %7805 = vmatpush.msra.mxu0 0.0
    %7806 = vmatpush.msra.mxu0 0.0
    %7807 = vmatpush.msra.mxu0 0.0
    %7808 = vmatpush.msra.mxu0 0.0
    %7809 = vmatpush.msra.mxu0 0.0
    %7810 = vmatpush.msra.mxu0 0.0
    %7811 = vmatpush.msra.mxu0 0.0
    %7812 = vmatpush.msra.mxu0 0.0
    %7813 = vmatpush.msra.mxu0 0.0
    %7814 = vmatpush.msra.mxu0 0.0
    %7815 = vmatpush.msra.mxu0 0.0
    %7816 = vmatpush.msra.mxu0 0.0
    %7817 = vmatpush.msra.mxu0 %v7800
    %7818 = vmatmul.f32.gmra.mxu0 %v7797
    %v7819 = vpop.f32.mrf.mxu0
    %v7820 = vadd.f32 %v7794, %v7819
    %7821 = vdwg.mxu0
    %s7822 = scalar_lea.vmem %s0, 14
    %v7823 = vld [vmem:[%s7822] sm:$0x3]
    %v7824 = vadd.f32 %v7820, 1.0
    %v7825 = vmul.f32 %v7824, %v7823
    %v7826 = vmax.f32 %v7825, 0.0
    %vm7827 = vcmask 17408
    %7828 = vst.msk [vmem:[#allocation7] sm:$0x3] %vm7827, %v7826
    // Predicated region
    $region34: #{tpu_custom_call.1} parent=1 // pred_check
      _
    $region35: #{tpu_custom_call.1} parent=1 // pred_check_branch
      %7830 = sbr.rel (0) target = $region37
    $region36: #{tpu_custom_call.1} parent=1 // pred_region
      %7832 = vsyncadd [#allocation4], 0
      %s7834 = sshll.u32 [#allocation7], 4
      %s7835 = int_to_ptr.vmem [resolvable:$true] %s7834
      %s7836 = sshll.u32 %s6, 4
      %s7837 = int_to_ptr.hbm [resolvable:$true] %s7836
      %7839 = dma.vmem_to_hbm [thread:$0]  %s7835, 32, %s7837, [#allocation4]
    $region37: #{tpu_custom_call.1} parent=1 // pred_fallthru
      _
    // Predicated region
    $region38: #{tpu_custom_call.1} parent=1 // pred_check
      _
    $region39: #{tpu_custom_call.1} parent=1 // pred_check_branch
      %7841 = sbr.rel (0) target = $region41
    $region40: #{tpu_custom_call.1} parent=1 // pred_region
      %7843 = dma.done [#allocation4], 32
    $region41: #{tpu_custom_call.1} parent=1 // pred_fallthru
      _
    %7844 = vsyncpa [#allocation3], 1
    %7845 = vsyncpa [#allocation6], 1
    %7846 = vsyncpa [#allocation4], 1

</llo_original>
